<compile_context>
chip_gen: v5e
topology: v5e:2x2
jax: 0.10.0
libtpu: 0.0.40
codegen_flags: <defaults>
</compile_context>

<pallas_src>
import functools

import jax
import jax.numpy as jnp
from jax.experimental import pallas as pl
from jax.experimental.pallas import tpu as pltpu


MXU_DTYPE = jnp.bfloat16       # MXU operand dtype (f32 accumulation / epilogue)
LANE = 128
MAX_TM = 512                   # lane-tile cap for the M = H*W*N axis
VMEM_LIMIT = 32 * 1024 * 1024  # explicit scoped-VMEM budget (safe on v5e/v6e/v7x)


# ---------------------------------------------------------------------------
# Pallas kernels
# ---------------------------------------------------------------------------
def _powerprop_kernel(w_ref, o_ref, *, alpha):
    """w_eff = w * |w|^(alpha-1), computed ONCE per layer (hoisted out of matmuls)."""
    w = w_ref[...]
    if alpha == 2.0:                         # fast path: pure VPU (abs + mul)
        w_eff = w * jnp.abs(w)
    elif float(alpha).is_integer() and alpha >= 1.0:
        aw = jnp.abs(w)
        p = jnp.ones_like(w)
        for _ in range(int(alpha) - 1):      # small static unroll, VPU only
            p = p * aw
        w_eff = w * p
    else:
        # TODO(synk): non-integer alpha keeps the exp/log pow path (inf/nan at
        #             w==0 for alpha<2, exactly as the PyTorch reference).
        w_eff = w * jnp.abs(w) ** (alpha - 1.0)
    o_ref[...] = w_eff.astype(o_ref.dtype)


def powerprop_transform(w, alpha):
    """[C_out, K] f32 -> bf16 effective weight (tiny one-shot kernel per layer)."""
    return pl.pallas_call(
        functools.partial(_powerprop_kernel, alpha=float(alpha)),
        out_shape=jax.ShapeDtypeStruct(w.shape, MXU_DTYPE),
    )(w)


def _conv_mm_stats_kernel(a_ref, w_ref, b_ref, o_ref, sum_ref, ssq_ref,
                          *, m_true, tm, need_mask):
    """out[C_out, tm] = w_eff @ patches_tile + b, with fused BN batch statistics."""
    i = pl.program_id(0)

    @pl.when(i == 0)
    def _():
        sum_ref[...] = jnp.zeros_like(sum_ref)
        ssq_ref[...] = jnp.zeros_like(ssq_ref)

    # [C_out, K] @ [K, tm] -> [C_out, tm]; bf16 operands, f32 accumulation on MXU.
    acc = jnp.dot(w_ref[...], a_ref[...], preferred_element_type=jnp.float32)
    acc = acc + b_ref[...]                                   # f32 bias epilogue
    if need_mask:                                            # zero padded lanes
        col = i * tm + jax.lax.broadcasted_iota(jnp.int32, acc.shape, 1)
        acc = jnp.where(col < m_true, acc, 0.0)
    o_ref[...] = acc
    # fused training-mode BatchNorm statistics (per-channel sum / sum-of-squares)
    sum_ref[...] += jnp.sum(acc, axis=1, keepdims=True)
    ssq_ref[...] += jnp.sum(acc * acc, axis=1, keepdims=True)


def conv_matmul_stats(a, w_eff, b, m_true, tm):
    """a: [K, M_pad] bf16 patches, w_eff: [C_out, K] bf16, b: [C_out] f32.

    Returns (conv_out [C_out, M_pad] f32, sum [C_out,1] f32, sumsq [C_out,1] f32).
    Output lane axis = M (lane-dense stores); weight block resident across grid.
    """
    k_dim, m_pad = a.shape
    c_out = w_eff.shape[0]
    grid = (m_pad // tm,)
    kernel = functools.partial(
        _conv_mm_stats_kernel, m_true=m_true, tm=tm, need_mask=(m_pad != m_true))
    return pl.pallas_call(
        kernel,
        out_shape=(
            jax.ShapeDtypeStruct((c_out, m_pad), jnp.float32),
            jax.ShapeDtypeStruct((c_out, 1), jnp.float32),
            jax.ShapeDtypeStruct((c_out, 1), jnp.float32),
        ),
        grid=grid,
        in_specs=[
            pl.BlockSpec((k_dim, tm), lambda i: (0, i)),
            pl.BlockSpec((c_out, k_dim), lambda i: (0, 0)),
            pl.BlockSpec((c_out, 1), lambda i: (0, 0)),
        ],
        out_specs=(
            pl.BlockSpec((c_out, tm), lambda i: (0, i)),
            pl.BlockSpec((c_out, 1), lambda i: (0, 0)),      # resident accumulator
            pl.BlockSpec((c_out, 1), lambda i: (0, 0)),      # resident accumulator
        ),
        compiler_params=pltpu.CompilerParams(
            dimension_semantics=("arbitrary",),              # stats reduce over M
            vmem_limit_bytes=VMEM_LIMIT),
    )(a, w_eff, b.reshape(c_out, 1))


def _bn_relu_kernel(x_ref, sum_ref, ssq_ref, g_ref, b_ref, o_ref, *, m_true, eps):
    """Training-mode BatchNorm2d normalize (+ReLU) from precomputed batch sums."""
    inv_m = 1.0 / m_true
    mean = sum_ref[...] * inv_m                              # [C, 1]
    var = jnp.maximum(ssq_ref[...] * inv_m - mean * mean, 0.0)   # biased variance
    scale = jax.lax.rsqrt(var + eps) * g_ref[...]
    shift = b_ref[...] - mean * scale
    y = x_ref[...] * scale + shift                           # all f32
    o_ref[...] = jnp.maximum(y, 0.0).astype(o_ref.dtype)     # store bf16


def bn_relu(x, stat_sum, stat_ssq, gamma, beta, m_true, tm, eps=1e-5):
    """x: [C, M_pad] f32 conv output; returns bf16 [C, M_pad] normalized + ReLU."""
    c, m_pad = x.shape
    grid = (m_pad // tm,)
    kernel = functools.partial(_bn_relu_kernel, m_true=float(m_true), eps=eps)
    return pl.pallas_call(
        kernel,
        out_shape=jax.ShapeDtypeStruct((c, m_pad), MXU_DTYPE),
        grid=grid,
        in_specs=[
            pl.BlockSpec((c, tm), lambda i: (0, i)),
            pl.BlockSpec((c, 1), lambda i: (0, 0)),
            pl.BlockSpec((c, 1), lambda i: (0, 0)),
            pl.BlockSpec((c, 1), lambda i: (0, 0)),
            pl.BlockSpec((c, 1), lambda i: (0, 0)),
        ],
        out_specs=pl.BlockSpec((c, tm), lambda i: (0, i)),
        compiler_params=pltpu.CompilerParams(
            dimension_semantics=("parallel",),
            vmem_limit_bytes=VMEM_LIMIT),
    )(x, stat_sum, stat_ssq, gamma.reshape(c, 1), beta.reshape(c, 1))


def _fc_fused_kernel(x_ref, w1_ref, b1_ref, w2_ref, b2_ref, w3_ref, b3_ref, o_ref):
    """All three PowerPropLinear layers fused; transposed form: out = W @ x.

    Features on sublanes, batch on lanes; weights stay in native [out, in] layout
    so there is no transpose anywhere. bf16 MXU inputs, f32 accumulate/epilogue.
    """
    h = jnp.dot(w1_ref[...], x_ref[...], preferred_element_type=jnp.float32)
    h = jnp.maximum(h + b1_ref[...], 0.0)
    h = jnp.dot(w2_ref[...], h.astype(MXU_DTYPE), preferred_element_type=jnp.float32)
    h = jnp.maximum(h + b2_ref[...], 0.0)
    h = jnp.dot(w3_ref[...], h.astype(MXU_DTYPE), preferred_element_type=jnp.float32)
    o_ref[...] = h + b3_ref[...]


def fc_fused(x_t, fc_weights_eff, fc_biases):
    """x_t: [in_features, batch] bf16. Returns logits [n_classes, batch] f32."""
    w1, w2, w3 = fc_weights_eff
    b1, b2, b3 = fc_biases
    n_out, batch = w3.shape[0], x_t.shape[1]
    return pl.pallas_call(
        _fc_fused_kernel,
        out_shape=jax.ShapeDtypeStruct((n_out, batch), jnp.float32),
    )(x_t, w1, b1.reshape(-1, 1), w2, b2.reshape(-1, 1), w3, b3.reshape(-1, 1))


# ---------------------------------------------------------------------------
# JAX glue (layout / patch extraction / pooling)
# ---------------------------------------------------------------------------
def _plan_tiles(m):
    """Lane-tile (multiple of 128, capped) and padded M for the grid over M."""
    tm = min(MAX_TM, ((m + LANE - 1) // LANE) * LANE)
    m_pad = ((m + tm - 1) // tm) * tm
    return tm, m_pad


def im2col_3x3_T(x_chwn):
    """3x3 / stride-1 / pad-1 patches in K-major layout: [9*C, H*W*N] (bf16)."""
    C, H, W, N = x_chwn.shape
    xp = jnp.pad(x_chwn, ((0, 0), (1, 1), (1, 1), (0, 0)))
    rows = []
    for dy in range(3):
        for dx in range(3):
            rows.append(xp[:, dy:dy + H, dx:dx + W, :])
    patches = jnp.stack(rows, axis=0)                  # [9, C, H, W, N]
    return patches.reshape(9 * C, H * W * N)           # K order = (ky,kx,c_in)


def powerprop_conv_bn_relu(x_chwn, w_oihw, b, gamma, beta, alpha):
    """PowerPropConv (stride 1, pad 1) + training-mode BatchNorm2d + ReLU."""
    C_in, H, W, N = x_chwn.shape
    C_out = w_oihw.shape[0]
    m = H * W * N
    tm, m_pad = _plan_tiles(m)

    a = im2col_3x3_T(x_chwn.astype(MXU_DTYPE))         # bf16 patch matrix [K, M]
    if m_pad != m:
        a = jnp.pad(a, ((0, 0), (0, m_pad - m)))

    # flatten weight in the same (ky, kx, c_in) K-ordering as the patches
    w2d = jnp.transpose(w_oihw, (0, 2, 3, 1)).reshape(C_out, 9 * C_in)
    w_eff = powerprop_transform(w2d, alpha)            # hoisted, alpha fast path

    y, s, ss = conv_matmul_stats(a, w_eff, b, m_true=m, tm=tm)
    y = bn_relu(y, s, ss, gamma, beta, m_true=m, tm=tm)
    if m_pad != m:
        y = y[:, :m]
    return y.reshape(C_out, H, W, N)


def maxpool2x2(x_chwn):
    # TODO(synk): 2x2/stride-2 maxpool kept as XLA reshape+max glue (tiny reduction).
    C, H, W, N = x_chwn.shape
    return jnp.max(x_chwn.reshape(C, H // 2, 2, W // 2, 2, N), axis=(2, 4))


# ---------------------------------------------------------------------------
# Model: parameters + forward
# ---------------------------------------------------------------------------
FC_FEATURES = (256, 256, 10)


def init_params(key, in_channels, out_channels):
    convs, fcs = [], []
    ic = in_channels
    for ch in out_channels:
        for _ in range(2):
            key, k1, k2 = jax.random.split(key, 3)
            w = 0.2 * jax.random.normal(k1, (ch, ic, 3, 3), jnp.float32)
            b = 0.1 * jax.random.normal(k2, (ch,), jnp.float32)
            gamma = jnp.ones((ch,), jnp.float32)       # nn.BatchNorm2d default init
            beta = jnp.zeros((ch,), jnp.float32)
            convs.append((w, b, gamma, beta))
            ic = ch
    in_features = out_channels[-1] * 16                # assumes 32x32 input -> 4x4
    for feat in FC_FEATURES:
        key, k1, k2 = jax.random.split(key, 3)
        w = 0.1 * jax.random.normal(k1, (feat, in_features), jnp.float32)
        b = 0.05 * jax.random.normal(k2, (feat,), jnp.float32)
        fcs.append((w, b))
        in_features = feat
    return {"convs": convs, "fcs": fcs}


def cnn_forward(params, x_nchw, alpha):
    # NCHW -> CHWN (channel-major, batch-minor): the big H*W*N axis lives on TPU
    # lanes and torch.flatten(NCHW, start_dim=1) becomes a plain reshape below.
    x = jnp.transpose(x_nchw, (1, 2, 3, 0))
    for i, (cw, cb, gamma, beta) in enumerate(params["convs"]):
        x = powerprop_conv_bn_relu(x, cw, cb, gamma, beta, alpha)
        if i % 2 == 1:
            x = maxpool2x2(x)
    C, H, W, N = x.shape
    x_t = x.reshape(C * H * W, N)                      # rows already in torch order

    w_eff = tuple(powerprop_transform(fw, alpha) for fw, _ in params["fcs"])
    biases = tuple(fb for _, fb in params["fcs"])
    logits_t = fc_fused(x_t, w_eff, biases)            # [num_classes, N]
    return logits_t.T                                  # [N, num_classes]


# ---------------------------------------------------------------------------
if __name__ == "__main__":
    alpha = 2.0
    batch, in_channels = 2, 3
    out_channels = (8, 16, 32)                         # small synthetic widths
    H = W = 32                                         # flatten implies 32x32 input

    key = jax.random.PRNGKey(0)
    key, kp, kx = jax.random.split(key, 3)
    params = init_params(kp, in_channels, out_channels)
    x = jax.random.normal(kx, (batch, in_channels, H, W), jnp.float32)

    fwd = jax.jit(functools.partial(cnn_forward, alpha=alpha))
    out = fwd(params, x)
    jax.block_until_ready(out)
    assert out.shape == (batch, FC_FEATURES[-1]), out.shape
    print("KERNEL_OK")
</pallas_src>

<mosaic_0001>
module attributes {stable_mosaic.version = 11 : i64} {
  func.func @_powerprop_kernel(%arg0: memref<8x27xf32, #tpu.memory_space<vmem>>, %arg1: memref<8x27xbf16, #tpu.memory_space<vmem>>) attributes {dimension_semantics = [], scalar_prefetch = 0 : i64, scratch_operands = 0 : i64, tpu.core_type = #tpu.core_type<tc>} {
    %c0 = arith.constant 0 : index
    %c0_0 = arith.constant 0 : index
    %0 = vector.load %arg0[%c0, %c0_0] : memref<8x27xf32, #tpu.memory_space<vmem>>, vector<8x27xf32>
    %1 = math.absf %0 : vector<8x27xf32>
    %2 = arith.mulf %0, %1 : vector<8x27xf32>
    %3 = arith.truncf %2 : vector<8x27xf32> to vector<8x27xbf16>
    %c0_1 = arith.constant 0 : index
    %c0_2 = arith.constant 0 : index
    %4 = vector.load %arg1[%c0_1, %c0_2] : memref<8x27xbf16, #tpu.memory_space<vmem>>, vector<8x27xbf16>
    tpu.vector_store %arg1[%c0_1, %c0_2], %3 {strides = array<i32>} : memref<8x27xbf16, #tpu.memory_space<vmem>>, vector<8x27xbf16>,
    return
  }
}

module attributes {stable_mosaic.version = 11 : i64} {
  func.func @_conv_mm_stats_kernel(%arg0: i32, %arg1: memref<27x512xbf16, #tpu.memory_space<vmem>>, %arg2: memref<8x27xbf16, #tpu.memory_space<vmem>>, %arg3: memref<8x1xf32, #tpu.memory_space<vmem>>, %arg4: memref<8x512xf32, #tpu.memory_space<vmem>>, %arg5: memref<8x1xf32, #tpu.memory_space<vmem>>, %arg6: memref<8x1xf32, #tpu.memory_space<vmem>>) attributes {dimension_semantics = [#tpu.dimension_semantics<arbitrary>], iteration_bounds = array<i64: 4>, scalar_prefetch = 0 : i64, scratch_operands = 0 : i64, tpu.core_type = #tpu.core_type<tc>, window_params = [{transform_indices = @transform_0, window_bounds = array<i64: 27, 512>}, {pipeline_mode = #tpu.pipeline_mode<synchronous>, transform_indices = @transform_1, window_bounds = array<i64: 8, 27>}, {pipeline_mode = #tpu.pipeline_mode<synchronous>, transform_indices = @transform_2, window_bounds = array<i64: 8, 1>}, {transform_indices = @transform_3, window_bounds = array<i64: 8, 512>}, {pipeline_mode = #tpu.pipeline_mode<synchronous>, transform_indices = @transform_4, window_bounds = array<i64: 8, 1>}, {pipeline_mode = #tpu.pipeline_mode<synchronous>, transform_indices = @transform_5, window_bounds = array<i64: 8, 1>}]} {
    %c0_i32 = arith.constant 0 : i32
    %0 = arith.cmpi eq, %arg0, %c0_i32 : i32
    %1 = arith.extui %0 : i1 to i32
    %c0_i32_0 = arith.constant 0 : i32
    %2 = arith.cmpi ne, %1, %c0_i32_0 : i32
    scf.if %2 {
      %cst_18 = arith.constant 0.000000e+00 : f32
      %21 = vector.broadcast %cst_18 : f32 to vector<8x1xf32>
      %c0_19 = arith.constant 0 : index
      %c0_20 = arith.constant 0 : index
      %22 = vector.load %arg5[%c0_19, %c0_20] : memref<8x1xf32, #tpu.memory_space<vmem>>, vector<8x1xf32>
      tpu.vector_store %arg5[%c0_19, %c0_20], %21 {strides = array<i32>} : memref<8x1xf32, #tpu.memory_space<vmem>>, vector<8x1xf32>,
      %cst_21 = arith.constant 0.000000e+00 : f32
      %23 = vector.broadcast %cst_21 : f32 to vector<8x1xf32>
      %c0_22 = arith.constant 0 : index
      %c0_23 = arith.constant 0 : index
      %24 = vector.load %arg6[%c0_22, %c0_23] : memref<8x1xf32, #tpu.memory_space<vmem>>, vector<8x1xf32>
      tpu.vector_store %arg6[%c0_22, %c0_23], %23 {strides = array<i32>} : memref<8x1xf32, #tpu.memory_space<vmem>>, vector<8x1xf32>,
    } else {
    }
    %c0 = arith.constant 0 : index
    %c0_1 = arith.constant 0 : index
    %3 = vector.load %arg2[%c0, %c0_1] : memref<8x27xbf16, #tpu.memory_space<vmem>>, vector<8x27xbf16>
    %c0_2 = arith.constant 0 : index
    %c0_3 = arith.constant 0 : index
    %4 = vector.load %arg1[%c0_2, %c0_3] : memref<27x512xbf16, #tpu.memory_space<vmem>>, vector<27x512xbf16>
    %cst = arith.constant dense<0.000000e+00> : vector<8x512xf32>
    %5 = tpu.matmul %3, %4, %cst {dimension_numbers = #tpu.dot_dimension_numbers<[1], [0], [0], [1], [0, 0, 1, 1], [], []>} : vector<8x27xbf16>, vector<27x512xbf16>, vector<8x512xf32> -> vector<8x512xf32>
    %c0_4 = arith.constant 0 : index
    %c0_5 = arith.constant 0 : index
    %6 = vector.load %arg3[%c0_4, %c0_5] : memref<8x1xf32, #tpu.memory_space<vmem>>, vector<8x1xf32>
    %7 = vector.broadcast %6 : vector<8x1xf32> to vector<8x512xf32>
    %8 = arith.addf %5, %7 : vector<8x512xf32>
    %c0_6 = arith.constant 0 : index
    %c0_7 = arith.constant 0 : index
    %9 = vector.load %arg4[%c0_6, %c0_7] : memref<8x512xf32, #tpu.memory_space<vmem>>, vector<8x512xf32>
    tpu.vector_store %arg4[%c0_6, %c0_7], %8 {strides = array<i32>} : memref<8x512xf32, #tpu.memory_space<vmem>>, vector<8x512xf32>,
    %c0_8 = arith.constant 0 : index
    %c0_9 = arith.constant 0 : index
    %10 = vector.load %arg5[%c0_8, %c0_9] : memref<8x1xf32, #tpu.memory_space<vmem>>, vector<8x1xf32>
    %cst_10 = arith.constant dense<0.000000e+00> : vector<8xf32>
    %11 = vector.multi_reduction <add>, %8, %cst_10 [1] : vector<8x512xf32> to vector<8xf32>
    %12 = vector.shape_cast %11 : vector<8xf32> to vector<8x1xf32>
    %13 = arith.addf %10, %12 : vector<8x1xf32>
    %c0_11 = arith.constant 0 : index
    %c0_12 = arith.constant 0 : index
    %14 = vector.load %arg5[%c0_11, %c0_12] : memref<8x1xf32, #tpu.memory_space<vmem>>, vector<8x1xf32>
    tpu.vector_store %arg5[%c0_11, %c0_12], %13 {strides = array<i32>} : memref<8x1xf32, #tpu.memory_space<vmem>>, vector<8x1xf32>,
    %c0_13 = arith.constant 0 : index
    %c0_14 = arith.constant 0 : index
    %15 = vector.load %arg6[%c0_13, %c0_14] : memref<8x1xf32, #tpu.memory_space<vmem>>, vector<8x1xf32>
    %16 = arith.mulf %8, %8 : vector<8x512xf32>
    %cst_15 = arith.constant dense<0.000000e+00> : vector<8xf32>
    %17 = vector.multi_reduction <add>, %16, %cst_15 [1] : vector<8x512xf32> to vector<8xf32>
    %18 = vector.shape_cast %17 : vector<8xf32> to vector<8x1xf32>
    %19 = arith.addf %15, %18 : vector<8x1xf32>
    %c0_16 = arith.constant 0 : index
    %c0_17 = arith.constant 0 : index
    %20 = vector.load %arg6[%c0_16, %c0_17] : memref<8x1xf32, #tpu.memory_space<vmem>>, vector<8x1xf32>
    tpu.vector_store %arg6[%c0_16, %c0_17], %19 {strides = array<i32>} : memref<8x1xf32, #tpu.memory_space<vmem>>, vector<8x1xf32>,
    return
  }
  func.func @transform_0(%arg0: i32) -> (i32, i32) {
    %c0_i32 = arith.constant 0 : i32
    %c0_i32_0 = arith.constant 0 : i32
    return %c0_i32, %arg0 : i32, i32
  }
  func.func @transform_1(%arg0: i32) -> (i32, i32) {
    %c0_i32 = arith.constant 0 : i32
    %c0_i32_0 = arith.constant 0 : i32
    %c0_i32_1 = arith.constant 0 : i32
    return %c0_i32, %c0_i32_0 : i32, i32
  }
  func.func @transform_2(%arg0: i32) -> (i32, i32) {
    %c0_i32 = arith.constant 0 : i32
    %c0_i32_0 = arith.constant 0 : i32
    %c0_i32_1 = arith.constant 0 : i32
    return %c0_i32, %c0_i32_0 : i32, i32
  }
  func.func @transform_3(%arg0: i32) -> (i32, i32) {
    %c0_i32 = arith.constant 0 : i32
    %c0_i32_0 = arith.constant 0 : i32
    return %c0_i32, %arg0 : i32, i32
  }
  func.func @transform_4(%arg0: i32) -> (i32, i32) {
    %c0_i32 = arith.constant 0 : i32
    %c0_i32_0 = arith.constant 0 : i32
    %c0_i32_1 = arith.constant 0 : i32
    return %c0_i32, %c0_i32_0 : i32, i32
  }
  func.func @transform_5(%arg0: i32) -> (i32, i32) {
    %c0_i32 = arith.constant 0 : i32
    %c0_i32_0 = arith.constant 0 : i32
    %c0_i32_1 = arith.constant 0 : i32
    return %c0_i32, %c0_i32_0 : i32, i32
  }
}

module attributes {stable_mosaic.version = 11 : i64} {
  func.func @_bn_relu_kernel(%arg0: i32, %arg1: memref<8x512xf32, #tpu.memory_space<vmem>>, %arg2: memref<8x1xf32, #tpu.memory_space<vmem>>, %arg3: memref<8x1xf32, #tpu.memory_space<vmem>>, %arg4: memref<8x1xf32, #tpu.memory_space<vmem>>, %arg5: memref<8x1xf32, #tpu.memory_space<vmem>>, %arg6: memref<8x512xbf16, #tpu.memory_space<vmem>>) attributes {dimension_semantics = [#tpu.dimension_semantics<parallel>], iteration_bounds = array<i64: 4>, scalar_prefetch = 0 : i64, scratch_operands = 0 : i64, tpu.core_type = #tpu.core_type<tc>, window_params = [{transform_indices = @transform_0, window_bounds = array<i64: 8, 512>}, {pipeline_mode = #tpu.pipeline_mode<synchronous>, transform_indices = @transform_1, window_bounds = array<i64: 8, 1>}, {pipeline_mode = #tpu.pipeline_mode<synchronous>, transform_indices = @transform_2, window_bounds = array<i64: 8, 1>}, {pipeline_mode = #tpu.pipeline_mode<synchronous>, transform_indices = @transform_3, window_bounds = array<i64: 8, 1>}, {pipeline_mode = #tpu.pipeline_mode<synchronous>, transform_indices = @transform_4, window_bounds = array<i64: 8, 1>}, {transform_indices = @transform_5, window_bounds = array<i64: 8, 512>}]} {
    %c0 = arith.constant 0 : index
    %c0_0 = arith.constant 0 : index
    %0 = vector.load %arg2[%c0, %c0_0] : memref<8x1xf32, #tpu.memory_space<vmem>>, vector<8x1xf32>
    %cst = arith.constant 4.8828125E-4 : f32
    %1 = vector.broadcast %cst : f32 to vector<8x1xf32>
    %2 = arith.mulf %0, %1 : vector<8x1xf32>
    %c0_1 = arith.constant 0 : index
    %c0_2 = arith.constant 0 : index
    %3 = vector.load %arg3[%c0_1, %c0_2] : memref<8x1xf32, #tpu.memory_space<vmem>>, vector<8x1xf32>
    %cst_3 = arith.constant 4.8828125E-4 : f32
    %4 = vector.broadcast %cst_3 : f32 to vector<8x1xf32>
    %5 = arith.mulf %3, %4 : vector<8x1xf32>
    %6 = arith.mulf %2, %2 : vector<8x1xf32>
    %7 = arith.subf %5, %6 : vector<8x1xf32>
    %cst_4 = arith.constant 0.000000e+00 : f32
    %8 = vector.broadcast %cst_4 : f32 to vector<8x1xf32>
    %9 = arith.maximumf %7, %8 : vector<8x1xf32>
    %cst_5 = arith.constant 9.99999974E-6 : f32
    %10 = vector.broadcast %cst_5 : f32 to vector<8x1xf32>
    %11 = arith.addf %9, %10 : vector<8x1xf32>
    %12 = math.rsqrt %11 : vector<8x1xf32>
    %c0_6 = arith.constant 0 : index
    %c0_7 = arith.constant 0 : index
    %13 = vector.load %arg4[%c0_6, %c0_7] : memref<8x1xf32, #tpu.memory_space<vmem>>, vector<8x1xf32>
    %14 = arith.mulf %12, %13 : vector<8x1xf32>
    %c0_8 = arith.constant 0 : index
    %c0_9 = arith.constant 0 : index
    %15 = vector.load %arg5[%c0_8, %c0_9] : memref<8x1xf32, #tpu.memory_space<vmem>>, vector<8x1xf32>
    %16 = arith.mulf %2, %14 : vector<8x1xf32>
    %17 = arith.subf %15, %16 : vector<8x1xf32>
    %c0_10 = arith.constant 0 : index
    %c0_11 = arith.constant 0 : index
    %18 = vector.load %arg1[%c0_10, %c0_11] : memref<8x512xf32, #tpu.memory_space<vmem>>, vector<8x512xf32>
    %19 = vector.broadcast %14 : vector<8x1xf32> to vector<8x512xf32>
    %20 = arith.mulf %18, %19 : vector<8x512xf32>
    %21 = vector.broadcast %17 : vector<8x1xf32> to vector<8x512xf32>
    %22 = arith.addf %20, %21 : vector<8x512xf32>
    %cst_12 = arith.constant 0.000000e+00 : f32
    %23 = vector.broadcast %cst_12 : f32 to vector<8x512xf32>
    %24 = arith.maximumf %22, %23 : vector<8x512xf32>
    %25 = arith.truncf %24 : vector<8x512xf32> to vector<8x512xbf16>
    %c0_13 = arith.constant 0 : index
    %c0_14 = arith.constant 0 : index
    %26 = vector.load %arg6[%c0_13, %c0_14] : memref<8x512xbf16, #tpu.memory_space<vmem>>, vector<8x512xbf16>
    tpu.vector_store %arg6[%c0_13, %c0_14], %25 {strides = array<i32>} : memref<8x512xbf16, #tpu.memory_space<vmem>>, vector<8x512xbf16>,
    return
  }
  func.func @transform_0(%arg0: i32) -> (i32, i32) {
    %c0_i32 = arith.constant 0 : i32
    %c0_i32_0 = arith.constant 0 : i32
    return %c0_i32, %arg0 : i32, i32
  }
  func.func @transform_1(%arg0: i32) -> (i32, i32) {
    %c0_i32 = arith.constant 0 : i32
    %c0_i32_0 = arith.constant 0 : i32
    %c0_i32_1 = arith.constant 0 : i32
    return %c0_i32, %c0_i32_0 : i32, i32
  }
  func.func @transform_2(%arg0: i32) -> (i32, i32) {
    %c0_i32 = arith.constant 0 : i32
    %c0_i32_0 = arith.constant 0 : i32
    %c0_i32_1 = arith.constant 0 : i32
    return %c0_i32, %c0_i32_0 : i32, i32
  }
  func.func @transform_3(%arg0: i32) -> (i32, i32) {
    %c0_i32 = arith.constant 0 : i32
    %c0_i32_0 = arith.constant 0 : i32
    %c0_i32_1 = arith.constant 0 : i32
    return %c0_i32, %c0_i32_0 : i32, i32
  }
  func.func @transform_4(%arg0: i32) -> (i32, i32) {
    %c0_i32 = arith.constant 0 : i32
    %c0_i32_0 = arith.constant 0 : i32
    %c0_i32_1 = arith.constant 0 : i32
    return %c0_i32, %c0_i32_0 : i32, i32
  }
  func.func @transform_5(%arg0: i32) -> (i32, i32) {
    %c0_i32 = arith.constant 0 : i32
    %c0_i32_0 = arith.constant 0 : i32
    return %c0_i32, %arg0 : i32, i32
  }
}

module attributes {stable_mosaic.version = 11 : i64} {
  func.func @_powerprop_kernel(%arg0: memref<8x72xf32, #tpu.memory_space<vmem>>, %arg1: memref<8x72xbf16, #tpu.memory_space<vmem>>) attributes {dimension_semantics = [], scalar_prefetch = 0 : i64, scratch_operands = 0 : i64, tpu.core_type = #tpu.core_type<tc>} {
    %c0 = arith.constant 0 : index
    %c0_0 = arith.constant 0 : index
    %0 = vector.load %arg0[%c0, %c0_0] : memref<8x72xf32, #tpu.memory_space<vmem>>, vector<8x72xf32>
    %1 = math.absf %0 : vector<8x72xf32>
    %2 = arith.mulf %0, %1 : vector<8x72xf32>
    %3 = arith.truncf %2 : vector<8x72xf32> to vector<8x72xbf16>
    %c0_1 = arith.constant 0 : index
    %c0_2 = arith.constant 0 : index
    %4 = vector.load %arg1[%c0_1, %c0_2] : memref<8x72xbf16, #tpu.memory_space<vmem>>, vector<8x72xbf16>
    tpu.vector_store %arg1[%c0_1, %c0_2], %3 {strides = array<i32>} : memref<8x72xbf16, #tpu.memory_space<vmem>>, vector<8x72xbf16>,
    return
  }
}

module attributes {stable_mosaic.version = 11 : i64} {
  func.func @_conv_mm_stats_kernel(%arg0: i32, %arg1: memref<72x512xbf16, #tpu.memory_space<vmem>>, %arg2: memref<8x72xbf16, #tpu.memory_space<vmem>>, %arg3: memref<8x1xf32, #tpu.memory_space<vmem>>, %arg4: memref<8x512xf32, #tpu.memory_space<vmem>>, %arg5: memref<8x1xf32, #tpu.memory_space<vmem>>, %arg6: memref<8x1xf32, #tpu.memory_space<vmem>>) attributes {dimension_semantics = [#tpu.dimension_semantics<arbitrary>], iteration_bounds = array<i64: 4>, scalar_prefetch = 0 : i64, scratch_operands = 0 : i64, tpu.core_type = #tpu.core_type<tc>, window_params = [{transform_indices = @transform_0, window_bounds = array<i64: 72, 512>}, {pipeline_mode = #tpu.pipeline_mode<synchronous>, transform_indices = @transform_1, window_bounds = array<i64: 8, 72>}, {pipeline_mode = #tpu.pipeline_mode<synchronous>, transform_indices = @transform_2, window_bounds = array<i64: 8, 1>}, {transform_indices = @transform_3, window_bounds = array<i64: 8, 512>}, {pipeline_mode = #tpu.pipeline_mode<synchronous>, transform_indices = @transform_4, window_bounds = array<i64: 8, 1>}, {pipeline_mode = #tpu.pipeline_mode<synchronous>, transform_indices = @transform_5, window_bounds = array<i64: 8, 1>}]} {
    %c0_i32 = arith.constant 0 : i32
    %0 = arith.cmpi eq, %arg0, %c0_i32 : i32
    %1 = arith.extui %0 : i1 to i32
    %c0_i32_0 = arith.constant 0 : i32
    %2 = arith.cmpi ne, %1, %c0_i32_0 : i32
    scf.if %2 {
      %cst_18 = arith.constant 0.000000e+00 : f32
      %21 = vector.broadcast %cst_18 : f32 to vector<8x1xf32>
      %c0_19 = arith.constant 0 : index
      %c0_20 = arith.constant 0 : index
      %22 = vector.load %arg5[%c0_19, %c0_20] : memref<8x1xf32, #tpu.memory_space<vmem>>, vector<8x1xf32>
      tpu.vector_store %arg5[%c0_19, %c0_20], %21 {strides = array<i32>} : memref<8x1xf32, #tpu.memory_space<vmem>>, vector<8x1xf32>,
      %cst_21 = arith.constant 0.000000e+00 : f32
      %23 = vector.broadcast %cst_21 : f32 to vector<8x1xf32>
      %c0_22 = arith.constant 0 : index
      %c0_23 = arith.constant 0 : index
      %24 = vector.load %arg6[%c0_22, %c0_23] : memref<8x1xf32, #tpu.memory_space<vmem>>, vector<8x1xf32>
      tpu.vector_store %arg6[%c0_22, %c0_23], %23 {strides = array<i32>} : memref<8x1xf32, #tpu.memory_space<vmem>>, vector<8x1xf32>,
    } else {
    }
    %c0 = arith.constant 0 : index
    %c0_1 = arith.constant 0 : index
    %3 = vector.load %arg2[%c0, %c0_1] : memref<8x72xbf16, #tpu.memory_space<vmem>>, vector<8x72xbf16>
    %c0_2 = arith.constant 0 : index
    %c0_3 = arith.constant 0 : index
    %4 = vector.load %arg1[%c0_2, %c0_3] : memref<72x512xbf16, #tpu.memory_space<vmem>>, vector<72x512xbf16>
    %cst = arith.constant dense<0.000000e+00> : vector<8x512xf32>
    %5 = tpu.matmul %3, %4, %cst {dimension_numbers = #tpu.dot_dimension_numbers<[1], [0], [0], [1], [0, 0, 1, 1], [], []>} : vector<8x72xbf16>, vector<72x512xbf16>, vector<8x512xf32> -> vector<8x512xf32>
    %c0_4 = arith.constant 0 : index
    %c0_5 = arith.constant 0 : index
    %6 = vector.load %arg3[%c0_4, %c0_5] : memref<8x1xf32, #tpu.memory_space<vmem>>, vector<8x1xf32>
    %7 = vector.broadcast %6 : vector<8x1xf32> to vector<8x512xf32>
    %8 = arith.addf %5, %7 : vector<8x512xf32>
    %c0_6 = arith.constant 0 : index
    %c0_7 = arith.constant 0 : index
    %9 = vector.load %arg4[%c0_6, %c0_7] : memref<8x512xf32, #tpu.memory_space<vmem>>, vector<8x512xf32>
    tpu.vector_store %arg4[%c0_6, %c0_7], %8 {strides = array<i32>} : memref<8x512xf32, #tpu.memory_space<vmem>>, vector<8x512xf32>,
    %c0_8 = arith.constant 0 : index
    %c0_9 = arith.constant 0 : index
    %10 = vector.load %arg5[%c0_8, %c0_9] : memref<8x1xf32, #tpu.memory_space<vmem>>, vector<8x1xf32>
    %cst_10 = arith.constant dense<0.000000e+00> : vector<8xf32>
    %11 = vector.multi_reduction <add>, %8, %cst_10 [1] : vector<8x512xf32> to vector<8xf32>
    %12 = vector.shape_cast %11 : vector<8xf32> to vector<8x1xf32>
    %13 = arith.addf %10, %12 : vector<8x1xf32>
    %c0_11 = arith.constant 0 : index
    %c0_12 = arith.constant 0 : index
    %14 = vector.load %arg5[%c0_11, %c0_12] : memref<8x1xf32, #tpu.memory_space<vmem>>, vector<8x1xf32>
    tpu.vector_store %arg5[%c0_11, %c0_12], %13 {strides = array<i32>} : memref<8x1xf32, #tpu.memory_space<vmem>>, vector<8x1xf32>,
    %c0_13 = arith.constant 0 : index
    %c0_14 = arith.constant 0 : index
    %15 = vector.load %arg6[%c0_13, %c0_14] : memref<8x1xf32, #tpu.memory_space<vmem>>, vector<8x1xf32>
    %16 = arith.mulf %8, %8 : vector<8x512xf32>
    %cst_15 = arith.constant dense<0.000000e+00> : vector<8xf32>
    %17 = vector.multi_reduction <add>, %16, %cst_15 [1] : vector<8x512xf32> to vector<8xf32>
    %18 = vector.shape_cast %17 : vector<8xf32> to vector<8x1xf32>
    %19 = arith.addf %15, %18 : vector<8x1xf32>
    %c0_16 = arith.constant 0 : index
    %c0_17 = arith.constant 0 : index
    %20 = vector.load %arg6[%c0_16, %c0_17] : memref<8x1xf32, #tpu.memory_space<vmem>>, vector<8x1xf32>
    tpu.vector_store %arg6[%c0_16, %c0_17], %19 {strides = array<i32>} : memref<8x1xf32, #tpu.memory_space<vmem>>, vector<8x1xf32>,
    return
  }
  func.func @transform_0(%arg0: i32) -> (i32, i32) {
    %c0_i32 = arith.constant 0 : i32
    %c0_i32_0 = arith.constant 0 : i32
    return %c0_i32, %arg0 : i32, i32
  }
  func.func @transform_1(%arg0: i32) -> (i32, i32) {
    %c0_i32 = arith.constant 0 : i32
    %c0_i32_0 = arith.constant 0 : i32
    %c0_i32_1 = arith.constant 0 : i32
    return %c0_i32, %c0_i32_0 : i32, i32
  }
  func.func @transform_2(%arg0: i32) -> (i32, i32) {
    %c0_i32 = arith.constant 0 : i32
    %c0_i32_0 = arith.constant 0 : i32
    %c0_i32_1 = arith.constant 0 : i32
    return %c0_i32, %c0_i32_0 : i32, i32
  }
  func.func @transform_3(%arg0: i32) -> (i32, i32) {
    %c0_i32 = arith.constant 0 : i32
    %c0_i32_0 = arith.constant 0 : i32
    return %c0_i32, %arg0 : i32, i32
  }
  func.func @transform_4(%arg0: i32) -> (i32, i32) {
    %c0_i32 = arith.constant 0 : i32
    %c0_i32_0 = arith.constant 0 : i32
    %c0_i32_1 = arith.constant 0 : i32
    return %c0_i32, %c0_i32_0 : i32, i32
  }
  func.func @transform_5(%arg0: i32) -> (i32, i32) {
    %c0_i32 = arith.constant 0 : i32
    %c0_i32_0 = arith.constant 0 : i32
    %c0_i32_1 = arith.constant 0 : i32
    return %c0_i32, %c0_i32_0 : i32, i32
  }
}

module attributes {stable_mosaic.version = 11 : i64} {
  func.func @_powerprop_kernel(%arg0: memref<16x72xf32, #tpu.memory_space<vmem>>, %arg1: memref<16x72xbf16, #tpu.memory_space<vmem>>) attributes {dimension_semantics = [], scalar_prefetch = 0 : i64, scratch_operands = 0 : i64, tpu.core_type = #tpu.core_type<tc>} {
    %c0 = arith.constant 0 : index
    %c0_0 = arith.constant 0 : index
    %0 = vector.load %arg0[%c0, %c0_0] : memref<16x72xf32, #tpu.memory_space<vmem>>, vector<16x72xf32>
    %1 = math.absf %0 : vector<16x72xf32>
    %2 = arith.mulf %0, %1 : vector<16x72xf32>
    %3 = arith.truncf %2 : vector<16x72xf32> to vector<16x72xbf16>
    %c0_1 = arith.constant 0 : index
    %c0_2 = arith.constant 0 : index
    %4 = vector.load %arg1[%c0_1, %c0_2] : memref<16x72xbf16, #tpu.memory_space<vmem>>, vector<16x72xbf16>
    tpu.vector_store %arg1[%c0_1, %c0_2], %3 {strides = array<i32>} : memref<16x72xbf16, #tpu.memory_space<vmem>>, vector<16x72xbf16>,
    return
  }
}

module attributes {stable_mosaic.version = 11 : i64} {
  func.func @_conv_mm_stats_kernel(%arg0: i32, %arg1: memref<72x512xbf16, #tpu.memory_space<vmem>>, %arg2: memref<16x72xbf16, #tpu.memory_space<vmem>>, %arg3: memref<16x1xf32, #tpu.memory_space<vmem>>, %arg4: memref<16x512xf32, #tpu.memory_space<vmem>>, %arg5: memref<16x1xf32, #tpu.memory_space<vmem>>, %arg6: memref<16x1xf32, #tpu.memory_space<vmem>>) attributes {dimension_semantics = [#tpu.dimension_semantics<arbitrary>], iteration_bounds = array<i64: 1>, scalar_prefetch = 0 : i64, scratch_operands = 0 : i64, tpu.core_type = #tpu.core_type<tc>, window_params = [{transform_indices = @transform_0, window_bounds = array<i64: 72, 512>}, {pipeline_mode = #tpu.pipeline_mode<synchronous>, transform_indices = @transform_1, window_bounds = array<i64: 16, 72>}, {pipeline_mode = #tpu.pipeline_mode<synchronous>, transform_indices = @transform_2, window_bounds = array<i64: 16, 1>}, {transform_indices = @transform_3, window_bounds = array<i64: 16, 512>}, {pipeline_mode = #tpu.pipeline_mode<synchronous>, transform_indices = @transform_4, window_bounds = array<i64: 16, 1>}, {pipeline_mode = #tpu.pipeline_mode<synchronous>, transform_indices = @transform_5, window_bounds = array<i64: 16, 1>}]} {
    %c0_i32 = arith.constant 0 : i32
    %0 = arith.cmpi eq, %arg0, %c0_i32 : i32
    %1 = arith.extui %0 : i1 to i32
    %c0_i32_0 = arith.constant 0 : i32
    %2 = arith.cmpi ne, %1, %c0_i32_0 : i32
    scf.if %2 {
      %cst_18 = arith.constant 0.000000e+00 : f32
      %21 = vector.broadcast %cst_18 : f32 to vector<16x1xf32>
      %c0_19 = arith.constant 0 : index
      %c0_20 = arith.constant 0 : index
      %22 = vector.load %arg5[%c0_19, %c0_20] : memref<16x1xf32, #tpu.memory_space<vmem>>, vector<16x1xf32>
      tpu.vector_store %arg5[%c0_19, %c0_20], %21 {strides = array<i32>} : memref<16x1xf32, #tpu.memory_space<vmem>>, vector<16x1xf32>,
      %cst_21 = arith.constant 0.000000e+00 : f32
      %23 = vector.broadcast %cst_21 : f32 to vector<16x1xf32>
      %c0_22 = arith.constant 0 : index
      %c0_23 = arith.constant 0 : index
      %24 = vector.load %arg6[%c0_22, %c0_23] : memref<16x1xf32, #tpu.memory_space<vmem>>, vector<16x1xf32>
      tpu.vector_store %arg6[%c0_22, %c0_23], %23 {strides = array<i32>} : memref<16x1xf32, #tpu.memory_space<vmem>>, vector<16x1xf32>,
    } else {
    }
    %c0 = arith.constant 0 : index
    %c0_1 = arith.constant 0 : index
    %3 = vector.load %arg2[%c0, %c0_1] : memref<16x72xbf16, #tpu.memory_space<vmem>>, vector<16x72xbf16>
    %c0_2 = arith.constant 0 : index
    %c0_3 = arith.constant 0 : index
    %4 = vector.load %arg1[%c0_2, %c0_3] : memref<72x512xbf16, #tpu.memory_space<vmem>>, vector<72x512xbf16>
    %cst = arith.constant dense<0.000000e+00> : vector<16x512xf32>
    %5 = tpu.matmul %3, %4, %cst {dimension_numbers = #tpu.dot_dimension_numbers<[1], [0], [0], [1], [0, 0, 1, 1], [], []>} : vector<16x72xbf16>, vector<72x512xbf16>, vector<16x512xf32> -> vector<16x512xf32>
    %c0_4 = arith.constant 0 : index
    %c0_5 = arith.constant 0 : index
    %6 = vector.load %arg3[%c0_4, %c0_5] : memref<16x1xf32, #tpu.memory_space<vmem>>, vector<16x1xf32>
    %7 = vector.broadcast %6 : vector<16x1xf32> to vector<16x512xf32>
    %8 = arith.addf %5, %7 : vector<16x512xf32>
    %c0_6 = arith.constant 0 : index
    %c0_7 = arith.constant 0 : index
    %9 = vector.load %arg4[%c0_6, %c0_7] : memref<16x512xf32, #tpu.memory_space<vmem>>, vector<16x512xf32>
    tpu.vector_store %arg4[%c0_6, %c0_7], %8 {strides = array<i32>} : memref<16x512xf32, #tpu.memory_space<vmem>>, vector<16x512xf32>,
    %c0_8 = arith.constant 0 : index
    %c0_9 = arith.constant 0 : index
    %10 = vector.load %arg5[%c0_8, %c0_9] : memref<16x1xf32, #tpu.memory_space<vmem>>, vector<16x1xf32>
    %cst_10 = arith.constant dense<0.000000e+00> : vector<16xf32>
    %11 = vector.multi_reduction <add>, %8, %cst_10 [1] : vector<16x512xf32> to vector<16xf32>
    %12 = vector.shape_cast %11 : vector<16xf32> to vector<16x1xf32>
    %13 = arith.addf %10, %12 : vector<16x1xf32>
    %c0_11 = arith.constant 0 : index
    %c0_12 = arith.constant 0 : index
    %14 = vector.load %arg5[%c0_11, %c0_12] : memref<16x1xf32, #tpu.memory_space<vmem>>, vector<16x1xf32>
    tpu.vector_store %arg5[%c0_11, %c0_12], %13 {strides = array<i32>} : memref<16x1xf32, #tpu.memory_space<vmem>>, vector<16x1xf32>,
    %c0_13 = arith.constant 0 : index
    %c0_14 = arith.constant 0 : index
    %15 = vector.load %arg6[%c0_13, %c0_14] : memref<16x1xf32, #tpu.memory_space<vmem>>, vector<16x1xf32>
    %16 = arith.mulf %8, %8 : vector<16x512xf32>
    %cst_15 = arith.constant dense<0.000000e+00> : vector<16xf32>
    %17 = vector.multi_reduction <add>, %16, %cst_15 [1] : vector<16x512xf32> to vector<16xf32>
    %18 = vector.shape_cast %17 : vector<16xf32> to vector<16x1xf32>
    %19 = arith.addf %15, %18 : vector<16x1xf32>
    %c0_16 = arith.constant 0 : index
    %c0_17 = arith.constant 0 : index
    %20 = vector.load %arg6[%c0_16, %c0_17] : memref<16x1xf32, #tpu.memory_space<vmem>>, vector<16x1xf32>
    tpu.vector_store %arg6[%c0_16, %c0_17], %19 {strides = array<i32>} : memref<16x1xf32, #tpu.memory_space<vmem>>, vector<16x1xf32>,
    return
  }
  func.func @transform_0(%arg0: i32) -> (i32, i32) {
    %c0_i32 = arith.constant 0 : i32
    %c0_i32_0 = arith.constant 0 : i32
    return %c0_i32, %arg0 : i32, i32
  }
  func.func @transform_1(%arg0: i32) -> (i32, i32) {
    %c0_i32 = arith.constant 0 : i32
    %c0_i32_0 = arith.constant 0 : i32
    %c0_i32_1 = arith.constant 0 : i32
    return %c0_i32, %c0_i32_0 : i32, i32
  }
  func.func @transform_2(%arg0: i32) -> (i32, i32) {
    %c0_i32 = arith.constant 0 : i32
    %c0_i32_0 = arith.constant 0 : i32
    %c0_i32_1 = arith.constant 0 : i32
    return %c0_i32, %c0_i32_0 : i32, i32
  }
  func.func @transform_3(%arg0: i32) -> (i32, i32) {
    %c0_i32 = arith.constant 0 : i32
    %c0_i32_0 = arith.constant 0 : i32
    return %c0_i32, %arg0 : i32, i32
  }
  func.func @transform_4(%arg0: i32) -> (i32, i32) {
    %c0_i32 = arith.constant 0 : i32
    %c0_i32_0 = arith.constant 0 : i32
    %c0_i32_1 = arith.constant 0 : i32
    return %c0_i32, %c0_i32_0 : i32, i32
  }
  func.func @transform_5(%arg0: i32) -> (i32, i32) {
    %c0_i32 = arith.constant 0 : i32
    %c0_i32_0 = arith.constant 0 : i32
    %c0_i32_1 = arith.constant 0 : i32
    return %c0_i32, %c0_i32_0 : i32, i32
  }
}

module attributes {stable_mosaic.version = 11 : i64} {
  func.func @_bn_relu_kernel(%arg0: i32, %arg1: memref<16x512xf32, #tpu.memory_space<vmem>>, %arg2: memref<16x1xf32, #tpu.memory_space<vmem>>, %arg3: memref<16x1xf32, #tpu.memory_space<vmem>>, %arg4: memref<16x1xf32, #tpu.memory_space<vmem>>, %arg5: memref<16x1xf32, #tpu.memory_space<vmem>>, %arg6: memref<16x512xbf16, #tpu.memory_space<vmem>>) attributes {dimension_semantics = [#tpu.dimension_semantics<parallel>], iteration_bounds = array<i64: 1>, scalar_prefetch = 0 : i64, scratch_operands = 0 : i64, tpu.core_type = #tpu.core_type<tc>, window_params = [{transform_indices = @transform_0, window_bounds = array<i64: 16, 512>}, {pipeline_mode = #tpu.pipeline_mode<synchronous>, transform_indices = @transform_1, window_bounds = array<i64: 16, 1>}, {pipeline_mode = #tpu.pipeline_mode<synchronous>, transform_indices = @transform_2, window_bounds = array<i64: 16, 1>}, {pipeline_mode = #tpu.pipeline_mode<synchronous>, transform_indices = @transform_3, window_bounds = array<i64: 16, 1>}, {pipeline_mode = #tpu.pipeline_mode<synchronous>, transform_indices = @transform_4, window_bounds = array<i64: 16, 1>}, {transform_indices = @transform_5, window_bounds = array<i64: 16, 512>}]} {
    %c0 = arith.constant 0 : index
    %c0_0 = arith.constant 0 : index
    %0 = vector.load %arg2[%c0, %c0_0] : memref<16x1xf32, #tpu.memory_space<vmem>>, vector<16x1xf32>
    %cst = arith.constant 0.001953125 : f32
    %1 = vector.broadcast %cst : f32 to vector<16x1xf32>
    %2 = arith.mulf %0, %1 : vector<16x1xf32>
    %c0_1 = arith.constant 0 : index
    %c0_2 = arith.constant 0 : index
    %3 = vector.load %arg3[%c0_1, %c0_2] : memref<16x1xf32, #tpu.memory_space<vmem>>, vector<16x1xf32>
    %cst_3 = arith.constant 0.001953125 : f32
    %4 = vector.broadcast %cst_3 : f32 to vector<16x1xf32>
    %5 = arith.mulf %3, %4 : vector<16x1xf32>
    %6 = arith.mulf %2, %2 : vector<16x1xf32>
    %7 = arith.subf %5, %6 : vector<16x1xf32>
    %cst_4 = arith.constant 0.000000e+00 : f32
    %8 = vector.broadcast %cst_4 : f32 to vector<16x1xf32>
    %9 = arith.maximumf %7, %8 : vector<16x1xf32>
    %cst_5 = arith.constant 9.99999974E-6 : f32
    %10 = vector.broadcast %cst_5 : f32 to vector<16x1xf32>
    %11 = arith.addf %9, %10 : vector<16x1xf32>
    %12 = math.rsqrt %11 : vector<16x1xf32>
    %c0_6 = arith.constant 0 : index
    %c0_7 = arith.constant 0 : index
    %13 = vector.load %arg4[%c0_6, %c0_7] : memref<16x1xf32, #tpu.memory_space<vmem>>, vector<16x1xf32>
    %14 = arith.mulf %12, %13 : vector<16x1xf32>
    %c0_8 = arith.constant 0 : index
    %c0_9 = arith.constant 0 : index
    %15 = vector.load %arg5[%c0_8, %c0_9] : memref<16x1xf32, #tpu.memory_space<vmem>>, vector<16x1xf32>
    %16 = arith.mulf %2, %14 : vector<16x1xf32>
    %17 = arith.subf %15, %16 : vector<16x1xf32>
    %c0_10 = arith.constant 0 : index
    %c0_11 = arith.constant 0 : index
    %18 = vector.load %arg1[%c0_10, %c0_11] : memref<16x512xf32, #tpu.memory_space<vmem>>, vector<16x512xf32>
    %19 = vector.broadcast %14 : vector<16x1xf32> to vector<16x512xf32>
    %20 = arith.mulf %18, %19 : vector<16x512xf32>
    %21 = vector.broadcast %17 : vector<16x1xf32> to vector<16x512xf32>
    %22 = arith.addf %20, %21 : vector<16x512xf32>
    %cst_12 = arith.constant 0.000000e+00 : f32
    %23 = vector.broadcast %cst_12 : f32 to vector<16x512xf32>
    %24 = arith.maximumf %22, %23 : vector<16x512xf32>
    %25 = arith.truncf %24 : vector<16x512xf32> to vector<16x512xbf16>
    %c0_13 = arith.constant 0 : index
    %c0_14 = arith.constant 0 : index
    %26 = vector.load %arg6[%c0_13, %c0_14] : memref<16x512xbf16, #tpu.memory_space<vmem>>, vector<16x512xbf16>
    tpu.vector_store %arg6[%c0_13, %c0_14], %25 {strides = array<i32>} : memref<16x512xbf16, #tpu.memory_space<vmem>>, vector<16x512xbf16>,
    return
  }
  func.func @transform_0(%arg0: i32) -> (i32, i32) {
    %c0_i32 = arith.constant 0 : i32
    %c0_i32_0 = arith.constant 0 : i32
    return %c0_i32, %arg0 : i32, i32
  }
  func.func @transform_1(%arg0: i32) -> (i32, i32) {
    %c0_i32 = arith.constant 0 : i32
    %c0_i32_0 = arith.constant 0 : i32
    %c0_i32_1 = arith.constant 0 : i32
    return %c0_i32, %c0_i32_0 : i32, i32
  }
  func.func @transform_2(%arg0: i32) -> (i32, i32) {
    %c0_i32 = arith.constant 0 : i32
    %c0_i32_0 = arith.constant 0 : i32
    %c0_i32_1 = arith.constant 0 : i32
    return %c0_i32, %c0_i32_0 : i32, i32
  }
  func.func @transform_3(%arg0: i32) -> (i32, i32) {
    %c0_i32 = arith.constant 0 : i32
    %c0_i32_0 = arith.constant 0 : i32
    %c0_i32_1 = arith.constant 0 : i32
    return %c0_i32, %c0_i32_0 : i32, i32
  }
  func.func @transform_4(%arg0: i32) -> (i32, i32) {
    %c0_i32 = arith.constant 0 : i32
    %c0_i32_0 = arith.constant 0 : i32
    %c0_i32_1 = arith.constant 0 : i32
    return %c0_i32, %c0_i32_0 : i32, i32
  }
  func.func @transform_5(%arg0: i32) -> (i32, i32) {
    %c0_i32 = arith.constant 0 : i32
    %c0_i32_0 = arith.constant 0 : i32
    return %c0_i32, %arg0 : i32, i32
  }
}

module attributes {stable_mosaic.version = 11 : i64} {
  func.func @_powerprop_kernel(%arg0: memref<16x144xf32, #tpu.memory_space<vmem>>, %arg1: memref<16x144xbf16, #tpu.memory_space<vmem>>) attributes {dimension_semantics = [], scalar_prefetch = 0 : i64, scratch_operands = 0 : i64, tpu.core_type = #tpu.core_type<tc>} {
    %c0 = arith.constant 0 : index
    %c0_0 = arith.constant 0 : index
    %0 = vector.load %arg0[%c0, %c0_0] : memref<16x144xf32, #tpu.memory_space<vmem>>, vector<16x144xf32>
    %1 = math.absf %0 : vector<16x144xf32>
    %2 = arith.mulf %0, %1 : vector<16x144xf32>
    %3 = arith.truncf %2 : vector<16x144xf32> to vector<16x144xbf16>
    %c0_1 = arith.constant 0 : index
    %c0_2 = arith.constant 0 : index
    %4 = vector.load %arg1[%c0_1, %c0_2] : memref<16x144xbf16, #tpu.memory_space<vmem>>, vector<16x144xbf16>
    tpu.vector_store %arg1[%c0_1, %c0_2], %3 {strides = array<i32>} : memref<16x144xbf16, #tpu.memory_space<vmem>>, vector<16x144xbf16>,
    return
  }
}

module attributes {stable_mosaic.version = 11 : i64} {
  func.func @_conv_mm_stats_kernel(%arg0: i32, %arg1: memref<144x512xbf16, #tpu.memory_space<vmem>>, %arg2: memref<16x144xbf16, #tpu.memory_space<vmem>>, %arg3: memref<16x1xf32, #tpu.memory_space<vmem>>, %arg4: memref<16x512xf32, #tpu.memory_space<vmem>>, %arg5: memref<16x1xf32, #tpu.memory_space<vmem>>, %arg6: memref<16x1xf32, #tpu.memory_space<vmem>>) attributes {dimension_semantics = [#tpu.dimension_semantics<arbitrary>], iteration_bounds = array<i64: 1>, scalar_prefetch = 0 : i64, scratch_operands = 0 : i64, tpu.core_type = #tpu.core_type<tc>, window_params = [{transform_indices = @transform_0, window_bounds = array<i64: 144, 512>}, {pipeline_mode = #tpu.pipeline_mode<synchronous>, transform_indices = @transform_1, window_bounds = array<i64: 16, 144>}, {pipeline_mode = #tpu.pipeline_mode<synchronous>, transform_indices = @transform_2, window_bounds = array<i64: 16, 1>}, {transform_indices = @transform_3, window_bounds = array<i64: 16, 512>}, {pipeline_mode = #tpu.pipeline_mode<synchronous>, transform_indices = @transform_4, window_bounds = array<i64: 16, 1>}, {pipeline_mode = #tpu.pipeline_mode<synchronous>, transform_indices = @transform_5, window_bounds = array<i64: 16, 1>}]} {
    %c0_i32 = arith.constant 0 : i32
    %0 = arith.cmpi eq, %arg0, %c0_i32 : i32
    %1 = arith.extui %0 : i1 to i32
    %c0_i32_0 = arith.constant 0 : i32
    %2 = arith.cmpi ne, %1, %c0_i32_0 : i32
    scf.if %2 {
      %cst_18 = arith.constant 0.000000e+00 : f32
      %21 = vector.broadcast %cst_18 : f32 to vector<16x1xf32>
      %c0_19 = arith.constant 0 : index
      %c0_20 = arith.constant 0 : index
      %22 = vector.load %arg5[%c0_19, %c0_20] : memref<16x1xf32, #tpu.memory_space<vmem>>, vector<16x1xf32>
      tpu.vector_store %arg5[%c0_19, %c0_20], %21 {strides = array<i32>} : memref<16x1xf32, #tpu.memory_space<vmem>>, vector<16x1xf32>,
      %cst_21 = arith.constant 0.000000e+00 : f32
      %23 = vector.broadcast %cst_21 : f32 to vector<16x1xf32>
      %c0_22 = arith.constant 0 : index
      %c0_23 = arith.constant 0 : index
      %24 = vector.load %arg6[%c0_22, %c0_23] : memref<16x1xf32, #tpu.memory_space<vmem>>, vector<16x1xf32>
      tpu.vector_store %arg6[%c0_22, %c0_23], %23 {strides = array<i32>} : memref<16x1xf32, #tpu.memory_space<vmem>>, vector<16x1xf32>,
    } else {
    }
    %c0 = arith.constant 0 : index
    %c0_1 = arith.constant 0 : index
    %3 = vector.load %arg2[%c0, %c0_1] : memref<16x144xbf16, #tpu.memory_space<vmem>>, vector<16x144xbf16>
    %c0_2 = arith.constant 0 : index
    %c0_3 = arith.constant 0 : index
    %4 = vector.load %arg1[%c0_2, %c0_3] : memref<144x512xbf16, #tpu.memory_space<vmem>>, vector<144x512xbf16>
    %cst = arith.constant dense<0.000000e+00> : vector<16x512xf32>
    %5 = tpu.matmul %3, %4, %cst {dimension_numbers = #tpu.dot_dimension_numbers<[1], [0], [0], [1], [0, 0, 1, 1], [], []>} : vector<16x144xbf16>, vector<144x512xbf16>, vector<16x512xf32> -> vector<16x512xf32>
    %c0_4 = arith.constant 0 : index
    %c0_5 = arith.constant 0 : index
    %6 = vector.load %arg3[%c0_4, %c0_5] : memref<16x1xf32, #tpu.memory_space<vmem>>, vector<16x1xf32>
    %7 = vector.broadcast %6 : vector<16x1xf32> to vector<16x512xf32>
    %8 = arith.addf %5, %7 : vector<16x512xf32>
    %c0_6 = arith.constant 0 : index
    %c0_7 = arith.constant 0 : index
    %9 = vector.load %arg4[%c0_6, %c0_7] : memref<16x512xf32, #tpu.memory_space<vmem>>, vector<16x512xf32>
    tpu.vector_store %arg4[%c0_6, %c0_7], %8 {strides = array<i32>} : memref<16x512xf32, #tpu.memory_space<vmem>>, vector<16x512xf32>,
    %c0_8 = arith.constant 0 : index
    %c0_9 = arith.constant 0 : index
    %10 = vector.load %arg5[%c0_8, %c0_9] : memref<16x1xf32, #tpu.memory_space<vmem>>, vector<16x1xf32>
    %cst_10 = arith.constant dense<0.000000e+00> : vector<16xf32>
    %11 = vector.multi_reduction <add>, %8, %cst_10 [1] : vector<16x512xf32> to vector<16xf32>
    %12 = vector.shape_cast %11 : vector<16xf32> to vector<16x1xf32>
    %13 = arith.addf %10, %12 : vector<16x1xf32>
    %c0_11 = arith.constant 0 : index
    %c0_12 = arith.constant 0 : index
    %14 = vector.load %arg5[%c0_11, %c0_12] : memref<16x1xf32, #tpu.memory_space<vmem>>, vector<16x1xf32>
    tpu.vector_store %arg5[%c0_11, %c0_12], %13 {strides = array<i32>} : memref<16x1xf32, #tpu.memory_space<vmem>>, vector<16x1xf32>,
    %c0_13 = arith.constant 0 : index
    %c0_14 = arith.constant 0 : index
    %15 = vector.load %arg6[%c0_13, %c0_14] : memref<16x1xf32, #tpu.memory_space<vmem>>, vector<16x1xf32>
    %16 = arith.mulf %8, %8 : vector<16x512xf32>
    %cst_15 = arith.constant dense<0.000000e+00> : vector<16xf32>
    %17 = vector.multi_reduction <add>, %16, %cst_15 [1] : vector<16x512xf32> to vector<16xf32>
    %18 = vector.shape_cast %17 : vector<16xf32> to vector<16x1xf32>
    %19 = arith.addf %15, %18 : vector<16x1xf32>
    %c0_16 = arith.constant 0 : index
    %c0_17 = arith.constant 0 : index
    %20 = vector.load %arg6[%c0_16, %c0_17] : memref<16x1xf32, #tpu.memory_space<vmem>>, vector<16x1xf32>
    tpu.vector_store %arg6[%c0_16, %c0_17], %19 {strides = array<i32>} : memref<16x1xf32, #tpu.memory_space<vmem>>, vector<16x1xf32>,
    return
  }
  func.func @transform_0(%arg0: i32) -> (i32, i32) {
    %c0_i32 = arith.constant 0 : i32
    %c0_i32_0 = arith.constant 0 : i32
    return %c0_i32, %arg0 : i32, i32
  }
  func.func @transform_1(%arg0: i32) -> (i32, i32) {
    %c0_i32 = arith.constant 0 : i32
    %c0_i32_0 = arith.constant 0 : i32
    %c0_i32_1 = arith.constant 0 : i32
    return %c0_i32, %c0_i32_0 : i32, i32
  }
  func.func @transform_2(%arg0: i32) -> (i32, i32) {
    %c0_i32 = arith.constant 0 : i32
    %c0_i32_0 = arith.constant 0 : i32
    %c0_i32_1 = arith.constant 0 : i32
    return %c0_i32, %c0_i32_0 : i32, i32
  }
  func.func @transform_3(%arg0: i32) -> (i32, i32) {
    %c0_i32 = arith.constant 0 : i32
    %c0_i32_0 = arith.constant 0 : i32
    return %c0_i32, %arg0 : i32, i32
  }
  func.func @transform_4(%arg0: i32) -> (i32, i32) {
    %c0_i32 = arith.constant 0 : i32
    %c0_i32_0 = arith.constant 0 : i32
    %c0_i32_1 = arith.constant 0 : i32
    return %c0_i32, %c0_i32_0 : i32, i32
  }
  func.func @transform_5(%arg0: i32) -> (i32, i32) {
    %c0_i32 = arith.constant 0 : i32
    %c0_i32_0 = arith.constant 0 : i32
    %c0_i32_1 = arith.constant 0 : i32
    return %c0_i32, %c0_i32_0 : i32, i32
  }
}

module attributes {stable_mosaic.version = 11 : i64} {
  func.func @_powerprop_kernel(%arg0: memref<32x144xf32, #tpu.memory_space<vmem>>, %arg1: memref<32x144xbf16, #tpu.memory_space<vmem>>) attributes {dimension_semantics = [], scalar_prefetch = 0 : i64, scratch_operands = 0 : i64, tpu.core_type = #tpu.core_type<tc>} {
    %c0 = arith.constant 0 : index
    %c0_0 = arith.constant 0 : index
    %0 = vector.load %arg0[%c0, %c0_0] : memref<32x144xf32, #tpu.memory_space<vmem>>, vector<32x144xf32>
    %1 = math.absf %0 : vector<32x144xf32>
    %2 = arith.mulf %0, %1 : vector<32x144xf32>
    %3 = arith.truncf %2 : vector<32x144xf32> to vector<32x144xbf16>
    %c0_1 = arith.constant 0 : index
    %c0_2 = arith.constant 0 : index
    %4 = vector.load %arg1[%c0_1, %c0_2] : memref<32x144xbf16, #tpu.memory_space<vmem>>, vector<32x144xbf16>
    tpu.vector_store %arg1[%c0_1, %c0_2], %3 {strides = array<i32>} : memref<32x144xbf16, #tpu.memory_space<vmem>>, vector<32x144xbf16>,
    return
  }
}

module attributes {stable_mosaic.version = 11 : i64} {
  func.func @_conv_mm_stats_kernel(%arg0: i32, %arg1: memref<144x128xbf16, #tpu.memory_space<vmem>>, %arg2: memref<32x144xbf16, #tpu.memory_space<vmem>>, %arg3: memref<32x1xf32, #tpu.memory_space<vmem>>, %arg4: memref<32x128xf32, #tpu.memory_space<vmem>>, %arg5: memref<32x1xf32, #tpu.memory_space<vmem>>, %arg6: memref<32x1xf32, #tpu.memory_space<vmem>>) attributes {dimension_semantics = [#tpu.dimension_semantics<arbitrary>], iteration_bounds = array<i64: 1>, scalar_prefetch = 0 : i64, scratch_operands = 0 : i64, tpu.core_type = #tpu.core_type<tc>, window_params = [{transform_indices = @transform_0, window_bounds = array<i64: 144, 128>}, {pipeline_mode = #tpu.pipeline_mode<synchronous>, transform_indices = @transform_1, window_bounds = array<i64: 32, 144>}, {pipeline_mode = #tpu.pipeline_mode<synchronous>, transform_indices = @transform_2, window_bounds = array<i64: 32, 1>}, {transform_indices = @transform_3, window_bounds = array<i64: 32, 128>}, {pipeline_mode = #tpu.pipeline_mode<synchronous>, transform_indices = @transform_4, window_bounds = array<i64: 32, 1>}, {pipeline_mode = #tpu.pipeline_mode<synchronous>, transform_indices = @transform_5, window_bounds = array<i64: 32, 1>}]} {
    %c0_i32 = arith.constant 0 : i32
    %0 = arith.cmpi eq, %arg0, %c0_i32 : i32
    %1 = arith.extui %0 : i1 to i32
    %c0_i32_0 = arith.constant 0 : i32
    %2 = arith.cmpi ne, %1, %c0_i32_0 : i32
    scf.if %2 {
      %cst_18 = arith.constant 0.000000e+00 : f32
      %21 = vector.broadcast %cst_18 : f32 to vector<32x1xf32>
      %c0_19 = arith.constant 0 : index
      %c0_20 = arith.constant 0 : index
      %22 = vector.load %arg5[%c0_19, %c0_20] : memref<32x1xf32, #tpu.memory_space<vmem>>, vector<32x1xf32>
      tpu.vector_store %arg5[%c0_19, %c0_20], %21 {strides = array<i32>} : memref<32x1xf32, #tpu.memory_space<vmem>>, vector<32x1xf32>,
      %cst_21 = arith.constant 0.000000e+00 : f32
      %23 = vector.broadcast %cst_21 : f32 to vector<32x1xf32>
      %c0_22 = arith.constant 0 : index
      %c0_23 = arith.constant 0 : index
      %24 = vector.load %arg6[%c0_22, %c0_23] : memref<32x1xf32, #tpu.memory_space<vmem>>, vector<32x1xf32>
      tpu.vector_store %arg6[%c0_22, %c0_23], %23 {strides = array<i32>} : memref<32x1xf32, #tpu.memory_space<vmem>>, vector<32x1xf32>,
    } else {
    }
    %c0 = arith.constant 0 : index
    %c0_1 = arith.constant 0 : index
    %3 = vector.load %arg2[%c0, %c0_1] : memref<32x144xbf16, #tpu.memory_space<vmem>>, vector<32x144xbf16>
    %c0_2 = arith.constant 0 : index
    %c0_3 = arith.constant 0 : index
    %4 = vector.load %arg1[%c0_2, %c0_3] : memref<144x128xbf16, #tpu.memory_space<vmem>>, vector<144x128xbf16>
    %cst = arith.constant dense<0.000000e+00> : vector<32x128xf32>
    %5 = tpu.matmul %3, %4, %cst {dimension_numbers = #tpu.dot_dimension_numbers<[1], [0], [0], [1], [0, 0, 1, 1], [], []>} : vector<32x144xbf16>, vector<144x128xbf16>, vector<32x128xf32> -> vector<32x128xf32>
    %c0_4 = arith.constant 0 : index
    %c0_5 = arith.constant 0 : index
    %6 = vector.load %arg3[%c0_4, %c0_5] : memref<32x1xf32, #tpu.memory_space<vmem>>, vector<32x1xf32>
    %7 = vector.broadcast %6 : vector<32x1xf32> to vector<32x128xf32>
    %8 = arith.addf %5, %7 : vector<32x128xf32>
    %c0_6 = arith.constant 0 : index
    %c0_7 = arith.constant 0 : index
    %9 = vector.load %arg4[%c0_6, %c0_7] : memref<32x128xf32, #tpu.memory_space<vmem>>, vector<32x128xf32>
    tpu.vector_store %arg4[%c0_6, %c0_7], %8 {strides = array<i32>} : memref<32x128xf32, #tpu.memory_space<vmem>>, vector<32x128xf32>,
    %c0_8 = arith.constant 0 : index
    %c0_9 = arith.constant 0 : index
    %10 = vector.load %arg5[%c0_8, %c0_9] : memref<32x1xf32, #tpu.memory_space<vmem>>, vector<32x1xf32>
    %cst_10 = arith.constant dense<0.000000e+00> : vector<32xf32>
    %11 = vector.multi_reduction <add>, %8, %cst_10 [1] : vector<32x128xf32> to vector<32xf32>
    %12 = vector.shape_cast %11 : vector<32xf32> to vector<32x1xf32>
    %13 = arith.addf %10, %12 : vector<32x1xf32>
    %c0_11 = arith.constant 0 : index
    %c0_12 = arith.constant 0 : index
    %14 = vector.load %arg5[%c0_11, %c0_12] : memref<32x1xf32, #tpu.memory_space<vmem>>, vector<32x1xf32>
    tpu.vector_store %arg5[%c0_11, %c0_12], %13 {strides = array<i32>} : memref<32x1xf32, #tpu.memory_space<vmem>>, vector<32x1xf32>,
    %c0_13 = arith.constant 0 : index
    %c0_14 = arith.constant 0 : index
    %15 = vector.load %arg6[%c0_13, %c0_14] : memref<32x1xf32, #tpu.memory_space<vmem>>, vector<32x1xf32>
    %16 = arith.mulf %8, %8 : vector<32x128xf32>
    %cst_15 = arith.constant dense<0.000000e+00> : vector<32xf32>
    %17 = vector.multi_reduction <add>, %16, %cst_15 [1] : vector<32x128xf32> to vector<32xf32>
    %18 = vector.shape_cast %17 : vector<32xf32> to vector<32x1xf32>
    %19 = arith.addf %15, %18 : vector<32x1xf32>
    %c0_16 = arith.constant 0 : index
    %c0_17 = arith.constant 0 : index
    %20 = vector.load %arg6[%c0_16, %c0_17] : memref<32x1xf32, #tpu.memory_space<vmem>>, vector<32x1xf32>
    tpu.vector_store %arg6[%c0_16, %c0_17], %19 {strides = array<i32>} : memref<32x1xf32, #tpu.memory_space<vmem>>, vector<32x1xf32>,
    return
  }
  func.func @transform_0(%arg0: i32) -> (i32, i32) {
    %c0_i32 = arith.constant 0 : i32
    %c0_i32_0 = arith.constant 0 : i32
    return %c0_i32, %arg0 : i32, i32
  }
  func.func @transform_1(%arg0: i32) -> (i32, i32) {
    %c0_i32 = arith.constant 0 : i32
    %c0_i32_0 = arith.constant 0 : i32
    %c0_i32_1 = arith.constant 0 : i32
    return %c0_i32, %c0_i32_0 : i32, i32
  }
  func.func @transform_2(%arg0: i32) -> (i32, i32) {
    %c0_i32 = arith.constant 0 : i32
    %c0_i32_0 = arith.constant 0 : i32
    %c0_i32_1 = arith.constant 0 : i32
    return %c0_i32, %c0_i32_0 : i32, i32
  }
  func.func @transform_3(%arg0: i32) -> (i32, i32) {
    %c0_i32 = arith.constant 0 : i32
    %c0_i32_0 = arith.constant 0 : i32
    return %c0_i32, %arg0 : i32, i32
  }
  func.func @transform_4(%arg0: i32) -> (i32, i32) {
    %c0_i32 = arith.constant 0 : i32
    %c0_i32_0 = arith.constant 0 : i32
    %c0_i32_1 = arith.constant 0 : i32
    return %c0_i32, %c0_i32_0 : i32, i32
  }
  func.func @transform_5(%arg0: i32) -> (i32, i32) {
    %c0_i32 = arith.constant 0 : i32
    %c0_i32_0 = arith.constant 0 : i32
    %c0_i32_1 = arith.constant 0 : i32
    return %c0_i32, %c0_i32_0 : i32, i32
  }
}

module attributes {stable_mosaic.version = 11 : i64} {
  func.func @_bn_relu_kernel(%arg0: i32, %arg1: memref<32x128xf32, #tpu.memory_space<vmem>>, %arg2: memref<32x1xf32, #tpu.memory_space<vmem>>, %arg3: memref<32x1xf32, #tpu.memory_space<vmem>>, %arg4: memref<32x1xf32, #tpu.memory_space<vmem>>, %arg5: memref<32x1xf32, #tpu.memory_space<vmem>>, %arg6: memref<32x128xbf16, #tpu.memory_space<vmem>>) attributes {dimension_semantics = [#tpu.dimension_semantics<parallel>], iteration_bounds = array<i64: 1>, scalar_prefetch = 0 : i64, scratch_operands = 0 : i64, tpu.core_type = #tpu.core_type<tc>, window_params = [{transform_indices = @transform_0, window_bounds = array<i64: 32, 128>}, {pipeline_mode = #tpu.pipeline_mode<synchronous>, transform_indices = @transform_1, window_bounds = array<i64: 32, 1>}, {pipeline_mode = #tpu.pipeline_mode<synchronous>, transform_indices = @transform_2, window_bounds = array<i64: 32, 1>}, {pipeline_mode = #tpu.pipeline_mode<synchronous>, transform_indices = @transform_3, window_bounds = array<i64: 32, 1>}, {pipeline_mode = #tpu.pipeline_mode<synchronous>, transform_indices = @transform_4, window_bounds = array<i64: 32, 1>}, {transform_indices = @transform_5, window_bounds = array<i64: 32, 128>}]} {
    %c0 = arith.constant 0 : index
    %c0_0 = arith.constant 0 : index
    %0 = vector.load %arg2[%c0, %c0_0] : memref<32x1xf32, #tpu.memory_space<vmem>>, vector<32x1xf32>
    %cst = arith.constant 7.812500e-03 : f32
    %1 = vector.broadcast %cst : f32 to vector<32x1xf32>
    %2 = arith.mulf %0, %1 : vector<32x1xf32>
    %c0_1 = arith.constant 0 : index
    %c0_2 = arith.constant 0 : index
    %3 = vector.load %arg3[%c0_1, %c0_2] : memref<32x1xf32, #tpu.memory_space<vmem>>, vector<32x1xf32>
    %cst_3 = arith.constant 7.812500e-03 : f32
    %4 = vector.broadcast %cst_3 : f32 to vector<32x1xf32>
    %5 = arith.mulf %3, %4 : vector<32x1xf32>
    %6 = arith.mulf %2, %2 : vector<32x1xf32>
    %7 = arith.subf %5, %6 : vector<32x1xf32>
    %cst_4 = arith.constant 0.000000e+00 : f32
    %8 = vector.broadcast %cst_4 : f32 to vector<32x1xf32>
    %9 = arith.maximumf %7, %8 : vector<32x1xf32>
    %cst_5 = arith.constant 9.99999974E-6 : f32
    %10 = vector.broadcast %cst_5 : f32 to vector<32x1xf32>
    %11 = arith.addf %9, %10 : vector<32x1xf32>
    %12 = math.rsqrt %11 : vector<32x1xf32>
    %c0_6 = arith.constant 0 : index
    %c0_7 = arith.constant 0 : index
    %13 = vector.load %arg4[%c0_6, %c0_7] : memref<32x1xf32, #tpu.memory_space<vmem>>, vector<32x1xf32>
    %14 = arith.mulf %12, %13 : vector<32x1xf32>
    %c0_8 = arith.constant 0 : index
    %c0_9 = arith.constant 0 : index
    %15 = vector.load %arg5[%c0_8, %c0_9] : memref<32x1xf32, #tpu.memory_space<vmem>>, vector<32x1xf32>
    %16 = arith.mulf %2, %14 : vector<32x1xf32>
    %17 = arith.subf %15, %16 : vector<32x1xf32>
    %c0_10 = arith.constant 0 : index
    %c0_11 = arith.constant 0 : index
    %18 = vector.load %arg1[%c0_10, %c0_11] : memref<32x128xf32, #tpu.memory_space<vmem>>, vector<32x128xf32>
    %19 = vector.broadcast %14 : vector<32x1xf32> to vector<32x128xf32>
    %20 = arith.mulf %18, %19 : vector<32x128xf32>
    %21 = vector.broadcast %17 : vector<32x1xf32> to vector<32x128xf32>
    %22 = arith.addf %20, %21 : vector<32x128xf32>
    %cst_12 = arith.constant 0.000000e+00 : f32
    %23 = vector.broadcast %cst_12 : f32 to vector<32x128xf32>
    %24 = arith.maximumf %22, %23 : vector<32x128xf32>
    %25 = arith.truncf %24 : vector<32x128xf32> to vector<32x128xbf16>
    %c0_13 = arith.constant 0 : index
    %c0_14 = arith.constant 0 : index
    %26 = vector.load %arg6[%c0_13, %c0_14] : memref<32x128xbf16, #tpu.memory_space<vmem>>, vector<32x128xbf16>
    tpu.vector_store %arg6[%c0_13, %c0_14], %25 {strides = array<i32>} : memref<32x128xbf16, #tpu.memory_space<vmem>>, vector<32x128xbf16>,
    return
  }
  func.func @transform_0(%arg0: i32) -> (i32, i32) {
    %c0_i32 = arith.constant 0 : i32
    %c0_i32_0 = arith.constant 0 : i32
    return %c0_i32, %arg0 : i32, i32
  }
  func.func @transform_1(%arg0: i32) -> (i32, i32) {
    %c0_i32 = arith.constant 0 : i32
    %c0_i32_0 = arith.constant 0 : i32
    %c0_i32_1 = arith.constant 0 : i32
    return %c0_i32, %c0_i32_0 : i32, i32
  }
  func.func @transform_2(%arg0: i32) -> (i32, i32) {
    %c0_i32 = arith.constant 0 : i32
    %c0_i32_0 = arith.constant 0 : i32
    %c0_i32_1 = arith.constant 0 : i32
    return %c0_i32, %c0_i32_0 : i32, i32
  }
  func.func @transform_3(%arg0: i32) -> (i32, i32) {
    %c0_i32 = arith.constant 0 : i32
    %c0_i32_0 = arith.constant 0 : i32
    %c0_i32_1 = arith.constant 0 : i32
    return %c0_i32, %c0_i32_0 : i32, i32
  }
  func.func @transform_4(%arg0: i32) -> (i32, i32) {
    %c0_i32 = arith.constant 0 : i32
    %c0_i32_0 = arith.constant 0 : i32
    %c0_i32_1 = arith.constant 0 : i32
    return %c0_i32, %c0_i32_0 : i32, i32
  }
  func.func @transform_5(%arg0: i32) -> (i32, i32) {
    %c0_i32 = arith.constant 0 : i32
    %c0_i32_0 = arith.constant 0 : i32
    return %c0_i32, %arg0 : i32, i32
  }
}

module attributes {stable_mosaic.version = 11 : i64} {
  func.func @_powerprop_kernel(%arg0: memref<32x288xf32, #tpu.memory_space<vmem>>, %arg1: memref<32x288xbf16, #tpu.memory_space<vmem>>) attributes {dimension_semantics = [], scalar_prefetch = 0 : i64, scratch_operands = 0 : i64, tpu.core_type = #tpu.core_type<tc>} {
    %c0 = arith.constant 0 : index
    %c0_0 = arith.constant 0 : index
    %0 = vector.load %arg0[%c0, %c0_0] : memref<32x288xf32, #tpu.memory_space<vmem>>, vector<32x288xf32>
    %1 = math.absf %0 : vector<32x288xf32>
    %2 = arith.mulf %0, %1 : vector<32x288xf32>
    %3 = arith.truncf %2 : vector<32x288xf32> to vector<32x288xbf16>
    %c0_1 = arith.constant 0 : index
    %c0_2 = arith.constant 0 : index
    %4 = vector.load %arg1[%c0_1, %c0_2] : memref<32x288xbf16, #tpu.memory_space<vmem>>, vector<32x288xbf16>
    tpu.vector_store %arg1[%c0_1, %c0_2], %3 {strides = array<i32>} : memref<32x288xbf16, #tpu.memory_space<vmem>>, vector<32x288xbf16>,
    return
  }
}

module attributes {stable_mosaic.version = 11 : i64} {
  func.func @_conv_mm_stats_kernel(%arg0: i32, %arg1: memref<288x128xbf16, #tpu.memory_space<vmem>>, %arg2: memref<32x288xbf16, #tpu.memory_space<vmem>>, %arg3: memref<32x1xf32, #tpu.memory_space<vmem>>, %arg4: memref<32x128xf32, #tpu.memory_space<vmem>>, %arg5: memref<32x1xf32, #tpu.memory_space<vmem>>, %arg6: memref<32x1xf32, #tpu.memory_space<vmem>>) attributes {dimension_semantics = [#tpu.dimension_semantics<arbitrary>], iteration_bounds = array<i64: 1>, scalar_prefetch = 0 : i64, scratch_operands = 0 : i64, tpu.core_type = #tpu.core_type<tc>, window_params = [{transform_indices = @transform_0, window_bounds = array<i64: 288, 128>}, {pipeline_mode = #tpu.pipeline_mode<synchronous>, transform_indices = @transform_1, window_bounds = array<i64: 32, 288>}, {pipeline_mode = #tpu.pipeline_mode<synchronous>, transform_indices = @transform_2, window_bounds = array<i64: 32, 1>}, {transform_indices = @transform_3, window_bounds = array<i64: 32, 128>}, {pipeline_mode = #tpu.pipeline_mode<synchronous>, transform_indices = @transform_4, window_bounds = array<i64: 32, 1>}, {pipeline_mode = #tpu.pipeline_mode<synchronous>, transform_indices = @transform_5, window_bounds = array<i64: 32, 1>}]} {
    %c0_i32 = arith.constant 0 : i32
    %0 = arith.cmpi eq, %arg0, %c0_i32 : i32
    %1 = arith.extui %0 : i1 to i32
    %c0_i32_0 = arith.constant 0 : i32
    %2 = arith.cmpi ne, %1, %c0_i32_0 : i32
    scf.if %2 {
      %cst_18 = arith.constant 0.000000e+00 : f32
      %21 = vector.broadcast %cst_18 : f32 to vector<32x1xf32>
      %c0_19 = arith.constant 0 : index
      %c0_20 = arith.constant 0 : index
      %22 = vector.load %arg5[%c0_19, %c0_20] : memref<32x1xf32, #tpu.memory_space<vmem>>, vector<32x1xf32>
      tpu.vector_store %arg5[%c0_19, %c0_20], %21 {strides = array<i32>} : memref<32x1xf32, #tpu.memory_space<vmem>>, vector<32x1xf32>,
      %cst_21 = arith.constant 0.000000e+00 : f32
      %23 = vector.broadcast %cst_21 : f32 to vector<32x1xf32>
      %c0_22 = arith.constant 0 : index
      %c0_23 = arith.constant 0 : index
      %24 = vector.load %arg6[%c0_22, %c0_23] : memref<32x1xf32, #tpu.memory_space<vmem>>, vector<32x1xf32>
      tpu.vector_store %arg6[%c0_22, %c0_23], %23 {strides = array<i32>} : memref<32x1xf32, #tpu.memory_space<vmem>>, vector<32x1xf32>,
    } else {
    }
    %c0 = arith.constant 0 : index
    %c0_1 = arith.constant 0 : index
    %3 = vector.load %arg2[%c0, %c0_1] : memref<32x288xbf16, #tpu.memory_space<vmem>>, vector<32x288xbf16>
    %c0_2 = arith.constant 0 : index
    %c0_3 = arith.constant 0 : index
    %4 = vector.load %arg1[%c0_2, %c0_3] : memref<288x128xbf16, #tpu.memory_space<vmem>>, vector<288x128xbf16>
    %cst = arith.constant dense<0.000000e+00> : vector<32x128xf32>
    %5 = tpu.matmul %3, %4, %cst {dimension_numbers = #tpu.dot_dimension_numbers<[1], [0], [0], [1], [0, 0, 1, 1], [], []>} : vector<32x288xbf16>, vector<288x128xbf16>, vector<32x128xf32> -> vector<32x128xf32>
    %c0_4 = arith.constant 0 : index
    %c0_5 = arith.constant 0 : index
    %6 = vector.load %arg3[%c0_4, %c0_5] : memref<32x1xf32, #tpu.memory_space<vmem>>, vector<32x1xf32>
    %7 = vector.broadcast %6 : vector<32x1xf32> to vector<32x128xf32>
    %8 = arith.addf %5, %7 : vector<32x128xf32>
    %c0_6 = arith.constant 0 : index
    %c0_7 = arith.constant 0 : index
    %9 = vector.load %arg4[%c0_6, %c0_7] : memref<32x128xf32, #tpu.memory_space<vmem>>, vector<32x128xf32>
    tpu.vector_store %arg4[%c0_6, %c0_7], %8 {strides = array<i32>} : memref<32x128xf32, #tpu.memory_space<vmem>>, vector<32x128xf32>,
    %c0_8 = arith.constant 0 : index
    %c0_9 = arith.constant 0 : index
    %10 = vector.load %arg5[%c0_8, %c0_9] : memref<32x1xf32, #tpu.memory_space<vmem>>, vector<32x1xf32>
    %cst_10 = arith.constant dense<0.000000e+00> : vector<32xf32>
    %11 = vector.multi_reduction <add>, %8, %cst_10 [1] : vector<32x128xf32> to vector<32xf32>
    %12 = vector.shape_cast %11 : vector<32xf32> to vector<32x1xf32>
    %13 = arith.addf %10, %12 : vector<32x1xf32>
    %c0_11 = arith.constant 0 : index
    %c0_12 = arith.constant 0 : index
    %14 = vector.load %arg5[%c0_11, %c0_12] : memref<32x1xf32, #tpu.memory_space<vmem>>, vector<32x1xf32>
    tpu.vector_store %arg5[%c0_11, %c0_12], %13 {strides = array<i32>} : memref<32x1xf32, #tpu.memory_space<vmem>>, vector<32x1xf32>,
    %c0_13 = arith.constant 0 : index
    %c0_14 = arith.constant 0 : index
    %15 = vector.load %arg6[%c0_13, %c0_14] : memref<32x1xf32, #tpu.memory_space<vmem>>, vector<32x1xf32>
    %16 = arith.mulf %8, %8 : vector<32x128xf32>
    %cst_15 = arith.constant dense<0.000000e+00> : vector<32xf32>
    %17 = vector.multi_reduction <add>, %16, %cst_15 [1] : vector<32x128xf32> to vector<32xf32>
    %18 = vector.shape_cast %17 : vector<32xf32> to vector<32x1xf32>
    %19 = arith.addf %15, %18 : vector<32x1xf32>
    %c0_16 = arith.constant 0 : index
    %c0_17 = arith.constant 0 : index
    %20 = vector.load %arg6[%c0_16, %c0_17] : memref<32x1xf32, #tpu.memory_space<vmem>>, vector<32x1xf32>
    tpu.vector_store %arg6[%c0_16, %c0_17], %19 {strides = array<i32>} : memref<32x1xf32, #tpu.memory_space<vmem>>, vector<32x1xf32>,
    return
  }
  func.func @transform_0(%arg0: i32) -> (i32, i32) {
    %c0_i32 = arith.constant 0 : i32
    %c0_i32_0 = arith.constant 0 : i32
    return %c0_i32, %arg0 : i32, i32
  }
  func.func @transform_1(%arg0: i32) -> (i32, i32) {
    %c0_i32 = arith.constant 0 : i32
    %c0_i32_0 = arith.constant 0 : i32
    %c0_i32_1 = arith.constant 0 : i32
    return %c0_i32, %c0_i32_0 : i32, i32
  }
  func.func @transform_2(%arg0: i32) -> (i32, i32) {
    %c0_i32 = arith.constant 0 : i32
    %c0_i32_0 = arith.constant 0 : i32
    %c0_i32_1 = arith.constant 0 : i32
    return %c0_i32, %c0_i32_0 : i32, i32
  }
  func.func @transform_3(%arg0: i32) -> (i32, i32) {
    %c0_i32 = arith.constant 0 : i32
    %c0_i32_0 = arith.constant 0 : i32
    return %c0_i32, %arg0 : i32, i32
  }
  func.func @transform_4(%arg0: i32) -> (i32, i32) {
    %c0_i32 = arith.constant 0 : i32
    %c0_i32_0 = arith.constant 0 : i32
    %c0_i32_1 = arith.constant 0 : i32
    return %c0_i32, %c0_i32_0 : i32, i32
  }
  func.func @transform_5(%arg0: i32) -> (i32, i32) {
    %c0_i32 = arith.constant 0 : i32
    %c0_i32_0 = arith.constant 0 : i32
    %c0_i32_1 = arith.constant 0 : i32
    return %c0_i32, %c0_i32_0 : i32, i32
  }
}

module attributes {stable_mosaic.version = 11 : i64} {
  func.func @_powerprop_kernel(%arg0: memref<256x512xf32, #tpu.memory_space<vmem>>, %arg1: memref<256x512xbf16, #tpu.memory_space<vmem>>) attributes {dimension_semantics = [], scalar_prefetch = 0 : i64, scratch_operands = 0 : i64, tpu.core_type = #tpu.core_type<tc>} {
    %c0 = arith.constant 0 : index
    %c0_0 = arith.constant 0 : index
    %0 = vector.load %arg0[%c0, %c0_0] : memref<256x512xf32, #tpu.memory_space<vmem>>, vector<256x512xf32>
    %1 = math.absf %0 : vector<256x512xf32>
    %2 = arith.mulf %0, %1 : vector<256x512xf32>
    %3 = arith.truncf %2 : vector<256x512xf32> to vector<256x512xbf16>
    %c0_1 = arith.constant 0 : index
    %c0_2 = arith.constant 0 : index
    %4 = vector.load %arg1[%c0_1, %c0_2] : memref<256x512xbf16, #tpu.memory_space<vmem>>, vector<256x512xbf16>
    tpu.vector_store %arg1[%c0_1, %c0_2], %3 {strides = array<i32>} : memref<256x512xbf16, #tpu.memory_space<vmem>>, vector<256x512xbf16>,
    return
  }
}

module attributes {stable_mosaic.version = 11 : i64} {
  func.func @_powerprop_kernel(%arg0: memref<256x256xf32, #tpu.memory_space<vmem>>, %arg1: memref<256x256xbf16, #tpu.memory_space<vmem>>) attributes {dimension_semantics = [], scalar_prefetch = 0 : i64, scratch_operands = 0 : i64, tpu.core_type = #tpu.core_type<tc>} {
    %c0 = arith.constant 0 : index
    %c0_0 = arith.constant 0 : index
    %0 = vector.load %arg0[%c0, %c0_0] : memref<256x256xf32, #tpu.memory_space<vmem>>, vector<256x256xf32>
    %1 = math.absf %0 : vector<256x256xf32>
    %2 = arith.mulf %0, %1 : vector<256x256xf32>
    %3 = arith.truncf %2 : vector<256x256xf32> to vector<256x256xbf16>
    %c0_1 = arith.constant 0 : index
    %c0_2 = arith.constant 0 : index
    %4 = vector.load %arg1[%c0_1, %c0_2] : memref<256x256xbf16, #tpu.memory_space<vmem>>, vector<256x256xbf16>
    tpu.vector_store %arg1[%c0_1, %c0_2], %3 {strides = array<i32>} : memref<256x256xbf16, #tpu.memory_space<vmem>>, vector<256x256xbf16>,
    return
  }
}

module attributes {stable_mosaic.version = 11 : i64} {
  func.func @_powerprop_kernel(%arg0: memref<10x256xf32, #tpu.memory_space<vmem>>, %arg1: memref<10x256xbf16, #tpu.memory_space<vmem>>) attributes {dimension_semantics = [], scalar_prefetch = 0 : i64, scratch_operands = 0 : i64, tpu.core_type = #tpu.core_type<tc>} {
    %c0 = arith.constant 0 : index
    %c0_0 = arith.constant 0 : index
    %0 = vector.load %arg0[%c0, %c0_0] : memref<10x256xf32, #tpu.memory_space<vmem>>, vector<10x256xf32>
    %1 = math.absf %0 : vector<10x256xf32>
    %2 = arith.mulf %0, %1 : vector<10x256xf32>
    %3 = arith.truncf %2 : vector<10x256xf32> to vector<10x256xbf16>
    %c0_1 = arith.constant 0 : index
    %c0_2 = arith.constant 0 : index
    %4 = vector.load %arg1[%c0_1, %c0_2] : memref<10x256xbf16, #tpu.memory_space<vmem>>, vector<10x256xbf16>
    tpu.vector_store %arg1[%c0_1, %c0_2], %3 {strides = array<i32>} : memref<10x256xbf16, #tpu.memory_space<vmem>>, vector<10x256xbf16>,
    return
  }
}

module attributes {stable_mosaic.version = 11 : i64} {
  func.func @_fc_fused_kernel(%arg0: memref<512x2xbf16, #tpu.memory_space<vmem>>, %arg1: memref<256x512xbf16, #tpu.memory_space<vmem>>, %arg2: memref<256x1xf32, #tpu.memory_space<vmem>>, %arg3: memref<256x256xbf16, #tpu.memory_space<vmem>>, %arg4: memref<256x1xf32, #tpu.memory_space<vmem>>, %arg5: memref<10x256xbf16, #tpu.memory_space<vmem>>, %arg6: memref<10x1xf32, #tpu.memory_space<vmem>>, %arg7: memref<10x2xf32, #tpu.memory_space<vmem>>) attributes {dimension_semantics = [], scalar_prefetch = 0 : i64, scratch_operands = 0 : i64, tpu.core_type = #tpu.core_type<tc>} {
    %c0 = arith.constant 0 : index
    %c0_0 = arith.constant 0 : index
    %0 = vector.load %arg1[%c0, %c0_0] : memref<256x512xbf16, #tpu.memory_space<vmem>>, vector<256x512xbf16>
    %c0_1 = arith.constant 0 : index
    %c0_2 = arith.constant 0 : index
    %1 = vector.load %arg0[%c0_1, %c0_2] : memref<512x2xbf16, #tpu.memory_space<vmem>>, vector<512x2xbf16>
    %cst = arith.constant dense<0.000000e+00> : vector<256x2xf32>
    %2 = tpu.matmul %0, %1, %cst {dimension_numbers = #tpu.dot_dimension_numbers<[1], [0], [0], [1], [0, 0, 1, 1], [], []>} : vector<256x512xbf16>, vector<512x2xbf16>, vector<256x2xf32> -> vector<256x2xf32>
    %c0_3 = arith.constant 0 : index
    %c0_4 = arith.constant 0 : index
    %3 = vector.load %arg2[%c0_3, %c0_4] : memref<256x1xf32, #tpu.memory_space<vmem>>, vector<256x1xf32>
    %4 = vector.broadcast %3 : vector<256x1xf32> to vector<256x2xf32>
    %5 = arith.addf %2, %4 : vector<256x2xf32>
    %cst_5 = arith.constant 0.000000e+00 : f32
    %6 = vector.broadcast %cst_5 : f32 to vector<256x2xf32>
    %7 = arith.maximumf %5, %6 : vector<256x2xf32>
    %c0_6 = arith.constant 0 : index
    %c0_7 = arith.constant 0 : index
    %8 = vector.load %arg3[%c0_6, %c0_7] : memref<256x256xbf16, #tpu.memory_space<vmem>>, vector<256x256xbf16>
    %9 = arith.truncf %7 : vector<256x2xf32> to vector<256x2xbf16>
    %cst_8 = arith.constant dense<0.000000e+00> : vector<256x2xf32>
    %10 = tpu.matmul %8, %9, %cst_8 {dimension_numbers = #tpu.dot_dimension_numbers<[1], [0], [0], [1], [0, 0, 1, 1], [], []>} : vector<256x256xbf16>, vector<256x2xbf16>, vector<256x2xf32> -> vector<256x2xf32>
    %c0_9 = arith.constant 0 : index
    %c0_10 = arith.constant 0 : index
    %11 = vector.load %arg4[%c0_9, %c0_10] : memref<256x1xf32, #tpu.memory_space<vmem>>, vector<256x1xf32>
    %12 = vector.broadcast %11 : vector<256x1xf32> to vector<256x2xf32>
    %13 = arith.addf %10, %12 : vector<256x2xf32>
    %cst_11 = arith.constant 0.000000e+00 : f32
    %14 = vector.broadcast %cst_11 : f32 to vector<256x2xf32>
    %15 = arith.maximumf %13, %14 : vector<256x2xf32>
    %c0_12 = arith.constant 0 : index
    %c0_13 = arith.constant 0 : index
    %16 = vector.load %arg5[%c0_12, %c0_13] : memref<10x256xbf16, #tpu.memory_space<vmem>>, vector<10x256xbf16>
    %17 = arith.truncf %15 : vector<256x2xf32> to vector<256x2xbf16>
    %cst_14 = arith.constant dense<0.000000e+00> : vector<10x2xf32>
    %18 = tpu.matmul %16, %17, %cst_14 {dimension_numbers = #tpu.dot_dimension_numbers<[1], [0], [0], [1], [0, 0, 1, 1], [], []>} : vector<10x256xbf16>, vector<256x2xbf16>, vector<10x2xf32> -> vector<10x2xf32>
    %c0_15 = arith.constant 0 : index
    %c0_16 = arith.constant 0 : index
    %19 = vector.load %arg6[%c0_15, %c0_16] : memref<10x1xf32, #tpu.memory_space<vmem>>, vector<10x1xf32>
    %20 = vector.broadcast %19 : vector<10x1xf32> to vector<10x2xf32>
    %21 = arith.addf %18, %20 : vector<10x2xf32>
    %c0_17 = arith.constant 0 : index
    %c0_18 = arith.constant 0 : index
    %22 = vector.load %arg7[%c0_17, %c0_18] : memref<10x2xf32, #tpu.memory_space<vmem>>, vector<10x2xf32>
    tpu.vector_store %arg7[%c0_17, %c0_18], %21 {strides = array<i32>} : memref<10x2xf32, #tpu.memory_space<vmem>>, vector<10x2xf32>,
    return
  }
}

</mosaic_0001>

<llo_original>
// kernel: cnn_forward.22
$region0: #{cnn_forward.22}
  #allocation0 [shape = 'u32[]', space=smem, size = 0x4, offset = 0x4, fixed_abs, tag = 'smem constant byte address 0x4 - core index']
  #allocation1 [shape = 'u32[72,128]{1,0:T(1,128)}', space=vmem, size = 0x9000, scoped, tag = 'internal scratch']
  %s0 = inlined_call_operand.vmem [shape: f32[8,27], index: 0, kind: input, shape index: {}]
  %s1 = inlined_call_operand.vmem [shape: bf16[8,27], index: 1, kind: output, shape index: {}]
  %s2 = sld [smem:[#allocation0]]
  $region14: #{cnn_forward.22} parent=0
    _
  %s4 = ssub.s32 1, %s2
  %s5 = scalar_select 0, %s4, %s2
  // Predicated region
  $region2: #{cnn_forward.22} parent=0 // pred_check
    _
  $region3: #{cnn_forward.22} parent=0 // pred_check_branch
    %7 = sbr.rel (0) target = $region5
  $region4: #{cnn_forward.22} parent=0 // pred_region
    _
  $region5: #{cnn_forward.22} parent=0 // pred_fallthru
    _
  %v8 = vld [vmem:[%s0] sm:$0xff]
  %v9 = vand.u32 2147483647, %v8
  %v10 = vmul.f32 %v8, %v9
  %v11 = vpack.c.bf16 %v10, %v10
  %vm12 = vcmask 216064
  %13 = vst.msk [vmem:[%s1] sm:$0xf] %vm12, %v11
  // Predicated region
  $region6: #{cnn_forward.22} parent=0 // pred_check
    _
  $region7: #{cnn_forward.22} parent=0 // pred_check_branch
    %15 = sbr.rel (0) target = $region9
  $region8: #{cnn_forward.22} parent=0 // pred_region
    _
  $region9: #{cnn_forward.22} parent=0 // pred_fallthru
    _
  // Predicated region
  $region10: #{cnn_forward.22} parent=0 // pred_check
    _
  $region11: #{cnn_forward.22} parent=0 // pred_check_branch
    %17 = sbr.rel (0) target = $region13
  $region12: #{cnn_forward.22} parent=0 // pred_region
    _
  $region13: #{cnn_forward.22} parent=0 // pred_fallthru
    _

// kernel: cnn_forward.23
$region0: #{cnn_forward.23}
  #allocation0 [shape = 'u32[]', space=smem, size = 0x4, offset = 0x4, fixed_abs, tag = 'smem constant byte address 0x4 - core index']
  #allocation1 [shape = 'u32[72,128]{1,0:T(1,128)}', space=vmem, size = 0x9000, scoped, tag = 'internal scratch']
  %s0 = inlined_call_operand.vmem [shape: bf16[27,2048], index: 0, kind: input, shape index: {}]
  %s1 = inlined_call_operand.vmem [shape: bf16[8,27], index: 1, kind: input, shape index: {}]
  %s2 = inlined_call_operand.vmem [shape: f32[8,1], index: 2, kind: input, shape index: {}]
  %s3 = inlined_call_operand.vmem [shape: f32[8,2048], index: 3, kind: output, shape index: {0}]
  %s4 = inlined_call_operand.vmem [shape: f32[8,1], index: 4, kind: output, shape index: {1}]
  %s5 = inlined_call_operand.vmem [shape: f32[8,1], index: 5, kind: output, shape index: {2}]
  %6 = xla_tuple %s3, %s4, %s5
  %s7 = sld [smem:[#allocation0]]
  $region88: #{cnn_forward.23} parent=0
    _
  %s9 = ssub.s32 1, %s7
  %s10 = scalar_select 0, %s9, %s7
  $region1: #{cnn_forward.23} parent=0
    #allocation2 [shape = 'u8[65536]{0}', space=vmem, size = 0x10000, scoped, tag = 'input window, operand 0']
    loop: start=0, step=1, limit=6
    $region2: #{cnn_forward.23} parent=1 // loop_pre_header
      _
    $region3: #{cnn_forward.23} parent=1 // loop_header
      %s12 = sphi 0, %s16
      %p13 = scmp.ge.s32.totalorder %s12, 6
      %s22 = sphi 0, %s24
      %s25 = sphi 0, %s22
      %s26 = sphi 0, %s25
      %s42 = sphi 0, %s26
      %s46 = sphi 0, %s46
      %s48 = sphi 0, %s46
      %s49 = sphi 0, %s48
      %s63 = sphi 0, %s49
      %s67 = sphi 0, %s67
      %s69 = sphi 0, %s67
      %s70 = sphi 0, %s69
      %s84 = sphi 0, %s70
      %s90 = sphi 0, %s92
      %s93 = sphi 0, %s90
      %s94 = sphi 0, %s93
      %s110 = sphi 0, %s94
      %s114 = sphi 0, %s114
      %s116 = sphi 0, %s114
      %s117 = sphi 0, %s116
      %s131 = sphi 0, %s117
      %s135 = sphi 0, %s135
      %s137 = sphi 0, %s135
      %s138 = sphi 0, %s137
      %s152 = sphi 0, %s138
    $region4: #{cnn_forward.23} parent=1 // loop_header_branch
      %15 = sbr.rel (%p13) target = $region8
    $region5: #{cnn_forward.23} parent=1 // loop_body
      %s17 = ssub.s32 %s12, 1
      %s18 = ssub.s32 %s12, 2
      %s19 = sadd.s32 %s12, 1
      %s20 = ssub.s32 %s12, %s19
      %p21 = scmp.eq.s32.totalorder %s20, 0
      %s23 = sadd.s32 %s22, 1
      %s24 = scalar_select %p21, %s22, %s23
      %p27 = pneg %p21
      %p28 = scmp.eq.s32.totalorder %s12, 3
      %p29 = por %p27, %p28
      %p30 = scmp.ne.s32.totalorder %s22, %s25
      %p31 = scmp.eq.s32.totalorder %s12, 0
      %p32 = por %p30, %p31
      %p33 = scmp.ne.s32.totalorder %s22, %s25
      %p34 = scmp.eq.s32.totalorder %s17, 3
      %p35 = por %p33, %p34
      %p36 = scmp.ne.s32.totalorder %s25, %s26
      %p37 = scmp.eq.s32.totalorder %s17, 0
      %p38 = por %p36, %p37
      %p39 = scmp.ne.s32.totalorder %s25, %s26
      %p40 = scmp.eq.s32.totalorder %s18, 3
      %p41 = por %p39, %p40
      %p43 = scmp.ne.s32.totalorder %s26, %s42
      %p44 = scmp.eq.s32.totalorder %s18, 0
      %p45 = por %p43, %p44
      %s47 = sadd.s32 %s46, 1
      %p50 = scmp.eq.s32.totalorder %s12, 3
      %p51 = scmp.ne.s32.totalorder %s46, %s48
      %p52 = scmp.eq.s32.totalorder %s12, 0
      %p53 = por %p51, %p52
      %p54 = scmp.ne.s32.totalorder %s46, %s48
      %p55 = scmp.eq.s32.totalorder %s17, 3
      %p56 = por %p54, %p55
      %p57 = scmp.ne.s32.totalorder %s48, %s49
      %p58 = scmp.eq.s32.totalorder %s17, 0
      %p59 = por %p57, %p58
      %p60 = scmp.ne.s32.totalorder %s48, %s49
      %p61 = scmp.eq.s32.totalorder %s18, 3
      %p62 = por %p60, %p61
      %p64 = scmp.ne.s32.totalorder %s49, %s63
      %p65 = scmp.eq.s32.totalorder %s18, 0
      %p66 = por %p64, %p65
      %s68 = sadd.s32 %s67, 1
      %p71 = scmp.eq.s32.totalorder %s12, 3
      %p72 = scmp.ne.s32.totalorder %s67, %s69
      %p73 = scmp.eq.s32.totalorder %s12, 0
      %p74 = por %p72, %p73
      %p75 = scmp.ne.s32.totalorder %s67, %s69
      %p76 = scmp.eq.s32.totalorder %s17, 3
      %p77 = por %p75, %p76
      %p78 = scmp.ne.s32.totalorder %s69, %s70
      %p79 = scmp.eq.s32.totalorder %s17, 0
      %p80 = por %p78, %p79
      %p81 = scmp.ne.s32.totalorder %s69, %s70
      %p82 = scmp.eq.s32.totalorder %s18, 3
      %p83 = por %p81, %p82
      %p85 = scmp.ne.s32.totalorder %s70, %s84
      %p86 = scmp.eq.s32.totalorder %s18, 0
      %p87 = por %p85, %p86
      %s88 = ssub.s32 %s12, %s19
      %p89 = scmp.eq.s32.totalorder %s88, 0
      %s91 = sadd.s32 %s90, 1
      %s92 = scalar_select %p89, %s90, %s91
      %p95 = pneg %p89
      %p96 = scmp.eq.s32.totalorder %s12, 3
      %p97 = por %p95, %p96
      %p98 = scmp.ne.s32.totalorder %s90, %s93
      %p99 = scmp.eq.s32.totalorder %s12, 0
      %p100 = por %p98, %p99
      %p101 = scmp.ne.s32.totalorder %s90, %s93
      %p102 = scmp.eq.s32.totalorder %s17, 3
      %p103 = por %p101, %p102
      %p104 = scmp.ne.s32.totalorder %s93, %s94
      %p105 = scmp.eq.s32.totalorder %s17, 0
      %p106 = por %p104, %p105
      %p107 = scmp.ne.s32.totalorder %s93, %s94
      %p108 = scmp.eq.s32.totalorder %s18, 3
      %p109 = por %p107, %p108
      %p111 = scmp.ne.s32.totalorder %s94, %s110
      %p112 = scmp.eq.s32.totalorder %s18, 0
      %p113 = por %p111, %p112
      %s115 = sadd.s32 %s114, 1
      %p118 = scmp.eq.s32.totalorder %s12, 3
      %p119 = scmp.ne.s32.totalorder %s114, %s116
      %p120 = scmp.eq.s32.totalorder %s12, 0
      %p121 = por %p119, %p120
      %p122 = scmp.ne.s32.totalorder %s114, %s116
      %p123 = scmp.eq.s32.totalorder %s17, 3
      %p124 = por %p122, %p123
      %p125 = scmp.ne.s32.totalorder %s116, %s117
      %p126 = scmp.eq.s32.totalorder %s17, 0
      %p127 = por %p125, %p126
      %p128 = scmp.ne.s32.totalorder %s116, %s117
      %p129 = scmp.eq.s32.totalorder %s18, 3
      %p130 = por %p128, %p129
      %p132 = scmp.ne.s32.totalorder %s117, %s131
      %p133 = scmp.eq.s32.totalorder %s18, 0
      %p134 = por %p132, %p133
      %s136 = sadd.s32 %s135, 1
      %p139 = scmp.eq.s32.totalorder %s12, 3
      %p140 = scmp.ne.s32.totalorder %s135, %s137
      %p141 = scmp.eq.s32.totalorder %s12, 0
      %p142 = por %p140, %p141
      %p143 = scmp.ne.s32.totalorder %s135, %s137
      %p144 = scmp.eq.s32.totalorder %s17, 3
      %p145 = por %p143, %p144
      %p146 = scmp.ne.s32.totalorder %s137, %s138
      %p147 = scmp.eq.s32.totalorder %s17, 0
      %p148 = por %p146, %p147
      %p149 = scmp.ne.s32.totalorder %s137, %s138
      %p150 = scmp.eq.s32.totalorder %s18, 3
      %p151 = por %p149, %p150
      %p153 = scmp.ne.s32.totalorder %s138, %s152
      %p154 = scmp.eq.s32.totalorder %s18, 0
      %p155 = por %p153, %p154
      %p156 = scmp.le.s32.totalorder 1, %s12
      %p157 = scmp.lt.s32.totalorder %s12, 5
      %p158 = pnand %p156, %p157
      %p159 = pneg %p158
      // Predicated region
      $region9: #{cnn_forward.23} parent=5 // pred_check
        _
      $region10: #{cnn_forward.23} parent=5 // pred_check_branch
        %161 = sbr.rel (%p158) target = $region12
      $region11: #{cnn_forward.23} parent=5 // pred_region
        %s162 = ssub.s32 %s12, 1
        // Predicated region
        $region13: #{cnn_forward.23} parent=11 // pred_check
          %p163 = pneg %p59
        $region14: #{cnn_forward.23} parent=11 // pred_check_branch
          %165 = sbr.rel (%p163) target = $region16
        $region15: #{cnn_forward.23} parent=11 // pred_region
          _
        $region16: #{cnn_forward.23} parent=11 // pred_fallthru
          _
        // Predicated region
        $region17: #{cnn_forward.23} parent=11 // pred_check
          %p166 = pneg %p80
        $region18: #{cnn_forward.23} parent=11 // pred_check_branch
          %168 = sbr.rel (%p166) target = $region20
        $region19: #{cnn_forward.23} parent=11 // pred_region
          _
        $region20: #{cnn_forward.23} parent=11 // pred_fallthru
          _
      $region12: #{cnn_forward.23} parent=5 // pred_fallthru
        _
      %p169 = scmp.lt.s32.totalorder %s12, 4
      // Predicated region
      $region21: #{cnn_forward.23} parent=5 // pred_check
        %p170 = pneg %p169
      $region22: #{cnn_forward.23} parent=5 // pred_check_branch
        %172 = sbr.rel (%p170) target = $region24
      $region23: #{cnn_forward.23} parent=5 // pred_region
        // Predicated region
        $region25: #{cnn_forward.23} parent=23 // pred_check
          %p173 = pneg %p32
        $region26: #{cnn_forward.23} parent=23 // pred_check_branch
          %175 = sbr.rel (%p173) target = $region28
        $region27: #{cnn_forward.23} parent=23 // pred_region
          %s176 = sand.u32 %s22, 1
          %s177 = sand.u32 %s22, 1
          %s178 = smul.addr %s177, 64
          %s179 = scalar_lea.vmem [#allocation2], %s178
          %s180 = smul.u32 4, %s12
          %s181 = smul.addr %s180, 4
          %s182 = scalar_lea.vmem %s0, %s181
          // Predicated region
          $region29: #{cnn_forward.23} parent=27 // pred_check
            _
          $region30: #{cnn_forward.23} parent=27 // pred_check_branch
            %184 = sbr.rel (0) target = $region32
          $region31: #{cnn_forward.23} parent=27 // pred_region
            // Predicated region
            $region33: #{cnn_forward.23} parent=31 // pred_check
              _
            $region34: #{cnn_forward.23} parent=31 // pred_check_branch
              %186 = sbr.rel (0) target = $region36
            $region35: #{cnn_forward.23} parent=31 // pred_region
              loop: start=0, step=1, limit=1
              $region37: #{cnn_forward.23} parent=35 // loop_pre_header
                _
              $region38: #{cnn_forward.23} parent=35 // loop_header
                %s188 = sphi 0, %s192
                %p189 = scmp.ge.s32.totalorder %s188, 1
                %s193 = sphi %s182, %s182
                %s194 = sphi %s179, %s179
              $region39: #{cnn_forward.23} parent=35 // loop_header_branch
                %191 = sbr.rel (%p189) target = $region43
              $region40: #{cnn_forward.23} parent=35 // loop_body
                %v195 = vld [vmem:[%s193] sm:$0xff]
                %196 = vst [vmem:[%s194] sm:$0xff] %v195
                %v197 = vld [vmem:[%s193 + $0x8] sm:$0xff]
                %198 = vst [vmem:[%s194 + $0x8] sm:$0xff] %v197
                %v199 = vld [vmem:[%s193 + $0x40] sm:$0xff]
                %200 = vst [vmem:[%s194 + $0x10] sm:$0xff] %v199
                %v201 = vld [vmem:[%s193 + $0x48] sm:$0xff]
                %202 = vst [vmem:[%s194 + $0x18] sm:$0xff] %v201
                %v203 = vld [vmem:[%s193 + $0x80] sm:$0xff]
                %204 = vst [vmem:[%s194 + $0x20] sm:$0xff] %v203
                %v205 = vld [vmem:[%s193 + $0x88] sm:$0xff]
                %206 = vst [vmem:[%s194 + $0x28] sm:$0xff] %v205
                %v207 = vld [vmem:[%s193 + $0xc0] sm:$0xff]
                %208 = vst [vmem:[%s194 + $0x30] sm:$0xff] %v207
                %v209 = vld [vmem:[%s193 + $0xc8] sm:$0xff]
                %210 = vst [vmem:[%s194 + $0x38] sm:$0xff] %v209
              $region41: #{cnn_forward.23} parent=35 // loop_footer
                %s192 = sadd.s32 1, %s188
              $region42: #{cnn_forward.23} parent=35 // loop_footer_branch
                %187 = sbr.rel target = $region38
              $region43: #{cnn_forward.23} parent=35 // loop_exit
                _
            $region36: #{cnn_forward.23} parent=31 // pred_fallthru
              _
            // Predicated region
            $region44: #{cnn_forward.23} parent=31 // pred_check
              _
            $region45: #{cnn_forward.23} parent=31 // pred_check_branch
              %212 = sbr.rel target = $region47
            $region46: #{cnn_forward.23} parent=31 // pred_region
              _
            $region47: #{cnn_forward.23} parent=31 // pred_fallthru
              _
          $region32: #{cnn_forward.23} parent=27 // pred_fallthru
            _
          %213 = vnop
        $region28: #{cnn_forward.23} parent=23 // pred_fallthru
          _
      $region24: #{cnn_forward.23} parent=5 // pred_fallthru
        _
      %p214 = scmp.le.s32.totalorder 1, %s12
      %p215 = scmp.lt.s32.totalorder %s12, 5
      %p216 = pnand %p214, %p215
      %p217 = pneg %p216
      // Predicated region
      $region48: #{cnn_forward.23} parent=5 // pred_check
        _
      $region49: #{cnn_forward.23} parent=5 // pred_check_branch
        %219 = sbr.rel (%p216) target = $region51
      $region50: #{cnn_forward.23} parent=5 // pred_region
        %s220 = ssub.s32 %s12, 1
        %s221 = sand.u32 %s25, 1
        %s222 = sand.u32 %s25, 1
        %s223 = smul.addr %s222, 64
        %s224 = scalar_lea.vmem [#allocation2], %s223
        // Predicated region
        $region52: #{cnn_forward.23} parent=50 // pred_check
          %p225 = pneg %p38
        $region53: #{cnn_forward.23} parent=50 // pred_check_branch
          %227 = sbr.rel (%p225) target = $region55
        $region54: #{cnn_forward.23} parent=50 // pred_region
          _
        $region55: #{cnn_forward.23} parent=50 // pred_fallthru
          _
        %s228 = sand.u32 %s25, 1
        %s229 = sand.u32 %s25, 1
        %s230 = smul.addr %s229, 64
        %s231 = scalar_lea.vmem [#allocation2], %s230
        %p232 = pneg %p38
        %p233 = pneg %p35
        %p234 = pneg %p59
        %p235 = pneg %p56
        %p236 = pneg %p80
        %p237 = pneg %p77
        %p238 = pneg %p106
        %p239 = pneg %p103
        %s240 = smul.u32 4, %s17
        %p241 = scmp.lt.s32.totalorder %s240, 15
        %s242 = scalar_select %p241, %s240, 15
        %s243 = smul.addr %s242, 8
        %s244 = scalar_lea.vmem %s3, %s243
        %p245 = pneg %p127
        %p246 = pneg %p124
        %p247 = pneg %p148
        %p248 = pneg %p145
        %s249 = smul.u32 4, %s17
        %s250 = smul.u32 4, %s17
        %p251 = scmp.lt.s32.totalorder %s250, 15
        %s252 = scalar_select %p251, %s250, 15
        %s253 = smul.addr %s252, 8
        %s254 = scalar_lea.vmem %s3, %s253
        %s255 = smul.u32 4, %s17
        %p257 = scmp.eq.s32.totalorder %s17, 0
        // Predicated region
        $region56: #{cnn_forward.23} parent=50 // pred_check
          %p258 = pneg %p257
        $region57: #{cnn_forward.23} parent=50 // pred_check_branch
          %260 = sbr.rel (%p258) target = $region59
        $region58: #{cnn_forward.23} parent=50 // pred_region
          %vm261 = vcmask 7168
          %262 = vst.msk [vmem:[%s4] sm:$0xff] %vm261, 0.0
          %263 = vst.msk [vmem:[%s5] sm:$0xff] %vm261, 0.0
        $region59: #{cnn_forward.23} parent=50 // pred_fallthru
          _
        %v264 = vld [vmem:[%s1] sm:$0xf]
        %v265 = vld [vmem:[%s224] sm:$0xff]
        %v266 = vld [vmem:[%s224 + $0x8] sm:$0xff]
        %v267 = vld [vmem:[%s224 + $0x10] sm:$0xff]
        %v268 = vld [vmem:[%s224 + $0x18] sm:$0xff]
        %v269 = vld [vmem:[%s224 + $0x20] sm:$0xff]
        %v270 = vld [vmem:[%s224 + $0x28] sm:$0xff]
        %v271 = vld [vmem:[%s224 + $0x30] sm:$0x33]
        %v272 = vld [vmem:[%s224 + $0x38] sm:$0x33]
        %v273 = vld [vmem:[%s2] sm:$0xff]
        %275 = vset.pattern.permute.xlu0 0
        %276 = vperm.xlu0 %275, %v273
        %v277 = vpop.permute.xlu0 %276
        %v287 = vunpack.c.l.b16 %v265
        %v288 = vunpack.c.h.b16 %v265
        %v289 = vunpack.c.l.b16 %v266
        %v290 = vunpack.c.h.b16 %v266
        %v291 = vunpack.c.l.b16 %v267
        %v292 = vunpack.c.h.b16 %v267
        %v293 = vunpack.c.l.b16 %v268
        %v294 = vunpack.c.h.b16 %v268
        %v295 = vunpack.c.l.b16 %v269
        %v296 = vunpack.c.h.b16 %v269
        %v297 = vunpack.c.l.b16 %v270
        %v298 = vunpack.c.h.b16 %v270
        %v299 = vunpack.c.l.b16 %v271
        %v300 = vunpack.c.h.b16 %v271
        %v301 = vunpack.c.l.b16 %v272
        %v302 = vunpack.c.h.b16 %v272
        %v303 = vpack.c.b16 %v291, %v287
        %v304 = vpack.c.b16 %v292, %v288
        %v305 = vpack.c.b16 %v293, %v289
        %v306 = vpack.c.b16 %v294, %v290
        %v307 = vpack.c.b16 %v299, %v295
        %v308 = vpack.c.b16 %v300, %v296
        %v309 = vpack.c.b16 %v301, %v297
        %v310 = vpack.c.b16 %v302, %v298
        %vm315 = vcmask 220160
        %v317 = vsel %vm315, %v264, 0
        %vm319 = vcmask 1044480
        %vm320 = vcmask 1045504
        %v321 = vsel %vm319, 4294967295, 65535
        %v322 = vsel %vm320, %v321, 0
        %v324 = vand.u32 %v307, %v322
        %v327 = vand.u32 %v308, %v322
        %v330 = vand.u32 %v309, %v322
        %v333 = vand.u32 %v310, %v322
        %335 = vmatpush.bf16.msra.mxu0 0
        %336 = vmatpush.bf16.msra.mxu0 0
        %337 = vmatpush.bf16.msra.mxu0 0
        %338 = vmatpush.bf16.msra.mxu0 0
        %339 = vmatpush.bf16.msra.mxu0 0
        %340 = vmatpush.bf16.msra.mxu0 0
        %341 = vmatpush.bf16.msra.mxu0 %v324
        %342 = vmatpush.bf16.msra.mxu0 %v303
        %343 = vmatmul.bf16.gmra.mxu0 %v317
        %v344 = vpop.f32.mrf.mxu0
        %v345 = vadd.f32 %v277, %v344
        %v346 = vpop.f32.mrf.mxu0
        %347 = vdwg.mxu0
        %348 = vmatpush.bf16.msra.mxu0 0
        %349 = vmatpush.bf16.msra.mxu0 0
        %350 = vmatpush.bf16.msra.mxu0 0
        %351 = vmatpush.bf16.msra.mxu0 0
        %352 = vmatpush.bf16.msra.mxu0 0
        %353 = vmatpush.bf16.msra.mxu0 0
        %354 = vmatpush.bf16.msra.mxu0 %v327
        %355 = vmatpush.bf16.msra.mxu0 %v304
        %356 = vmatmul.bf16.gmra.mxu0 %v317
        %v357 = vpop.f32.mrf.mxu0
        %v358 = vadd.f32 %v277, %v357
        %v359 = vpop.f32.mrf.mxu0
        %360 = vdwg.mxu0
        %361 = vmatpush.bf16.msra.mxu0 0
        %362 = vmatpush.bf16.msra.mxu0 0
        %363 = vmatpush.bf16.msra.mxu0 0
        %364 = vmatpush.bf16.msra.mxu0 0
        %365 = vmatpush.bf16.msra.mxu0 0
        %366 = vmatpush.bf16.msra.mxu0 0
        %367 = vmatpush.bf16.msra.mxu0 %v330
        %368 = vmatpush.bf16.msra.mxu0 %v305
        %369 = vmatmul.bf16.gmra.mxu0 %v317
        %v370 = vpop.f32.mrf.mxu0
        %v371 = vadd.f32 %v277, %v370
        %v372 = vpop.f32.mrf.mxu0
        %373 = vdwg.mxu0
        %374 = vmatpush.bf16.msra.mxu0 0
        %375 = vmatpush.bf16.msra.mxu0 0
        %376 = vmatpush.bf16.msra.mxu0 0
        %377 = vmatpush.bf16.msra.mxu0 0
        %378 = vmatpush.bf16.msra.mxu0 0
        %379 = vmatpush.bf16.msra.mxu0 0
        %380 = vmatpush.bf16.msra.mxu0 %v333
        %381 = vmatpush.bf16.msra.mxu0 %v306
        %382 = vmatmul.bf16.gmra.mxu0 %v317
        %v383 = vpop.f32.mrf.mxu0
        %v384 = vadd.f32 %v277, %v383
        %v385 = vpop.f32.mrf.mxu0
        %386 = vdwg.mxu0
        %387 = vst [vmem:[%s254] sm:$0xff] %v345
        %388 = vst [vmem:[%s254 + $0x8] sm:$0xff] %v358
        %389 = vst [vmem:[%s254 + $0x10] sm:$0xff] %v371
        %390 = vst [vmem:[%s254 + $0x18] sm:$0xff] %v384
        %v391 = vld [vmem:[%s4] sm:$0xff]
        %v392 = vadd.f32 %v345, %v358
        %v393 = vadd.f32 %v392, %v371
        %v394 = vadd.f32 %v393, %v384
        %395 = vadd.xlane.f32.xlu0 %v394
        %v396 = vpop.xlane.xlu0 %395
        %v397 = vadd.f32 %v391, %v396
        %vm398 = vcmask 7168
        %399 = vst.msk [vmem:[%s4] sm:$0xff] %vm398, %v397
        %v400 = vld [vmem:[%s5] sm:$0xff]
        %v401 = vmul.f32 %v345, %v345
        %v402 = vmul.f32 %v358, %v358
        %v403 = vmul.f32 %v371, %v371
        %v404 = vmul.f32 %v384, %v384
        %v405 = vadd.f32 %v401, %v402
        %v406 = vadd.f32 %v405, %v403
        %v407 = vadd.f32 %v406, %v404
        %408 = vadd.xlane.f32.xlu0 %v407
        %v409 = vpop.xlane.xlu0 %408
        %v410 = vadd.f32 %v400, %v409
        %411 = vst.msk [vmem:[%s5] sm:$0xff] %vm398, %v410
        %s412 = smul.u32 4, %s17
        %p413 = scmp.lt.s32.totalorder %s412, 15
        %s414 = scalar_select %p413, %s412, 15
        %s415 = smul.addr %s414, 8
        %s416 = scalar_lea.vmem %s3, %s415
        // Predicated region
        $region60: #{cnn_forward.23} parent=50 // pred_check
          %p417 = pneg %p103
        $region61: #{cnn_forward.23} parent=50 // pred_check_branch
          %419 = sbr.rel (%p417) target = $region63
        $region62: #{cnn_forward.23} parent=50 // pred_region
          %s420 = smul.u32 4, %s17
        $region63: #{cnn_forward.23} parent=50 // pred_fallthru
          _
        // Predicated region
        $region64: #{cnn_forward.23} parent=50 // pred_check
          %p421 = pneg %p124
        $region65: #{cnn_forward.23} parent=50 // pred_check_branch
          %423 = sbr.rel (%p421) target = $region67
        $region66: #{cnn_forward.23} parent=50 // pred_region
          _
        $region67: #{cnn_forward.23} parent=50 // pred_fallthru
          _
        // Predicated region
        $region68: #{cnn_forward.23} parent=50 // pred_check
          %p424 = pneg %p145
        $region69: #{cnn_forward.23} parent=50 // pred_check_branch
          %426 = sbr.rel (%p424) target = $region71
        $region70: #{cnn_forward.23} parent=50 // pred_region
          _
        $region71: #{cnn_forward.23} parent=50 // pred_fallthru
          _
        // Predicated region
        $region72: #{cnn_forward.23} parent=50 // pred_check
          %p427 = pneg %p124
        $region73: #{cnn_forward.23} parent=50 // pred_check_branch
          %429 = sbr.rel (%p427) target = $region75
        $region74: #{cnn_forward.23} parent=50 // pred_region
          _
        $region75: #{cnn_forward.23} parent=50 // pred_fallthru
          _
        // Predicated region
        $region76: #{cnn_forward.23} parent=50 // pred_check
          %p430 = pneg %p145
        $region77: #{cnn_forward.23} parent=50 // pred_check_branch
          %432 = sbr.rel (%p430) target = $region79
        $region78: #{cnn_forward.23} parent=50 // pred_region
          _
        $region79: #{cnn_forward.23} parent=50 // pred_fallthru
          _
      $region51: #{cnn_forward.23} parent=5 // pred_fallthru
        _
      %p433 = scmp.le.s32.totalorder 2, %s12
      // Predicated region
      $region80: #{cnn_forward.23} parent=5 // pred_check
        %p434 = pneg %p433
      $region81: #{cnn_forward.23} parent=5 // pred_check_branch
        %436 = sbr.rel (%p434) target = $region83
      $region82: #{cnn_forward.23} parent=5 // pred_region
        %s437 = ssub.s32 %s12, 2
        // Predicated region
        $region84: #{cnn_forward.23} parent=82 // pred_check
          %p438 = pneg %p109
        $region85: #{cnn_forward.23} parent=82 // pred_check_branch
          %440 = sbr.rel (%p438) target = $region87
        $region86: #{cnn_forward.23} parent=82 // pred_region
          %s441 = smul.u32 4, %s18
          %p442 = scmp.lt.s32.totalorder %s441, 15
          %s443 = scalar_select %p442, %s441, 15
          %s444 = smul.addr %s443, 8
          %s445 = scalar_lea.vmem %s3, %s444
        $region87: #{cnn_forward.23} parent=82 // pred_fallthru
          _
      $region83: #{cnn_forward.23} parent=5 // pred_fallthru
        _
    $region6: #{cnn_forward.23} parent=1 // loop_footer
      %s16 = sadd.s32 1, %s12
    $region7: #{cnn_forward.23} parent=1 // loop_footer_branch
      %11 = sbr.rel target = $region3
    $region8: #{cnn_forward.23} parent=1 // loop_exit
      _

// kernel: cnn_forward.24
$region0: #{cnn_forward.24}
  #allocation0 [shape = 'u32[]', space=smem, size = 0x4, offset = 0x4, fixed_abs, tag = 'smem constant byte address 0x4 - core index']
  #allocation1 [shape = 'u32[72,128]{1,0:T(1,128)}', space=vmem, size = 0x9000, scoped, tag = 'internal scratch']
  %s0 = inlined_call_operand.vmem [shape: f32[8,2048], index: 0, kind: input, shape index: {}]
  %s1 = inlined_call_operand.vmem [shape: f32[8,1], index: 1, kind: input, shape index: {}]
  %s2 = inlined_call_operand.vmem [shape: f32[8,1], index: 2, kind: input, shape index: {}]
  %s3 = inlined_call_operand.vmem [shape: f32[8,1], index: 3, kind: input, shape index: {}]
  %s4 = inlined_call_operand.vmem [shape: f32[8,1], index: 4, kind: input, shape index: {}]
  %s5 = inlined_call_operand.vmem [shape: bf16[8,2048], index: 5, kind: output, shape index: {}]
  %s6 = sld [smem:[#allocation0]]
  $region53: #{cnn_forward.24} parent=0
    _
  %s8 = ssub.s32 1, %s6
  %s9 = scalar_select 0, %s8, %s6
  loop: start=0, step=1, limit=6
  $region2: #{cnn_forward.24} parent=0 // loop_pre_header
    _
  $region3: #{cnn_forward.24} parent=0 // loop_header
    %s11 = sphi 0, %s15
    %p12 = scmp.ge.s32.totalorder %s11, 6
    %s21 = sphi 0, %s23
    %s24 = sphi 0, %s21
    %s25 = sphi 0, %s24
    %s41 = sphi 0, %s25
    %s45 = sphi 0, %s45
    %s47 = sphi 0, %s45
    %s48 = sphi 0, %s47
    %s62 = sphi 0, %s48
    %s66 = sphi 0, %s66
    %s68 = sphi 0, %s66
    %s69 = sphi 0, %s68
    %s83 = sphi 0, %s69
    %s87 = sphi 0, %s87
    %s89 = sphi 0, %s87
    %s90 = sphi 0, %s89
    %s104 = sphi 0, %s90
    %s108 = sphi 0, %s108
    %s110 = sphi 0, %s108
    %s111 = sphi 0, %s110
    %s125 = sphi 0, %s111
    %s131 = sphi 0, %s133
    %s134 = sphi 0, %s131
    %s135 = sphi 0, %s134
    %s151 = sphi 0, %s135
  $region4: #{cnn_forward.24} parent=0 // loop_header_branch
    %14 = sbr.rel (%p12) target = $region8
  $region5: #{cnn_forward.24} parent=0 // loop_body
    %s16 = ssub.s32 %s11, 1
    %s17 = ssub.s32 %s11, 2
    %s18 = sadd.s32 %s11, 1
    %s19 = ssub.s32 %s11, %s18
    %p20 = scmp.eq.s32.totalorder %s19, 0
    %s22 = sadd.s32 %s21, 1
    %s23 = scalar_select %p20, %s21, %s22
    %p26 = pneg %p20
    %p27 = scmp.eq.s32.totalorder %s11, 3
    %p28 = por %p26, %p27
    %p29 = scmp.ne.s32.totalorder %s21, %s24
    %p30 = scmp.eq.s32.totalorder %s11, 0
    %p31 = por %p29, %p30
    %p32 = scmp.ne.s32.totalorder %s21, %s24
    %p33 = scmp.eq.s32.totalorder %s16, 3
    %p34 = por %p32, %p33
    %p35 = scmp.ne.s32.totalorder %s24, %s25
    %p36 = scmp.eq.s32.totalorder %s16, 0
    %p37 = por %p35, %p36
    %p38 = scmp.ne.s32.totalorder %s24, %s25
    %p39 = scmp.eq.s32.totalorder %s17, 3
    %p40 = por %p38, %p39
    %p42 = scmp.ne.s32.totalorder %s25, %s41
    %p43 = scmp.eq.s32.totalorder %s17, 0
    %p44 = por %p42, %p43
    %s46 = sadd.s32 %s45, 1
    %p49 = scmp.eq.s32.totalorder %s11, 3
    %p50 = scmp.ne.s32.totalorder %s45, %s47
    %p51 = scmp.eq.s32.totalorder %s11, 0
    %p52 = por %p50, %p51
    %p53 = scmp.ne.s32.totalorder %s45, %s47
    %p54 = scmp.eq.s32.totalorder %s16, 3
    %p55 = por %p53, %p54
    %p56 = scmp.ne.s32.totalorder %s47, %s48
    %p57 = scmp.eq.s32.totalorder %s16, 0
    %p58 = por %p56, %p57
    %p59 = scmp.ne.s32.totalorder %s47, %s48
    %p60 = scmp.eq.s32.totalorder %s17, 3
    %p61 = por %p59, %p60
    %p63 = scmp.ne.s32.totalorder %s48, %s62
    %p64 = scmp.eq.s32.totalorder %s17, 0
    %p65 = por %p63, %p64
    %s67 = sadd.s32 %s66, 1
    %p70 = scmp.eq.s32.totalorder %s11, 3
    %p71 = scmp.ne.s32.totalorder %s66, %s68
    %p72 = scmp.eq.s32.totalorder %s11, 0
    %p73 = por %p71, %p72
    %p74 = scmp.ne.s32.totalorder %s66, %s68
    %p75 = scmp.eq.s32.totalorder %s16, 3
    %p76 = por %p74, %p75
    %p77 = scmp.ne.s32.totalorder %s68, %s69
    %p78 = scmp.eq.s32.totalorder %s16, 0
    %p79 = por %p77, %p78
    %p80 = scmp.ne.s32.totalorder %s68, %s69
    %p81 = scmp.eq.s32.totalorder %s17, 3
    %p82 = por %p80, %p81
    %p84 = scmp.ne.s32.totalorder %s69, %s83
    %p85 = scmp.eq.s32.totalorder %s17, 0
    %p86 = por %p84, %p85
    %s88 = sadd.s32 %s87, 1
    %p91 = scmp.eq.s32.totalorder %s11, 3
    %p92 = scmp.ne.s32.totalorder %s87, %s89
    %p93 = scmp.eq.s32.totalorder %s11, 0
    %p94 = por %p92, %p93
    %p95 = scmp.ne.s32.totalorder %s87, %s89
    %p96 = scmp.eq.s32.totalorder %s16, 3
    %p97 = por %p95, %p96
    %p98 = scmp.ne.s32.totalorder %s89, %s90
    %p99 = scmp.eq.s32.totalorder %s16, 0
    %p100 = por %p98, %p99
    %p101 = scmp.ne.s32.totalorder %s89, %s90
    %p102 = scmp.eq.s32.totalorder %s17, 3
    %p103 = por %p101, %p102
    %p105 = scmp.ne.s32.totalorder %s90, %s104
    %p106 = scmp.eq.s32.totalorder %s17, 0
    %p107 = por %p105, %p106
    %s109 = sadd.s32 %s108, 1
    %p112 = scmp.eq.s32.totalorder %s11, 3
    %p113 = scmp.ne.s32.totalorder %s108, %s110
    %p114 = scmp.eq.s32.totalorder %s11, 0
    %p115 = por %p113, %p114
    %p116 = scmp.ne.s32.totalorder %s108, %s110
    %p117 = scmp.eq.s32.totalorder %s16, 3
    %p118 = por %p116, %p117
    %p119 = scmp.ne.s32.totalorder %s110, %s111
    %p120 = scmp.eq.s32.totalorder %s16, 0
    %p121 = por %p119, %p120
    %p122 = scmp.ne.s32.totalorder %s110, %s111
    %p123 = scmp.eq.s32.totalorder %s17, 3
    %p124 = por %p122, %p123
    %p126 = scmp.ne.s32.totalorder %s111, %s125
    %p127 = scmp.eq.s32.totalorder %s17, 0
    %p128 = por %p126, %p127
    %s129 = ssub.s32 %s11, %s18
    %p130 = scmp.eq.s32.totalorder %s129, 0
    %s132 = sadd.s32 %s131, 1
    %s133 = scalar_select %p130, %s131, %s132
    %p136 = pneg %p130
    %p137 = scmp.eq.s32.totalorder %s11, 3
    %p138 = por %p136, %p137
    %p139 = scmp.ne.s32.totalorder %s131, %s134
    %p140 = scmp.eq.s32.totalorder %s11, 0
    %p141 = por %p139, %p140
    %p142 = scmp.ne.s32.totalorder %s131, %s134
    %p143 = scmp.eq.s32.totalorder %s16, 3
    %p144 = por %p142, %p143
    %p145 = scmp.ne.s32.totalorder %s134, %s135
    %p146 = scmp.eq.s32.totalorder %s16, 0
    %p147 = por %p145, %p146
    %p148 = scmp.ne.s32.totalorder %s134, %s135
    %p149 = scmp.eq.s32.totalorder %s17, 3
    %p150 = por %p148, %p149
    %p152 = scmp.ne.s32.totalorder %s135, %s151
    %p153 = scmp.eq.s32.totalorder %s17, 0
    %p154 = por %p152, %p153
    %p155 = scmp.le.s32.totalorder 1, %s11
    %p156 = scmp.lt.s32.totalorder %s11, 5
    %p157 = pnand %p155, %p156
    %p158 = pneg %p157
    // Predicated region
    $region9: #{cnn_forward.24} parent=5 // pred_check
      _
    $region10: #{cnn_forward.24} parent=5 // pred_check_branch
      %160 = sbr.rel (%p157) target = $region12
    $region11: #{cnn_forward.24} parent=5 // pred_region
      %s161 = ssub.s32 %s11, 1
      // Predicated region
      $region13: #{cnn_forward.24} parent=11 // pred_check
        %p162 = pneg %p58
      $region14: #{cnn_forward.24} parent=11 // pred_check_branch
        %164 = sbr.rel (%p162) target = $region16
      $region15: #{cnn_forward.24} parent=11 // pred_region
        _
      $region16: #{cnn_forward.24} parent=11 // pred_fallthru
        _
      // Predicated region
      $region17: #{cnn_forward.24} parent=11 // pred_check
        %p165 = pneg %p79
      $region18: #{cnn_forward.24} parent=11 // pred_check_branch
        %167 = sbr.rel (%p165) target = $region20
      $region19: #{cnn_forward.24} parent=11 // pred_region
        _
      $region20: #{cnn_forward.24} parent=11 // pred_fallthru
        _
      // Predicated region
      $region21: #{cnn_forward.24} parent=11 // pred_check
        %p168 = pneg %p100
      $region22: #{cnn_forward.24} parent=11 // pred_check_branch
        %170 = sbr.rel (%p168) target = $region24
      $region23: #{cnn_forward.24} parent=11 // pred_region
        _
      $region24: #{cnn_forward.24} parent=11 // pred_fallthru
        _
      // Predicated region
      $region25: #{cnn_forward.24} parent=11 // pred_check
        %p171 = pneg %p121
      $region26: #{cnn_forward.24} parent=11 // pred_check_branch
        %173 = sbr.rel (%p171) target = $region28
      $region27: #{cnn_forward.24} parent=11 // pred_region
        _
      $region28: #{cnn_forward.24} parent=11 // pred_fallthru
        _
    $region12: #{cnn_forward.24} parent=5 // pred_fallthru
      _
    %p174 = scmp.lt.s32.totalorder %s11, 4
    // Predicated region
    $region29: #{cnn_forward.24} parent=5 // pred_check
      %p175 = pneg %p174
    $region30: #{cnn_forward.24} parent=5 // pred_check_branch
      %177 = sbr.rel (%p175) target = $region32
    $region31: #{cnn_forward.24} parent=5 // pred_region
      // Predicated region
      $region33: #{cnn_forward.24} parent=31 // pred_check
        %p178 = pneg %p31
      $region34: #{cnn_forward.24} parent=31 // pred_check_branch
        %180 = sbr.rel (%p178) target = $region36
      $region35: #{cnn_forward.24} parent=31 // pred_region
        %s181 = smul.u32 4, %s11
        %p182 = scmp.lt.s32.totalorder %s181, 15
        %s183 = scalar_select %p182, %s181, 15
        %s184 = smul.addr %s183, 8
        %s185 = scalar_lea.vmem %s0, %s184
        %s186 = smul.u32 4, %s11
      $region36: #{cnn_forward.24} parent=31 // pred_fallthru
        _
    $region32: #{cnn_forward.24} parent=5 // pred_fallthru
      _
    %p187 = scmp.le.s32.totalorder 1, %s11
    %p188 = scmp.lt.s32.totalorder %s11, 5
    %p189 = pnand %p187, %p188
    %p190 = pneg %p189
    // Predicated region
    $region37: #{cnn_forward.24} parent=5 // pred_check
      _
    $region38: #{cnn_forward.24} parent=5 // pred_check_branch
      %192 = sbr.rel (%p189) target = $region40
    $region39: #{cnn_forward.24} parent=5 // pred_region
      %s193 = ssub.s32 %s11, 1
      %s194 = smul.u32 4, %s16
      %p195 = scmp.lt.s32.totalorder %s194, 15
      %s196 = scalar_select %p195, %s194, 15
      %s197 = smul.addr %s196, 8
      %s198 = scalar_lea.vmem %s0, %s197
      %p199 = pneg %p37
      %p200 = pneg %p34
      %p201 = pneg %p58
      %p202 = pneg %p55
      %p203 = pneg %p79
      %p204 = pneg %p76
      %p205 = pneg %p100
      %p206 = pneg %p97
      %p207 = pneg %p121
      %p208 = pneg %p118
      %p209 = pneg %p147
      %p210 = pneg %p144
      %s211 = smul.u32 4, %s16
      %p212 = scmp.lt.s32.totalorder %s211, 15
      %s213 = scalar_select %p212, %s211, 15
      %s214 = smul.addr %s213, 4
      %s215 = scalar_lea.vmem %s5, %s214
      %s216 = smul.u32 4, %s16
      %p217 = scmp.lt.s32.totalorder %s216, 15
      %s218 = scalar_select %p217, %s216, 15
      %s219 = smul.addr %s218, 8
      %s220 = scalar_lea.vmem %s0, %s219
      %s221 = smul.u32 4, %s16
      %s222 = smul.u32 4, %s16
      %p223 = scmp.lt.s32.totalorder %s222, 15
      %s224 = scalar_select %p223, %s222, 15
      %s225 = smul.addr %s224, 4
      %s226 = scalar_lea.vmem %s5, %s225
      %s227 = smul.u32 4, %s16
      %v228 = vld [vmem:[%s1] sm:$0xff]
      %v229 = vmul.f32 %v228, 0.00048828125
      %v230 = vld [vmem:[%s2] sm:$0xff]
      %v231 = vmul.f32 %v230, 0.00048828125
      %v232 = vmul.f32 %v229, %v229
      %v233 = vsub.f32 %v231, %v232
      %v234 = vmax.f32 %v233, 0.0
      %v235 = vadd.f32 %v234, 1e-05
      %v236 = vrsqrt.pop %v235
      %v237 = vmul.f32 %v236, %v235
      %v238 = vmul.f32 %v237, %v236
      %v239 = vmul.f32 0.5, %v238
      %v240 = vsub.f32 1.5, %v239
      %v241 = vmul.f32 %v236, %v240
      %vm242 = vweird.f32 %v235
      %vm243 = vweird.f32 %v236
      %vm244 = vmor %vm242, %vm243
      %v245 = vsel %vm244, %v236, %v241
      %v246 = vld [vmem:[%s3] sm:$0xff]
      %v247 = vmul.f32 %v245, %v246
      %v248 = vld [vmem:[%s4] sm:$0xff]
      %v249 = vmul.f32 %v229, %v247
      %v250 = vsub.f32 %v248, %v249
      %v251 = vld [vmem:[%s220] sm:$0xff]
      %v252 = vld [vmem:[%s220 + $0x8] sm:$0xff]
      %v253 = vld [vmem:[%s220 + $0x10] sm:$0xff]
      %v254 = vld [vmem:[%s220 + $0x18] sm:$0xff]
      %256 = vset.pattern.permute.xlu0 0
      %257 = vperm.xlu0 %256, %v247
      %v258 = vpop.permute.xlu0 %257
      %v260 = vmul.f32 %v251, %v258
      %v261 = vmul.f32 %v252, %v258
      %v262 = vmul.f32 %v253, %v258
      %v263 = vmul.f32 %v254, %v258
      %265 = vset.pattern.permute.xlu0 0
      %266 = vperm.xlu0 %265, %v250
      %v267 = vpop.permute.xlu0 %266
      %v269 = vadd.f32 %v260, %v267
      %v270 = vadd.f32 %v261, %v267
      %v271 = vadd.f32 %v262, %v267
      %v272 = vadd.f32 %v263, %v267
      %v273 = vmax.f32 %v269, 0.0
      %v274 = vmax.f32 %v270, 0.0
      %v275 = vmax.f32 %v271, 0.0
      %v276 = vmax.f32 %v272, 0.0
      %v277 = vpack.c.bf16 %v274, %v273
      %v278 = vpack.c.bf16 %v276, %v275
      %279 = vst [vmem:[%s226] sm:$0xff] %v277
      %280 = vst [vmem:[%s226 + $0x8] sm:$0xff] %v278
      %s281 = smul.u32 4, %s16
      %p282 = scmp.lt.s32.totalorder %s281, 15
      %s283 = scalar_select %p282, %s281, 15
      %s284 = smul.addr %s283, 4
      %s285 = scalar_lea.vmem %s5, %s284
      // Predicated region
      $region41: #{cnn_forward.24} parent=39 // pred_check
        %p286 = pneg %p144
      $region42: #{cnn_forward.24} parent=39 // pred_check_branch
        %288 = sbr.rel (%p286) target = $region44
      $region43: #{cnn_forward.24} parent=39 // pred_region
        %s289 = smul.u32 4, %s16
      $region44: #{cnn_forward.24} parent=39 // pred_fallthru
        _
    $region40: #{cnn_forward.24} parent=5 // pred_fallthru
      _
    %p290 = scmp.le.s32.totalorder 2, %s11
    // Predicated region
    $region45: #{cnn_forward.24} parent=5 // pred_check
      %p291 = pneg %p290
    $region46: #{cnn_forward.24} parent=5 // pred_check_branch
      %293 = sbr.rel (%p291) target = $region48
    $region47: #{cnn_forward.24} parent=5 // pred_region
      %s294 = ssub.s32 %s11, 2
      // Predicated region
      $region49: #{cnn_forward.24} parent=47 // pred_check
        %p295 = pneg %p150
      $region50: #{cnn_forward.24} parent=47 // pred_check_branch
        %297 = sbr.rel (%p295) target = $region52
      $region51: #{cnn_forward.24} parent=47 // pred_region
        %s298 = smul.u32 4, %s17
        %p299 = scmp.lt.s32.totalorder %s298, 15
        %s300 = scalar_select %p299, %s298, 15
        %s301 = smul.addr %s300, 4
        %s302 = scalar_lea.vmem %s5, %s301
      $region52: #{cnn_forward.24} parent=47 // pred_fallthru
        _
    $region48: #{cnn_forward.24} parent=5 // pred_fallthru
      _
  $region6: #{cnn_forward.24} parent=0 // loop_footer
    %s15 = sadd.s32 1, %s11
  $region7: #{cnn_forward.24} parent=0 // loop_footer_branch
    %10 = sbr.rel target = $region3
  $region8: #{cnn_forward.24} parent=0 // loop_exit
    _

// kernel: cnn_forward.25
$region0: #{cnn_forward.25}
  #allocation0 [shape = 'u32[]', space=smem, size = 0x4, offset = 0x4, fixed_abs, tag = 'smem constant byte address 0x4 - core index']
  #allocation1 [shape = 'u32[72,128]{1,0:T(1,128)}', space=vmem, size = 0x9000, scoped, tag = 'internal scratch']
  %s0 = inlined_call_operand.vmem [shape: f32[8,72], index: 0, kind: input, shape index: {}]
  %s1 = inlined_call_operand.vmem [shape: bf16[8,72], index: 1, kind: output, shape index: {}]
  %s2 = sld [smem:[#allocation0]]
  $region14: #{cnn_forward.25} parent=0
    _
  %s4 = ssub.s32 1, %s2
  %s5 = scalar_select 0, %s4, %s2
  // Predicated region
  $region2: #{cnn_forward.25} parent=0 // pred_check
    _
  $region3: #{cnn_forward.25} parent=0 // pred_check_branch
    %7 = sbr.rel (0) target = $region5
  $region4: #{cnn_forward.25} parent=0 // pred_region
    _
  $region5: #{cnn_forward.25} parent=0 // pred_fallthru
    _
  %v8 = vld [vmem:[%s0] sm:$0xff]
  %v9 = vand.u32 2147483647, %v8
  %v10 = vmul.f32 %v8, %v9
  %v11 = vpack.c.bf16 %v10, %v10
  %vm12 = vcmask 584704
  %13 = vst.msk [vmem:[%s1] sm:$0xf] %vm12, %v11
  // Predicated region
  $region6: #{cnn_forward.25} parent=0 // pred_check
    _
  $region7: #{cnn_forward.25} parent=0 // pred_check_branch
    %15 = sbr.rel (0) target = $region9
  $region8: #{cnn_forward.25} parent=0 // pred_region
    _
  $region9: #{cnn_forward.25} parent=0 // pred_fallthru
    _
  // Predicated region
  $region10: #{cnn_forward.25} parent=0 // pred_check
    _
  $region11: #{cnn_forward.25} parent=0 // pred_check_branch
    %17 = sbr.rel (0) target = $region13
  $region12: #{cnn_forward.25} parent=0 // pred_region
    _
  $region13: #{cnn_forward.25} parent=0 // pred_fallthru
    _

// kernel: cnn_forward.26
$region0: #{cnn_forward.26}
  #allocation0 [shape = 'u32[]', space=smem, size = 0x4, offset = 0x4, fixed_abs, tag = 'smem constant byte address 0x4 - core index']
  #allocation1 [shape = 'u32[72,128]{1,0:T(1,128)}', space=vmem, size = 0x9000, scoped, tag = 'internal scratch']
  %s0 = inlined_call_operand.vmem [shape: bf16[72,2048], index: 0, kind: input, shape index: {}]
  %s1 = inlined_call_operand.vmem [shape: bf16[8,72], index: 1, kind: input, shape index: {}]
  %s2 = inlined_call_operand.vmem [shape: f32[8,1], index: 2, kind: input, shape index: {}]
  %s3 = inlined_call_operand.vmem [shape: f32[8,2048], index: 3, kind: output, shape index: {0}]
  %s4 = inlined_call_operand.vmem [shape: f32[8,1], index: 4, kind: output, shape index: {1}]
  %s5 = inlined_call_operand.vmem [shape: f32[8,1], index: 5, kind: output, shape index: {2}]
  %6 = xla_tuple %s3, %s4, %s5
  %s7 = sld [smem:[#allocation0]]
  $region88: #{cnn_forward.26} parent=0
    _
  %s9 = ssub.s32 1, %s7
  %s10 = scalar_select 0, %s9, %s7
  $region1: #{cnn_forward.26} parent=0
    #allocation2 [shape = 'u8[147456]{0}', space=vmem, size = 0x24000, scoped, tag = 'input window, operand 0']
    loop: start=0, step=1, limit=6
    $region2: #{cnn_forward.26} parent=1 // loop_pre_header
      _
    $region3: #{cnn_forward.26} parent=1 // loop_header
      %s12 = sphi 0, %s16
      %p13 = scmp.ge.s32.totalorder %s12, 6
      %s22 = sphi 0, %s24
      %s25 = sphi 0, %s22
      %s26 = sphi 0, %s25
      %s42 = sphi 0, %s26
      %s46 = sphi 0, %s46
      %s48 = sphi 0, %s46
      %s49 = sphi 0, %s48
      %s63 = sphi 0, %s49
      %s67 = sphi 0, %s67
      %s69 = sphi 0, %s67
      %s70 = sphi 0, %s69
      %s84 = sphi 0, %s70
      %s90 = sphi 0, %s92
      %s93 = sphi 0, %s90
      %s94 = sphi 0, %s93
      %s110 = sphi 0, %s94
      %s114 = sphi 0, %s114
      %s116 = sphi 0, %s114
      %s117 = sphi 0, %s116
      %s131 = sphi 0, %s117
      %s135 = sphi 0, %s135
      %s137 = sphi 0, %s135
      %s138 = sphi 0, %s137
      %s152 = sphi 0, %s138
    $region4: #{cnn_forward.26} parent=1 // loop_header_branch
      %15 = sbr.rel (%p13) target = $region8
    $region5: #{cnn_forward.26} parent=1 // loop_body
      %s17 = ssub.s32 %s12, 1
      %s18 = ssub.s32 %s12, 2
      %s19 = sadd.s32 %s12, 1
      %s20 = ssub.s32 %s12, %s19
      %p21 = scmp.eq.s32.totalorder %s20, 0
      %s23 = sadd.s32 %s22, 1
      %s24 = scalar_select %p21, %s22, %s23
      %p27 = pneg %p21
      %p28 = scmp.eq.s32.totalorder %s12, 3
      %p29 = por %p27, %p28
      %p30 = scmp.ne.s32.totalorder %s22, %s25
      %p31 = scmp.eq.s32.totalorder %s12, 0
      %p32 = por %p30, %p31
      %p33 = scmp.ne.s32.totalorder %s22, %s25
      %p34 = scmp.eq.s32.totalorder %s17, 3
      %p35 = por %p33, %p34
      %p36 = scmp.ne.s32.totalorder %s25, %s26
      %p37 = scmp.eq.s32.totalorder %s17, 0
      %p38 = por %p36, %p37
      %p39 = scmp.ne.s32.totalorder %s25, %s26
      %p40 = scmp.eq.s32.totalorder %s18, 3
      %p41 = por %p39, %p40
      %p43 = scmp.ne.s32.totalorder %s26, %s42
      %p44 = scmp.eq.s32.totalorder %s18, 0
      %p45 = por %p43, %p44
      %s47 = sadd.s32 %s46, 1
      %p50 = scmp.eq.s32.totalorder %s12, 3
      %p51 = scmp.ne.s32.totalorder %s46, %s48
      %p52 = scmp.eq.s32.totalorder %s12, 0
      %p53 = por %p51, %p52
      %p54 = scmp.ne.s32.totalorder %s46, %s48
      %p55 = scmp.eq.s32.totalorder %s17, 3
      %p56 = por %p54, %p55
      %p57 = scmp.ne.s32.totalorder %s48, %s49
      %p58 = scmp.eq.s32.totalorder %s17, 0
      %p59 = por %p57, %p58
      %p60 = scmp.ne.s32.totalorder %s48, %s49
      %p61 = scmp.eq.s32.totalorder %s18, 3
      %p62 = por %p60, %p61
      %p64 = scmp.ne.s32.totalorder %s49, %s63
      %p65 = scmp.eq.s32.totalorder %s18, 0
      %p66 = por %p64, %p65
      %s68 = sadd.s32 %s67, 1
      %p71 = scmp.eq.s32.totalorder %s12, 3
      %p72 = scmp.ne.s32.totalorder %s67, %s69
      %p73 = scmp.eq.s32.totalorder %s12, 0
      %p74 = por %p72, %p73
      %p75 = scmp.ne.s32.totalorder %s67, %s69
      %p76 = scmp.eq.s32.totalorder %s17, 3
      %p77 = por %p75, %p76
      %p78 = scmp.ne.s32.totalorder %s69, %s70
      %p79 = scmp.eq.s32.totalorder %s17, 0
      %p80 = por %p78, %p79
      %p81 = scmp.ne.s32.totalorder %s69, %s70
      %p82 = scmp.eq.s32.totalorder %s18, 3
      %p83 = por %p81, %p82
      %p85 = scmp.ne.s32.totalorder %s70, %s84
      %p86 = scmp.eq.s32.totalorder %s18, 0
      %p87 = por %p85, %p86
      %s88 = ssub.s32 %s12, %s19
      %p89 = scmp.eq.s32.totalorder %s88, 0
      %s91 = sadd.s32 %s90, 1
      %s92 = scalar_select %p89, %s90, %s91
      %p95 = pneg %p89
      %p96 = scmp.eq.s32.totalorder %s12, 3
      %p97 = por %p95, %p96
      %p98 = scmp.ne.s32.totalorder %s90, %s93
      %p99 = scmp.eq.s32.totalorder %s12, 0
      %p100 = por %p98, %p99
      %p101 = scmp.ne.s32.totalorder %s90, %s93
      %p102 = scmp.eq.s32.totalorder %s17, 3
      %p103 = por %p101, %p102
      %p104 = scmp.ne.s32.totalorder %s93, %s94
      %p105 = scmp.eq.s32.totalorder %s17, 0
      %p106 = por %p104, %p105
      %p107 = scmp.ne.s32.totalorder %s93, %s94
      %p108 = scmp.eq.s32.totalorder %s18, 3
      %p109 = por %p107, %p108
      %p111 = scmp.ne.s32.totalorder %s94, %s110
      %p112 = scmp.eq.s32.totalorder %s18, 0
      %p113 = por %p111, %p112
      %s115 = sadd.s32 %s114, 1
      %p118 = scmp.eq.s32.totalorder %s12, 3
      %p119 = scmp.ne.s32.totalorder %s114, %s116
      %p120 = scmp.eq.s32.totalorder %s12, 0
      %p121 = por %p119, %p120
      %p122 = scmp.ne.s32.totalorder %s114, %s116
      %p123 = scmp.eq.s32.totalorder %s17, 3
      %p124 = por %p122, %p123
      %p125 = scmp.ne.s32.totalorder %s116, %s117
      %p126 = scmp.eq.s32.totalorder %s17, 0
      %p127 = por %p125, %p126
      %p128 = scmp.ne.s32.totalorder %s116, %s117
      %p129 = scmp.eq.s32.totalorder %s18, 3
      %p130 = por %p128, %p129
      %p132 = scmp.ne.s32.totalorder %s117, %s131
      %p133 = scmp.eq.s32.totalorder %s18, 0
      %p134 = por %p132, %p133
      %s136 = sadd.s32 %s135, 1
      %p139 = scmp.eq.s32.totalorder %s12, 3
      %p140 = scmp.ne.s32.totalorder %s135, %s137
      %p141 = scmp.eq.s32.totalorder %s12, 0
      %p142 = por %p140, %p141
      %p143 = scmp.ne.s32.totalorder %s135, %s137
      %p144 = scmp.eq.s32.totalorder %s17, 3
      %p145 = por %p143, %p144
      %p146 = scmp.ne.s32.totalorder %s137, %s138
      %p147 = scmp.eq.s32.totalorder %s17, 0
      %p148 = por %p146, %p147
      %p149 = scmp.ne.s32.totalorder %s137, %s138
      %p150 = scmp.eq.s32.totalorder %s18, 3
      %p151 = por %p149, %p150
      %p153 = scmp.ne.s32.totalorder %s138, %s152
      %p154 = scmp.eq.s32.totalorder %s18, 0
      %p155 = por %p153, %p154
      %p156 = scmp.le.s32.totalorder 1, %s12
      %p157 = scmp.lt.s32.totalorder %s12, 5
      %p158 = pnand %p156, %p157
      %p159 = pneg %p158
      // Predicated region
      $region9: #{cnn_forward.26} parent=5 // pred_check
        _
      $region10: #{cnn_forward.26} parent=5 // pred_check_branch
        %161 = sbr.rel (%p158) target = $region12
      $region11: #{cnn_forward.26} parent=5 // pred_region
        %s162 = ssub.s32 %s12, 1
        // Predicated region
        $region13: #{cnn_forward.26} parent=11 // pred_check
          %p163 = pneg %p59
        $region14: #{cnn_forward.26} parent=11 // pred_check_branch
          %165 = sbr.rel (%p163) target = $region16
        $region15: #{cnn_forward.26} parent=11 // pred_region
          _
        $region16: #{cnn_forward.26} parent=11 // pred_fallthru
          _
        // Predicated region
        $region17: #{cnn_forward.26} parent=11 // pred_check
          %p166 = pneg %p80
        $region18: #{cnn_forward.26} parent=11 // pred_check_branch
          %168 = sbr.rel (%p166) target = $region20
        $region19: #{cnn_forward.26} parent=11 // pred_region
          _
        $region20: #{cnn_forward.26} parent=11 // pred_fallthru
          _
      $region12: #{cnn_forward.26} parent=5 // pred_fallthru
        _
      %p169 = scmp.lt.s32.totalorder %s12, 4
      // Predicated region
      $region21: #{cnn_forward.26} parent=5 // pred_check
        %p170 = pneg %p169
      $region22: #{cnn_forward.26} parent=5 // pred_check_branch
        %172 = sbr.rel (%p170) target = $region24
      $region23: #{cnn_forward.26} parent=5 // pred_region
        // Predicated region
        $region25: #{cnn_forward.26} parent=23 // pred_check
          %p173 = pneg %p32
        $region26: #{cnn_forward.26} parent=23 // pred_check_branch
          %175 = sbr.rel (%p173) target = $region28
        $region27: #{cnn_forward.26} parent=23 // pred_region
          %s176 = sand.u32 %s22, 1
          %s177 = sand.u32 %s22, 1
          %s178 = smul.addr %s177, 144
          %s179 = scalar_lea.vmem [#allocation2], %s178
          %s180 = smul.u32 4, %s12
          %s181 = smul.addr %s180, 4
          %s182 = scalar_lea.vmem %s0, %s181
          // Predicated region
          $region29: #{cnn_forward.26} parent=27 // pred_check
            _
          $region30: #{cnn_forward.26} parent=27 // pred_check_branch
            %184 = sbr.rel (0) target = $region32
          $region31: #{cnn_forward.26} parent=27 // pred_region
            // Predicated region
            $region33: #{cnn_forward.26} parent=31 // pred_check
              _
            $region34: #{cnn_forward.26} parent=31 // pred_check_branch
              %186 = sbr.rel (0) target = $region36
            $region35: #{cnn_forward.26} parent=31 // pred_region
              loop: start=0, step=1, limit=1
              $region37: #{cnn_forward.26} parent=35 // loop_pre_header
                _
              $region38: #{cnn_forward.26} parent=35 // loop_header
                %s188 = sphi 0, %s192
                %p189 = scmp.ge.s32.totalorder %s188, 1
                %s193 = sphi %s182, %s182
                %s194 = sphi %s179, %s179
              $region39: #{cnn_forward.26} parent=35 // loop_header_branch
                %191 = sbr.rel (%p189) target = $region43
              $region40: #{cnn_forward.26} parent=35 // loop_body
                %v195 = vld [vmem:[%s193] sm:$0xff]
                %196 = vst [vmem:[%s194] sm:$0xff] %v195
                %v197 = vld [vmem:[%s193 + $0x8] sm:$0xff]
                %198 = vst [vmem:[%s194 + $0x8] sm:$0xff] %v197
                %v199 = vld [vmem:[%s193 + $0x40] sm:$0xff]
                %200 = vst [vmem:[%s194 + $0x10] sm:$0xff] %v199
                %v201 = vld [vmem:[%s193 + $0x48] sm:$0xff]
                %202 = vst [vmem:[%s194 + $0x18] sm:$0xff] %v201
                %v203 = vld [vmem:[%s193 + $0x80] sm:$0xff]
                %204 = vst [vmem:[%s194 + $0x20] sm:$0xff] %v203
                %v205 = vld [vmem:[%s193 + $0x88] sm:$0xff]
                %206 = vst [vmem:[%s194 + $0x28] sm:$0xff] %v205
                %v207 = vld [vmem:[%s193 + $0xc0] sm:$0xff]
                %208 = vst [vmem:[%s194 + $0x30] sm:$0xff] %v207
                %v209 = vld [vmem:[%s193 + $0xc8] sm:$0xff]
                %210 = vst [vmem:[%s194 + $0x38] sm:$0xff] %v209
                %v211 = vld [vmem:[%s193 + $0x100] sm:$0xff]
                %212 = vst [vmem:[%s194 + $0x40] sm:$0xff] %v211
                %v213 = vld [vmem:[%s193 + $0x108] sm:$0xff]
                %214 = vst [vmem:[%s194 + $0x48] sm:$0xff] %v213
                %v215 = vld [vmem:[%s193 + $0x140] sm:$0xff]
                %216 = vst [vmem:[%s194 + $0x50] sm:$0xff] %v215
                %v217 = vld [vmem:[%s193 + $0x148] sm:$0xff]
                %218 = vst [vmem:[%s194 + $0x58] sm:$0xff] %v217
                %v219 = vld [vmem:[%s193 + $0x180] sm:$0xff]
                %220 = vst [vmem:[%s194 + $0x60] sm:$0xff] %v219
                %v221 = vld [vmem:[%s193 + $0x188] sm:$0xff]
                %222 = vst [vmem:[%s194 + $0x68] sm:$0xff] %v221
                %v223 = vld [vmem:[%s193 + $0x1c0] sm:$0xff]
                %224 = vst [vmem:[%s194 + $0x70] sm:$0xff] %v223
                %v225 = vld [vmem:[%s193 + $0x1c8] sm:$0xff]
                %226 = vst [vmem:[%s194 + $0x78] sm:$0xff] %v225
                %v227 = vld [vmem:[%s193 + $0x200] sm:$0xff]
                %228 = vst [vmem:[%s194 + $0x80] sm:$0xff] %v227
                %v229 = vld [vmem:[%s193 + $0x208] sm:$0xff]
                %230 = vst [vmem:[%s194 + $0x88] sm:$0xff] %v229
              $region41: #{cnn_forward.26} parent=35 // loop_footer
                %s192 = sadd.s32 1, %s188
              $region42: #{cnn_forward.26} parent=35 // loop_footer_branch
                %187 = sbr.rel target = $region38
              $region43: #{cnn_forward.26} parent=35 // loop_exit
                _
            $region36: #{cnn_forward.26} parent=31 // pred_fallthru
              _
            // Predicated region
            $region44: #{cnn_forward.26} parent=31 // pred_check
              _
            $region45: #{cnn_forward.26} parent=31 // pred_check_branch
              %232 = sbr.rel target = $region47
            $region46: #{cnn_forward.26} parent=31 // pred_region
              _
            $region47: #{cnn_forward.26} parent=31 // pred_fallthru
              _
          $region32: #{cnn_forward.26} parent=27 // pred_fallthru
            _
          %233 = vnop
        $region28: #{cnn_forward.26} parent=23 // pred_fallthru
          _
      $region24: #{cnn_forward.26} parent=5 // pred_fallthru
        _
      %p234 = scmp.le.s32.totalorder 1, %s12
      %p235 = scmp.lt.s32.totalorder %s12, 5
      %p236 = pnand %p234, %p235
      %p237 = pneg %p236
      // Predicated region
      $region48: #{cnn_forward.26} parent=5 // pred_check
        _
      $region49: #{cnn_forward.26} parent=5 // pred_check_branch
        %239 = sbr.rel (%p236) target = $region51
      $region50: #{cnn_forward.26} parent=5 // pred_region
        %s240 = ssub.s32 %s12, 1
        %s241 = sand.u32 %s25, 1
        %s242 = sand.u32 %s25, 1
        %s243 = smul.addr %s242, 144
        %s244 = scalar_lea.vmem [#allocation2], %s243
        // Predicated region
        $region52: #{cnn_forward.26} parent=50 // pred_check
          %p245 = pneg %p38
        $region53: #{cnn_forward.26} parent=50 // pred_check_branch
          %247 = sbr.rel (%p245) target = $region55
        $region54: #{cnn_forward.26} parent=50 // pred_region
          _
        $region55: #{cnn_forward.26} parent=50 // pred_fallthru
          _
        %s248 = sand.u32 %s25, 1
        %s249 = sand.u32 %s25, 1
        %s250 = smul.addr %s249, 144
        %s251 = scalar_lea.vmem [#allocation2], %s250
        %p252 = pneg %p38
        %p253 = pneg %p35
        %p254 = pneg %p59
        %p255 = pneg %p56
        %p256 = pneg %p80
        %p257 = pneg %p77
        %p258 = pneg %p106
        %p259 = pneg %p103
        %s260 = smul.u32 4, %s17
        %p261 = scmp.lt.s32.totalorder %s260, 15
        %s262 = scalar_select %p261, %s260, 15
        %s263 = smul.addr %s262, 8
        %s264 = scalar_lea.vmem %s3, %s263
        %p265 = pneg %p127
        %p266 = pneg %p124
        %p267 = pneg %p148
        %p268 = pneg %p145
        %s269 = smul.u32 4, %s17
        %s270 = smul.u32 4, %s17
        %p271 = scmp.lt.s32.totalorder %s270, 15
        %s272 = scalar_select %p271, %s270, 15
        %s273 = smul.addr %s272, 8
        %s274 = scalar_lea.vmem %s3, %s273
        %s275 = smul.u32 4, %s17
        %p277 = scmp.eq.s32.totalorder %s17, 0
        // Predicated region
        $region56: #{cnn_forward.26} parent=50 // pred_check
          %p278 = pneg %p277
        $region57: #{cnn_forward.26} parent=50 // pred_check_branch
          %280 = sbr.rel (%p278) target = $region59
        $region58: #{cnn_forward.26} parent=50 // pred_region
          %vm281 = vcmask 7168
          %282 = vst.msk [vmem:[%s4] sm:$0xff] %vm281, 0.0
          %283 = vst.msk [vmem:[%s5] sm:$0xff] %vm281, 0.0
        $region59: #{cnn_forward.26} parent=50 // pred_fallthru
          _
        %v284 = vld [vmem:[%s1] sm:$0xf]
        %v285 = vld [vmem:[%s244] sm:$0xff]
        %v286 = vld [vmem:[%s244 + $0x8] sm:$0xff]
        %v287 = vld [vmem:[%s244 + $0x10] sm:$0xff]
        %v288 = vld [vmem:[%s244 + $0x18] sm:$0xff]
        %v289 = vld [vmem:[%s244 + $0x20] sm:$0xff]
        %v290 = vld [vmem:[%s244 + $0x28] sm:$0xff]
        %v291 = vld [vmem:[%s244 + $0x30] sm:$0xff]
        %v292 = vld [vmem:[%s244 + $0x38] sm:$0xff]
        %v293 = vld [vmem:[%s244 + $0x40] sm:$0xff]
        %v294 = vld [vmem:[%s244 + $0x48] sm:$0xff]
        %v295 = vld [vmem:[%s244 + $0x50] sm:$0xff]
        %v296 = vld [vmem:[%s244 + $0x58] sm:$0xff]
        %v297 = vld [vmem:[%s244 + $0x60] sm:$0xff]
        %v298 = vld [vmem:[%s244 + $0x68] sm:$0xff]
        %v299 = vld [vmem:[%s244 + $0x70] sm:$0xff]
        %v300 = vld [vmem:[%s244 + $0x78] sm:$0xff]
        %v301 = vld [vmem:[%s244 + $0x80] sm:$0xff]
        %v302 = vld [vmem:[%s244 + $0x88] sm:$0xff]
        %v303 = vld [vmem:[%s2] sm:$0xff]
        %305 = vset.pattern.permute.xlu0 0
        %306 = vperm.xlu0 %305, %v303
        %v307 = vpop.permute.xlu0 %306
        %v327 = vunpack.c.l.b16 %v285
        %v328 = vunpack.c.h.b16 %v285
        %v329 = vunpack.c.l.b16 %v286
        %v330 = vunpack.c.h.b16 %v286
        %v331 = vunpack.c.l.b16 %v287
        %v332 = vunpack.c.h.b16 %v287
        %v333 = vunpack.c.l.b16 %v288
        %v334 = vunpack.c.h.b16 %v288
        %v335 = vunpack.c.l.b16 %v289
        %v336 = vunpack.c.h.b16 %v289
        %v337 = vunpack.c.l.b16 %v290
        %v338 = vunpack.c.h.b16 %v290
        %v339 = vunpack.c.l.b16 %v291
        %v340 = vunpack.c.h.b16 %v291
        %v341 = vunpack.c.l.b16 %v292
        %v342 = vunpack.c.h.b16 %v292
        %v343 = vunpack.c.l.b16 %v293
        %v344 = vunpack.c.h.b16 %v293
        %v345 = vunpack.c.l.b16 %v294
        %v346 = vunpack.c.h.b16 %v294
        %v347 = vunpack.c.l.b16 %v295
        %v348 = vunpack.c.h.b16 %v295
        %v349 = vunpack.c.l.b16 %v296
        %v350 = vunpack.c.h.b16 %v296
        %v351 = vunpack.c.l.b16 %v297
        %v352 = vunpack.c.h.b16 %v297
        %v353 = vunpack.c.l.b16 %v298
        %v354 = vunpack.c.h.b16 %v298
        %v355 = vunpack.c.l.b16 %v299
        %v356 = vunpack.c.h.b16 %v299
        %v357 = vunpack.c.l.b16 %v300
        %v358 = vunpack.c.h.b16 %v300
        %v359 = vunpack.c.l.b16 %v301
        %v360 = vunpack.c.h.b16 %v301
        %v361 = vunpack.c.l.b16 %v302
        %v362 = vunpack.c.h.b16 %v302
        %v363 = vpack.c.b16 %v331, %v327
        %v364 = vpack.c.b16 %v332, %v328
        %v365 = vpack.c.b16 %v333, %v329
        %v366 = vpack.c.b16 %v334, %v330
        %v367 = vpack.c.b16 %v339, %v335
        %v368 = vpack.c.b16 %v340, %v336
        %v369 = vpack.c.b16 %v341, %v337
        %v370 = vpack.c.b16 %v342, %v338
        %v371 = vpack.c.b16 %v347, %v343
        %v372 = vpack.c.b16 %v348, %v344
        %v373 = vpack.c.b16 %v349, %v345
        %v374 = vpack.c.b16 %v350, %v346
        %v375 = vpack.c.b16 %v355, %v351
        %v376 = vpack.c.b16 %v356, %v352
        %v377 = vpack.c.b16 %v357, %v353
        %v378 = vpack.c.b16 %v358, %v354
        %v379 = vpack.c.b16 %v359, %v359
        %v380 = vpack.c.b16 %v360, %v360
        %v381 = vpack.c.b16 %v361, %v361
        %v382 = vpack.c.b16 %v362, %v362
        %vm399 = vcmask 588800
        %v401 = vsel %vm399, %v284, 0
        %vm403 = vcmask 1043456
        %v405 = vsel %vm403, %v379, 0
        %v408 = vsel %vm403, %v380, 0
        %v411 = vsel %vm403, %v381, 0
        %v414 = vsel %vm403, %v382, 0
        %416 = vmatpush.bf16.msra.mxu0 0
        %417 = vmatpush.bf16.msra.mxu0 0
        %418 = vmatpush.bf16.msra.mxu0 0
        %419 = vmatpush.bf16.msra.mxu0 %v405
        %420 = vmatpush.bf16.msra.mxu0 %v375
        %421 = vmatpush.bf16.msra.mxu0 %v371
        %422 = vmatpush.bf16.msra.mxu0 %v367
        %423 = vmatpush.bf16.msra.mxu0 %v363
        %424 = vmatmul.bf16.gmra.mxu0 %v401
        %v425 = vpop.f32.mrf.mxu0
        %v426 = vadd.f32 %v307, %v425
        %v427 = vpop.f32.mrf.mxu0
        %428 = vdwg.mxu0
        %429 = vmatpush.bf16.msra.mxu0 0
        %430 = vmatpush.bf16.msra.mxu0 0
        %431 = vmatpush.bf16.msra.mxu0 0
        %432 = vmatpush.bf16.msra.mxu0 %v408
        %433 = vmatpush.bf16.msra.mxu0 %v376
        %434 = vmatpush.bf16.msra.mxu0 %v372
        %435 = vmatpush.bf16.msra.mxu0 %v368
        %436 = vmatpush.bf16.msra.mxu0 %v364
        %437 = vmatmul.bf16.gmra.mxu0 %v401
        %v438 = vpop.f32.mrf.mxu0
        %v439 = vadd.f32 %v307, %v438
        %v440 = vpop.f32.mrf.mxu0
        %441 = vdwg.mxu0
        %442 = vmatpush.bf16.msra.mxu0 0
        %443 = vmatpush.bf16.msra.mxu0 0
        %444 = vmatpush.bf16.msra.mxu0 0
        %445 = vmatpush.bf16.msra.mxu0 %v411
        %446 = vmatpush.bf16.msra.mxu0 %v377
        %447 = vmatpush.bf16.msra.mxu0 %v373
        %448 = vmatpush.bf16.msra.mxu0 %v369
        %449 = vmatpush.bf16.msra.mxu0 %v365
        %450 = vmatmul.bf16.gmra.mxu0 %v401
        %v451 = vpop.f32.mrf.mxu0
        %v452 = vadd.f32 %v307, %v451
        %v453 = vpop.f32.mrf.mxu0
        %454 = vdwg.mxu0
        %455 = vmatpush.bf16.msra.mxu0 0
        %456 = vmatpush.bf16.msra.mxu0 0
        %457 = vmatpush.bf16.msra.mxu0 0
        %458 = vmatpush.bf16.msra.mxu0 %v414
        %459 = vmatpush.bf16.msra.mxu0 %v378
        %460 = vmatpush.bf16.msra.mxu0 %v374
        %461 = vmatpush.bf16.msra.mxu0 %v370
        %462 = vmatpush.bf16.msra.mxu0 %v366
        %463 = vmatmul.bf16.gmra.mxu0 %v401
        %v464 = vpop.f32.mrf.mxu0
        %v465 = vadd.f32 %v307, %v464
        %v466 = vpop.f32.mrf.mxu0
        %467 = vdwg.mxu0
        %468 = vst [vmem:[%s274] sm:$0xff] %v426
        %469 = vst [vmem:[%s274 + $0x8] sm:$0xff] %v439
        %470 = vst [vmem:[%s274 + $0x10] sm:$0xff] %v452
        %471 = vst [vmem:[%s274 + $0x18] sm:$0xff] %v465
        %v472 = vld [vmem:[%s4] sm:$0xff]
        %v473 = vadd.f32 %v426, %v439
        %v474 = vadd.f32 %v473, %v452
        %v475 = vadd.f32 %v474, %v465
        %476 = vadd.xlane.f32.xlu0 %v475
        %v477 = vpop.xlane.xlu0 %476
        %v478 = vadd.f32 %v472, %v477
        %vm479 = vcmask 7168
        %480 = vst.msk [vmem:[%s4] sm:$0xff] %vm479, %v478
        %v481 = vld [vmem:[%s5] sm:$0xff]
        %v482 = vmul.f32 %v426, %v426
        %v483 = vmul.f32 %v439, %v439
        %v484 = vmul.f32 %v452, %v452
        %v485 = vmul.f32 %v465, %v465
        %v486 = vadd.f32 %v482, %v483
        %v487 = vadd.f32 %v486, %v484
        %v488 = vadd.f32 %v487, %v485
        %489 = vadd.xlane.f32.xlu0 %v488
        %v490 = vpop.xlane.xlu0 %489
        %v491 = vadd.f32 %v481, %v490
        %492 = vst.msk [vmem:[%s5] sm:$0xff] %vm479, %v491
        %s493 = smul.u32 4, %s17
        %p494 = scmp.lt.s32.totalorder %s493, 15
        %s495 = scalar_select %p494, %s493, 15
        %s496 = smul.addr %s495, 8
        %s497 = scalar_lea.vmem %s3, %s496
        // Predicated region
        $region60: #{cnn_forward.26} parent=50 // pred_check
          %p498 = pneg %p103
        $region61: #{cnn_forward.26} parent=50 // pred_check_branch
          %500 = sbr.rel (%p498) target = $region63
        $region62: #{cnn_forward.26} parent=50 // pred_region
          %s501 = smul.u32 4, %s17
        $region63: #{cnn_forward.26} parent=50 // pred_fallthru
          _
        // Predicated region
        $region64: #{cnn_forward.26} parent=50 // pred_check
          %p502 = pneg %p124
        $region65: #{cnn_forward.26} parent=50 // pred_check_branch
          %504 = sbr.rel (%p502) target = $region67
        $region66: #{cnn_forward.26} parent=50 // pred_region
          _
        $region67: #{cnn_forward.26} parent=50 // pred_fallthru
          _
        // Predicated region
        $region68: #{cnn_forward.26} parent=50 // pred_check
          %p505 = pneg %p145
        $region69: #{cnn_forward.26} parent=50 // pred_check_branch
          %507 = sbr.rel (%p505) target = $region71
        $region70: #{cnn_forward.26} parent=50 // pred_region
          _
        $region71: #{cnn_forward.26} parent=50 // pred_fallthru
          _
        // Predicated region
        $region72: #{cnn_forward.26} parent=50 // pred_check
          %p508 = pneg %p124
        $region73: #{cnn_forward.26} parent=50 // pred_check_branch
          %510 = sbr.rel (%p508) target = $region75
        $region74: #{cnn_forward.26} parent=50 // pred_region
          _
        $region75: #{cnn_forward.26} parent=50 // pred_fallthru
          _
        // Predicated region
        $region76: #{cnn_forward.26} parent=50 // pred_check
          %p511 = pneg %p145
        $region77: #{cnn_forward.26} parent=50 // pred_check_branch
          %513 = sbr.rel (%p511) target = $region79
        $region78: #{cnn_forward.26} parent=50 // pred_region
          _
        $region79: #{cnn_forward.26} parent=50 // pred_fallthru
          _
      $region51: #{cnn_forward.26} parent=5 // pred_fallthru
        _
      %p514 = scmp.le.s32.totalorder 2, %s12
      // Predicated region
      $region80: #{cnn_forward.26} parent=5 // pred_check
        %p515 = pneg %p514
      $region81: #{cnn_forward.26} parent=5 // pred_check_branch
        %517 = sbr.rel (%p515) target = $region83
      $region82: #{cnn_forward.26} parent=5 // pred_region
        %s518 = ssub.s32 %s12, 2
        // Predicated region
        $region84: #{cnn_forward.26} parent=82 // pred_check
          %p519 = pneg %p109
        $region85: #{cnn_forward.26} parent=82 // pred_check_branch
          %521 = sbr.rel (%p519) target = $region87
        $region86: #{cnn_forward.26} parent=82 // pred_region
          %s522 = smul.u32 4, %s18
          %p523 = scmp.lt.s32.totalorder %s522, 15
          %s524 = scalar_select %p523, %s522, 15
          %s525 = smul.addr %s524, 8
          %s526 = scalar_lea.vmem %s3, %s525
        $region87: #{cnn_forward.26} parent=82 // pred_fallthru
          _
      $region83: #{cnn_forward.26} parent=5 // pred_fallthru
        _
    $region6: #{cnn_forward.26} parent=1 // loop_footer
      %s16 = sadd.s32 1, %s12
    $region7: #{cnn_forward.26} parent=1 // loop_footer_branch
      %11 = sbr.rel target = $region3
    $region8: #{cnn_forward.26} parent=1 // loop_exit
      _

// kernel: cnn_forward.28
$region0: #{cnn_forward.28}
  #allocation0 [shape = 'u32[]', space=smem, size = 0x4, offset = 0x4, fixed_abs, tag = 'smem constant byte address 0x4 - core index']
  #allocation1 [shape = 'u32[72,128]{1,0:T(1,128)}', space=vmem, size = 0x9000, scoped, tag = 'internal scratch']
  %s0 = inlined_call_operand.vmem [shape: f32[16,72], index: 0, kind: input, shape index: {}]
  %s1 = inlined_call_operand.vmem [shape: bf16[16,72], index: 1, kind: output, shape index: {}]
  %s2 = sld [smem:[#allocation0]]
  $region14: #{cnn_forward.28} parent=0
    _
  %s4 = ssub.s32 1, %s2
  %s5 = scalar_select 0, %s4, %s2
  // Predicated region
  $region2: #{cnn_forward.28} parent=0 // pred_check
    _
  $region3: #{cnn_forward.28} parent=0 // pred_check_branch
    %7 = sbr.rel (0) target = $region5
  $region4: #{cnn_forward.28} parent=0 // pred_region
    _
  $region5: #{cnn_forward.28} parent=0 // pred_fallthru
    _
  %v8 = vld [vmem:[%s0] sm:$0xff]
  %v9 = vld [vmem:[%s0 + $0x8] sm:$0xff]
  %v10 = vand.u32 2147483647, %v8
  %v11 = vand.u32 2147483647, %v9
  %v12 = vmul.f32 %v8, %v10
  %v13 = vmul.f32 %v9, %v11
  %v14 = vpack.c.bf16 %v12, %v12
  %v15 = vpack.c.bf16 %v13, %v13
  %vm16 = vcmask 584704
  %17 = vst.msk [vmem:[%s1] sm:$0xf] %vm16, %v14
  %18 = vst.msk [vmem:[%s1 + $0x4] sm:$0xf] %vm16, %v15
  // Predicated region
  $region6: #{cnn_forward.28} parent=0 // pred_check
    _
  $region7: #{cnn_forward.28} parent=0 // pred_check_branch
    %20 = sbr.rel (0) target = $region9
  $region8: #{cnn_forward.28} parent=0 // pred_region
    _
  $region9: #{cnn_forward.28} parent=0 // pred_fallthru
    _
  // Predicated region
  $region10: #{cnn_forward.28} parent=0 // pred_check
    _
  $region11: #{cnn_forward.28} parent=0 // pred_check_branch
    %22 = sbr.rel (0) target = $region13
  $region12: #{cnn_forward.28} parent=0 // pred_region
    _
  $region13: #{cnn_forward.28} parent=0 // pred_fallthru
    _

// kernel: cnn_forward.29
$region0: #{cnn_forward.29}
  #allocation0 [shape = 'u32[]', space=smem, size = 0x4, offset = 0x4, fixed_abs, tag = 'smem constant byte address 0x4 - core index']
  #allocation1 [shape = 'u32[72,128]{1,0:T(1,128)}', space=vmem, size = 0x9000, scoped, tag = 'internal scratch']
  %s0 = inlined_call_operand.vmem [shape: bf16[72,512], index: 0, kind: input, shape index: {}]
  %s1 = inlined_call_operand.vmem [shape: bf16[16,72], index: 1, kind: input, shape index: {}]
  %s2 = inlined_call_operand.vmem [shape: f32[16,1], index: 2, kind: input, shape index: {}]
  %s3 = inlined_call_operand.vmem [shape: f32[16,512], index: 3, kind: output, shape index: {0}]
  %s4 = inlined_call_operand.vmem [shape: f32[16,1], index: 4, kind: output, shape index: {1}]
  %s5 = inlined_call_operand.vmem [shape: f32[16,1], index: 5, kind: output, shape index: {2}]
  %6 = xla_tuple %s3, %s4, %s5
  %s7 = sld [smem:[#allocation0]]
  $region42: #{cnn_forward.29} parent=0
    _
  %s9 = ssub.s32 1, %s7
  %s10 = scalar_select 0, %s9, %s7
  // Predicated region
  $region2: #{cnn_forward.29} parent=0 // pred_check
    _
  $region3: #{cnn_forward.29} parent=0 // pred_check_branch
    %12 = sbr.rel (0) target = $region5
  $region4: #{cnn_forward.29} parent=0 // pred_region
    _
  $region5: #{cnn_forward.29} parent=0 // pred_fallthru
    _
  // Predicated region
  $region6: #{cnn_forward.29} parent=0 // pred_check
    _
  $region7: #{cnn_forward.29} parent=0 // pred_check_branch
    %14 = sbr.rel (0) target = $region9
  $region8: #{cnn_forward.29} parent=0 // pred_region
    _
  $region9: #{cnn_forward.29} parent=0 // pred_fallthru
    _
  // Predicated region
  $region10: #{cnn_forward.29} parent=0 // pred_check
    _
  $region11: #{cnn_forward.29} parent=0 // pred_check_branch
    %16 = sbr.rel (0) target = $region13
  $region12: #{cnn_forward.29} parent=0 // pred_region
    _
  $region13: #{cnn_forward.29} parent=0 // pred_fallthru
    _
  %p18 = scmp.eq.s32.totalorder 0, 0
  // Predicated region
  $region14: #{cnn_forward.29} parent=0 // pred_check
    %p19 = pneg %p18
  $region15: #{cnn_forward.29} parent=0 // pred_check_branch
    %21 = sbr.rel (%p19) target = $region17
  $region16: #{cnn_forward.29} parent=0 // pred_region
    %vm22 = vcmask 7168
    %23 = vst.msk [vmem:[%s4] sm:$0xff] %vm22, 0.0
    %24 = vst.msk [vmem:[%s4 + $0x8] sm:$0xff] %vm22, 0.0
    %25 = vst.msk [vmem:[%s5] sm:$0xff] %vm22, 0.0
    %26 = vst.msk [vmem:[%s5 + $0x8] sm:$0xff] %vm22, 0.0
  $region17: #{cnn_forward.29} parent=0 // pred_fallthru
    _
  %v27 = vld [vmem:[%s1] sm:$0xf]
  %v28 = vld [vmem:[%s1 + $0x4] sm:$0xf]
  %v29 = vld [vmem:[%s0] sm:$0xff]
  %v30 = vld [vmem:[%s0 + $0x8] sm:$0xff]
  %v31 = vld [vmem:[%s0 + $0x10] sm:$0xff]
  %v32 = vld [vmem:[%s0 + $0x18] sm:$0xff]
  %v33 = vld [vmem:[%s0 + $0x20] sm:$0xff]
  %v34 = vld [vmem:[%s0 + $0x28] sm:$0xff]
  %v35 = vld [vmem:[%s0 + $0x30] sm:$0xff]
  %v36 = vld [vmem:[%s0 + $0x38] sm:$0xff]
  %v37 = vld [vmem:[%s0 + $0x40] sm:$0xff]
  %v38 = vld [vmem:[%s0 + $0x48] sm:$0xff]
  %v39 = vld [vmem:[%s0 + $0x50] sm:$0xff]
  %v40 = vld [vmem:[%s0 + $0x58] sm:$0xff]
  %v41 = vld [vmem:[%s0 + $0x60] sm:$0xff]
  %v42 = vld [vmem:[%s0 + $0x68] sm:$0xff]
  %v43 = vld [vmem:[%s0 + $0x70] sm:$0xff]
  %v44 = vld [vmem:[%s0 + $0x78] sm:$0xff]
  %v45 = vld [vmem:[%s0 + $0x80] sm:$0xff]
  %v46 = vld [vmem:[%s0 + $0x88] sm:$0xff]
  %v47 = vld [vmem:[%s2] sm:$0xff]
  %v48 = vld [vmem:[%s2 + $0x8] sm:$0xff]
  %50 = vset.pattern.permute.xlu0 0
  %51 = vperm.xlu0 %50, %v47
  %v52 = vpop.permute.xlu0 %51
  %55 = vset.pattern.permute.xlu0 0
  %56 = vperm.xlu0 %55, %v48
  %v57 = vpop.permute.xlu0 %56
  %v61 = vunpack.c.l.b16 %v27
  %v62 = vunpack.c.l.b16 %v28
  %v63 = vpack.c.b16 %v62, %v61
  %v82 = vunpack.c.l.b16 %v29
  %v83 = vunpack.c.h.b16 %v29
  %v84 = vunpack.c.l.b16 %v30
  %v85 = vunpack.c.h.b16 %v30
  %v86 = vunpack.c.l.b16 %v31
  %v87 = vunpack.c.h.b16 %v31
  %v88 = vunpack.c.l.b16 %v32
  %v89 = vunpack.c.h.b16 %v32
  %v90 = vunpack.c.l.b16 %v33
  %v91 = vunpack.c.h.b16 %v33
  %v92 = vunpack.c.l.b16 %v34
  %v93 = vunpack.c.h.b16 %v34
  %v94 = vunpack.c.l.b16 %v35
  %v95 = vunpack.c.h.b16 %v35
  %v96 = vunpack.c.l.b16 %v36
  %v97 = vunpack.c.h.b16 %v36
  %v98 = vunpack.c.l.b16 %v37
  %v99 = vunpack.c.h.b16 %v37
  %v100 = vunpack.c.l.b16 %v38
  %v101 = vunpack.c.h.b16 %v38
  %v102 = vunpack.c.l.b16 %v39
  %v103 = vunpack.c.h.b16 %v39
  %v104 = vunpack.c.l.b16 %v40
  %v105 = vunpack.c.h.b16 %v40
  %v106 = vunpack.c.l.b16 %v41
  %v107 = vunpack.c.h.b16 %v41
  %v108 = vunpack.c.l.b16 %v42
  %v109 = vunpack.c.h.b16 %v42
  %v110 = vunpack.c.l.b16 %v43
  %v111 = vunpack.c.h.b16 %v43
  %v112 = vunpack.c.l.b16 %v44
  %v113 = vunpack.c.h.b16 %v44
  %v114 = vunpack.c.l.b16 %v45
  %v115 = vunpack.c.h.b16 %v45
  %v116 = vunpack.c.l.b16 %v46
  %v117 = vunpack.c.h.b16 %v46
  %v118 = vpack.c.b16 %v86, %v82
  %v119 = vpack.c.b16 %v87, %v83
  %v120 = vpack.c.b16 %v88, %v84
  %v121 = vpack.c.b16 %v89, %v85
  %v122 = vpack.c.b16 %v94, %v90
  %v123 = vpack.c.b16 %v95, %v91
  %v124 = vpack.c.b16 %v96, %v92
  %v125 = vpack.c.b16 %v97, %v93
  %v126 = vpack.c.b16 %v102, %v98
  %v127 = vpack.c.b16 %v103, %v99
  %v128 = vpack.c.b16 %v104, %v100
  %v129 = vpack.c.b16 %v105, %v101
  %v130 = vpack.c.b16 %v110, %v106
  %v131 = vpack.c.b16 %v111, %v107
  %v132 = vpack.c.b16 %v112, %v108
  %v133 = vpack.c.b16 %v113, %v109
  %v134 = vpack.c.b16 %v114, %v114
  %v135 = vpack.c.b16 %v115, %v115
  %v136 = vpack.c.b16 %v116, %v116
  %v137 = vpack.c.b16 %v117, %v117
  %vm154 = vcmask 588800
  %v156 = vsel %vm154, %v63, 0
  %vm158 = vcmask 1043456
  %v160 = vsel %vm158, %v134, 0
  %v163 = vsel %vm158, %v135, 0
  %v166 = vsel %vm158, %v136, 0
  %v169 = vsel %vm158, %v137, 0
  %171 = vmatpush.bf16.msra.mxu0 0
  %172 = vmatpush.bf16.msra.mxu0 0
  %173 = vmatpush.bf16.msra.mxu0 0
  %174 = vmatpush.bf16.msra.mxu0 %v160
  %175 = vmatpush.bf16.msra.mxu0 %v130
  %176 = vmatpush.bf16.msra.mxu0 %v126
  %177 = vmatpush.bf16.msra.mxu0 %v122
  %178 = vmatpush.bf16.msra.mxu0 %v118
  %179 = vmatmul.bf16.gmra.mxu0 %v156
  %v180 = vpop.f32.mrf.mxu0
  %v181 = vadd.f32 %v52, %v180
  %v182 = vpop.f32.mrf.mxu0
  %v183 = vadd.f32 %v57, %v182
  %184 = vdwg.mxu0
  %185 = vmatpush.bf16.msra.mxu0 0
  %186 = vmatpush.bf16.msra.mxu0 0
  %187 = vmatpush.bf16.msra.mxu0 0
  %188 = vmatpush.bf16.msra.mxu0 %v163
  %189 = vmatpush.bf16.msra.mxu0 %v131
  %190 = vmatpush.bf16.msra.mxu0 %v127
  %191 = vmatpush.bf16.msra.mxu0 %v123
  %192 = vmatpush.bf16.msra.mxu0 %v119
  %193 = vmatmul.bf16.gmra.mxu0 %v156
  %v194 = vpop.f32.mrf.mxu0
  %v195 = vadd.f32 %v52, %v194
  %v196 = vpop.f32.mrf.mxu0
  %v197 = vadd.f32 %v57, %v196
  %198 = vdwg.mxu0
  %199 = vmatpush.bf16.msra.mxu0 0
  %200 = vmatpush.bf16.msra.mxu0 0
  %201 = vmatpush.bf16.msra.mxu0 0
  %202 = vmatpush.bf16.msra.mxu0 %v166
  %203 = vmatpush.bf16.msra.mxu0 %v132
  %204 = vmatpush.bf16.msra.mxu0 %v128
  %205 = vmatpush.bf16.msra.mxu0 %v124
  %206 = vmatpush.bf16.msra.mxu0 %v120
  %207 = vmatmul.bf16.gmra.mxu0 %v156
  %v208 = vpop.f32.mrf.mxu0
  %v209 = vadd.f32 %v52, %v208
  %v210 = vpop.f32.mrf.mxu0
  %v211 = vadd.f32 %v57, %v210
  %212 = vdwg.mxu0
  %213 = vmatpush.bf16.msra.mxu0 0
  %214 = vmatpush.bf16.msra.mxu0 0
  %215 = vmatpush.bf16.msra.mxu0 0
  %216 = vmatpush.bf16.msra.mxu0 %v169
  %217 = vmatpush.bf16.msra.mxu0 %v133
  %218 = vmatpush.bf16.msra.mxu0 %v129
  %219 = vmatpush.bf16.msra.mxu0 %v125
  %220 = vmatpush.bf16.msra.mxu0 %v121
  %221 = vmatmul.bf16.gmra.mxu0 %v156
  %v222 = vpop.f32.mrf.mxu0
  %v223 = vadd.f32 %v52, %v222
  %v224 = vpop.f32.mrf.mxu0
  %v225 = vadd.f32 %v57, %v224
  %226 = vdwg.mxu0
  %227 = vst [vmem:[%s3] sm:$0xff] %v181
  %228 = vst [vmem:[%s3 + $0x8] sm:$0xff] %v195
  %229 = vst [vmem:[%s3 + $0x10] sm:$0xff] %v209
  %230 = vst [vmem:[%s3 + $0x18] sm:$0xff] %v223
  %231 = vst [vmem:[%s3 + $0x20] sm:$0xff] %v183
  %232 = vst [vmem:[%s3 + $0x28] sm:$0xff] %v197
  %233 = vst [vmem:[%s3 + $0x30] sm:$0xff] %v211
  %234 = vst [vmem:[%s3 + $0x38] sm:$0xff] %v225
  %v235 = vld [vmem:[%s4] sm:$0xff]
  %v236 = vld [vmem:[%s4 + $0x8] sm:$0xff]
  %v237 = vadd.f32 %v181, %v195
  %v238 = vadd.f32 %v237, %v209
  %v239 = vadd.f32 %v238, %v223
  %240 = vadd.xlane.f32.xlu0 %v239
  %v241 = vpop.xlane.xlu0 %240
  %v242 = vadd.f32 %v183, %v197
  %v243 = vadd.f32 %v242, %v211
  %v244 = vadd.f32 %v243, %v225
  %245 = vadd.xlane.f32.xlu0 %v244
  %v246 = vpop.xlane.xlu0 %245
  %v247 = vadd.f32 %v235, %v241
  %v248 = vadd.f32 %v236, %v246
  %vm249 = vcmask 7168
  %250 = vst.msk [vmem:[%s4] sm:$0xff] %vm249, %v247
  %251 = vst.msk [vmem:[%s4 + $0x8] sm:$0xff] %vm249, %v248
  %v252 = vld [vmem:[%s5] sm:$0xff]
  %v253 = vld [vmem:[%s5 + $0x8] sm:$0xff]
  %v254 = vmul.f32 %v181, %v181
  %v255 = vmul.f32 %v195, %v195
  %v256 = vmul.f32 %v209, %v209
  %v257 = vmul.f32 %v223, %v223
  %v258 = vmul.f32 %v183, %v183
  %v259 = vmul.f32 %v197, %v197
  %v260 = vmul.f32 %v211, %v211
  %v261 = vmul.f32 %v225, %v225
  %v262 = vadd.f32 %v254, %v255
  %v263 = vadd.f32 %v262, %v256
  %v264 = vadd.f32 %v263, %v257
  %265 = vadd.xlane.f32.xlu0 %v264
  %v266 = vpop.xlane.xlu0 %265
  %v267 = vadd.f32 %v258, %v259
  %v268 = vadd.f32 %v267, %v260
  %v269 = vadd.f32 %v268, %v261
  %270 = vadd.xlane.f32.xlu0 %v269
  %v271 = vpop.xlane.xlu0 %270
  %v272 = vadd.f32 %v252, %v266
  %v273 = vadd.f32 %v253, %v271
  %274 = vst.msk [vmem:[%s5] sm:$0xff] %vm249, %v272
  %275 = vst.msk [vmem:[%s5 + $0x8] sm:$0xff] %vm249, %v273
  // Predicated region
  $region18: #{cnn_forward.29} parent=0 // pred_check
    _
  $region19: #{cnn_forward.29} parent=0 // pred_check_branch
    %277 = sbr.rel (0) target = $region21
  $region20: #{cnn_forward.29} parent=0 // pred_region
    _
  $region21: #{cnn_forward.29} parent=0 // pred_fallthru
    _
  // Predicated region
  $region22: #{cnn_forward.29} parent=0 // pred_check
    _
  $region23: #{cnn_forward.29} parent=0 // pred_check_branch
    %279 = sbr.rel (0) target = $region25
  $region24: #{cnn_forward.29} parent=0 // pred_region
    _
  $region25: #{cnn_forward.29} parent=0 // pred_fallthru
    _
  // Predicated region
  $region26: #{cnn_forward.29} parent=0 // pred_check
    _
  $region27: #{cnn_forward.29} parent=0 // pred_check_branch
    %281 = sbr.rel (0) target = $region29
  $region28: #{cnn_forward.29} parent=0 // pred_region
    _
  $region29: #{cnn_forward.29} parent=0 // pred_fallthru
    _
  // Predicated region
  $region30: #{cnn_forward.29} parent=0 // pred_check
    _
  $region31: #{cnn_forward.29} parent=0 // pred_check_branch
    %283 = sbr.rel (0) target = $region33
  $region32: #{cnn_forward.29} parent=0 // pred_region
    _
  $region33: #{cnn_forward.29} parent=0 // pred_fallthru
    _
  // Predicated region
  $region34: #{cnn_forward.29} parent=0 // pred_check
    _
  $region35: #{cnn_forward.29} parent=0 // pred_check_branch
    %285 = sbr.rel (0) target = $region37
  $region36: #{cnn_forward.29} parent=0 // pred_region
    _
  $region37: #{cnn_forward.29} parent=0 // pred_fallthru
    _
  // Predicated region
  $region38: #{cnn_forward.29} parent=0 // pred_check
    _
  $region39: #{cnn_forward.29} parent=0 // pred_check_branch
    %287 = sbr.rel (0) target = $region41
  $region40: #{cnn_forward.29} parent=0 // pred_region
    _
  $region41: #{cnn_forward.29} parent=0 // pred_fallthru
    _

// kernel: cnn_forward.30
$region0: #{cnn_forward.30}
  #allocation0 [shape = 'u32[]', space=smem, size = 0x4, offset = 0x4, fixed_abs, tag = 'smem constant byte address 0x4 - core index']
  #allocation1 [shape = 'u32[72,128]{1,0:T(1,128)}', space=vmem, size = 0x9000, scoped, tag = 'internal scratch']
  %s0 = inlined_call_operand.vmem [shape: f32[16,512], index: 0, kind: input, shape index: {}]
  %s1 = inlined_call_operand.vmem [shape: f32[16,1], index: 1, kind: input, shape index: {}]
  %s2 = inlined_call_operand.vmem [shape: f32[16,1], index: 2, kind: input, shape index: {}]
  %s3 = inlined_call_operand.vmem [shape: f32[16,1], index: 3, kind: input, shape index: {}]
  %s4 = inlined_call_operand.vmem [shape: f32[16,1], index: 4, kind: input, shape index: {}]
  %s5 = inlined_call_operand.vmem [shape: bf16[16,512], index: 5, kind: output, shape index: {}]
  %s6 = sld [smem:[#allocation0]]
  $region30: #{cnn_forward.30} parent=0
    _
  %s8 = ssub.s32 1, %s6
  %s9 = scalar_select 0, %s8, %s6
  // Predicated region
  $region2: #{cnn_forward.30} parent=0 // pred_check
    _
  $region3: #{cnn_forward.30} parent=0 // pred_check_branch
    %11 = sbr.rel (0) target = $region5
  $region4: #{cnn_forward.30} parent=0 // pred_region
    _
  $region5: #{cnn_forward.30} parent=0 // pred_fallthru
    _
  // Predicated region
  $region6: #{cnn_forward.30} parent=0 // pred_check
    _
  $region7: #{cnn_forward.30} parent=0 // pred_check_branch
    %13 = sbr.rel (0) target = $region9
  $region8: #{cnn_forward.30} parent=0 // pred_region
    _
  $region9: #{cnn_forward.30} parent=0 // pred_fallthru
    _
  // Predicated region
  $region10: #{cnn_forward.30} parent=0 // pred_check
    _
  $region11: #{cnn_forward.30} parent=0 // pred_check_branch
    %15 = sbr.rel (0) target = $region13
  $region12: #{cnn_forward.30} parent=0 // pred_region
    _
  $region13: #{cnn_forward.30} parent=0 // pred_fallthru
    _
  // Predicated region
  $region14: #{cnn_forward.30} parent=0 // pred_check
    _
  $region15: #{cnn_forward.30} parent=0 // pred_check_branch
    %17 = sbr.rel (0) target = $region17
  $region16: #{cnn_forward.30} parent=0 // pred_region
    _
  $region17: #{cnn_forward.30} parent=0 // pred_fallthru
    _
  // Predicated region
  $region18: #{cnn_forward.30} parent=0 // pred_check
    _
  $region19: #{cnn_forward.30} parent=0 // pred_check_branch
    %19 = sbr.rel (0) target = $region21
  $region20: #{cnn_forward.30} parent=0 // pred_region
    _
  $region21: #{cnn_forward.30} parent=0 // pred_fallthru
    _
  %v20 = vld [vmem:[%s1] sm:$0xff]
  %v21 = vld [vmem:[%s1 + $0x8] sm:$0xff]
  %v22 = vmul.f32 %v20, 0.001953125
  %v23 = vmul.f32 %v21, 0.001953125
  %v24 = vld [vmem:[%s2] sm:$0xff]
  %v25 = vld [vmem:[%s2 + $0x8] sm:$0xff]
  %v26 = vmul.f32 %v24, 0.001953125
  %v27 = vmul.f32 %v25, 0.001953125
  %v28 = vmul.f32 %v22, %v22
  %v29 = vmul.f32 %v23, %v23
  %v30 = vsub.f32 %v26, %v28
  %v31 = vsub.f32 %v27, %v29
  %v32 = vmax.f32 %v30, 0.0
  %v33 = vmax.f32 %v31, 0.0
  %v34 = vadd.f32 %v32, 1e-05
  %v35 = vadd.f32 %v33, 1e-05
  %v36 = vrsqrt.pop %v34
  %v37 = vmul.f32 %v36, %v34
  %v38 = vmul.f32 %v37, %v36
  %v39 = vmul.f32 0.5, %v38
  %v40 = vsub.f32 1.5, %v39
  %v41 = vmul.f32 %v36, %v40
  %vm42 = vweird.f32 %v34
  %vm43 = vweird.f32 %v36
  %vm44 = vmor %vm42, %vm43
  %v45 = vsel %vm44, %v36, %v41
  %v46 = vrsqrt.pop %v35
  %v47 = vmul.f32 %v46, %v35
  %v48 = vmul.f32 %v47, %v46
  %v49 = vmul.f32 0.5, %v48
  %v50 = vsub.f32 1.5, %v49
  %v51 = vmul.f32 %v46, %v50
  %vm52 = vweird.f32 %v35
  %vm53 = vweird.f32 %v46
  %vm54 = vmor %vm52, %vm53
  %v55 = vsel %vm54, %v46, %v51
  %v56 = vld [vmem:[%s3] sm:$0xff]
  %v57 = vld [vmem:[%s3 + $0x8] sm:$0xff]
  %v58 = vmul.f32 %v45, %v56
  %v59 = vmul.f32 %v55, %v57
  %v60 = vld [vmem:[%s4] sm:$0xff]
  %v61 = vld [vmem:[%s4 + $0x8] sm:$0xff]
  %v62 = vmul.f32 %v22, %v58
  %v63 = vmul.f32 %v23, %v59
  %v64 = vsub.f32 %v60, %v62
  %v65 = vsub.f32 %v61, %v63
  %v66 = vld [vmem:[%s0] sm:$0xff]
  %v67 = vld [vmem:[%s0 + $0x8] sm:$0xff]
  %v68 = vld [vmem:[%s0 + $0x10] sm:$0xff]
  %v69 = vld [vmem:[%s0 + $0x18] sm:$0xff]
  %v70 = vld [vmem:[%s0 + $0x20] sm:$0xff]
  %v71 = vld [vmem:[%s0 + $0x28] sm:$0xff]
  %v72 = vld [vmem:[%s0 + $0x30] sm:$0xff]
  %v73 = vld [vmem:[%s0 + $0x38] sm:$0xff]
  %75 = vset.pattern.permute.xlu0 0
  %76 = vperm.xlu0 %75, %v58
  %v77 = vpop.permute.xlu0 %76
  %80 = vset.pattern.permute.xlu0 0
  %81 = vperm.xlu0 %80, %v59
  %v82 = vpop.permute.xlu0 %81
  %v84 = vmul.f32 %v66, %v77
  %v85 = vmul.f32 %v67, %v77
  %v86 = vmul.f32 %v68, %v77
  %v87 = vmul.f32 %v69, %v77
  %v88 = vmul.f32 %v70, %v82
  %v89 = vmul.f32 %v71, %v82
  %v90 = vmul.f32 %v72, %v82
  %v91 = vmul.f32 %v73, %v82
  %93 = vset.pattern.permute.xlu0 0
  %94 = vperm.xlu0 %93, %v64
  %v95 = vpop.permute.xlu0 %94
  %98 = vset.pattern.permute.xlu0 0
  %99 = vperm.xlu0 %98, %v65
  %v100 = vpop.permute.xlu0 %99
  %v102 = vadd.f32 %v84, %v95
  %v103 = vadd.f32 %v85, %v95
  %v104 = vadd.f32 %v86, %v95
  %v105 = vadd.f32 %v87, %v95
  %v106 = vadd.f32 %v88, %v100
  %v107 = vadd.f32 %v89, %v100
  %v108 = vadd.f32 %v90, %v100
  %v109 = vadd.f32 %v91, %v100
  %v110 = vmax.f32 %v102, 0.0
  %v111 = vmax.f32 %v103, 0.0
  %v112 = vmax.f32 %v104, 0.0
  %v113 = vmax.f32 %v105, 0.0
  %v114 = vmax.f32 %v106, 0.0
  %v115 = vmax.f32 %v107, 0.0
  %v116 = vmax.f32 %v108, 0.0
  %v117 = vmax.f32 %v109, 0.0
  %v118 = vpack.c.bf16 %v111, %v110
  %v119 = vpack.c.bf16 %v113, %v112
  %v120 = vpack.c.bf16 %v115, %v114
  %v121 = vpack.c.bf16 %v117, %v116
  %122 = vst [vmem:[%s5] sm:$0xff] %v118
  %123 = vst [vmem:[%s5 + $0x8] sm:$0xff] %v119
  %124 = vst [vmem:[%s5 + $0x10] sm:$0xff] %v120
  %125 = vst [vmem:[%s5 + $0x18] sm:$0xff] %v121
  // Predicated region
  $region22: #{cnn_forward.30} parent=0 // pred_check
    _
  $region23: #{cnn_forward.30} parent=0 // pred_check_branch
    %127 = sbr.rel (0) target = $region25
  $region24: #{cnn_forward.30} parent=0 // pred_region
    _
  $region25: #{cnn_forward.30} parent=0 // pred_fallthru
    _
  // Predicated region
  $region26: #{cnn_forward.30} parent=0 // pred_check
    _
  $region27: #{cnn_forward.30} parent=0 // pred_check_branch
    %129 = sbr.rel (0) target = $region29
  $region28: #{cnn_forward.30} parent=0 // pred_region
    _
  $region29: #{cnn_forward.30} parent=0 // pred_fallthru
    _

// kernel: cnn_forward.31
$region0: #{cnn_forward.31}
  #allocation0 [shape = 'u32[]', space=smem, size = 0x4, offset = 0x4, fixed_abs, tag = 'smem constant byte address 0x4 - core index']
  #allocation1 [shape = 'u32[72,128]{1,0:T(1,128)}', space=vmem, size = 0x9000, scoped, tag = 'internal scratch']
  %s0 = inlined_call_operand.vmem [shape: f32[16,144], index: 0, kind: input, shape index: {}]
  %s1 = inlined_call_operand.vmem [shape: bf16[16,144], index: 1, kind: output, shape index: {}]
  %s2 = sld [smem:[#allocation0]]
  $region14: #{cnn_forward.31} parent=0
    _
  %s4 = ssub.s32 1, %s2
  %s5 = scalar_select 0, %s4, %s2
  // Predicated region
  $region2: #{cnn_forward.31} parent=0 // pred_check
    _
  $region3: #{cnn_forward.31} parent=0 // pred_check_branch
    %7 = sbr.rel (0) target = $region5
  $region4: #{cnn_forward.31} parent=0 // pred_region
    _
  $region5: #{cnn_forward.31} parent=0 // pred_fallthru
    _
  %v8 = vld [vmem:[%s0] sm:$0xff]
  %v9 = vld [vmem:[%s0 + $0x8] sm:$0xff]
  %v10 = vld [vmem:[%s0 + $0x10] sm:$0xff]
  %v11 = vld [vmem:[%s0 + $0x18] sm:$0xff]
  %v12 = vand.u32 2147483647, %v8
  %v13 = vand.u32 2147483647, %v9
  %v14 = vand.u32 2147483647, %v10
  %v15 = vand.u32 2147483647, %v11
  %v16 = vmul.f32 %v8, %v12
  %v17 = vmul.f32 %v9, %v13
  %v18 = vmul.f32 %v10, %v14
  %v19 = vmul.f32 %v11, %v15
  %v20 = vpack.c.bf16 %v17, %v16
  %v21 = vpack.c.bf16 %v19, %v18
  %vm22 = vcmask 1043456
  %vm23 = vcmask 130052
  %vm24 = vmor %vm23, %vm22
  %25 = vst.msk [vmem:[%s1] sm:$0xff] %vm24, %v20
  %26 = vst.msk [vmem:[%s1 + $0x8] sm:$0xff] %vm24, %v21
  // Predicated region
  $region6: #{cnn_forward.31} parent=0 // pred_check
    _
  $region7: #{cnn_forward.31} parent=0 // pred_check_branch
    %28 = sbr.rel (0) target = $region9
  $region8: #{cnn_forward.31} parent=0 // pred_region
    _
  $region9: #{cnn_forward.31} parent=0 // pred_fallthru
    _
  // Predicated region
  $region10: #{cnn_forward.31} parent=0 // pred_check
    _
  $region11: #{cnn_forward.31} parent=0 // pred_check_branch
    %30 = sbr.rel (0) target = $region13
  $region12: #{cnn_forward.31} parent=0 // pred_region
    _
  $region13: #{cnn_forward.31} parent=0 // pred_fallthru
    _

// kernel: cnn_forward.32
$region0: #{cnn_forward.32}
  #allocation0 [shape = 'u32[]', space=smem, size = 0x4, offset = 0x4, fixed_abs, tag = 'smem constant byte address 0x4 - core index']
  #allocation1 [shape = 'u32[72,128]{1,0:T(1,128)}', space=vmem, size = 0x9000, scoped, tag = 'internal scratch']
  %s0 = inlined_call_operand.vmem [shape: bf16[144,512], index: 0, kind: input, shape index: {}]
  %s1 = inlined_call_operand.vmem [shape: bf16[16,144], index: 1, kind: input, shape index: {}]
  %s2 = inlined_call_operand.vmem [shape: f32[16,1], index: 2, kind: input, shape index: {}]
  %s3 = inlined_call_operand.vmem [shape: f32[16,512], index: 3, kind: output, shape index: {0}]
  %s4 = inlined_call_operand.vmem [shape: f32[16,1], index: 4, kind: output, shape index: {1}]
  %s5 = inlined_call_operand.vmem [shape: f32[16,1], index: 5, kind: output, shape index: {2}]
  %6 = xla_tuple %s3, %s4, %s5
  %s7 = sld [smem:[#allocation0]]
  $region42: #{cnn_forward.32} parent=0
    _
  %s9 = ssub.s32 1, %s7
  %s10 = scalar_select 0, %s9, %s7
  // Predicated region
  $region2: #{cnn_forward.32} parent=0 // pred_check
    _
  $region3: #{cnn_forward.32} parent=0 // pred_check_branch
    %12 = sbr.rel (0) target = $region5
  $region4: #{cnn_forward.32} parent=0 // pred_region
    _
  $region5: #{cnn_forward.32} parent=0 // pred_fallthru
    _
  // Predicated region
  $region6: #{cnn_forward.32} parent=0 // pred_check
    _
  $region7: #{cnn_forward.32} parent=0 // pred_check_branch
    %14 = sbr.rel (0) target = $region9
  $region8: #{cnn_forward.32} parent=0 // pred_region
    _
  $region9: #{cnn_forward.32} parent=0 // pred_fallthru
    _
  // Predicated region
  $region10: #{cnn_forward.32} parent=0 // pred_check
    _
  $region11: #{cnn_forward.32} parent=0 // pred_check_branch
    %16 = sbr.rel (0) target = $region13
  $region12: #{cnn_forward.32} parent=0 // pred_region
    _
  $region13: #{cnn_forward.32} parent=0 // pred_fallthru
    _
  %p18 = scmp.eq.s32.totalorder 0, 0
  // Predicated region
  $region14: #{cnn_forward.32} parent=0 // pred_check
    %p19 = pneg %p18
  $region15: #{cnn_forward.32} parent=0 // pred_check_branch
    %21 = sbr.rel (%p19) target = $region17
  $region16: #{cnn_forward.32} parent=0 // pred_region
    %vm22 = vcmask 7168
    %23 = vst.msk [vmem:[%s4] sm:$0xff] %vm22, 0.0
    %24 = vst.msk [vmem:[%s4 + $0x8] sm:$0xff] %vm22, 0.0
    %25 = vst.msk [vmem:[%s5] sm:$0xff] %vm22, 0.0
    %26 = vst.msk [vmem:[%s5 + $0x8] sm:$0xff] %vm22, 0.0
  $region17: #{cnn_forward.32} parent=0 // pred_fallthru
    _
  %v27 = vld [vmem:[%s1] sm:$0xff]
  %v28 = vld [vmem:[%s1 + $0x8] sm:$0xff]
  %v29 = vld [vmem:[%s0] sm:$0xff]
  %v30 = vld [vmem:[%s0 + $0x8] sm:$0xff]
  %v31 = vld [vmem:[%s0 + $0x10] sm:$0xff]
  %v32 = vld [vmem:[%s0 + $0x18] sm:$0xff]
  %v33 = vld [vmem:[%s0 + $0x20] sm:$0xff]
  %v34 = vld [vmem:[%s0 + $0x28] sm:$0xff]
  %v35 = vld [vmem:[%s0 + $0x30] sm:$0xff]
  %v36 = vld [vmem:[%s0 + $0x38] sm:$0xff]
  %v37 = vld [vmem:[%s0 + $0x40] sm:$0xff]
  %v38 = vld [vmem:[%s0 + $0x48] sm:$0xff]
  %v39 = vld [vmem:[%s0 + $0x50] sm:$0xff]
  %v40 = vld [vmem:[%s0 + $0x58] sm:$0xff]
  %v41 = vld [vmem:[%s0 + $0x60] sm:$0xff]
  %v42 = vld [vmem:[%s0 + $0x68] sm:$0xff]
  %v43 = vld [vmem:[%s0 + $0x70] sm:$0xff]
  %v44 = vld [vmem:[%s0 + $0x78] sm:$0xff]
  %v45 = vld [vmem:[%s0 + $0x80] sm:$0xff]
  %v46 = vld [vmem:[%s0 + $0x88] sm:$0xff]
  %v47 = vld [vmem:[%s0 + $0x90] sm:$0xff]
  %v48 = vld [vmem:[%s0 + $0x98] sm:$0xff]
  %v49 = vld [vmem:[%s0 + $0xa0] sm:$0xff]
  %v50 = vld [vmem:[%s0 + $0xa8] sm:$0xff]
  %v51 = vld [vmem:[%s0 + $0xb0] sm:$0xff]
  %v52 = vld [vmem:[%s0 + $0xb8] sm:$0xff]
  %v53 = vld [vmem:[%s0 + $0xc0] sm:$0xff]
  %v54 = vld [vmem:[%s0 + $0xc8] sm:$0xff]
  %v55 = vld [vmem:[%s0 + $0xd0] sm:$0xff]
  %v56 = vld [vmem:[%s0 + $0xd8] sm:$0xff]
  %v57 = vld [vmem:[%s0 + $0xe0] sm:$0xff]
  %v58 = vld [vmem:[%s0 + $0xe8] sm:$0xff]
  %v59 = vld [vmem:[%s0 + $0xf0] sm:$0xff]
  %v60 = vld [vmem:[%s0 + $0xf8] sm:$0xff]
  %v61 = vld [vmem:[%s0 + $0x100] sm:$0xff]
  %v62 = vld [vmem:[%s0 + $0x108] sm:$0xff]
  %v63 = vld [vmem:[%s0 + $0x110] sm:$0xff]
  %v64 = vld [vmem:[%s0 + $0x118] sm:$0xff]
  %v65 = vld [vmem:[%s2] sm:$0xff]
  %v66 = vld [vmem:[%s2 + $0x8] sm:$0xff]
  %68 = vset.pattern.permute.xlu0 0
  %69 = vperm.xlu0 %68, %v65
  %v70 = vpop.permute.xlu0 %69
  %73 = vset.pattern.permute.xlu0 0
  %74 = vperm.xlu0 %73, %v66
  %v75 = vpop.permute.xlu0 %74
  %v79 = vunpack.c.l.b16 %v27
  %v80 = vunpack.c.h.b16 %v27
  %v81 = vunpack.c.l.b16 %v28
  %v82 = vunpack.c.h.b16 %v28
  %v83 = vpack.c.b16 %v81, %v79
  %v84 = vpack.c.b16 %v82, %v80
  %v122 = vunpack.c.l.b16 %v29
  %v123 = vunpack.c.h.b16 %v29
  %v124 = vunpack.c.l.b16 %v30
  %v125 = vunpack.c.h.b16 %v30
  %v126 = vunpack.c.l.b16 %v31
  %v127 = vunpack.c.h.b16 %v31
  %v128 = vunpack.c.l.b16 %v32
  %v129 = vunpack.c.h.b16 %v32
  %v130 = vunpack.c.l.b16 %v33
  %v131 = vunpack.c.h.b16 %v33
  %v132 = vunpack.c.l.b16 %v34
  %v133 = vunpack.c.h.b16 %v34
  %v134 = vunpack.c.l.b16 %v35
  %v135 = vunpack.c.h.b16 %v35
  %v136 = vunpack.c.l.b16 %v36
  %v137 = vunpack.c.h.b16 %v36
  %v138 = vunpack.c.l.b16 %v37
  %v139 = vunpack.c.h.b16 %v37
  %v140 = vunpack.c.l.b16 %v38
  %v141 = vunpack.c.h.b16 %v38
  %v142 = vunpack.c.l.b16 %v39
  %v143 = vunpack.c.h.b16 %v39
  %v144 = vunpack.c.l.b16 %v40
  %v145 = vunpack.c.h.b16 %v40
  %v146 = vunpack.c.l.b16 %v41
  %v147 = vunpack.c.h.b16 %v41
  %v148 = vunpack.c.l.b16 %v42
  %v149 = vunpack.c.h.b16 %v42
  %v150 = vunpack.c.l.b16 %v43
  %v151 = vunpack.c.h.b16 %v43
  %v152 = vunpack.c.l.b16 %v44
  %v153 = vunpack.c.h.b16 %v44
  %v154 = vunpack.c.l.b16 %v45
  %v155 = vunpack.c.h.b16 %v45
  %v156 = vunpack.c.l.b16 %v46
  %v157 = vunpack.c.h.b16 %v46
  %v158 = vunpack.c.l.b16 %v47
  %v159 = vunpack.c.h.b16 %v47
  %v160 = vunpack.c.l.b16 %v48
  %v161 = vunpack.c.h.b16 %v48
  %v162 = vunpack.c.l.b16 %v49
  %v163 = vunpack.c.h.b16 %v49
  %v164 = vunpack.c.l.b16 %v50
  %v165 = vunpack.c.h.b16 %v50
  %v166 = vunpack.c.l.b16 %v51
  %v167 = vunpack.c.h.b16 %v51
  %v168 = vunpack.c.l.b16 %v52
  %v169 = vunpack.c.h.b16 %v52
  %v170 = vunpack.c.l.b16 %v53
  %v171 = vunpack.c.h.b16 %v53
  %v172 = vunpack.c.l.b16 %v54
  %v173 = vunpack.c.h.b16 %v54
  %v174 = vunpack.c.l.b16 %v55
  %v175 = vunpack.c.h.b16 %v55
  %v176 = vunpack.c.l.b16 %v56
  %v177 = vunpack.c.h.b16 %v56
  %v178 = vunpack.c.l.b16 %v57
  %v179 = vunpack.c.h.b16 %v57
  %v180 = vunpack.c.l.b16 %v58
  %v181 = vunpack.c.h.b16 %v58
  %v182 = vunpack.c.l.b16 %v59
  %v183 = vunpack.c.h.b16 %v59
  %v184 = vunpack.c.l.b16 %v60
  %v185 = vunpack.c.h.b16 %v60
  %v186 = vunpack.c.l.b16 %v61
  %v187 = vunpack.c.h.b16 %v61
  %v188 = vunpack.c.l.b16 %v62
  %v189 = vunpack.c.h.b16 %v62
  %v190 = vunpack.c.l.b16 %v63
  %v191 = vunpack.c.h.b16 %v63
  %v192 = vunpack.c.l.b16 %v64
  %v193 = vunpack.c.h.b16 %v64
  %v194 = vpack.c.b16 %v126, %v122
  %v195 = vpack.c.b16 %v127, %v123
  %v196 = vpack.c.b16 %v128, %v124
  %v197 = vpack.c.b16 %v129, %v125
  %v198 = vpack.c.b16 %v134, %v130
  %v199 = vpack.c.b16 %v135, %v131
  %v200 = vpack.c.b16 %v136, %v132
  %v201 = vpack.c.b16 %v137, %v133
  %v202 = vpack.c.b16 %v142, %v138
  %v203 = vpack.c.b16 %v143, %v139
  %v204 = vpack.c.b16 %v144, %v140
  %v205 = vpack.c.b16 %v145, %v141
  %v206 = vpack.c.b16 %v150, %v146
  %v207 = vpack.c.b16 %v151, %v147
  %v208 = vpack.c.b16 %v152, %v148
  %v209 = vpack.c.b16 %v153, %v149
  %v210 = vpack.c.b16 %v158, %v154
  %v211 = vpack.c.b16 %v159, %v155
  %v212 = vpack.c.b16 %v160, %v156
  %v213 = vpack.c.b16 %v161, %v157
  %v214 = vpack.c.b16 %v166, %v162
  %v215 = vpack.c.b16 %v167, %v163
  %v216 = vpack.c.b16 %v168, %v164
  %v217 = vpack.c.b16 %v169, %v165
  %v218 = vpack.c.b16 %v174, %v170
  %v219 = vpack.c.b16 %v175, %v171
  %v220 = vpack.c.b16 %v176, %v172
  %v221 = vpack.c.b16 %v177, %v173
  %v222 = vpack.c.b16 %v182, %v178
  %v223 = vpack.c.b16 %v183, %v179
  %v224 = vpack.c.b16 %v184, %v180
  %v225 = vpack.c.b16 %v185, %v181
  %v226 = vpack.c.b16 %v190, %v186
  %v227 = vpack.c.b16 %v191, %v187
  %v228 = vpack.c.b16 %v192, %v188
  %v229 = vpack.c.b16 %v193, %v189
  %vm266 = vcmask 130048
  %v268 = vsel %vm266, %v84, 0
  %270 = vmatpush.bf16.msra.mxu0 %v222
  %271 = vmatpush.bf16.msra.mxu0 %v218
  %272 = vmatpush.bf16.msra.mxu0 %v214
  %273 = vmatpush.bf16.msra.mxu0 %v210
  %274 = vmatpush.bf16.msra.mxu0 %v206
  %275 = vmatpush.bf16.msra.mxu0 %v202
  %276 = vmatpush.bf16.msra.mxu0 %v198
  %277 = vmatpush.bf16.msra.mxu0 %v194
  %278 = vmatmul.bf16.gmra.mxu0 %v83
  %v279 = vpop.f32.mrf.mxu0
  %v280 = vadd.f32 %v70, %v279
  %v281 = vpop.f32.mrf.mxu0
  %v282 = vadd.f32 %v75, %v281
  %283 = vdwg.mxu0
  %284 = vmatpush.bf16.msra.mxu0 0
  %285 = vmatpush.bf16.msra.mxu0 0
  %286 = vmatpush.bf16.msra.mxu0 0
  %287 = vmatpush.bf16.msra.mxu0 0
  %288 = vmatpush.bf16.msra.mxu0 0
  %289 = vmatpush.bf16.msra.mxu0 0
  %290 = vmatpush.bf16.msra.mxu0 0
  %291 = vmatpush.bf16.msra.mxu0 %v226
  %292 = vmatmul.bf16.gmra.mxu0 %v268
  %v293 = vpop.f32.mrf.mxu0
  %v294 = vadd.f32 %v280, %v293
  %v295 = vpop.f32.mrf.mxu0
  %v296 = vadd.f32 %v282, %v295
  %297 = vdwg.mxu0
  %298 = vmatpush.bf16.msra.mxu0 %v223
  %299 = vmatpush.bf16.msra.mxu0 %v219
  %300 = vmatpush.bf16.msra.mxu0 %v215
  %301 = vmatpush.bf16.msra.mxu0 %v211
  %302 = vmatpush.bf16.msra.mxu0 %v207
  %303 = vmatpush.bf16.msra.mxu0 %v203
  %304 = vmatpush.bf16.msra.mxu0 %v199
  %305 = vmatpush.bf16.msra.mxu0 %v195
  %306 = vmatmul.bf16.gmra.mxu0 %v83
  %v307 = vpop.f32.mrf.mxu0
  %v308 = vadd.f32 %v70, %v307
  %v309 = vpop.f32.mrf.mxu0
  %v310 = vadd.f32 %v75, %v309
  %311 = vdwg.mxu0
  %312 = vmatpush.bf16.msra.mxu0 0
  %313 = vmatpush.bf16.msra.mxu0 0
  %314 = vmatpush.bf16.msra.mxu0 0
  %315 = vmatpush.bf16.msra.mxu0 0
  %316 = vmatpush.bf16.msra.mxu0 0
  %317 = vmatpush.bf16.msra.mxu0 0
  %318 = vmatpush.bf16.msra.mxu0 0
  %319 = vmatpush.bf16.msra.mxu0 %v227
  %320 = vmatmul.bf16.gmra.mxu0 %v268
  %v321 = vpop.f32.mrf.mxu0
  %v322 = vadd.f32 %v308, %v321
  %v323 = vpop.f32.mrf.mxu0
  %v324 = vadd.f32 %v310, %v323
  %325 = vdwg.mxu0
  %326 = vmatpush.bf16.msra.mxu0 %v224
  %327 = vmatpush.bf16.msra.mxu0 %v220
  %328 = vmatpush.bf16.msra.mxu0 %v216
  %329 = vmatpush.bf16.msra.mxu0 %v212
  %330 = vmatpush.bf16.msra.mxu0 %v208
  %331 = vmatpush.bf16.msra.mxu0 %v204
  %332 = vmatpush.bf16.msra.mxu0 %v200
  %333 = vmatpush.bf16.msra.mxu0 %v196
  %334 = vmatmul.bf16.gmra.mxu0 %v83
  %v335 = vpop.f32.mrf.mxu0
  %v336 = vadd.f32 %v70, %v335
  %v337 = vpop.f32.mrf.mxu0
  %v338 = vadd.f32 %v75, %v337
  %339 = vdwg.mxu0
  %340 = vmatpush.bf16.msra.mxu0 0
  %341 = vmatpush.bf16.msra.mxu0 0
  %342 = vmatpush.bf16.msra.mxu0 0
  %343 = vmatpush.bf16.msra.mxu0 0
  %344 = vmatpush.bf16.msra.mxu0 0
  %345 = vmatpush.bf16.msra.mxu0 0
  %346 = vmatpush.bf16.msra.mxu0 0
  %347 = vmatpush.bf16.msra.mxu0 %v228
  %348 = vmatmul.bf16.gmra.mxu0 %v268
  %v349 = vpop.f32.mrf.mxu0
  %v350 = vadd.f32 %v336, %v349
  %v351 = vpop.f32.mrf.mxu0
  %v352 = vadd.f32 %v338, %v351
  %353 = vdwg.mxu0
  %354 = vmatpush.bf16.msra.mxu0 %v225
  %355 = vmatpush.bf16.msra.mxu0 %v221
  %356 = vmatpush.bf16.msra.mxu0 %v217
  %357 = vmatpush.bf16.msra.mxu0 %v213
  %358 = vmatpush.bf16.msra.mxu0 %v209
  %359 = vmatpush.bf16.msra.mxu0 %v205
  %360 = vmatpush.bf16.msra.mxu0 %v201
  %361 = vmatpush.bf16.msra.mxu0 %v197
  %362 = vmatmul.bf16.gmra.mxu0 %v83
  %v363 = vpop.f32.mrf.mxu0
  %v364 = vadd.f32 %v70, %v363
  %v365 = vpop.f32.mrf.mxu0
  %v366 = vadd.f32 %v75, %v365
  %367 = vdwg.mxu0
  %368 = vmatpush.bf16.msra.mxu0 0
  %369 = vmatpush.bf16.msra.mxu0 0
  %370 = vmatpush.bf16.msra.mxu0 0
  %371 = vmatpush.bf16.msra.mxu0 0
  %372 = vmatpush.bf16.msra.mxu0 0
  %373 = vmatpush.bf16.msra.mxu0 0
  %374 = vmatpush.bf16.msra.mxu0 0
  %375 = vmatpush.bf16.msra.mxu0 %v229
  %376 = vmatmul.bf16.gmra.mxu0 %v268
  %v377 = vpop.f32.mrf.mxu0
  %v378 = vadd.f32 %v364, %v377
  %v379 = vpop.f32.mrf.mxu0
  %v380 = vadd.f32 %v366, %v379
  %381 = vdwg.mxu0
  %382 = vst [vmem:[%s3] sm:$0xff] %v294
  %383 = vst [vmem:[%s3 + $0x8] sm:$0xff] %v322
  %384 = vst [vmem:[%s3 + $0x10] sm:$0xff] %v350
  %385 = vst [vmem:[%s3 + $0x18] sm:$0xff] %v378
  %386 = vst [vmem:[%s3 + $0x20] sm:$0xff] %v296
  %387 = vst [vmem:[%s3 + $0x28] sm:$0xff] %v324
  %388 = vst [vmem:[%s3 + $0x30] sm:$0xff] %v352
  %389 = vst [vmem:[%s3 + $0x38] sm:$0xff] %v380
  %v390 = vld [vmem:[%s4] sm:$0xff]
  %v391 = vld [vmem:[%s4 + $0x8] sm:$0xff]
  %v392 = vadd.f32 %v294, %v322
  %v393 = vadd.f32 %v392, %v350
  %v394 = vadd.f32 %v393, %v378
  %395 = vadd.xlane.f32.xlu0 %v394
  %v396 = vpop.xlane.xlu0 %395
  %v397 = vadd.f32 %v296, %v324
  %v398 = vadd.f32 %v397, %v352
  %v399 = vadd.f32 %v398, %v380
  %400 = vadd.xlane.f32.xlu0 %v399
  %v401 = vpop.xlane.xlu0 %400
  %v402 = vadd.f32 %v390, %v396
  %v403 = vadd.f32 %v391, %v401
  %vm404 = vcmask 7168
  %405 = vst.msk [vmem:[%s4] sm:$0xff] %vm404, %v402
  %406 = vst.msk [vmem:[%s4 + $0x8] sm:$0xff] %vm404, %v403
  %v407 = vld [vmem:[%s5] sm:$0xff]
  %v408 = vld [vmem:[%s5 + $0x8] sm:$0xff]
  %v409 = vmul.f32 %v294, %v294
  %v410 = vmul.f32 %v322, %v322
  %v411 = vmul.f32 %v350, %v350
  %v412 = vmul.f32 %v378, %v378
  %v413 = vmul.f32 %v296, %v296
  %v414 = vmul.f32 %v324, %v324
  %v415 = vmul.f32 %v352, %v352
  %v416 = vmul.f32 %v380, %v380
  %v417 = vadd.f32 %v409, %v410
  %v418 = vadd.f32 %v417, %v411
  %v419 = vadd.f32 %v418, %v412
  %420 = vadd.xlane.f32.xlu0 %v419
  %v421 = vpop.xlane.xlu0 %420
  %v422 = vadd.f32 %v413, %v414
  %v423 = vadd.f32 %v422, %v415
  %v424 = vadd.f32 %v423, %v416
  %425 = vadd.xlane.f32.xlu0 %v424
  %v426 = vpop.xlane.xlu0 %425
  %v427 = vadd.f32 %v407, %v421
  %v428 = vadd.f32 %v408, %v426
  %429 = vst.msk [vmem:[%s5] sm:$0xff] %vm404, %v427
  %430 = vst.msk [vmem:[%s5 + $0x8] sm:$0xff] %vm404, %v428
  // Predicated region
  $region18: #{cnn_forward.32} parent=0 // pred_check
    _
  $region19: #{cnn_forward.32} parent=0 // pred_check_branch
    %432 = sbr.rel (0) target = $region21
  $region20: #{cnn_forward.32} parent=0 // pred_region
    _
  $region21: #{cnn_forward.32} parent=0 // pred_fallthru
    _
  // Predicated region
  $region22: #{cnn_forward.32} parent=0 // pred_check
    _
  $region23: #{cnn_forward.32} parent=0 // pred_check_branch
    %434 = sbr.rel (0) target = $region25
  $region24: #{cnn_forward.32} parent=0 // pred_region
    _
  $region25: #{cnn_forward.32} parent=0 // pred_fallthru
    _
  // Predicated region
  $region26: #{cnn_forward.32} parent=0 // pred_check
    _
  $region27: #{cnn_forward.32} parent=0 // pred_check_branch
    %436 = sbr.rel (0) target = $region29
  $region28: #{cnn_forward.32} parent=0 // pred_region
    _
  $region29: #{cnn_forward.32} parent=0 // pred_fallthru
    _
  // Predicated region
  $region30: #{cnn_forward.32} parent=0 // pred_check
    _
  $region31: #{cnn_forward.32} parent=0 // pred_check_branch
    %438 = sbr.rel (0) target = $region33
  $region32: #{cnn_forward.32} parent=0 // pred_region
    _
  $region33: #{cnn_forward.32} parent=0 // pred_fallthru
    _
  // Predicated region
  $region34: #{cnn_forward.32} parent=0 // pred_check
    _
  $region35: #{cnn_forward.32} parent=0 // pred_check_branch
    %440 = sbr.rel (0) target = $region37
  $region36: #{cnn_forward.32} parent=0 // pred_region
    _
  $region37: #{cnn_forward.32} parent=0 // pred_fallthru
    _
  // Predicated region
  $region38: #{cnn_forward.32} parent=0 // pred_check
    _
  $region39: #{cnn_forward.32} parent=0 // pred_check_branch
    %442 = sbr.rel (0) target = $region41
  $region40: #{cnn_forward.32} parent=0 // pred_region
    _
  $region41: #{cnn_forward.32} parent=0 // pred_fallthru
    _

// kernel: cnn_forward.34
$region0: #{cnn_forward.34}
  #allocation0 [shape = 'u32[]', space=smem, size = 0x4, offset = 0x4, fixed_abs, tag = 'smem constant byte address 0x4 - core index']
  #allocation1 [shape = 'u32[72,128]{1,0:T(1,128)}', space=vmem, size = 0x9000, scoped, tag = 'internal scratch']
  %s0 = inlined_call_operand.vmem [shape: f32[32,144], index: 0, kind: input, shape index: {}]
  %s1 = inlined_call_operand.vmem [shape: bf16[32,144], index: 1, kind: output, shape index: {}]
  %s2 = sld [smem:[#allocation0]]
  $region14: #{cnn_forward.34} parent=0
    _
  %s4 = ssub.s32 1, %s2
  %s5 = scalar_select 0, %s4, %s2
  // Predicated region
  $region2: #{cnn_forward.34} parent=0 // pred_check
    _
  $region3: #{cnn_forward.34} parent=0 // pred_check_branch
    %7 = sbr.rel (0) target = $region5
  $region4: #{cnn_forward.34} parent=0 // pred_region
    _
  $region5: #{cnn_forward.34} parent=0 // pred_fallthru
    _
  %v8 = vld [vmem:[%s0] sm:$0xff]
  %v9 = vld [vmem:[%s0 + $0x8] sm:$0xff]
  %v10 = vld [vmem:[%s0 + $0x10] sm:$0xff]
  %v11 = vld [vmem:[%s0 + $0x18] sm:$0xff]
  %v12 = vld [vmem:[%s0 + $0x20] sm:$0xff]
  %v13 = vld [vmem:[%s0 + $0x28] sm:$0xff]
  %v14 = vld [vmem:[%s0 + $0x30] sm:$0xff]
  %v15 = vld [vmem:[%s0 + $0x38] sm:$0xff]
  %v16 = vand.u32 2147483647, %v8
  %v17 = vand.u32 2147483647, %v9
  %v18 = vand.u32 2147483647, %v10
  %v19 = vand.u32 2147483647, %v11
  %v20 = vand.u32 2147483647, %v12
  %v21 = vand.u32 2147483647, %v13
  %v22 = vand.u32 2147483647, %v14
  %v23 = vand.u32 2147483647, %v15
  %v24 = vmul.f32 %v8, %v16
  %v25 = vmul.f32 %v9, %v17
  %v26 = vmul.f32 %v10, %v18
  %v27 = vmul.f32 %v11, %v19
  %v28 = vmul.f32 %v12, %v20
  %v29 = vmul.f32 %v13, %v21
  %v30 = vmul.f32 %v14, %v22
  %v31 = vmul.f32 %v15, %v23
  %v32 = vpack.c.bf16 %v25, %v24
  %v33 = vpack.c.bf16 %v27, %v26
  %v34 = vpack.c.bf16 %v29, %v28
  %v35 = vpack.c.bf16 %v31, %v30
  %vm36 = vcmask 1043456
  %vm37 = vcmask 130052
  %vm38 = vmor %vm37, %vm36
  %39 = vst.msk [vmem:[%s1] sm:$0xff] %vm38, %v32
  %40 = vst.msk [vmem:[%s1 + $0x8] sm:$0xff] %vm38, %v33
  %41 = vst.msk [vmem:[%s1 + $0x10] sm:$0xff] %vm38, %v34
  %42 = vst.msk [vmem:[%s1 + $0x18] sm:$0xff] %vm38, %v35
  // Predicated region
  $region6: #{cnn_forward.34} parent=0 // pred_check
    _
  $region7: #{cnn_forward.34} parent=0 // pred_check_branch
    %44 = sbr.rel (0) target = $region9
  $region8: #{cnn_forward.34} parent=0 // pred_region
    _
  $region9: #{cnn_forward.34} parent=0 // pred_fallthru
    _
  // Predicated region
  $region10: #{cnn_forward.34} parent=0 // pred_check
    _
  $region11: #{cnn_forward.34} parent=0 // pred_check_branch
    %46 = sbr.rel (0) target = $region13
  $region12: #{cnn_forward.34} parent=0 // pred_region
    _
  $region13: #{cnn_forward.34} parent=0 // pred_fallthru
    _

// kernel: cnn_forward.35
$region0: #{cnn_forward.35}
  #allocation0 [shape = 'u32[]', space=smem, size = 0x4, offset = 0x4, fixed_abs, tag = 'smem constant byte address 0x4 - core index']
  #allocation1 [shape = 'u32[72,128]{1,0:T(1,128)}', space=vmem, size = 0x9000, scoped, tag = 'internal scratch']
  %s0 = inlined_call_operand.vmem [shape: bf16[144,128], index: 0, kind: input, shape index: {}]
  %s1 = inlined_call_operand.vmem [shape: bf16[32,144], index: 1, kind: input, shape index: {}]
  %s2 = inlined_call_operand.vmem [shape: f32[32,1], index: 2, kind: input, shape index: {}]
  %s3 = inlined_call_operand.vmem [shape: f32[32,128], index: 3, kind: output, shape index: {0}]
  %s4 = inlined_call_operand.vmem [shape: f32[32,1], index: 4, kind: output, shape index: {1}]
  %s5 = inlined_call_operand.vmem [shape: f32[32,1], index: 5, kind: output, shape index: {2}]
  %6 = xla_tuple %s3, %s4, %s5
  %s7 = sld [smem:[#allocation0]]
  $region42: #{cnn_forward.35} parent=0
    _
  %s9 = ssub.s32 1, %s7
  %s10 = scalar_select 0, %s9, %s7
  // Predicated region
  $region2: #{cnn_forward.35} parent=0 // pred_check
    _
  $region3: #{cnn_forward.35} parent=0 // pred_check_branch
    %12 = sbr.rel (0) target = $region5
  $region4: #{cnn_forward.35} parent=0 // pred_region
    _
  $region5: #{cnn_forward.35} parent=0 // pred_fallthru
    _
  // Predicated region
  $region6: #{cnn_forward.35} parent=0 // pred_check
    _
  $region7: #{cnn_forward.35} parent=0 // pred_check_branch
    %14 = sbr.rel (0) target = $region9
  $region8: #{cnn_forward.35} parent=0 // pred_region
    _
  $region9: #{cnn_forward.35} parent=0 // pred_fallthru
    _
  // Predicated region
  $region10: #{cnn_forward.35} parent=0 // pred_check
    _
  $region11: #{cnn_forward.35} parent=0 // pred_check_branch
    %16 = sbr.rel (0) target = $region13
  $region12: #{cnn_forward.35} parent=0 // pred_region
    _
  $region13: #{cnn_forward.35} parent=0 // pred_fallthru
    _
  %p18 = scmp.eq.s32.totalorder 0, 0
  // Predicated region
  $region14: #{cnn_forward.35} parent=0 // pred_check
    %p19 = pneg %p18
  $region15: #{cnn_forward.35} parent=0 // pred_check_branch
    %21 = sbr.rel (%p19) target = $region17
  $region16: #{cnn_forward.35} parent=0 // pred_region
    %vm22 = vcmask 7168
    %23 = vst.msk [vmem:[%s4] sm:$0xff] %vm22, 0.0
    %24 = vst.msk [vmem:[%s4 + $0x8] sm:$0xff] %vm22, 0.0
    %25 = vst.msk [vmem:[%s4 + $0x10] sm:$0xff] %vm22, 0.0
    %26 = vst.msk [vmem:[%s4 + $0x18] sm:$0xff] %vm22, 0.0
    %27 = vst.msk [vmem:[%s5] sm:$0xff] %vm22, 0.0
    %28 = vst.msk [vmem:[%s5 + $0x8] sm:$0xff] %vm22, 0.0
    %29 = vst.msk [vmem:[%s5 + $0x10] sm:$0xff] %vm22, 0.0
    %30 = vst.msk [vmem:[%s5 + $0x18] sm:$0xff] %vm22, 0.0
  $region17: #{cnn_forward.35} parent=0 // pred_fallthru
    _
  %v31 = vld [vmem:[%s1] sm:$0xff]
  %v32 = vld [vmem:[%s1 + $0x8] sm:$0xff]
  %v33 = vld [vmem:[%s1 + $0x10] sm:$0xff]
  %v34 = vld [vmem:[%s1 + $0x18] sm:$0xff]
  %v35 = vld [vmem:[%s0] sm:$0xf]
  %v36 = vld [vmem:[%s0 + $0x4] sm:$0xf]
  %v37 = vld [vmem:[%s0 + $0x8] sm:$0xf]
  %v38 = vld [vmem:[%s0 + $0xc] sm:$0xf]
  %v39 = vld [vmem:[%s0 + $0x10] sm:$0xf]
  %v40 = vld [vmem:[%s0 + $0x14] sm:$0xf]
  %v41 = vld [vmem:[%s0 + $0x18] sm:$0xf]
  %v42 = vld [vmem:[%s0 + $0x1c] sm:$0xf]
  %v43 = vld [vmem:[%s0 + $0x20] sm:$0xf]
  %v44 = vld [vmem:[%s0 + $0x24] sm:$0xf]
  %v45 = vld [vmem:[%s0 + $0x28] sm:$0xf]
  %v46 = vld [vmem:[%s0 + $0x2c] sm:$0xf]
  %v47 = vld [vmem:[%s0 + $0x30] sm:$0xf]
  %v48 = vld [vmem:[%s0 + $0x34] sm:$0xf]
  %v49 = vld [vmem:[%s0 + $0x38] sm:$0xf]
  %v50 = vld [vmem:[%s0 + $0x3c] sm:$0xf]
  %v51 = vld [vmem:[%s0 + $0x40] sm:$0xf]
  %v52 = vld [vmem:[%s0 + $0x44] sm:$0xf]
  %v53 = vld [vmem:[%s2] sm:$0xff]
  %v54 = vld [vmem:[%s2 + $0x8] sm:$0xff]
  %v55 = vld [vmem:[%s2 + $0x10] sm:$0xff]
  %v56 = vld [vmem:[%s2 + $0x18] sm:$0xff]
  %58 = vset.pattern.permute.xlu0 0
  %59 = vperm.xlu0 %58, %v53
  %v60 = vpop.permute.xlu0 %59
  %63 = vset.pattern.permute.xlu0 0
  %64 = vperm.xlu0 %63, %v54
  %v65 = vpop.permute.xlu0 %64
  %68 = vset.pattern.permute.xlu0 0
  %69 = vperm.xlu0 %68, %v55
  %v70 = vpop.permute.xlu0 %69
  %73 = vset.pattern.permute.xlu0 0
  %74 = vperm.xlu0 %73, %v56
  %v75 = vpop.permute.xlu0 %74
  %v81 = vunpack.c.l.b16 %v31
  %v82 = vunpack.c.h.b16 %v31
  %v83 = vunpack.c.l.b16 %v32
  %v84 = vunpack.c.h.b16 %v32
  %v85 = vunpack.c.l.b16 %v33
  %v86 = vunpack.c.h.b16 %v33
  %v87 = vunpack.c.l.b16 %v34
  %v88 = vunpack.c.h.b16 %v34
  %v89 = vpack.c.b16 %v83, %v81
  %v90 = vpack.c.b16 %v84, %v82
  %v91 = vpack.c.b16 %v87, %v85
  %v92 = vpack.c.b16 %v88, %v86
  %v113 = vunpack.c.l.b16 %v35
  %v114 = vunpack.c.l.b16 %v36
  %v115 = vunpack.c.l.b16 %v37
  %v116 = vunpack.c.l.b16 %v38
  %v117 = vunpack.c.l.b16 %v39
  %v118 = vunpack.c.l.b16 %v40
  %v119 = vunpack.c.l.b16 %v41
  %v120 = vunpack.c.l.b16 %v42
  %v121 = vunpack.c.l.b16 %v43
  %v122 = vunpack.c.l.b16 %v44
  %v123 = vunpack.c.l.b16 %v45
  %v124 = vunpack.c.l.b16 %v46
  %v125 = vunpack.c.l.b16 %v47
  %v126 = vunpack.c.l.b16 %v48
  %v127 = vunpack.c.l.b16 %v49
  %v128 = vunpack.c.l.b16 %v50
  %v129 = vunpack.c.l.b16 %v51
  %v130 = vunpack.c.l.b16 %v52
  %v131 = vpack.c.b16 %v114, %v113
  %v132 = vpack.c.b16 %v116, %v115
  %v133 = vpack.c.b16 %v118, %v117
  %v134 = vpack.c.b16 %v120, %v119
  %v135 = vpack.c.b16 %v122, %v121
  %v136 = vpack.c.b16 %v124, %v123
  %v137 = vpack.c.b16 %v126, %v125
  %v138 = vpack.c.b16 %v128, %v127
  %v139 = vpack.c.b16 %v130, %v129
  %vm149 = vcmask 130048
  %v151 = vsel %vm149, %v90, 0
  %v154 = vsel %vm149, %v92, 0
  %156 = vmatpush.bf16.msra.mxu0 %v138
  %157 = vmatpush.bf16.msra.mxu0 %v137
  %158 = vmatpush.bf16.msra.mxu0 %v136
  %159 = vmatpush.bf16.msra.mxu0 %v135
  %160 = vmatpush.bf16.msra.mxu0 %v134
  %161 = vmatpush.bf16.msra.mxu0 %v133
  %162 = vmatpush.bf16.msra.mxu0 %v132
  %163 = vmatpush.bf16.msra.mxu0 %v131
  %164 = vmatmul.bf16.gmra.mxu0 %v89
  %v165 = vpop.f32.mrf.mxu0
  %v166 = vadd.f32 %v60, %v165
  %v167 = vpop.f32.mrf.mxu0
  %v168 = vadd.f32 %v65, %v167
  %169 = vmatmul.bf16.gmra.mxu0 %v91
  %v170 = vpop.f32.mrf.mxu0
  %v171 = vadd.f32 %v70, %v170
  %v172 = vpop.f32.mrf.mxu0
  %v173 = vadd.f32 %v75, %v172
  %174 = vdwg.mxu0
  %175 = vmatpush.bf16.msra.mxu0 0
  %176 = vmatpush.bf16.msra.mxu0 0
  %177 = vmatpush.bf16.msra.mxu0 0
  %178 = vmatpush.bf16.msra.mxu0 0
  %179 = vmatpush.bf16.msra.mxu0 0
  %180 = vmatpush.bf16.msra.mxu0 0
  %181 = vmatpush.bf16.msra.mxu0 0
  %182 = vmatpush.bf16.msra.mxu0 %v139
  %183 = vmatmul.bf16.gmra.mxu0 %v151
  %v184 = vpop.f32.mrf.mxu0
  %v185 = vadd.f32 %v166, %v184
  %v186 = vpop.f32.mrf.mxu0
  %v187 = vadd.f32 %v168, %v186
  %188 = vmatmul.bf16.gmra.mxu0 %v154
  %v189 = vpop.f32.mrf.mxu0
  %v190 = vadd.f32 %v171, %v189
  %v191 = vpop.f32.mrf.mxu0
  %v192 = vadd.f32 %v173, %v191
  %193 = vdwg.mxu0
  %194 = vst [vmem:[%s3] sm:$0xff] %v185
  %195 = vst [vmem:[%s3 + $0x8] sm:$0xff] %v187
  %196 = vst [vmem:[%s3 + $0x10] sm:$0xff] %v190
  %197 = vst [vmem:[%s3 + $0x18] sm:$0xff] %v192
  %v198 = vld [vmem:[%s4] sm:$0xff]
  %v199 = vld [vmem:[%s4 + $0x8] sm:$0xff]
  %v200 = vld [vmem:[%s4 + $0x10] sm:$0xff]
  %v201 = vld [vmem:[%s4 + $0x18] sm:$0xff]
  %202 = vadd.xlane.f32.xlu0 %v185
  %v203 = vpop.xlane.xlu0 %202
  %204 = vadd.xlane.f32.xlu0 %v187
  %v205 = vpop.xlane.xlu0 %204
  %206 = vadd.xlane.f32.xlu0 %v190
  %v207 = vpop.xlane.xlu0 %206
  %208 = vadd.xlane.f32.xlu0 %v192
  %v209 = vpop.xlane.xlu0 %208
  %v210 = vadd.f32 %v198, %v203
  %v211 = vadd.f32 %v199, %v205
  %v212 = vadd.f32 %v200, %v207
  %v213 = vadd.f32 %v201, %v209
  %vm214 = vcmask 7168
  %215 = vst.msk [vmem:[%s4] sm:$0xff] %vm214, %v210
  %216 = vst.msk [vmem:[%s4 + $0x8] sm:$0xff] %vm214, %v211
  %217 = vst.msk [vmem:[%s4 + $0x10] sm:$0xff] %vm214, %v212
  %218 = vst.msk [vmem:[%s4 + $0x18] sm:$0xff] %vm214, %v213
  %v219 = vld [vmem:[%s5] sm:$0xff]
  %v220 = vld [vmem:[%s5 + $0x8] sm:$0xff]
  %v221 = vld [vmem:[%s5 + $0x10] sm:$0xff]
  %v222 = vld [vmem:[%s5 + $0x18] sm:$0xff]
  %v223 = vmul.f32 %v185, %v185
  %v224 = vmul.f32 %v187, %v187
  %v225 = vmul.f32 %v190, %v190
  %v226 = vmul.f32 %v192, %v192
  %227 = vadd.xlane.f32.xlu0 %v223
  %v228 = vpop.xlane.xlu0 %227
  %229 = vadd.xlane.f32.xlu0 %v224
  %v230 = vpop.xlane.xlu0 %229
  %231 = vadd.xlane.f32.xlu0 %v225
  %v232 = vpop.xlane.xlu0 %231
  %233 = vadd.xlane.f32.xlu0 %v226
  %v234 = vpop.xlane.xlu0 %233
  %v235 = vadd.f32 %v219, %v228
  %v236 = vadd.f32 %v220, %v230
  %v237 = vadd.f32 %v221, %v232
  %v238 = vadd.f32 %v222, %v234
  %239 = vst.msk [vmem:[%s5] sm:$0xff] %vm214, %v235
  %240 = vst.msk [vmem:[%s5 + $0x8] sm:$0xff] %vm214, %v236
  %241 = vst.msk [vmem:[%s5 + $0x10] sm:$0xff] %vm214, %v237
  %242 = vst.msk [vmem:[%s5 + $0x18] sm:$0xff] %vm214, %v238
  // Predicated region
  $region18: #{cnn_forward.35} parent=0 // pred_check
    _
  $region19: #{cnn_forward.35} parent=0 // pred_check_branch
    %244 = sbr.rel (0) target = $region21
  $region20: #{cnn_forward.35} parent=0 // pred_region
    _
  $region21: #{cnn_forward.35} parent=0 // pred_fallthru
    _
  // Predicated region
  $region22: #{cnn_forward.35} parent=0 // pred_check
    _
  $region23: #{cnn_forward.35} parent=0 // pred_check_branch
    %246 = sbr.rel (0) target = $region25
  $region24: #{cnn_forward.35} parent=0 // pred_region
    _
  $region25: #{cnn_forward.35} parent=0 // pred_fallthru
    _
  // Predicated region
  $region26: #{cnn_forward.35} parent=0 // pred_check
    _
  $region27: #{cnn_forward.35} parent=0 // pred_check_branch
    %248 = sbr.rel (0) target = $region29
  $region28: #{cnn_forward.35} parent=0 // pred_region
    _
  $region29: #{cnn_forward.35} parent=0 // pred_fallthru
    _
  // Predicated region
  $region30: #{cnn_forward.35} parent=0 // pred_check
    _
  $region31: #{cnn_forward.35} parent=0 // pred_check_branch
    %250 = sbr.rel (0) target = $region33
  $region32: #{cnn_forward.35} parent=0 // pred_region
    _
  $region33: #{cnn_forward.35} parent=0 // pred_fallthru
    _
  // Predicated region
  $region34: #{cnn_forward.35} parent=0 // pred_check
    _
  $region35: #{cnn_forward.35} parent=0 // pred_check_branch
    %252 = sbr.rel (0) target = $region37
  $region36: #{cnn_forward.35} parent=0 // pred_region
    _
  $region37: #{cnn_forward.35} parent=0 // pred_fallthru
    _
  // Predicated region
  $region38: #{cnn_forward.35} parent=0 // pred_check
    _
  $region39: #{cnn_forward.35} parent=0 // pred_check_branch
    %254 = sbr.rel (0) target = $region41
  $region40: #{cnn_forward.35} parent=0 // pred_region
    _
  $region41: #{cnn_forward.35} parent=0 // pred_fallthru
    _

// kernel: cnn_forward.36
$region0: #{cnn_forward.36}
  #allocation0 [shape = 'u32[]', space=smem, size = 0x4, offset = 0x4, fixed_abs, tag = 'smem constant byte address 0x4 - core index']
  #allocation1 [shape = 'u32[72,128]{1,0:T(1,128)}', space=vmem, size = 0x9000, scoped, tag = 'internal scratch']
  %s0 = inlined_call_operand.vmem [shape: f32[32,128], index: 0, kind: input, shape index: {}]
  %s1 = inlined_call_operand.vmem [shape: f32[32,1], index: 1, kind: input, shape index: {}]
  %s2 = inlined_call_operand.vmem [shape: f32[32,1], index: 2, kind: input, shape index: {}]
  %s3 = inlined_call_operand.vmem [shape: f32[32,1], index: 3, kind: input, shape index: {}]
  %s4 = inlined_call_operand.vmem [shape: f32[32,1], index: 4, kind: input, shape index: {}]
  %s5 = inlined_call_operand.vmem [shape: bf16[32,128], index: 5, kind: output, shape index: {}]
  %s6 = sld [smem:[#allocation0]]
  $region30: #{cnn_forward.36} parent=0
    _
  %s8 = ssub.s32 1, %s6
  %s9 = scalar_select 0, %s8, %s6
  // Predicated region
  $region2: #{cnn_forward.36} parent=0 // pred_check
    _
  $region3: #{cnn_forward.36} parent=0 // pred_check_branch
    %11 = sbr.rel (0) target = $region5
  $region4: #{cnn_forward.36} parent=0 // pred_region
    _
  $region5: #{cnn_forward.36} parent=0 // pred_fallthru
    _
  // Predicated region
  $region6: #{cnn_forward.36} parent=0 // pred_check
    _
  $region7: #{cnn_forward.36} parent=0 // pred_check_branch
    %13 = sbr.rel (0) target = $region9
  $region8: #{cnn_forward.36} parent=0 // pred_region
    _
  $region9: #{cnn_forward.36} parent=0 // pred_fallthru
    _
  // Predicated region
  $region10: #{cnn_forward.36} parent=0 // pred_check
    _
  $region11: #{cnn_forward.36} parent=0 // pred_check_branch
    %15 = sbr.rel (0) target = $region13
  $region12: #{cnn_forward.36} parent=0 // pred_region
    _
  $region13: #{cnn_forward.36} parent=0 // pred_fallthru
    _
  // Predicated region
  $region14: #{cnn_forward.36} parent=0 // pred_check
    _
  $region15: #{cnn_forward.36} parent=0 // pred_check_branch
    %17 = sbr.rel (0) target = $region17
  $region16: #{cnn_forward.36} parent=0 // pred_region
    _
  $region17: #{cnn_forward.36} parent=0 // pred_fallthru
    _
  // Predicated region
  $region18: #{cnn_forward.36} parent=0 // pred_check
    _
  $region19: #{cnn_forward.36} parent=0 // pred_check_branch
    %19 = sbr.rel (0) target = $region21
  $region20: #{cnn_forward.36} parent=0 // pred_region
    _
  $region21: #{cnn_forward.36} parent=0 // pred_fallthru
    _
  %v20 = vld [vmem:[%s1] sm:$0xff]
  %v21 = vld [vmem:[%s1 + $0x8] sm:$0xff]
  %v22 = vld [vmem:[%s1 + $0x10] sm:$0xff]
  %v23 = vld [vmem:[%s1 + $0x18] sm:$0xff]
  %v24 = vmul.f32 %v20, 0.0078125
  %v25 = vmul.f32 %v21, 0.0078125
  %v26 = vmul.f32 %v22, 0.0078125
  %v27 = vmul.f32 %v23, 0.0078125
  %v28 = vld [vmem:[%s2] sm:$0xff]
  %v29 = vld [vmem:[%s2 + $0x8] sm:$0xff]
  %v30 = vld [vmem:[%s2 + $0x10] sm:$0xff]
  %v31 = vld [vmem:[%s2 + $0x18] sm:$0xff]
  %v32 = vmul.f32 %v28, 0.0078125
  %v33 = vmul.f32 %v29, 0.0078125
  %v34 = vmul.f32 %v30, 0.0078125
  %v35 = vmul.f32 %v31, 0.0078125
  %v36 = vmul.f32 %v24, %v24
  %v37 = vmul.f32 %v25, %v25
  %v38 = vmul.f32 %v26, %v26
  %v39 = vmul.f32 %v27, %v27
  %v40 = vsub.f32 %v32, %v36
  %v41 = vsub.f32 %v33, %v37
  %v42 = vsub.f32 %v34, %v38
  %v43 = vsub.f32 %v35, %v39
  %v44 = vmax.f32 %v40, 0.0
  %v45 = vmax.f32 %v41, 0.0
  %v46 = vmax.f32 %v42, 0.0
  %v47 = vmax.f32 %v43, 0.0
  %v48 = vadd.f32 %v44, 1e-05
  %v49 = vadd.f32 %v45, 1e-05
  %v50 = vadd.f32 %v46, 1e-05
  %v51 = vadd.f32 %v47, 1e-05
  %v52 = vrsqrt.pop %v48
  %v53 = vmul.f32 %v52, %v48
  %v54 = vmul.f32 %v53, %v52
  %v55 = vmul.f32 0.5, %v54
  %v56 = vsub.f32 1.5, %v55
  %v57 = vmul.f32 %v52, %v56
  %vm58 = vweird.f32 %v48
  %vm59 = vweird.f32 %v52
  %vm60 = vmor %vm58, %vm59
  %v61 = vsel %vm60, %v52, %v57
  %v62 = vrsqrt.pop %v49
  %v63 = vmul.f32 %v62, %v49
  %v64 = vmul.f32 %v63, %v62
  %v65 = vmul.f32 0.5, %v64
  %v66 = vsub.f32 1.5, %v65
  %v67 = vmul.f32 %v62, %v66
  %vm68 = vweird.f32 %v49
  %vm69 = vweird.f32 %v62
  %vm70 = vmor %vm68, %vm69
  %v71 = vsel %vm70, %v62, %v67
  %v72 = vrsqrt.pop %v50
  %v73 = vmul.f32 %v72, %v50
  %v74 = vmul.f32 %v73, %v72
  %v75 = vmul.f32 0.5, %v74
  %v76 = vsub.f32 1.5, %v75
  %v77 = vmul.f32 %v72, %v76
  %vm78 = vweird.f32 %v50
  %vm79 = vweird.f32 %v72
  %vm80 = vmor %vm78, %vm79
  %v81 = vsel %vm80, %v72, %v77
  %v82 = vrsqrt.pop %v51
  %v83 = vmul.f32 %v82, %v51
  %v84 = vmul.f32 %v83, %v82
  %v85 = vmul.f32 0.5, %v84
  %v86 = vsub.f32 1.5, %v85
  %v87 = vmul.f32 %v82, %v86
  %vm88 = vweird.f32 %v51
  %vm89 = vweird.f32 %v82
  %vm90 = vmor %vm88, %vm89
  %v91 = vsel %vm90, %v82, %v87
  %v92 = vld [vmem:[%s3] sm:$0xff]
  %v93 = vld [vmem:[%s3 + $0x8] sm:$0xff]
  %v94 = vld [vmem:[%s3 + $0x10] sm:$0xff]
  %v95 = vld [vmem:[%s3 + $0x18] sm:$0xff]
  %v96 = vmul.f32 %v61, %v92
  %v97 = vmul.f32 %v71, %v93
  %v98 = vmul.f32 %v81, %v94
  %v99 = vmul.f32 %v91, %v95
  %v100 = vld [vmem:[%s4] sm:$0xff]
  %v101 = vld [vmem:[%s4 + $0x8] sm:$0xff]
  %v102 = vld [vmem:[%s4 + $0x10] sm:$0xff]
  %v103 = vld [vmem:[%s4 + $0x18] sm:$0xff]
  %v104 = vmul.f32 %v24, %v96
  %v105 = vmul.f32 %v25, %v97
  %v106 = vmul.f32 %v26, %v98
  %v107 = vmul.f32 %v27, %v99
  %v108 = vsub.f32 %v100, %v104
  %v109 = vsub.f32 %v101, %v105
  %v110 = vsub.f32 %v102, %v106
  %v111 = vsub.f32 %v103, %v107
  %v112 = vld [vmem:[%s0] sm:$0xff]
  %v113 = vld [vmem:[%s0 + $0x8] sm:$0xff]
  %v114 = vld [vmem:[%s0 + $0x10] sm:$0xff]
  %v115 = vld [vmem:[%s0 + $0x18] sm:$0xff]
  %117 = vset.pattern.permute.xlu0 0
  %118 = vperm.xlu0 %117, %v96
  %v119 = vpop.permute.xlu0 %118
  %122 = vset.pattern.permute.xlu0 0
  %123 = vperm.xlu0 %122, %v97
  %v124 = vpop.permute.xlu0 %123
  %127 = vset.pattern.permute.xlu0 0
  %128 = vperm.xlu0 %127, %v98
  %v129 = vpop.permute.xlu0 %128
  %132 = vset.pattern.permute.xlu0 0
  %133 = vperm.xlu0 %132, %v99
  %v134 = vpop.permute.xlu0 %133
  %v136 = vmul.f32 %v112, %v119
  %v137 = vmul.f32 %v113, %v124
  %v138 = vmul.f32 %v114, %v129
  %v139 = vmul.f32 %v115, %v134
  %141 = vset.pattern.permute.xlu0 0
  %142 = vperm.xlu0 %141, %v108
  %v143 = vpop.permute.xlu0 %142
  %146 = vset.pattern.permute.xlu0 0
  %147 = vperm.xlu0 %146, %v109
  %v148 = vpop.permute.xlu0 %147
  %151 = vset.pattern.permute.xlu0 0
  %152 = vperm.xlu0 %151, %v110
  %v153 = vpop.permute.xlu0 %152
  %156 = vset.pattern.permute.xlu0 0
  %157 = vperm.xlu0 %156, %v111
  %v158 = vpop.permute.xlu0 %157
  %v160 = vadd.f32 %v136, %v143
  %v161 = vadd.f32 %v137, %v148
  %v162 = vadd.f32 %v138, %v153
  %v163 = vadd.f32 %v139, %v158
  %v164 = vmax.f32 %v160, 0.0
  %v165 = vmax.f32 %v161, 0.0
  %v166 = vmax.f32 %v162, 0.0
  %v167 = vmax.f32 %v163, 0.0
  %v168 = vpack.c.bf16 %v164, %v164
  %v169 = vpack.c.bf16 %v165, %v165
  %v170 = vpack.c.bf16 %v166, %v166
  %v171 = vpack.c.bf16 %v167, %v167
  %172 = vst [vmem:[%s5] sm:$0xf] %v168
  %173 = vst [vmem:[%s5 + $0x4] sm:$0xf] %v169
  %174 = vst [vmem:[%s5 + $0x8] sm:$0xf] %v170
  %175 = vst [vmem:[%s5 + $0xc] sm:$0xf] %v171
  // Predicated region
  $region22: #{cnn_forward.36} parent=0 // pred_check
    _
  $region23: #{cnn_forward.36} parent=0 // pred_check_branch
    %177 = sbr.rel (0) target = $region25
  $region24: #{cnn_forward.36} parent=0 // pred_region
    _
  $region25: #{cnn_forward.36} parent=0 // pred_fallthru
    _
  // Predicated region
  $region26: #{cnn_forward.36} parent=0 // pred_check
    _
  $region27: #{cnn_forward.36} parent=0 // pred_check_branch
    %179 = sbr.rel (0) target = $region29
  $region28: #{cnn_forward.36} parent=0 // pred_region
    _
  $region29: #{cnn_forward.36} parent=0 // pred_fallthru
    _

// kernel: cnn_forward.37
$region0: #{cnn_forward.37}
  #allocation0 [shape = 'u32[]', space=smem, size = 0x4, offset = 0x4, fixed_abs, tag = 'smem constant byte address 0x4 - core index']
  #allocation1 [shape = 'u32[72,128]{1,0:T(1,128)}', space=vmem, size = 0x9000, scoped, tag = 'internal scratch']
  %s0 = inlined_call_operand.vmem [shape: f32[32,288], index: 0, kind: input, shape index: {}]
  %s1 = inlined_call_operand.vmem [shape: bf16[32,288], index: 1, kind: output, shape index: {}]
  %s2 = sld [smem:[#allocation0]]
  $region14: #{cnn_forward.37} parent=0
    _
  %s4 = ssub.s32 1, %s2
  %s5 = scalar_select 0, %s4, %s2
  // Predicated region
  $region2: #{cnn_forward.37} parent=0 // pred_check
    _
  $region3: #{cnn_forward.37} parent=0 // pred_check_branch
    %7 = sbr.rel (0) target = $region5
  $region4: #{cnn_forward.37} parent=0 // pred_region
    _
  $region5: #{cnn_forward.37} parent=0 // pred_fallthru
    _
  %v8 = vld [vmem:[%s0] sm:$0xff]
  %v9 = vld [vmem:[%s0 + $0x8] sm:$0xff]
  %v10 = vld [vmem:[%s0 + $0x10] sm:$0xff]
  %v11 = vld [vmem:[%s0 + $0x18] sm:$0xff]
  %v12 = vld [vmem:[%s0 + $0x20] sm:$0xff]
  %v13 = vld [vmem:[%s0 + $0x28] sm:$0xff]
  %v14 = vld [vmem:[%s0 + $0x30] sm:$0xff]
  %v15 = vld [vmem:[%s0 + $0x38] sm:$0xff]
  %v16 = vld [vmem:[%s0 + $0x40] sm:$0xff]
  %v17 = vld [vmem:[%s0 + $0x48] sm:$0xff]
  %v18 = vld [vmem:[%s0 + $0x50] sm:$0xff]
  %v19 = vld [vmem:[%s0 + $0x58] sm:$0xff]
  %v20 = vand.u32 2147483647, %v8
  %v21 = vand.u32 2147483647, %v9
  %v22 = vand.u32 2147483647, %v10
  %v23 = vand.u32 2147483647, %v11
  %v24 = vand.u32 2147483647, %v12
  %v25 = vand.u32 2147483647, %v13
  %v26 = vand.u32 2147483647, %v14
  %v27 = vand.u32 2147483647, %v15
  %v28 = vand.u32 2147483647, %v16
  %v29 = vand.u32 2147483647, %v17
  %v30 = vand.u32 2147483647, %v18
  %v31 = vand.u32 2147483647, %v19
  %v32 = vmul.f32 %v8, %v20
  %v33 = vmul.f32 %v9, %v21
  %v34 = vmul.f32 %v10, %v22
  %v35 = vmul.f32 %v11, %v23
  %v36 = vmul.f32 %v12, %v24
  %v37 = vmul.f32 %v13, %v25
  %v38 = vmul.f32 %v14, %v26
  %v39 = vmul.f32 %v15, %v27
  %v40 = vmul.f32 %v16, %v28
  %v41 = vmul.f32 %v17, %v29
  %v42 = vmul.f32 %v18, %v30
  %v43 = vmul.f32 %v19, %v31
  %v44 = vpack.c.bf16 %v33, %v32
  %v45 = vpack.c.bf16 %v34, %v34
  %v46 = vpack.c.bf16 %v36, %v35
  %v47 = vpack.c.bf16 %v37, %v37
  %v48 = vpack.c.bf16 %v39, %v38
  %v49 = vpack.c.bf16 %v40, %v40
  %v50 = vpack.c.bf16 %v42, %v41
  %v51 = vpack.c.bf16 %v43, %v43
  %52 = vst [vmem:[%s1] sm:$0xff] %v44
  %vm53 = vcmask 257024
  %54 = vst.msk [vmem:[%s1 + $0x8] sm:$0xf] %vm53, %v45
  %55 = vst [vmem:[%s1 + $0xc] sm:$0xff] %v46
  %56 = vst.msk [vmem:[%s1 + $0x14] sm:$0xf] %vm53, %v47
  %57 = vst [vmem:[%s1 + $0x18] sm:$0xff] %v48
  %58 = vst.msk [vmem:[%s1 + $0x20] sm:$0xf] %vm53, %v49
  %59 = vst [vmem:[%s1 + $0x24] sm:$0xff] %v50
  %60 = vst.msk [vmem:[%s1 + $0x2c] sm:$0xf] %vm53, %v51
  // Predicated region
  $region6: #{cnn_forward.37} parent=0 // pred_check
    _
  $region7: #{cnn_forward.37} parent=0 // pred_check_branch
    %62 = sbr.rel (0) target = $region9
  $region8: #{cnn_forward.37} parent=0 // pred_region
    _
  $region9: #{cnn_forward.37} parent=0 // pred_fallthru
    _
  // Predicated region
  $region10: #{cnn_forward.37} parent=0 // pred_check
    _
  $region11: #{cnn_forward.37} parent=0 // pred_check_branch
    %64 = sbr.rel (0) target = $region13
  $region12: #{cnn_forward.37} parent=0 // pred_region
    _
  $region13: #{cnn_forward.37} parent=0 // pred_fallthru
    _

// kernel: cnn_forward.38
$region0: #{cnn_forward.38}
  #allocation0 [shape = 'u32[]', space=smem, size = 0x4, offset = 0x4, fixed_abs, tag = 'smem constant byte address 0x4 - core index']
  #allocation1 [shape = 'u32[72,128]{1,0:T(1,128)}', space=vmem, size = 0x9000, scoped, tag = 'internal scratch']
  %s0 = inlined_call_operand.vmem [shape: bf16[288,128], index: 0, kind: input, shape index: {}]
  %s1 = inlined_call_operand.vmem [shape: bf16[32,288], index: 1, kind: input, shape index: {}]
  %s2 = inlined_call_operand.vmem [shape: f32[32,1], index: 2, kind: input, shape index: {}]
  %s3 = inlined_call_operand.vmem [shape: f32[32,128], index: 3, kind: output, shape index: {0}]
  %s4 = inlined_call_operand.vmem [shape: f32[32,1], index: 4, kind: output, shape index: {1}]
  %s5 = inlined_call_operand.vmem [shape: f32[32,1], index: 5, kind: output, shape index: {2}]
  %6 = xla_tuple %s3, %s4, %s5
  %s7 = sld [smem:[#allocation0]]
  $region42: #{cnn_forward.38} parent=0
    _
  %s9 = ssub.s32 1, %s7
  %s10 = scalar_select 0, %s9, %s7
  // Predicated region
  $region2: #{cnn_forward.38} parent=0 // pred_check
    _
  $region3: #{cnn_forward.38} parent=0 // pred_check_branch
    %12 = sbr.rel (0) target = $region5
  $region4: #{cnn_forward.38} parent=0 // pred_region
    _
  $region5: #{cnn_forward.38} parent=0 // pred_fallthru
    _
  // Predicated region
  $region6: #{cnn_forward.38} parent=0 // pred_check
    _
  $region7: #{cnn_forward.38} parent=0 // pred_check_branch
    %14 = sbr.rel (0) target = $region9
  $region8: #{cnn_forward.38} parent=0 // pred_region
    _
  $region9: #{cnn_forward.38} parent=0 // pred_fallthru
    _
  // Predicated region
  $region10: #{cnn_forward.38} parent=0 // pred_check
    _
  $region11: #{cnn_forward.38} parent=0 // pred_check_branch
    %16 = sbr.rel (0) target = $region13
  $region12: #{cnn_forward.38} parent=0 // pred_region
    _
  $region13: #{cnn_forward.38} parent=0 // pred_fallthru
    _
  %p18 = scmp.eq.s32.totalorder 0, 0
  // Predicated region
  $region14: #{cnn_forward.38} parent=0 // pred_check
    %p19 = pneg %p18
  $region15: #{cnn_forward.38} parent=0 // pred_check_branch
    %21 = sbr.rel (%p19) target = $region17
  $region16: #{cnn_forward.38} parent=0 // pred_region
    %vm22 = vcmask 7168
    %23 = vst.msk [vmem:[%s4] sm:$0xff] %vm22, 0.0
    %24 = vst.msk [vmem:[%s4 + $0x8] sm:$0xff] %vm22, 0.0
    %25 = vst.msk [vmem:[%s4 + $0x10] sm:$0xff] %vm22, 0.0
    %26 = vst.msk [vmem:[%s4 + $0x18] sm:$0xff] %vm22, 0.0
    %27 = vst.msk [vmem:[%s5] sm:$0xff] %vm22, 0.0
    %28 = vst.msk [vmem:[%s5 + $0x8] sm:$0xff] %vm22, 0.0
    %29 = vst.msk [vmem:[%s5 + $0x10] sm:$0xff] %vm22, 0.0
    %30 = vst.msk [vmem:[%s5 + $0x18] sm:$0xff] %vm22, 0.0
  $region17: #{cnn_forward.38} parent=0 // pred_fallthru
    _
  %v31 = vld [vmem:[%s1] sm:$0xff]
  %v32 = vld [vmem:[%s1 + $0x8] sm:$0xf]
  %v33 = vld [vmem:[%s1 + $0xc] sm:$0xff]
  %v34 = vld [vmem:[%s1 + $0x14] sm:$0xf]
  %v35 = vld [vmem:[%s1 + $0x18] sm:$0xff]
  %v36 = vld [vmem:[%s1 + $0x20] sm:$0xf]
  %v37 = vld [vmem:[%s1 + $0x24] sm:$0xff]
  %v38 = vld [vmem:[%s1 + $0x2c] sm:$0xf]
  %v39 = vld [vmem:[%s0] sm:$0xf]
  %v40 = vld [vmem:[%s0 + $0x4] sm:$0xf]
  %v41 = vld [vmem:[%s0 + $0x8] sm:$0xf]
  %v42 = vld [vmem:[%s0 + $0xc] sm:$0xf]
  %v43 = vld [vmem:[%s0 + $0x10] sm:$0xf]
  %v44 = vld [vmem:[%s0 + $0x14] sm:$0xf]
  %v45 = vld [vmem:[%s0 + $0x18] sm:$0xf]
  %v46 = vld [vmem:[%s0 + $0x1c] sm:$0xf]
  %v47 = vld [vmem:[%s0 + $0x20] sm:$0xf]
  %v48 = vld [vmem:[%s0 + $0x24] sm:$0xf]
  %v49 = vld [vmem:[%s0 + $0x28] sm:$0xf]
  %v50 = vld [vmem:[%s0 + $0x2c] sm:$0xf]
  %v51 = vld [vmem:[%s0 + $0x30] sm:$0xf]
  %v52 = vld [vmem:[%s0 + $0x34] sm:$0xf]
  %v53 = vld [vmem:[%s0 + $0x38] sm:$0xf]
  %v54 = vld [vmem:[%s0 + $0x3c] sm:$0xf]
  %v55 = vld [vmem:[%s0 + $0x40] sm:$0xf]
  %v56 = vld [vmem:[%s0 + $0x44] sm:$0xf]
  %v57 = vld [vmem:[%s0 + $0x48] sm:$0xf]
  %v58 = vld [vmem:[%s0 + $0x4c] sm:$0xf]
  %v59 = vld [vmem:[%s0 + $0x50] sm:$0xf]
  %v60 = vld [vmem:[%s0 + $0x54] sm:$0xf]
  %v61 = vld [vmem:[%s0 + $0x58] sm:$0xf]
  %v62 = vld [vmem:[%s0 + $0x5c] sm:$0xf]
  %v63 = vld [vmem:[%s0 + $0x60] sm:$0xf]
  %v64 = vld [vmem:[%s0 + $0x64] sm:$0xf]
  %v65 = vld [vmem:[%s0 + $0x68] sm:$0xf]
  %v66 = vld [vmem:[%s0 + $0x6c] sm:$0xf]
  %v67 = vld [vmem:[%s0 + $0x70] sm:$0xf]
  %v68 = vld [vmem:[%s0 + $0x74] sm:$0xf]
  %v69 = vld [vmem:[%s0 + $0x78] sm:$0xf]
  %v70 = vld [vmem:[%s0 + $0x7c] sm:$0xf]
  %v71 = vld [vmem:[%s0 + $0x80] sm:$0xf]
  %v72 = vld [vmem:[%s0 + $0x84] sm:$0xf]
  %v73 = vld [vmem:[%s0 + $0x88] sm:$0xf]
  %v74 = vld [vmem:[%s0 + $0x8c] sm:$0xf]
  %v75 = vld [vmem:[%s2] sm:$0xff]
  %v76 = vld [vmem:[%s2 + $0x8] sm:$0xff]
  %v77 = vld [vmem:[%s2 + $0x10] sm:$0xff]
  %v78 = vld [vmem:[%s2 + $0x18] sm:$0xff]
  %80 = vset.pattern.permute.xlu0 0
  %81 = vperm.xlu0 %80, %v75
  %v82 = vpop.permute.xlu0 %81
  %85 = vset.pattern.permute.xlu0 0
  %86 = vperm.xlu0 %85, %v76
  %v87 = vpop.permute.xlu0 %86
  %90 = vset.pattern.permute.xlu0 0
  %91 = vperm.xlu0 %90, %v77
  %v92 = vpop.permute.xlu0 %91
  %95 = vset.pattern.permute.xlu0 0
  %96 = vperm.xlu0 %95, %v78
  %v97 = vpop.permute.xlu0 %96
  %v107 = vunpack.c.l.b16 %v31
  %v108 = vunpack.c.h.b16 %v31
  %v109 = vunpack.c.l.b16 %v32
  %v110 = vunpack.c.l.b16 %v33
  %v111 = vunpack.c.h.b16 %v33
  %v112 = vunpack.c.l.b16 %v34
  %v113 = vunpack.c.l.b16 %v35
  %v114 = vunpack.c.h.b16 %v35
  %v115 = vunpack.c.l.b16 %v36
  %v116 = vunpack.c.l.b16 %v37
  %v117 = vunpack.c.h.b16 %v37
  %v118 = vunpack.c.l.b16 %v38
  %v119 = vpack.c.b16 %v110, %v107
  %v120 = vpack.c.b16 %v111, %v108
  %v121 = vpack.c.b16 %v112, %v109
  %v122 = vpack.c.b16 %v116, %v113
  %v123 = vpack.c.b16 %v117, %v114
  %v124 = vpack.c.b16 %v118, %v115
  %v165 = vunpack.c.l.b16 %v39
  %v166 = vunpack.c.l.b16 %v40
  %v167 = vunpack.c.l.b16 %v41
  %v168 = vunpack.c.l.b16 %v42
  %v169 = vunpack.c.l.b16 %v43
  %v170 = vunpack.c.l.b16 %v44
  %v171 = vunpack.c.l.b16 %v45
  %v172 = vunpack.c.l.b16 %v46
  %v173 = vunpack.c.l.b16 %v47
  %v174 = vunpack.c.l.b16 %v48
  %v175 = vunpack.c.l.b16 %v49
  %v176 = vunpack.c.l.b16 %v50
  %v177 = vunpack.c.l.b16 %v51
  %v178 = vunpack.c.l.b16 %v52
  %v179 = vunpack.c.l.b16 %v53
  %v180 = vunpack.c.l.b16 %v54
  %v181 = vunpack.c.l.b16 %v55
  %v182 = vunpack.c.l.b16 %v56
  %v183 = vunpack.c.l.b16 %v57
  %v184 = vunpack.c.l.b16 %v58
  %v185 = vunpack.c.l.b16 %v59
  %v186 = vunpack.c.l.b16 %v60
  %v187 = vunpack.c.l.b16 %v61
  %v188 = vunpack.c.l.b16 %v62
  %v189 = vunpack.c.l.b16 %v63
  %v190 = vunpack.c.l.b16 %v64
  %v191 = vunpack.c.l.b16 %v65
  %v192 = vunpack.c.l.b16 %v66
  %v193 = vunpack.c.l.b16 %v67
  %v194 = vunpack.c.l.b16 %v68
  %v195 = vunpack.c.l.b16 %v69
  %v196 = vunpack.c.l.b16 %v70
  %v197 = vunpack.c.l.b16 %v71
  %v198 = vunpack.c.l.b16 %v72
  %v199 = vunpack.c.l.b16 %v73
  %v200 = vunpack.c.l.b16 %v74
  %v201 = vpack.c.b16 %v166, %v165
  %v202 = vpack.c.b16 %v168, %v167
  %v203 = vpack.c.b16 %v170, %v169
  %v204 = vpack.c.b16 %v172, %v171
  %v205 = vpack.c.b16 %v174, %v173
  %v206 = vpack.c.b16 %v176, %v175
  %v207 = vpack.c.b16 %v178, %v177
  %v208 = vpack.c.b16 %v180, %v179
  %v209 = vpack.c.b16 %v182, %v181
  %v210 = vpack.c.b16 %v184, %v183
  %v211 = vpack.c.b16 %v186, %v185
  %v212 = vpack.c.b16 %v188, %v187
  %v213 = vpack.c.b16 %v190, %v189
  %v214 = vpack.c.b16 %v192, %v191
  %v215 = vpack.c.b16 %v194, %v193
  %v216 = vpack.c.b16 %v196, %v195
  %v217 = vpack.c.b16 %v198, %v197
  %v218 = vpack.c.b16 %v200, %v199
  %vm237 = vcmask 261120
  %v239 = vsel %vm237, %v121, 0
  %v242 = vsel %vm237, %v124, 0
  %244 = vmatpush.bf16.msra.mxu0 %v208
  %245 = vmatpush.bf16.msra.mxu0 %v207
  %246 = vmatpush.bf16.msra.mxu0 %v206
  %247 = vmatpush.bf16.msra.mxu0 %v205
  %248 = vmatpush.bf16.msra.mxu0 %v204
  %249 = vmatpush.bf16.msra.mxu0 %v203
  %250 = vmatpush.bf16.msra.mxu0 %v202
  %251 = vmatpush.bf16.msra.mxu0 %v201
  %252 = vmatmul.bf16.gmra.mxu0 %v119
  %v253 = vpop.f32.mrf.mxu0
  %v254 = vadd.f32 %v82, %v253
  %v255 = vpop.f32.mrf.mxu0
  %v256 = vadd.f32 %v87, %v255
  %257 = vmatmul.bf16.gmra.mxu0 %v122
  %v258 = vpop.f32.mrf.mxu0
  %v259 = vadd.f32 %v92, %v258
  %v260 = vpop.f32.mrf.mxu0
  %v261 = vadd.f32 %v97, %v260
  %262 = vdwg.mxu0
  %263 = vmatpush.bf16.msra.mxu0 %v216
  %264 = vmatpush.bf16.msra.mxu0 %v215
  %265 = vmatpush.bf16.msra.mxu0 %v214
  %266 = vmatpush.bf16.msra.mxu0 %v213
  %267 = vmatpush.bf16.msra.mxu0 %v212
  %268 = vmatpush.bf16.msra.mxu0 %v211
  %269 = vmatpush.bf16.msra.mxu0 %v210
  %270 = vmatpush.bf16.msra.mxu0 %v209
  %271 = vmatmul.bf16.gmra.mxu0 %v120
  %v272 = vpop.f32.mrf.mxu0
  %v273 = vadd.f32 %v254, %v272
  %v274 = vpop.f32.mrf.mxu0
  %v275 = vadd.f32 %v256, %v274
  %276 = vmatmul.bf16.gmra.mxu0 %v123
  %v277 = vpop.f32.mrf.mxu0
  %v278 = vadd.f32 %v259, %v277
  %v279 = vpop.f32.mrf.mxu0
  %v280 = vadd.f32 %v261, %v279
  %281 = vdwg.mxu0
  %282 = vmatpush.bf16.msra.mxu0 0
  %283 = vmatpush.bf16.msra.mxu0 0
  %284 = vmatpush.bf16.msra.mxu0 0
  %285 = vmatpush.bf16.msra.mxu0 0
  %286 = vmatpush.bf16.msra.mxu0 0
  %287 = vmatpush.bf16.msra.mxu0 0
  %288 = vmatpush.bf16.msra.mxu0 %v218
  %289 = vmatpush.bf16.msra.mxu0 %v217
  %290 = vmatmul.bf16.gmra.mxu0 %v239
  %v291 = vpop.f32.mrf.mxu0
  %v292 = vadd.f32 %v273, %v291
  %v293 = vpop.f32.mrf.mxu0
  %v294 = vadd.f32 %v275, %v293
  %295 = vmatmul.bf16.gmra.mxu0 %v242
  %v296 = vpop.f32.mrf.mxu0
  %v297 = vadd.f32 %v278, %v296
  %v298 = vpop.f32.mrf.mxu0
  %v299 = vadd.f32 %v280, %v298
  %300 = vdwg.mxu0
  %301 = vst [vmem:[%s3] sm:$0xff] %v292
  %302 = vst [vmem:[%s3 + $0x8] sm:$0xff] %v294
  %303 = vst [vmem:[%s3 + $0x10] sm:$0xff] %v297
  %304 = vst [vmem:[%s3 + $0x18] sm:$0xff] %v299
  %v305 = vld [vmem:[%s4] sm:$0xff]
  %v306 = vld [vmem:[%s4 + $0x8] sm:$0xff]
  %v307 = vld [vmem:[%s4 + $0x10] sm:$0xff]
  %v308 = vld [vmem:[%s4 + $0x18] sm:$0xff]
  %309 = vadd.xlane.f32.xlu0 %v292
  %v310 = vpop.xlane.xlu0 %309
  %311 = vadd.xlane.f32.xlu0 %v294
  %v312 = vpop.xlane.xlu0 %311
  %313 = vadd.xlane.f32.xlu0 %v297
  %v314 = vpop.xlane.xlu0 %313
  %315 = vadd.xlane.f32.xlu0 %v299
  %v316 = vpop.xlane.xlu0 %315
  %v317 = vadd.f32 %v305, %v310
  %v318 = vadd.f32 %v306, %v312
  %v319 = vadd.f32 %v307, %v314
  %v320 = vadd.f32 %v308, %v316
  %vm321 = vcmask 7168
  %322 = vst.msk [vmem:[%s4] sm:$0xff] %vm321, %v317
  %323 = vst.msk [vmem:[%s4 + $0x8] sm:$0xff] %vm321, %v318
  %324 = vst.msk [vmem:[%s4 + $0x10] sm:$0xff] %vm321, %v319
  %325 = vst.msk [vmem:[%s4 + $0x18] sm:$0xff] %vm321, %v320
  %v326 = vld [vmem:[%s5] sm:$0xff]
  %v327 = vld [vmem:[%s5 + $0x8] sm:$0xff]
  %v328 = vld [vmem:[%s5 + $0x10] sm:$0xff]
  %v329 = vld [vmem:[%s5 + $0x18] sm:$0xff]
  %v330 = vmul.f32 %v292, %v292
  %v331 = vmul.f32 %v294, %v294
  %v332 = vmul.f32 %v297, %v297
  %v333 = vmul.f32 %v299, %v299
  %334 = vadd.xlane.f32.xlu0 %v330
  %v335 = vpop.xlane.xlu0 %334
  %336 = vadd.xlane.f32.xlu0 %v331
  %v337 = vpop.xlane.xlu0 %336
  %338 = vadd.xlane.f32.xlu0 %v332
  %v339 = vpop.xlane.xlu0 %338
  %340 = vadd.xlane.f32.xlu0 %v333
  %v341 = vpop.xlane.xlu0 %340
  %v342 = vadd.f32 %v326, %v335
  %v343 = vadd.f32 %v327, %v337
  %v344 = vadd.f32 %v328, %v339
  %v345 = vadd.f32 %v329, %v341
  %346 = vst.msk [vmem:[%s5] sm:$0xff] %vm321, %v342
  %347 = vst.msk [vmem:[%s5 + $0x8] sm:$0xff] %vm321, %v343
  %348 = vst.msk [vmem:[%s5 + $0x10] sm:$0xff] %vm321, %v344
  %349 = vst.msk [vmem:[%s5 + $0x18] sm:$0xff] %vm321, %v345
  // Predicated region
  $region18: #{cnn_forward.38} parent=0 // pred_check
    _
  $region19: #{cnn_forward.38} parent=0 // pred_check_branch
    %351 = sbr.rel (0) target = $region21
  $region20: #{cnn_forward.38} parent=0 // pred_region
    _
  $region21: #{cnn_forward.38} parent=0 // pred_fallthru
    _
  // Predicated region
  $region22: #{cnn_forward.38} parent=0 // pred_check
    _
  $region23: #{cnn_forward.38} parent=0 // pred_check_branch
    %353 = sbr.rel (0) target = $region25
  $region24: #{cnn_forward.38} parent=0 // pred_region
    _
  $region25: #{cnn_forward.38} parent=0 // pred_fallthru
    _
  // Predicated region
  $region26: #{cnn_forward.38} parent=0 // pred_check
    _
  $region27: #{cnn_forward.38} parent=0 // pred_check_branch
    %355 = sbr.rel (0) target = $region29
  $region28: #{cnn_forward.38} parent=0 // pred_region
    _
  $region29: #{cnn_forward.38} parent=0 // pred_fallthru
    _
  // Predicated region
  $region30: #{cnn_forward.38} parent=0 // pred_check
    _
  $region31: #{cnn_forward.38} parent=0 // pred_check_branch
    %357 = sbr.rel (0) target = $region33
  $region32: #{cnn_forward.38} parent=0 // pred_region
    _
  $region33: #{cnn_forward.38} parent=0 // pred_fallthru
    _
  // Predicated region
  $region34: #{cnn_forward.38} parent=0 // pred_check
    _
  $region35: #{cnn_forward.38} parent=0 // pred_check_branch
    %359 = sbr.rel (0) target = $region37
  $region36: #{cnn_forward.38} parent=0 // pred_region
    _
  $region37: #{cnn_forward.38} parent=0 // pred_fallthru
    _
  // Predicated region
  $region38: #{cnn_forward.38} parent=0 // pred_check
    _
  $region39: #{cnn_forward.38} parent=0 // pred_check_branch
    %361 = sbr.rel (0) target = $region41
  $region40: #{cnn_forward.38} parent=0 // pred_region
    _
  $region41: #{cnn_forward.38} parent=0 // pred_fallthru
    _

// kernel: cnn_forward.40
$region0: #{cnn_forward.40}
  #allocation0 [shape = 'u32[]', space=smem, size = 0x4, offset = 0x4, fixed_abs, tag = 'smem constant byte address 0x4 - core index']
  #allocation1 [shape = 'u32[72,128]{1,0:T(1,128)}', space=vmem, size = 0x9000, scoped, tag = 'internal scratch']
  %s0 = inlined_call_operand.vmem [shape: f32[256,512], index: 0, kind: input, shape index: {}]
  %s1 = inlined_call_operand.vmem [shape: bf16[256,512], index: 1, kind: output, shape index: {}]
  %s2 = sld [smem:[#allocation0]]
  $region14: #{cnn_forward.40} parent=0
    _
  %s4 = ssub.s32 1, %s2
  %s5 = scalar_select 0, %s4, %s2
  // Predicated region
  $region2: #{cnn_forward.40} parent=0 // pred_check
    _
  $region3: #{cnn_forward.40} parent=0 // pred_check_branch
    %7 = sbr.rel (0) target = $region5
  $region4: #{cnn_forward.40} parent=0 // pred_region
    _
  $region5: #{cnn_forward.40} parent=0 // pred_fallthru
    _
  %v8 = vld [vmem:[%s0] sm:$0xff]
  %v9 = vld [vmem:[%s0 + $0x8] sm:$0xff]
  %v10 = vld [vmem:[%s0 + $0x10] sm:$0xff]
  %v11 = vld [vmem:[%s0 + $0x18] sm:$0xff]
  %v12 = vld [vmem:[%s0 + $0x20] sm:$0xff]
  %v13 = vld [vmem:[%s0 + $0x28] sm:$0xff]
  %v14 = vld [vmem:[%s0 + $0x30] sm:$0xff]
  %v15 = vld [vmem:[%s0 + $0x38] sm:$0xff]
  %v16 = vld [vmem:[%s0 + $0x40] sm:$0xff]
  %v17 = vld [vmem:[%s0 + $0x48] sm:$0xff]
  %v18 = vld [vmem:[%s0 + $0x50] sm:$0xff]
  %v19 = vld [vmem:[%s0 + $0x58] sm:$0xff]
  %v20 = vld [vmem:[%s0 + $0x60] sm:$0xff]
  %v21 = vld [vmem:[%s0 + $0x68] sm:$0xff]
  %v22 = vld [vmem:[%s0 + $0x70] sm:$0xff]
  %v23 = vld [vmem:[%s0 + $0x78] sm:$0xff]
  %v24 = vld [vmem:[%s0 + $0x80] sm:$0xff]
  %v25 = vld [vmem:[%s0 + $0x88] sm:$0xff]
  %v26 = vld [vmem:[%s0 + $0x90] sm:$0xff]
  %v27 = vld [vmem:[%s0 + $0x98] sm:$0xff]
  %v28 = vld [vmem:[%s0 + $0xa0] sm:$0xff]
  %v29 = vld [vmem:[%s0 + $0xa8] sm:$0xff]
  %v30 = vld [vmem:[%s0 + $0xb0] sm:$0xff]
  %v31 = vld [vmem:[%s0 + $0xb8] sm:$0xff]
  %v32 = vld [vmem:[%s0 + $0xc0] sm:$0xff]
  %v33 = vld [vmem:[%s0 + $0xc8] sm:$0xff]
  %v34 = vld [vmem:[%s0 + $0xd0] sm:$0xff]
  %v35 = vld [vmem:[%s0 + $0xd8] sm:$0xff]
  %v36 = vld [vmem:[%s0 + $0xe0] sm:$0xff]
  %v37 = vld [vmem:[%s0 + $0xe8] sm:$0xff]
  %v38 = vld [vmem:[%s0 + $0xf0] sm:$0xff]
  %v39 = vld [vmem:[%s0 + $0xf8] sm:$0xff]
  %v40 = vld [vmem:[%s0 + $0x100] sm:$0xff]
  %v41 = vld [vmem:[%s0 + $0x108] sm:$0xff]
  %v42 = vld [vmem:[%s0 + $0x110] sm:$0xff]
  %v43 = vld [vmem:[%s0 + $0x118] sm:$0xff]
  %v44 = vld [vmem:[%s0 + $0x120] sm:$0xff]
  %v45 = vld [vmem:[%s0 + $0x128] sm:$0xff]
  %v46 = vld [vmem:[%s0 + $0x130] sm:$0xff]
  %v47 = vld [vmem:[%s0 + $0x138] sm:$0xff]
  %v48 = vld [vmem:[%s0 + $0x140] sm:$0xff]
  %v49 = vld [vmem:[%s0 + $0x148] sm:$0xff]
  %v50 = vld [vmem:[%s0 + $0x150] sm:$0xff]
  %v51 = vld [vmem:[%s0 + $0x158] sm:$0xff]
  %v52 = vld [vmem:[%s0 + $0x160] sm:$0xff]
  %v53 = vld [vmem:[%s0 + $0x168] sm:$0xff]
  %v54 = vld [vmem:[%s0 + $0x170] sm:$0xff]
  %v55 = vld [vmem:[%s0 + $0x178] sm:$0xff]
  %v56 = vld [vmem:[%s0 + $0x180] sm:$0xff]
  %v57 = vld [vmem:[%s0 + $0x188] sm:$0xff]
  %v58 = vld [vmem:[%s0 + $0x190] sm:$0xff]
  %v59 = vld [vmem:[%s0 + $0x198] sm:$0xff]
  %v60 = vld [vmem:[%s0 + $0x1a0] sm:$0xff]
  %v61 = vld [vmem:[%s0 + $0x1a8] sm:$0xff]
  %v62 = vld [vmem:[%s0 + $0x1b0] sm:$0xff]
  %v63 = vld [vmem:[%s0 + $0x1b8] sm:$0xff]
  %v64 = vld [vmem:[%s0 + $0x1c0] sm:$0xff]
  %v65 = vld [vmem:[%s0 + $0x1c8] sm:$0xff]
  %v66 = vld [vmem:[%s0 + $0x1d0] sm:$0xff]
  %v67 = vld [vmem:[%s0 + $0x1d8] sm:$0xff]
  %v68 = vld [vmem:[%s0 + $0x1e0] sm:$0xff]
  %v69 = vld [vmem:[%s0 + $0x1e8] sm:$0xff]
  %v70 = vld [vmem:[%s0 + $0x1f0] sm:$0xff]
  %v71 = vld [vmem:[%s0 + $0x1f8] sm:$0xff]
  %v72 = vld [vmem:[%s0 + $0x200] sm:$0xff]
  %v73 = vld [vmem:[%s0 + $0x208] sm:$0xff]
  %v74 = vld [vmem:[%s0 + $0x210] sm:$0xff]
  %v75 = vld [vmem:[%s0 + $0x218] sm:$0xff]
  %v76 = vld [vmem:[%s0 + $0x220] sm:$0xff]
  %v77 = vld [vmem:[%s0 + $0x228] sm:$0xff]
  %v78 = vld [vmem:[%s0 + $0x230] sm:$0xff]
  %v79 = vld [vmem:[%s0 + $0x238] sm:$0xff]
  %v80 = vld [vmem:[%s0 + $0x240] sm:$0xff]
  %v81 = vld [vmem:[%s0 + $0x248] sm:$0xff]
  %v82 = vld [vmem:[%s0 + $0x250] sm:$0xff]
  %v83 = vld [vmem:[%s0 + $0x258] sm:$0xff]
  %v84 = vld [vmem:[%s0 + $0x260] sm:$0xff]
  %v85 = vld [vmem:[%s0 + $0x268] sm:$0xff]
  %v86 = vld [vmem:[%s0 + $0x270] sm:$0xff]
  %v87 = vld [vmem:[%s0 + $0x278] sm:$0xff]
  %v88 = vld [vmem:[%s0 + $0x280] sm:$0xff]
  %v89 = vld [vmem:[%s0 + $0x288] sm:$0xff]
  %v90 = vld [vmem:[%s0 + $0x290] sm:$0xff]
  %v91 = vld [vmem:[%s0 + $0x298] sm:$0xff]
  %v92 = vld [vmem:[%s0 + $0x2a0] sm:$0xff]
  %v93 = vld [vmem:[%s0 + $0x2a8] sm:$0xff]
  %v94 = vld [vmem:[%s0 + $0x2b0] sm:$0xff]
  %v95 = vld [vmem:[%s0 + $0x2b8] sm:$0xff]
  %v96 = vld [vmem:[%s0 + $0x2c0] sm:$0xff]
  %v97 = vld [vmem:[%s0 + $0x2c8] sm:$0xff]
  %v98 = vld [vmem:[%s0 + $0x2d0] sm:$0xff]
  %v99 = vld [vmem:[%s0 + $0x2d8] sm:$0xff]
  %v100 = vld [vmem:[%s0 + $0x2e0] sm:$0xff]
  %v101 = vld [vmem:[%s0 + $0x2e8] sm:$0xff]
  %v102 = vld [vmem:[%s0 + $0x2f0] sm:$0xff]
  %v103 = vld [vmem:[%s0 + $0x2f8] sm:$0xff]
  %v104 = vld [vmem:[%s0 + $0x300] sm:$0xff]
  %v105 = vld [vmem:[%s0 + $0x308] sm:$0xff]
  %v106 = vld [vmem:[%s0 + $0x310] sm:$0xff]
  %v107 = vld [vmem:[%s0 + $0x318] sm:$0xff]
  %v108 = vld [vmem:[%s0 + $0x320] sm:$0xff]
  %v109 = vld [vmem:[%s0 + $0x328] sm:$0xff]
  %v110 = vld [vmem:[%s0 + $0x330] sm:$0xff]
  %v111 = vld [vmem:[%s0 + $0x338] sm:$0xff]
  %v112 = vld [vmem:[%s0 + $0x340] sm:$0xff]
  %v113 = vld [vmem:[%s0 + $0x348] sm:$0xff]
  %v114 = vld [vmem:[%s0 + $0x350] sm:$0xff]
  %v115 = vld [vmem:[%s0 + $0x358] sm:$0xff]
  %v116 = vld [vmem:[%s0 + $0x360] sm:$0xff]
  %v117 = vld [vmem:[%s0 + $0x368] sm:$0xff]
  %v118 = vld [vmem:[%s0 + $0x370] sm:$0xff]
  %v119 = vld [vmem:[%s0 + $0x378] sm:$0xff]
  %v120 = vld [vmem:[%s0 + $0x380] sm:$0xff]
  %v121 = vld [vmem:[%s0 + $0x388] sm:$0xff]
  %v122 = vld [vmem:[%s0 + $0x390] sm:$0xff]
  %v123 = vld [vmem:[%s0 + $0x398] sm:$0xff]
  %v124 = vld [vmem:[%s0 + $0x3a0] sm:$0xff]
  %v125 = vld [vmem:[%s0 + $0x3a8] sm:$0xff]
  %v126 = vld [vmem:[%s0 + $0x3b0] sm:$0xff]
  %v127 = vld [vmem:[%s0 + $0x3b8] sm:$0xff]
  %v128 = vld [vmem:[%s0 + $0x3c0] sm:$0xff]
  %v129 = vld [vmem:[%s0 + $0x3c8] sm:$0xff]
  %v130 = vld [vmem:[%s0 + $0x3d0] sm:$0xff]
  %v131 = vld [vmem:[%s0 + $0x3d8] sm:$0xff]
  %v132 = vld [vmem:[%s0 + $0x3e0] sm:$0xff]
  %v133 = vld [vmem:[%s0 + $0x3e8] sm:$0xff]
  %v134 = vld [vmem:[%s0 + $0x3f0] sm:$0xff]
  %v135 = vld [vmem:[%s0 + $0x3f8] sm:$0xff]
  %v136 = vand.u32 2147483647, %v8
  %v137 = vand.u32 2147483647, %v9
  %v138 = vand.u32 2147483647, %v10
  %v139 = vand.u32 2147483647, %v11
  %v140 = vand.u32 2147483647, %v12
  %v141 = vand.u32 2147483647, %v13
  %v142 = vand.u32 2147483647, %v14
  %v143 = vand.u32 2147483647, %v15
  %v144 = vand.u32 2147483647, %v16
  %v145 = vand.u32 2147483647, %v17
  %v146 = vand.u32 2147483647, %v18
  %v147 = vand.u32 2147483647, %v19
  %v148 = vand.u32 2147483647, %v20
  %v149 = vand.u32 2147483647, %v21
  %v150 = vand.u32 2147483647, %v22
  %v151 = vand.u32 2147483647, %v23
  %v152 = vand.u32 2147483647, %v24
  %v153 = vand.u32 2147483647, %v25
  %v154 = vand.u32 2147483647, %v26
  %v155 = vand.u32 2147483647, %v27
  %v156 = vand.u32 2147483647, %v28
  %v157 = vand.u32 2147483647, %v29
  %v158 = vand.u32 2147483647, %v30
  %v159 = vand.u32 2147483647, %v31
  %v160 = vand.u32 2147483647, %v32
  %v161 = vand.u32 2147483647, %v33
  %v162 = vand.u32 2147483647, %v34
  %v163 = vand.u32 2147483647, %v35
  %v164 = vand.u32 2147483647, %v36
  %v165 = vand.u32 2147483647, %v37
  %v166 = vand.u32 2147483647, %v38
  %v167 = vand.u32 2147483647, %v39
  %v168 = vand.u32 2147483647, %v40
  %v169 = vand.u32 2147483647, %v41
  %v170 = vand.u32 2147483647, %v42
  %v171 = vand.u32 2147483647, %v43
  %v172 = vand.u32 2147483647, %v44
  %v173 = vand.u32 2147483647, %v45
  %v174 = vand.u32 2147483647, %v46
  %v175 = vand.u32 2147483647, %v47
  %v176 = vand.u32 2147483647, %v48
  %v177 = vand.u32 2147483647, %v49
  %v178 = vand.u32 2147483647, %v50
  %v179 = vand.u32 2147483647, %v51
  %v180 = vand.u32 2147483647, %v52
  %v181 = vand.u32 2147483647, %v53
  %v182 = vand.u32 2147483647, %v54
  %v183 = vand.u32 2147483647, %v55
  %v184 = vand.u32 2147483647, %v56
  %v185 = vand.u32 2147483647, %v57
  %v186 = vand.u32 2147483647, %v58
  %v187 = vand.u32 2147483647, %v59
  %v188 = vand.u32 2147483647, %v60
  %v189 = vand.u32 2147483647, %v61
  %v190 = vand.u32 2147483647, %v62
  %v191 = vand.u32 2147483647, %v63
  %v192 = vand.u32 2147483647, %v64
  %v193 = vand.u32 2147483647, %v65
  %v194 = vand.u32 2147483647, %v66
  %v195 = vand.u32 2147483647, %v67
  %v196 = vand.u32 2147483647, %v68
  %v197 = vand.u32 2147483647, %v69
  %v198 = vand.u32 2147483647, %v70
  %v199 = vand.u32 2147483647, %v71
  %v200 = vand.u32 2147483647, %v72
  %v201 = vand.u32 2147483647, %v73
  %v202 = vand.u32 2147483647, %v74
  %v203 = vand.u32 2147483647, %v75
  %v204 = vand.u32 2147483647, %v76
  %v205 = vand.u32 2147483647, %v77
  %v206 = vand.u32 2147483647, %v78
  %v207 = vand.u32 2147483647, %v79
  %v208 = vand.u32 2147483647, %v80
  %v209 = vand.u32 2147483647, %v81
  %v210 = vand.u32 2147483647, %v82
  %v211 = vand.u32 2147483647, %v83
  %v212 = vand.u32 2147483647, %v84
  %v213 = vand.u32 2147483647, %v85
  %v214 = vand.u32 2147483647, %v86
  %v215 = vand.u32 2147483647, %v87
  %v216 = vand.u32 2147483647, %v88
  %v217 = vand.u32 2147483647, %v89
  %v218 = vand.u32 2147483647, %v90
  %v219 = vand.u32 2147483647, %v91
  %v220 = vand.u32 2147483647, %v92
  %v221 = vand.u32 2147483647, %v93
  %v222 = vand.u32 2147483647, %v94
  %v223 = vand.u32 2147483647, %v95
  %v224 = vand.u32 2147483647, %v96
  %v225 = vand.u32 2147483647, %v97
  %v226 = vand.u32 2147483647, %v98
  %v227 = vand.u32 2147483647, %v99
  %v228 = vand.u32 2147483647, %v100
  %v229 = vand.u32 2147483647, %v101
  %v230 = vand.u32 2147483647, %v102
  %v231 = vand.u32 2147483647, %v103
  %v232 = vand.u32 2147483647, %v104
  %v233 = vand.u32 2147483647, %v105
  %v234 = vand.u32 2147483647, %v106
  %v235 = vand.u32 2147483647, %v107
  %v236 = vand.u32 2147483647, %v108
  %v237 = vand.u32 2147483647, %v109
  %v238 = vand.u32 2147483647, %v110
  %v239 = vand.u32 2147483647, %v111
  %v240 = vand.u32 2147483647, %v112
  %v241 = vand.u32 2147483647, %v113
  %v242 = vand.u32 2147483647, %v114
  %v243 = vand.u32 2147483647, %v115
  %v244 = vand.u32 2147483647, %v116
  %v245 = vand.u32 2147483647, %v117
  %v246 = vand.u32 2147483647, %v118
  %v247 = vand.u32 2147483647, %v119
  %v248 = vand.u32 2147483647, %v120
  %v249 = vand.u32 2147483647, %v121
  %v250 = vand.u32 2147483647, %v122
  %v251 = vand.u32 2147483647, %v123
  %v252 = vand.u32 2147483647, %v124
  %v253 = vand.u32 2147483647, %v125
  %v254 = vand.u32 2147483647, %v126
  %v255 = vand.u32 2147483647, %v127
  %v256 = vand.u32 2147483647, %v128
  %v257 = vand.u32 2147483647, %v129
  %v258 = vand.u32 2147483647, %v130
  %v259 = vand.u32 2147483647, %v131
  %v260 = vand.u32 2147483647, %v132
  %v261 = vand.u32 2147483647, %v133
  %v262 = vand.u32 2147483647, %v134
  %v263 = vand.u32 2147483647, %v135
  %v264 = vmul.f32 %v8, %v136
  %v265 = vmul.f32 %v9, %v137
  %v266 = vmul.f32 %v10, %v138
  %v267 = vmul.f32 %v11, %v139
  %v268 = vmul.f32 %v12, %v140
  %v269 = vmul.f32 %v13, %v141
  %v270 = vmul.f32 %v14, %v142
  %v271 = vmul.f32 %v15, %v143
  %v272 = vmul.f32 %v16, %v144
  %v273 = vmul.f32 %v17, %v145
  %v274 = vmul.f32 %v18, %v146
  %v275 = vmul.f32 %v19, %v147
  %v276 = vmul.f32 %v20, %v148
  %v277 = vmul.f32 %v21, %v149
  %v278 = vmul.f32 %v22, %v150
  %v279 = vmul.f32 %v23, %v151
  %v280 = vmul.f32 %v24, %v152
  %v281 = vmul.f32 %v25, %v153
  %v282 = vmul.f32 %v26, %v154
  %v283 = vmul.f32 %v27, %v155
  %v284 = vmul.f32 %v28, %v156
  %v285 = vmul.f32 %v29, %v157
  %v286 = vmul.f32 %v30, %v158
  %v287 = vmul.f32 %v31, %v159
  %v288 = vmul.f32 %v32, %v160
  %v289 = vmul.f32 %v33, %v161
  %v290 = vmul.f32 %v34, %v162
  %v291 = vmul.f32 %v35, %v163
  %v292 = vmul.f32 %v36, %v164
  %v293 = vmul.f32 %v37, %v165
  %v294 = vmul.f32 %v38, %v166
  %v295 = vmul.f32 %v39, %v167
  %v296 = vmul.f32 %v40, %v168
  %v297 = vmul.f32 %v41, %v169
  %v298 = vmul.f32 %v42, %v170
  %v299 = vmul.f32 %v43, %v171
  %v300 = vmul.f32 %v44, %v172
  %v301 = vmul.f32 %v45, %v173
  %v302 = vmul.f32 %v46, %v174
  %v303 = vmul.f32 %v47, %v175
  %v304 = vmul.f32 %v48, %v176
  %v305 = vmul.f32 %v49, %v177
  %v306 = vmul.f32 %v50, %v178
  %v307 = vmul.f32 %v51, %v179
  %v308 = vmul.f32 %v52, %v180
  %v309 = vmul.f32 %v53, %v181
  %v310 = vmul.f32 %v54, %v182
  %v311 = vmul.f32 %v55, %v183
  %v312 = vmul.f32 %v56, %v184
  %v313 = vmul.f32 %v57, %v185
  %v314 = vmul.f32 %v58, %v186
  %v315 = vmul.f32 %v59, %v187
  %v316 = vmul.f32 %v60, %v188
  %v317 = vmul.f32 %v61, %v189
  %v318 = vmul.f32 %v62, %v190
  %v319 = vmul.f32 %v63, %v191
  %v320 = vmul.f32 %v64, %v192
  %v321 = vmul.f32 %v65, %v193
  %v322 = vmul.f32 %v66, %v194
  %v323 = vmul.f32 %v67, %v195
  %v324 = vmul.f32 %v68, %v196
  %v325 = vmul.f32 %v69, %v197
  %v326 = vmul.f32 %v70, %v198
  %v327 = vmul.f32 %v71, %v199
  %v328 = vmul.f32 %v72, %v200
  %v329 = vmul.f32 %v73, %v201
  %v330 = vmul.f32 %v74, %v202
  %v331 = vmul.f32 %v75, %v203
  %v332 = vmul.f32 %v76, %v204
  %v333 = vmul.f32 %v77, %v205
  %v334 = vmul.f32 %v78, %v206
  %v335 = vmul.f32 %v79, %v207
  %v336 = vmul.f32 %v80, %v208
  %v337 = vmul.f32 %v81, %v209
  %v338 = vmul.f32 %v82, %v210
  %v339 = vmul.f32 %v83, %v211
  %v340 = vmul.f32 %v84, %v212
  %v341 = vmul.f32 %v85, %v213
  %v342 = vmul.f32 %v86, %v214
  %v343 = vmul.f32 %v87, %v215
  %v344 = vmul.f32 %v88, %v216
  %v345 = vmul.f32 %v89, %v217
  %v346 = vmul.f32 %v90, %v218
  %v347 = vmul.f32 %v91, %v219
  %v348 = vmul.f32 %v92, %v220
  %v349 = vmul.f32 %v93, %v221
  %v350 = vmul.f32 %v94, %v222
  %v351 = vmul.f32 %v95, %v223
  %v352 = vmul.f32 %v96, %v224
  %v353 = vmul.f32 %v97, %v225
  %v354 = vmul.f32 %v98, %v226
  %v355 = vmul.f32 %v99, %v227
  %v356 = vmul.f32 %v100, %v228
  %v357 = vmul.f32 %v101, %v229
  %v358 = vmul.f32 %v102, %v230
  %v359 = vmul.f32 %v103, %v231
  %v360 = vmul.f32 %v104, %v232
  %v361 = vmul.f32 %v105, %v233
  %v362 = vmul.f32 %v106, %v234
  %v363 = vmul.f32 %v107, %v235
  %v364 = vmul.f32 %v108, %v236
  %v365 = vmul.f32 %v109, %v237
  %v366 = vmul.f32 %v110, %v238
  %v367 = vmul.f32 %v111, %v239
  %v368 = vmul.f32 %v112, %v240
  %v369 = vmul.f32 %v113, %v241
  %v370 = vmul.f32 %v114, %v242
  %v371 = vmul.f32 %v115, %v243
  %v372 = vmul.f32 %v116, %v244
  %v373 = vmul.f32 %v117, %v245
  %v374 = vmul.f32 %v118, %v246
  %v375 = vmul.f32 %v119, %v247
  %v376 = vmul.f32 %v120, %v248
  %v377 = vmul.f32 %v121, %v249
  %v378 = vmul.f32 %v122, %v250
  %v379 = vmul.f32 %v123, %v251
  %v380 = vmul.f32 %v124, %v252
  %v381 = vmul.f32 %v125, %v253
  %v382 = vmul.f32 %v126, %v254
  %v383 = vmul.f32 %v127, %v255
  %v384 = vmul.f32 %v128, %v256
  %v385 = vmul.f32 %v129, %v257
  %v386 = vmul.f32 %v130, %v258
  %v387 = vmul.f32 %v131, %v259
  %v388 = vmul.f32 %v132, %v260
  %v389 = vmul.f32 %v133, %v261
  %v390 = vmul.f32 %v134, %v262
  %v391 = vmul.f32 %v135, %v263
  %v392 = vpack.c.bf16 %v265, %v264
  %v393 = vpack.c.bf16 %v267, %v266
  %v394 = vpack.c.bf16 %v269, %v268
  %v395 = vpack.c.bf16 %v271, %v270
  %v396 = vpack.c.bf16 %v273, %v272
  %v397 = vpack.c.bf16 %v275, %v274
  %v398 = vpack.c.bf16 %v277, %v276
  %v399 = vpack.c.bf16 %v279, %v278
  %v400 = vpack.c.bf16 %v281, %v280
  %v401 = vpack.c.bf16 %v283, %v282
  %v402 = vpack.c.bf16 %v285, %v284
  %v403 = vpack.c.bf16 %v287, %v286
  %v404 = vpack.c.bf16 %v289, %v288
  %v405 = vpack.c.bf16 %v291, %v290
  %v406 = vpack.c.bf16 %v293, %v292
  %v407 = vpack.c.bf16 %v295, %v294
  %v408 = vpack.c.bf16 %v297, %v296
  %v409 = vpack.c.bf16 %v299, %v298
  %v410 = vpack.c.bf16 %v301, %v300
  %v411 = vpack.c.bf16 %v303, %v302
  %v412 = vpack.c.bf16 %v305, %v304
  %v413 = vpack.c.bf16 %v307, %v306
  %v414 = vpack.c.bf16 %v309, %v308
  %v415 = vpack.c.bf16 %v311, %v310
  %v416 = vpack.c.bf16 %v313, %v312
  %v417 = vpack.c.bf16 %v315, %v314
  %v418 = vpack.c.bf16 %v317, %v316
  %v419 = vpack.c.bf16 %v319, %v318
  %v420 = vpack.c.bf16 %v321, %v320
  %v421 = vpack.c.bf16 %v323, %v322
  %v422 = vpack.c.bf16 %v325, %v324
  %v423 = vpack.c.bf16 %v327, %v326
  %v424 = vpack.c.bf16 %v329, %v328
  %v425 = vpack.c.bf16 %v331, %v330
  %v426 = vpack.c.bf16 %v333, %v332
  %v427 = vpack.c.bf16 %v335, %v334
  %v428 = vpack.c.bf16 %v337, %v336
  %v429 = vpack.c.bf16 %v339, %v338
  %v430 = vpack.c.bf16 %v341, %v340
  %v431 = vpack.c.bf16 %v343, %v342
  %v432 = vpack.c.bf16 %v345, %v344
  %v433 = vpack.c.bf16 %v347, %v346
  %v434 = vpack.c.bf16 %v349, %v348
  %v435 = vpack.c.bf16 %v351, %v350
  %v436 = vpack.c.bf16 %v353, %v352
  %v437 = vpack.c.bf16 %v355, %v354
  %v438 = vpack.c.bf16 %v357, %v356
  %v439 = vpack.c.bf16 %v359, %v358
  %v440 = vpack.c.bf16 %v361, %v360
  %v441 = vpack.c.bf16 %v363, %v362
  %v442 = vpack.c.bf16 %v365, %v364
  %v443 = vpack.c.bf16 %v367, %v366
  %v444 = vpack.c.bf16 %v369, %v368
  %v445 = vpack.c.bf16 %v371, %v370
  %v446 = vpack.c.bf16 %v373, %v372
  %v447 = vpack.c.bf16 %v375, %v374
  %v448 = vpack.c.bf16 %v377, %v376
  %v449 = vpack.c.bf16 %v379, %v378
  %v450 = vpack.c.bf16 %v381, %v380
  %v451 = vpack.c.bf16 %v383, %v382
  %v452 = vpack.c.bf16 %v385, %v384
  %v453 = vpack.c.bf16 %v387, %v386
  %v454 = vpack.c.bf16 %v389, %v388
  %v455 = vpack.c.bf16 %v391, %v390
  %456 = vst [vmem:[%s1] sm:$0xff] %v392
  %457 = vst [vmem:[%s1 + $0x8] sm:$0xff] %v393
  %458 = vst [vmem:[%s1 + $0x10] sm:$0xff] %v394
  %459 = vst [vmem:[%s1 + $0x18] sm:$0xff] %v395
  %460 = vst [vmem:[%s1 + $0x20] sm:$0xff] %v396
  %461 = vst [vmem:[%s1 + $0x28] sm:$0xff] %v397
  %462 = vst [vmem:[%s1 + $0x30] sm:$0xff] %v398
  %463 = vst [vmem:[%s1 + $0x38] sm:$0xff] %v399
  %464 = vst [vmem:[%s1 + $0x40] sm:$0xff] %v400
  %465 = vst [vmem:[%s1 + $0x48] sm:$0xff] %v401
  %466 = vst [vmem:[%s1 + $0x50] sm:$0xff] %v402
  %467 = vst [vmem:[%s1 + $0x58] sm:$0xff] %v403
  %468 = vst [vmem:[%s1 + $0x60] sm:$0xff] %v404
  %469 = vst [vmem:[%s1 + $0x68] sm:$0xff] %v405
  %470 = vst [vmem:[%s1 + $0x70] sm:$0xff] %v406
  %471 = vst [vmem:[%s1 + $0x78] sm:$0xff] %v407
  %472 = vst [vmem:[%s1 + $0x80] sm:$0xff] %v408
  %473 = vst [vmem:[%s1 + $0x88] sm:$0xff] %v409
  %474 = vst [vmem:[%s1 + $0x90] sm:$0xff] %v410
  %475 = vst [vmem:[%s1 + $0x98] sm:$0xff] %v411
  %476 = vst [vmem:[%s1 + $0xa0] sm:$0xff] %v412
  %477 = vst [vmem:[%s1 + $0xa8] sm:$0xff] %v413
  %478 = vst [vmem:[%s1 + $0xb0] sm:$0xff] %v414
  %479 = vst [vmem:[%s1 + $0xb8] sm:$0xff] %v415
  %480 = vst [vmem:[%s1 + $0xc0] sm:$0xff] %v416
  %481 = vst [vmem:[%s1 + $0xc8] sm:$0xff] %v417
  %482 = vst [vmem:[%s1 + $0xd0] sm:$0xff] %v418
  %483 = vst [vmem:[%s1 + $0xd8] sm:$0xff] %v419
  %484 = vst [vmem:[%s1 + $0xe0] sm:$0xff] %v420
  %485 = vst [vmem:[%s1 + $0xe8] sm:$0xff] %v421
  %486 = vst [vmem:[%s1 + $0xf0] sm:$0xff] %v422
  %487 = vst [vmem:[%s1 + $0xf8] sm:$0xff] %v423
  %488 = vst [vmem:[%s1 + $0x100] sm:$0xff] %v424
  %489 = vst [vmem:[%s1 + $0x108] sm:$0xff] %v425
  %490 = vst [vmem:[%s1 + $0x110] sm:$0xff] %v426
  %491 = vst [vmem:[%s1 + $0x118] sm:$0xff] %v427
  %492 = vst [vmem:[%s1 + $0x120] sm:$0xff] %v428
  %493 = vst [vmem:[%s1 + $0x128] sm:$0xff] %v429
  %494 = vst [vmem:[%s1 + $0x130] sm:$0xff] %v430
  %495 = vst [vmem:[%s1 + $0x138] sm:$0xff] %v431
  %496 = vst [vmem:[%s1 + $0x140] sm:$0xff] %v432
  %497 = vst [vmem:[%s1 + $0x148] sm:$0xff] %v433
  %498 = vst [vmem:[%s1 + $0x150] sm:$0xff] %v434
  %499 = vst [vmem:[%s1 + $0x158] sm:$0xff] %v435
  %500 = vst [vmem:[%s1 + $0x160] sm:$0xff] %v436
  %501 = vst [vmem:[%s1 + $0x168] sm:$0xff] %v437
  %502 = vst [vmem:[%s1 + $0x170] sm:$0xff] %v438
  %503 = vst [vmem:[%s1 + $0x178] sm:$0xff] %v439
  %504 = vst [vmem:[%s1 + $0x180] sm:$0xff] %v440
  %505 = vst [vmem:[%s1 + $0x188] sm:$0xff] %v441
  %506 = vst [vmem:[%s1 + $0x190] sm:$0xff] %v442
  %507 = vst [vmem:[%s1 + $0x198] sm:$0xff] %v443
  %508 = vst [vmem:[%s1 + $0x1a0] sm:$0xff] %v444
  %509 = vst [vmem:[%s1 + $0x1a8] sm:$0xff] %v445
  %510 = vst [vmem:[%s1 + $0x1b0] sm:$0xff] %v446
  %511 = vst [vmem:[%s1 + $0x1b8] sm:$0xff] %v447
  %512 = vst [vmem:[%s1 + $0x1c0] sm:$0xff] %v448
  %513 = vst [vmem:[%s1 + $0x1c8] sm:$0xff] %v449
  %514 = vst [vmem:[%s1 + $0x1d0] sm:$0xff] %v450
  %515 = vst [vmem:[%s1 + $0x1d8] sm:$0xff] %v451
  %516 = vst [vmem:[%s1 + $0x1e0] sm:$0xff] %v452
  %517 = vst [vmem:[%s1 + $0x1e8] sm:$0xff] %v453
  %518 = vst [vmem:[%s1 + $0x1f0] sm:$0xff] %v454
  %519 = vst [vmem:[%s1 + $0x1f8] sm:$0xff] %v455
  // Predicated region
  $region6: #{cnn_forward.40} parent=0 // pred_check
    _
  $region7: #{cnn_forward.40} parent=0 // pred_check_branch
    %521 = sbr.rel (0) target = $region9
  $region8: #{cnn_forward.40} parent=0 // pred_region
    _
  $region9: #{cnn_forward.40} parent=0 // pred_fallthru
    _
  // Predicated region
  $region10: #{cnn_forward.40} parent=0 // pred_check
    _
  $region11: #{cnn_forward.40} parent=0 // pred_check_branch
    %523 = sbr.rel (0) target = $region13
  $region12: #{cnn_forward.40} parent=0 // pred_region
    _
  $region13: #{cnn_forward.40} parent=0 // pred_fallthru
    _

// kernel: cnn_forward.41
$region0: #{cnn_forward.41}
  #allocation0 [shape = 'u32[]', space=smem, size = 0x4, offset = 0x4, fixed_abs, tag = 'smem constant byte address 0x4 - core index']
  #allocation1 [shape = 'u32[72,128]{1,0:T(1,128)}', space=vmem, size = 0x9000, scoped, tag = 'internal scratch']
  %s0 = inlined_call_operand.vmem [shape: f32[256,256], index: 0, kind: input, shape index: {}]
  %s1 = inlined_call_operand.vmem [shape: bf16[256,256], index: 1, kind: output, shape index: {}]
  %s2 = sld [smem:[#allocation0]]
  $region14: #{cnn_forward.41} parent=0
    _
  %s4 = ssub.s32 1, %s2
  %s5 = scalar_select 0, %s4, %s2
  // Predicated region
  $region2: #{cnn_forward.41} parent=0 // pred_check
    _
  $region3: #{cnn_forward.41} parent=0 // pred_check_branch
    %7 = sbr.rel (0) target = $region5
  $region4: #{cnn_forward.41} parent=0 // pred_region
    _
  $region5: #{cnn_forward.41} parent=0 // pred_fallthru
    _
  %v8 = vld [vmem:[%s0] sm:$0xff]
  %v9 = vld [vmem:[%s0 + $0x8] sm:$0xff]
  %v10 = vld [vmem:[%s0 + $0x10] sm:$0xff]
  %v11 = vld [vmem:[%s0 + $0x18] sm:$0xff]
  %v12 = vld [vmem:[%s0 + $0x20] sm:$0xff]
  %v13 = vld [vmem:[%s0 + $0x28] sm:$0xff]
  %v14 = vld [vmem:[%s0 + $0x30] sm:$0xff]
  %v15 = vld [vmem:[%s0 + $0x38] sm:$0xff]
  %v16 = vld [vmem:[%s0 + $0x40] sm:$0xff]
  %v17 = vld [vmem:[%s0 + $0x48] sm:$0xff]
  %v18 = vld [vmem:[%s0 + $0x50] sm:$0xff]
  %v19 = vld [vmem:[%s0 + $0x58] sm:$0xff]
  %v20 = vld [vmem:[%s0 + $0x60] sm:$0xff]
  %v21 = vld [vmem:[%s0 + $0x68] sm:$0xff]
  %v22 = vld [vmem:[%s0 + $0x70] sm:$0xff]
  %v23 = vld [vmem:[%s0 + $0x78] sm:$0xff]
  %v24 = vld [vmem:[%s0 + $0x80] sm:$0xff]
  %v25 = vld [vmem:[%s0 + $0x88] sm:$0xff]
  %v26 = vld [vmem:[%s0 + $0x90] sm:$0xff]
  %v27 = vld [vmem:[%s0 + $0x98] sm:$0xff]
  %v28 = vld [vmem:[%s0 + $0xa0] sm:$0xff]
  %v29 = vld [vmem:[%s0 + $0xa8] sm:$0xff]
  %v30 = vld [vmem:[%s0 + $0xb0] sm:$0xff]
  %v31 = vld [vmem:[%s0 + $0xb8] sm:$0xff]
  %v32 = vld [vmem:[%s0 + $0xc0] sm:$0xff]
  %v33 = vld [vmem:[%s0 + $0xc8] sm:$0xff]
  %v34 = vld [vmem:[%s0 + $0xd0] sm:$0xff]
  %v35 = vld [vmem:[%s0 + $0xd8] sm:$0xff]
  %v36 = vld [vmem:[%s0 + $0xe0] sm:$0xff]
  %v37 = vld [vmem:[%s0 + $0xe8] sm:$0xff]
  %v38 = vld [vmem:[%s0 + $0xf0] sm:$0xff]
  %v39 = vld [vmem:[%s0 + $0xf8] sm:$0xff]
  %v40 = vld [vmem:[%s0 + $0x100] sm:$0xff]
  %v41 = vld [vmem:[%s0 + $0x108] sm:$0xff]
  %v42 = vld [vmem:[%s0 + $0x110] sm:$0xff]
  %v43 = vld [vmem:[%s0 + $0x118] sm:$0xff]
  %v44 = vld [vmem:[%s0 + $0x120] sm:$0xff]
  %v45 = vld [vmem:[%s0 + $0x128] sm:$0xff]
  %v46 = vld [vmem:[%s0 + $0x130] sm:$0xff]
  %v47 = vld [vmem:[%s0 + $0x138] sm:$0xff]
  %v48 = vld [vmem:[%s0 + $0x140] sm:$0xff]
  %v49 = vld [vmem:[%s0 + $0x148] sm:$0xff]
  %v50 = vld [vmem:[%s0 + $0x150] sm:$0xff]
  %v51 = vld [vmem:[%s0 + $0x158] sm:$0xff]
  %v52 = vld [vmem:[%s0 + $0x160] sm:$0xff]
  %v53 = vld [vmem:[%s0 + $0x168] sm:$0xff]
  %v54 = vld [vmem:[%s0 + $0x170] sm:$0xff]
  %v55 = vld [vmem:[%s0 + $0x178] sm:$0xff]
  %v56 = vld [vmem:[%s0 + $0x180] sm:$0xff]
  %v57 = vld [vmem:[%s0 + $0x188] sm:$0xff]
  %v58 = vld [vmem:[%s0 + $0x190] sm:$0xff]
  %v59 = vld [vmem:[%s0 + $0x198] sm:$0xff]
  %v60 = vld [vmem:[%s0 + $0x1a0] sm:$0xff]
  %v61 = vld [vmem:[%s0 + $0x1a8] sm:$0xff]
  %v62 = vld [vmem:[%s0 + $0x1b0] sm:$0xff]
  %v63 = vld [vmem:[%s0 + $0x1b8] sm:$0xff]
  %v64 = vld [vmem:[%s0 + $0x1c0] sm:$0xff]
  %v65 = vld [vmem:[%s0 + $0x1c8] sm:$0xff]
  %v66 = vld [vmem:[%s0 + $0x1d0] sm:$0xff]
  %v67 = vld [vmem:[%s0 + $0x1d8] sm:$0xff]
  %v68 = vld [vmem:[%s0 + $0x1e0] sm:$0xff]
  %v69 = vld [vmem:[%s0 + $0x1e8] sm:$0xff]
  %v70 = vld [vmem:[%s0 + $0x1f0] sm:$0xff]
  %v71 = vld [vmem:[%s0 + $0x1f8] sm:$0xff]
  %v72 = vand.u32 2147483647, %v8
  %v73 = vand.u32 2147483647, %v9
  %v74 = vand.u32 2147483647, %v10
  %v75 = vand.u32 2147483647, %v11
  %v76 = vand.u32 2147483647, %v12
  %v77 = vand.u32 2147483647, %v13
  %v78 = vand.u32 2147483647, %v14
  %v79 = vand.u32 2147483647, %v15
  %v80 = vand.u32 2147483647, %v16
  %v81 = vand.u32 2147483647, %v17
  %v82 = vand.u32 2147483647, %v18
  %v83 = vand.u32 2147483647, %v19
  %v84 = vand.u32 2147483647, %v20
  %v85 = vand.u32 2147483647, %v21
  %v86 = vand.u32 2147483647, %v22
  %v87 = vand.u32 2147483647, %v23
  %v88 = vand.u32 2147483647, %v24
  %v89 = vand.u32 2147483647, %v25
  %v90 = vand.u32 2147483647, %v26
  %v91 = vand.u32 2147483647, %v27
  %v92 = vand.u32 2147483647, %v28
  %v93 = vand.u32 2147483647, %v29
  %v94 = vand.u32 2147483647, %v30
  %v95 = vand.u32 2147483647, %v31
  %v96 = vand.u32 2147483647, %v32
  %v97 = vand.u32 2147483647, %v33
  %v98 = vand.u32 2147483647, %v34
  %v99 = vand.u32 2147483647, %v35
  %v100 = vand.u32 2147483647, %v36
  %v101 = vand.u32 2147483647, %v37
  %v102 = vand.u32 2147483647, %v38
  %v103 = vand.u32 2147483647, %v39
  %v104 = vand.u32 2147483647, %v40
  %v105 = vand.u32 2147483647, %v41
  %v106 = vand.u32 2147483647, %v42
  %v107 = vand.u32 2147483647, %v43
  %v108 = vand.u32 2147483647, %v44
  %v109 = vand.u32 2147483647, %v45
  %v110 = vand.u32 2147483647, %v46
  %v111 = vand.u32 2147483647, %v47
  %v112 = vand.u32 2147483647, %v48
  %v113 = vand.u32 2147483647, %v49
  %v114 = vand.u32 2147483647, %v50
  %v115 = vand.u32 2147483647, %v51
  %v116 = vand.u32 2147483647, %v52
  %v117 = vand.u32 2147483647, %v53
  %v118 = vand.u32 2147483647, %v54
  %v119 = vand.u32 2147483647, %v55
  %v120 = vand.u32 2147483647, %v56
  %v121 = vand.u32 2147483647, %v57
  %v122 = vand.u32 2147483647, %v58
  %v123 = vand.u32 2147483647, %v59
  %v124 = vand.u32 2147483647, %v60
  %v125 = vand.u32 2147483647, %v61
  %v126 = vand.u32 2147483647, %v62
  %v127 = vand.u32 2147483647, %v63
  %v128 = vand.u32 2147483647, %v64
  %v129 = vand.u32 2147483647, %v65
  %v130 = vand.u32 2147483647, %v66
  %v131 = vand.u32 2147483647, %v67
  %v132 = vand.u32 2147483647, %v68
  %v133 = vand.u32 2147483647, %v69
  %v134 = vand.u32 2147483647, %v70
  %v135 = vand.u32 2147483647, %v71
  %v136 = vmul.f32 %v8, %v72
  %v137 = vmul.f32 %v9, %v73
  %v138 = vmul.f32 %v10, %v74
  %v139 = vmul.f32 %v11, %v75
  %v140 = vmul.f32 %v12, %v76
  %v141 = vmul.f32 %v13, %v77
  %v142 = vmul.f32 %v14, %v78
  %v143 = vmul.f32 %v15, %v79
  %v144 = vmul.f32 %v16, %v80
  %v145 = vmul.f32 %v17, %v81
  %v146 = vmul.f32 %v18, %v82
  %v147 = vmul.f32 %v19, %v83
  %v148 = vmul.f32 %v20, %v84
  %v149 = vmul.f32 %v21, %v85
  %v150 = vmul.f32 %v22, %v86
  %v151 = vmul.f32 %v23, %v87
  %v152 = vmul.f32 %v24, %v88
  %v153 = vmul.f32 %v25, %v89
  %v154 = vmul.f32 %v26, %v90
  %v155 = vmul.f32 %v27, %v91
  %v156 = vmul.f32 %v28, %v92
  %v157 = vmul.f32 %v29, %v93
  %v158 = vmul.f32 %v30, %v94
  %v159 = vmul.f32 %v31, %v95
  %v160 = vmul.f32 %v32, %v96
  %v161 = vmul.f32 %v33, %v97
  %v162 = vmul.f32 %v34, %v98
  %v163 = vmul.f32 %v35, %v99
  %v164 = vmul.f32 %v36, %v100
  %v165 = vmul.f32 %v37, %v101
  %v166 = vmul.f32 %v38, %v102
  %v167 = vmul.f32 %v39, %v103
  %v168 = vmul.f32 %v40, %v104
  %v169 = vmul.f32 %v41, %v105
  %v170 = vmul.f32 %v42, %v106
  %v171 = vmul.f32 %v43, %v107
  %v172 = vmul.f32 %v44, %v108
  %v173 = vmul.f32 %v45, %v109
  %v174 = vmul.f32 %v46, %v110
  %v175 = vmul.f32 %v47, %v111
  %v176 = vmul.f32 %v48, %v112
  %v177 = vmul.f32 %v49, %v113
  %v178 = vmul.f32 %v50, %v114
  %v179 = vmul.f32 %v51, %v115
  %v180 = vmul.f32 %v52, %v116
  %v181 = vmul.f32 %v53, %v117
  %v182 = vmul.f32 %v54, %v118
  %v183 = vmul.f32 %v55, %v119
  %v184 = vmul.f32 %v56, %v120
  %v185 = vmul.f32 %v57, %v121
  %v186 = vmul.f32 %v58, %v122
  %v187 = vmul.f32 %v59, %v123
  %v188 = vmul.f32 %v60, %v124
  %v189 = vmul.f32 %v61, %v125
  %v190 = vmul.f32 %v62, %v126
  %v191 = vmul.f32 %v63, %v127
  %v192 = vmul.f32 %v64, %v128
  %v193 = vmul.f32 %v65, %v129
  %v194 = vmul.f32 %v66, %v130
  %v195 = vmul.f32 %v67, %v131
  %v196 = vmul.f32 %v68, %v132
  %v197 = vmul.f32 %v69, %v133
  %v198 = vmul.f32 %v70, %v134
  %v199 = vmul.f32 %v71, %v135
  %v200 = vpack.c.bf16 %v137, %v136
  %v201 = vpack.c.bf16 %v139, %v138
  %v202 = vpack.c.bf16 %v141, %v140
  %v203 = vpack.c.bf16 %v143, %v142
  %v204 = vpack.c.bf16 %v145, %v144
  %v205 = vpack.c.bf16 %v147, %v146
  %v206 = vpack.c.bf16 %v149, %v148
  %v207 = vpack.c.bf16 %v151, %v150
  %v208 = vpack.c.bf16 %v153, %v152
  %v209 = vpack.c.bf16 %v155, %v154
  %v210 = vpack.c.bf16 %v157, %v156
  %v211 = vpack.c.bf16 %v159, %v158
  %v212 = vpack.c.bf16 %v161, %v160
  %v213 = vpack.c.bf16 %v163, %v162
  %v214 = vpack.c.bf16 %v165, %v164
  %v215 = vpack.c.bf16 %v167, %v166
  %v216 = vpack.c.bf16 %v169, %v168
  %v217 = vpack.c.bf16 %v171, %v170
  %v218 = vpack.c.bf16 %v173, %v172
  %v219 = vpack.c.bf16 %v175, %v174
  %v220 = vpack.c.bf16 %v177, %v176
  %v221 = vpack.c.bf16 %v179, %v178
  %v222 = vpack.c.bf16 %v181, %v180
  %v223 = vpack.c.bf16 %v183, %v182
  %v224 = vpack.c.bf16 %v185, %v184
  %v225 = vpack.c.bf16 %v187, %v186
  %v226 = vpack.c.bf16 %v189, %v188
  %v227 = vpack.c.bf16 %v191, %v190
  %v228 = vpack.c.bf16 %v193, %v192
  %v229 = vpack.c.bf16 %v195, %v194
  %v230 = vpack.c.bf16 %v197, %v196
  %v231 = vpack.c.bf16 %v199, %v198
  %232 = vst [vmem:[%s1] sm:$0xff] %v200
  %233 = vst [vmem:[%s1 + $0x8] sm:$0xff] %v201
  %234 = vst [vmem:[%s1 + $0x10] sm:$0xff] %v202
  %235 = vst [vmem:[%s1 + $0x18] sm:$0xff] %v203
  %236 = vst [vmem:[%s1 + $0x20] sm:$0xff] %v204
  %237 = vst [vmem:[%s1 + $0x28] sm:$0xff] %v205
  %238 = vst [vmem:[%s1 + $0x30] sm:$0xff] %v206
  %239 = vst [vmem:[%s1 + $0x38] sm:$0xff] %v207
  %240 = vst [vmem:[%s1 + $0x40] sm:$0xff] %v208
  %241 = vst [vmem:[%s1 + $0x48] sm:$0xff] %v209
  %242 = vst [vmem:[%s1 + $0x50] sm:$0xff] %v210
  %243 = vst [vmem:[%s1 + $0x58] sm:$0xff] %v211
  %244 = vst [vmem:[%s1 + $0x60] sm:$0xff] %v212
  %245 = vst [vmem:[%s1 + $0x68] sm:$0xff] %v213
  %246 = vst [vmem:[%s1 + $0x70] sm:$0xff] %v214
  %247 = vst [vmem:[%s1 + $0x78] sm:$0xff] %v215
  %248 = vst [vmem:[%s1 + $0x80] sm:$0xff] %v216
  %249 = vst [vmem:[%s1 + $0x88] sm:$0xff] %v217
  %250 = vst [vmem:[%s1 + $0x90] sm:$0xff] %v218
  %251 = vst [vmem:[%s1 + $0x98] sm:$0xff] %v219
  %252 = vst [vmem:[%s1 + $0xa0] sm:$0xff] %v220
  %253 = vst [vmem:[%s1 + $0xa8] sm:$0xff] %v221
  %254 = vst [vmem:[%s1 + $0xb0] sm:$0xff] %v222
  %255 = vst [vmem:[%s1 + $0xb8] sm:$0xff] %v223
  %256 = vst [vmem:[%s1 + $0xc0] sm:$0xff] %v224
  %257 = vst [vmem:[%s1 + $0xc8] sm:$0xff] %v225
  %258 = vst [vmem:[%s1 + $0xd0] sm:$0xff] %v226
  %259 = vst [vmem:[%s1 + $0xd8] sm:$0xff] %v227
  %260 = vst [vmem:[%s1 + $0xe0] sm:$0xff] %v228
  %261 = vst [vmem:[%s1 + $0xe8] sm:$0xff] %v229
  %262 = vst [vmem:[%s1 + $0xf0] sm:$0xff] %v230
  %263 = vst [vmem:[%s1 + $0xf8] sm:$0xff] %v231
  // Predicated region
  $region6: #{cnn_forward.41} parent=0 // pred_check
    _
  $region7: #{cnn_forward.41} parent=0 // pred_check_branch
    %265 = sbr.rel (0) target = $region9
  $region8: #{cnn_forward.41} parent=0 // pred_region
    _
  $region9: #{cnn_forward.41} parent=0 // pred_fallthru
    _
  // Predicated region
  $region10: #{cnn_forward.41} parent=0 // pred_check
    _
  $region11: #{cnn_forward.41} parent=0 // pred_check_branch
    %267 = sbr.rel (0) target = $region13
  $region12: #{cnn_forward.41} parent=0 // pred_region
    _
  $region13: #{cnn_forward.41} parent=0 // pred_fallthru
    _

// kernel: cnn_forward.42
$region0: #{cnn_forward.42}
  #allocation0 [shape = 'u32[]', space=smem, size = 0x4, offset = 0x4, fixed_abs, tag = 'smem constant byte address 0x4 - core index']
  #allocation1 [shape = 'u32[72,128]{1,0:T(1,128)}', space=vmem, size = 0x9000, scoped, tag = 'internal scratch']
  %s0 = inlined_call_operand.vmem [shape: f32[10,256], index: 0, kind: input, shape index: {}]
  %s1 = inlined_call_operand.vmem [shape: bf16[10,256], index: 1, kind: output, shape index: {}]
  %s2 = sld [smem:[#allocation0]]
  $region14: #{cnn_forward.42} parent=0
    _
  %s4 = ssub.s32 1, %s2
  %s5 = scalar_select 0, %s4, %s2
  // Predicated region
  $region2: #{cnn_forward.42} parent=0 // pred_check
    _
  $region3: #{cnn_forward.42} parent=0 // pred_check_branch
    %7 = sbr.rel (0) target = $region5
  $region4: #{cnn_forward.42} parent=0 // pred_region
    _
  $region5: #{cnn_forward.42} parent=0 // pred_fallthru
    _
  %v8 = vld [vmem:[%s0] sm:$0xff]
  %v9 = vld [vmem:[%s0 + $0x8] sm:$0xff]
  %v10 = vld [vmem:[%s0 + $0x10] sm:$0x3]
  %v11 = vld [vmem:[%s0 + $0x18] sm:$0x3]
  %v12 = vand.u32 2147483647, %v8
  %v13 = vand.u32 2147483647, %v9
  %v14 = vand.u32 2147483647, %v10
  %v15 = vand.u32 2147483647, %v11
  %v16 = vmul.f32 %v8, %v12
  %v17 = vmul.f32 %v9, %v13
  %v18 = vmul.f32 %v10, %v14
  %v19 = vmul.f32 %v11, %v15
  %v20 = vpack.c.bf16 %v17, %v16
  %v21 = vpack.c.bf16 %v19, %v18
  %22 = vst [vmem:[%s1] sm:$0xff] %v20
  %23 = vst [vmem:[%s1 + $0x8] sm:$0x11] %v21
  // Predicated region
  $region6: #{cnn_forward.42} parent=0 // pred_check
    _
  $region7: #{cnn_forward.42} parent=0 // pred_check_branch
    %25 = sbr.rel (0) target = $region9
  $region8: #{cnn_forward.42} parent=0 // pred_region
    _
  $region9: #{cnn_forward.42} parent=0 // pred_fallthru
    _
  // Predicated region
  $region10: #{cnn_forward.42} parent=0 // pred_check
    _
  $region11: #{cnn_forward.42} parent=0 // pred_check_branch
    %27 = sbr.rel (0) target = $region13
  $region12: #{cnn_forward.42} parent=0 // pred_region
    _
  $region13: #{cnn_forward.42} parent=0 // pred_fallthru
    _

// kernel: cnn_forward.43
$region0: #{cnn_forward.43}
  #allocation0 [shape = 'u32[]', space=smem, size = 0x4, offset = 0x4, fixed_abs, tag = 'smem constant byte address 0x4 - core index']
  #allocation1 [shape = 'u32[72,128]{1,0:T(1,128)}', space=vmem, size = 0x9000, scoped, tag = 'internal scratch']
  %s0 = inlined_call_operand.vmem [shape: bf16[512,2], index: 0, kind: input, shape index: {}]
  %s1 = inlined_call_operand.vmem [shape: bf16[256,512], index: 1, kind: input, shape index: {}]
  %s2 = inlined_call_operand.vmem [shape: f32[256,1], index: 2, kind: input, shape index: {}]
  %s3 = inlined_call_operand.vmem [shape: bf16[256,256], index: 3, kind: input, shape index: {}]
  %s4 = inlined_call_operand.vmem [shape: f32[256,1], index: 4, kind: input, shape index: {}]
  %s5 = inlined_call_operand.vmem [shape: bf16[10,256], index: 5, kind: input, shape index: {}]
  %s6 = inlined_call_operand.vmem [shape: f32[10,1], index: 6, kind: input, shape index: {}]
  %s7 = inlined_call_operand.vmem [shape: f32[10,2], index: 7, kind: output, shape index: {}]
  %s8 = sld [smem:[#allocation0]]
  $region38: #{cnn_forward.43} parent=0
    _
  %s10 = ssub.s32 1, %s8
  %s11 = scalar_select 0, %s10, %s8
  // Predicated region
  $region2: #{cnn_forward.43} parent=0 // pred_check
    _
  $region3: #{cnn_forward.43} parent=0 // pred_check_branch
    %13 = sbr.rel (0) target = $region5
  $region4: #{cnn_forward.43} parent=0 // pred_region
    _
  $region5: #{cnn_forward.43} parent=0 // pred_fallthru
    _
  // Predicated region
  $region6: #{cnn_forward.43} parent=0 // pred_check
    _
  $region7: #{cnn_forward.43} parent=0 // pred_check_branch
    %15 = sbr.rel (0) target = $region9
  $region8: #{cnn_forward.43} parent=0 // pred_region
    _
  $region9: #{cnn_forward.43} parent=0 // pred_fallthru
    _
  // Predicated region
  $region10: #{cnn_forward.43} parent=0 // pred_check
    _
  $region11: #{cnn_forward.43} parent=0 // pred_check_branch
    %17 = sbr.rel (0) target = $region13
  $region12: #{cnn_forward.43} parent=0 // pred_region
    _
  $region13: #{cnn_forward.43} parent=0 // pred_fallthru
    _
  // Predicated region
  $region14: #{cnn_forward.43} parent=0 // pred_check
    _
  $region15: #{cnn_forward.43} parent=0 // pred_check_branch
    %19 = sbr.rel (0) target = $region17
  $region16: #{cnn_forward.43} parent=0 // pred_region
    _
  $region17: #{cnn_forward.43} parent=0 // pred_fallthru
    _
  // Predicated region
  $region18: #{cnn_forward.43} parent=0 // pred_check
    _
  $region19: #{cnn_forward.43} parent=0 // pred_check_branch
    %21 = sbr.rel (0) target = $region21
  $region20: #{cnn_forward.43} parent=0 // pred_region
    _
  $region21: #{cnn_forward.43} parent=0 // pred_fallthru
    _
  // Predicated region
  $region22: #{cnn_forward.43} parent=0 // pred_check
    _
  $region23: #{cnn_forward.43} parent=0 // pred_check_branch
    %23 = sbr.rel (0) target = $region25
  $region24: #{cnn_forward.43} parent=0 // pred_region
    _
  $region25: #{cnn_forward.43} parent=0 // pred_fallthru
    _
  // Predicated region
  $region26: #{cnn_forward.43} parent=0 // pred_check
    _
  $region27: #{cnn_forward.43} parent=0 // pred_check_branch
    %25 = sbr.rel (0) target = $region29
  $region28: #{cnn_forward.43} parent=0 // pred_region
    _
  $region29: #{cnn_forward.43} parent=0 // pred_fallthru
    _
  %v26 = vld [vmem:[%s1] sm:$0xff]
  %v27 = vld [vmem:[%s1 + $0x8] sm:$0xff]
  %v28 = vld [vmem:[%s1 + $0x10] sm:$0xff]
  %v29 = vld [vmem:[%s1 + $0x18] sm:$0xff]
  %v30 = vld [vmem:[%s1 + $0x20] sm:$0xff]
  %v31 = vld [vmem:[%s1 + $0x28] sm:$0xff]
  %v32 = vld [vmem:[%s1 + $0x30] sm:$0xff]
  %v33 = vld [vmem:[%s1 + $0x38] sm:$0xff]
  %v34 = vld [vmem:[%s1 + $0x40] sm:$0xff]
  %v35 = vld [vmem:[%s1 + $0x48] sm:$0xff]
  %v36 = vld [vmem:[%s1 + $0x50] sm:$0xff]
  %v37 = vld [vmem:[%s1 + $0x58] sm:$0xff]
  %v38 = vld [vmem:[%s1 + $0x60] sm:$0xff]
  %v39 = vld [vmem:[%s1 + $0x68] sm:$0xff]
  %v40 = vld [vmem:[%s1 + $0x70] sm:$0xff]
  %v41 = vld [vmem:[%s1 + $0x78] sm:$0xff]
  %v42 = vld [vmem:[%s1 + $0x80] sm:$0xff]
  %v43 = vld [vmem:[%s1 + $0x88] sm:$0xff]
  %v44 = vld [vmem:[%s1 + $0x90] sm:$0xff]
  %v45 = vld [vmem:[%s1 + $0x98] sm:$0xff]
  %v46 = vld [vmem:[%s1 + $0xa0] sm:$0xff]
  %v47 = vld [vmem:[%s1 + $0xa8] sm:$0xff]
  %v48 = vld [vmem:[%s1 + $0xb0] sm:$0xff]
  %v49 = vld [vmem:[%s1 + $0xb8] sm:$0xff]
  %v50 = vld [vmem:[%s1 + $0xc0] sm:$0xff]
  %v51 = vld [vmem:[%s1 + $0xc8] sm:$0xff]
  %v52 = vld [vmem:[%s1 + $0xd0] sm:$0xff]
  %v53 = vld [vmem:[%s1 + $0xd8] sm:$0xff]
  %v54 = vld [vmem:[%s1 + $0xe0] sm:$0xff]
  %v55 = vld [vmem:[%s1 + $0xe8] sm:$0xff]
  %v56 = vld [vmem:[%s1 + $0xf0] sm:$0xff]
  %v57 = vld [vmem:[%s1 + $0xf8] sm:$0xff]
  %v58 = vld [vmem:[%s1 + $0x100] sm:$0xff]
  %v59 = vld [vmem:[%s1 + $0x108] sm:$0xff]
  %v60 = vld [vmem:[%s1 + $0x110] sm:$0xff]
  %v61 = vld [vmem:[%s1 + $0x118] sm:$0xff]
  %v62 = vld [vmem:[%s1 + $0x120] sm:$0xff]
  %v63 = vld [vmem:[%s1 + $0x128] sm:$0xff]
  %v64 = vld [vmem:[%s1 + $0x130] sm:$0xff]
  %v65 = vld [vmem:[%s1 + $0x138] sm:$0xff]
  %v66 = vld [vmem:[%s1 + $0x140] sm:$0xff]
  %v67 = vld [vmem:[%s1 + $0x148] sm:$0xff]
  %v68 = vld [vmem:[%s1 + $0x150] sm:$0xff]
  %v69 = vld [vmem:[%s1 + $0x158] sm:$0xff]
  %v70 = vld [vmem:[%s1 + $0x160] sm:$0xff]
  %v71 = vld [vmem:[%s1 + $0x168] sm:$0xff]
  %v72 = vld [vmem:[%s1 + $0x170] sm:$0xff]
  %v73 = vld [vmem:[%s1 + $0x178] sm:$0xff]
  %v74 = vld [vmem:[%s1 + $0x180] sm:$0xff]
  %v75 = vld [vmem:[%s1 + $0x188] sm:$0xff]
  %v76 = vld [vmem:[%s1 + $0x190] sm:$0xff]
  %v77 = vld [vmem:[%s1 + $0x198] sm:$0xff]
  %v78 = vld [vmem:[%s1 + $0x1a0] sm:$0xff]
  %v79 = vld [vmem:[%s1 + $0x1a8] sm:$0xff]
  %v80 = vld [vmem:[%s1 + $0x1b0] sm:$0xff]
  %v81 = vld [vmem:[%s1 + $0x1b8] sm:$0xff]
  %v82 = vld [vmem:[%s1 + $0x1c0] sm:$0xff]
  %v83 = vld [vmem:[%s1 + $0x1c8] sm:$0xff]
  %v84 = vld [vmem:[%s1 + $0x1d0] sm:$0xff]
  %v85 = vld [vmem:[%s1 + $0x1d8] sm:$0xff]
  %v86 = vld [vmem:[%s1 + $0x1e0] sm:$0xff]
  %v87 = vld [vmem:[%s1 + $0x1e8] sm:$0xff]
  %v88 = vld [vmem:[%s1 + $0x1f0] sm:$0xff]
  %v89 = vld [vmem:[%s1 + $0x1f8] sm:$0xff]
  %v90 = vld [vmem:[%s0] sm:$0xf]
  %v91 = vld [vmem:[%s0 + $0x4] sm:$0xf]
  %v92 = vld [vmem:[%s0 + $0x8] sm:$0xf]
  %v93 = vld [vmem:[%s0 + $0xc] sm:$0xf]
  %v94 = vld [vmem:[%s0 + $0x10] sm:$0xf]
  %v95 = vld [vmem:[%s0 + $0x14] sm:$0xf]
  %v96 = vld [vmem:[%s0 + $0x18] sm:$0xf]
  %v97 = vld [vmem:[%s0 + $0x1c] sm:$0xf]
  %v98 = vld [vmem:[%s0 + $0x20] sm:$0xf]
  %v99 = vld [vmem:[%s0 + $0x24] sm:$0xf]
  %v100 = vld [vmem:[%s0 + $0x28] sm:$0xf]
  %v101 = vld [vmem:[%s0 + $0x2c] sm:$0xf]
  %v102 = vld [vmem:[%s0 + $0x30] sm:$0xf]
  %v103 = vld [vmem:[%s0 + $0x34] sm:$0xf]
  %v104 = vld [vmem:[%s0 + $0x38] sm:$0xf]
  %v105 = vld [vmem:[%s0 + $0x3c] sm:$0xf]
  %v106 = vld [vmem:[%s0 + $0x40] sm:$0xf]
  %v107 = vld [vmem:[%s0 + $0x44] sm:$0xf]
  %v108 = vld [vmem:[%s0 + $0x48] sm:$0xf]
  %v109 = vld [vmem:[%s0 + $0x4c] sm:$0xf]
  %v110 = vld [vmem:[%s0 + $0x50] sm:$0xf]
  %v111 = vld [vmem:[%s0 + $0x54] sm:$0xf]
  %v112 = vld [vmem:[%s0 + $0x58] sm:$0xf]
  %v113 = vld [vmem:[%s0 + $0x5c] sm:$0xf]
  %v114 = vld [vmem:[%s0 + $0x60] sm:$0xf]
  %v115 = vld [vmem:[%s0 + $0x64] sm:$0xf]
  %v116 = vld [vmem:[%s0 + $0x68] sm:$0xf]
  %v117 = vld [vmem:[%s0 + $0x6c] sm:$0xf]
  %v118 = vld [vmem:[%s0 + $0x70] sm:$0xf]
  %v119 = vld [vmem:[%s0 + $0x74] sm:$0xf]
  %v120 = vld [vmem:[%s0 + $0x78] sm:$0xf]
  %v121 = vld [vmem:[%s0 + $0x7c] sm:$0xf]
  %v122 = vld [vmem:[%s0 + $0x80] sm:$0xf]
  %v123 = vld [vmem:[%s0 + $0x84] sm:$0xf]
  %v124 = vld [vmem:[%s0 + $0x88] sm:$0xf]
  %v125 = vld [vmem:[%s0 + $0x8c] sm:$0xf]
  %v126 = vld [vmem:[%s0 + $0x90] sm:$0xf]
  %v127 = vld [vmem:[%s0 + $0x94] sm:$0xf]
  %v128 = vld [vmem:[%s0 + $0x98] sm:$0xf]
  %v129 = vld [vmem:[%s0 + $0x9c] sm:$0xf]
  %v130 = vld [vmem:[%s0 + $0xa0] sm:$0xf]
  %v131 = vld [vmem:[%s0 + $0xa4] sm:$0xf]
  %v132 = vld [vmem:[%s0 + $0xa8] sm:$0xf]
  %v133 = vld [vmem:[%s0 + $0xac] sm:$0xf]
  %v134 = vld [vmem:[%s0 + $0xb0] sm:$0xf]
  %v135 = vld [vmem:[%s0 + $0xb4] sm:$0xf]
  %v136 = vld [vmem:[%s0 + $0xb8] sm:$0xf]
  %v137 = vld [vmem:[%s0 + $0xbc] sm:$0xf]
  %v138 = vld [vmem:[%s0 + $0xc0] sm:$0xf]
  %v139 = vld [vmem:[%s0 + $0xc4] sm:$0xf]
  %v140 = vld [vmem:[%s0 + $0xc8] sm:$0xf]
  %v141 = vld [vmem:[%s0 + $0xcc] sm:$0xf]
  %v142 = vld [vmem:[%s0 + $0xd0] sm:$0xf]
  %v143 = vld [vmem:[%s0 + $0xd4] sm:$0xf]
  %v144 = vld [vmem:[%s0 + $0xd8] sm:$0xf]
  %v145 = vld [vmem:[%s0 + $0xdc] sm:$0xf]
  %v146 = vld [vmem:[%s0 + $0xe0] sm:$0xf]
  %v147 = vld [vmem:[%s0 + $0xe4] sm:$0xf]
  %v148 = vld [vmem:[%s0 + $0xe8] sm:$0xf]
  %v149 = vld [vmem:[%s0 + $0xec] sm:$0xf]
  %v150 = vld [vmem:[%s0 + $0xf0] sm:$0xf]
  %v151 = vld [vmem:[%s0 + $0xf4] sm:$0xf]
  %v152 = vld [vmem:[%s0 + $0xf8] sm:$0xf]
  %v153 = vld [vmem:[%s0 + $0xfc] sm:$0xf]
  %v154 = vld [vmem:[%s2] sm:$0xff]
  %v155 = vld [vmem:[%s2 + $0x8] sm:$0xff]
  %v156 = vld [vmem:[%s2 + $0x10] sm:$0xff]
  %v157 = vld [vmem:[%s2 + $0x18] sm:$0xff]
  %v158 = vld [vmem:[%s2 + $0x20] sm:$0xff]
  %v159 = vld [vmem:[%s2 + $0x28] sm:$0xff]
  %v160 = vld [vmem:[%s2 + $0x30] sm:$0xff]
  %v161 = vld [vmem:[%s2 + $0x38] sm:$0xff]
  %v162 = vld [vmem:[%s2 + $0x40] sm:$0xff]
  %v163 = vld [vmem:[%s2 + $0x48] sm:$0xff]
  %v164 = vld [vmem:[%s2 + $0x50] sm:$0xff]
  %v165 = vld [vmem:[%s2 + $0x58] sm:$0xff]
  %v166 = vld [vmem:[%s2 + $0x60] sm:$0xff]
  %v167 = vld [vmem:[%s2 + $0x68] sm:$0xff]
  %v168 = vld [vmem:[%s2 + $0x70] sm:$0xff]
  %v169 = vld [vmem:[%s2 + $0x78] sm:$0xff]
  %v170 = vld [vmem:[%s2 + $0x80] sm:$0xff]
  %v171 = vld [vmem:[%s2 + $0x88] sm:$0xff]
  %v172 = vld [vmem:[%s2 + $0x90] sm:$0xff]
  %v173 = vld [vmem:[%s2 + $0x98] sm:$0xff]
  %v174 = vld [vmem:[%s2 + $0xa0] sm:$0xff]
  %v175 = vld [vmem:[%s2 + $0xa8] sm:$0xff]
  %v176 = vld [vmem:[%s2 + $0xb0] sm:$0xff]
  %v177 = vld [vmem:[%s2 + $0xb8] sm:$0xff]
  %v178 = vld [vmem:[%s2 + $0xc0] sm:$0xff]
  %v179 = vld [vmem:[%s2 + $0xc8] sm:$0xff]
  %v180 = vld [vmem:[%s2 + $0xd0] sm:$0xff]
  %v181 = vld [vmem:[%s2 + $0xd8] sm:$0xff]
  %v182 = vld [vmem:[%s2 + $0xe0] sm:$0xff]
  %v183 = vld [vmem:[%s2 + $0xe8] sm:$0xff]
  %v184 = vld [vmem:[%s2 + $0xf0] sm:$0xff]
  %v185 = vld [vmem:[%s2 + $0xf8] sm:$0xff]
  %187 = vset.pattern.permute.xlu0 0
  %188 = vperm.xlu0 %187, %v154
  %v189 = vpop.permute.xlu0 %188
  %192 = vset.pattern.permute.xlu0 0
  %193 = vperm.xlu0 %192, %v155
  %v194 = vpop.permute.xlu0 %193
  %197 = vset.pattern.permute.xlu0 0
  %198 = vperm.xlu0 %197, %v156
  %v199 = vpop.permute.xlu0 %198
  %202 = vset.pattern.permute.xlu0 0
  %203 = vperm.xlu0 %202, %v157
  %v204 = vpop.permute.xlu0 %203
  %207 = vset.pattern.permute.xlu0 0
  %208 = vperm.xlu0 %207, %v158
  %v209 = vpop.permute.xlu0 %208
  %212 = vset.pattern.permute.xlu0 0
  %213 = vperm.xlu0 %212, %v159
  %v214 = vpop.permute.xlu0 %213
  %217 = vset.pattern.permute.xlu0 0
  %218 = vperm.xlu0 %217, %v160
  %v219 = vpop.permute.xlu0 %218
  %222 = vset.pattern.permute.xlu0 0
  %223 = vperm.xlu0 %222, %v161
  %v224 = vpop.permute.xlu0 %223
  %227 = vset.pattern.permute.xlu0 0
  %228 = vperm.xlu0 %227, %v162
  %v229 = vpop.permute.xlu0 %228
  %232 = vset.pattern.permute.xlu0 0
  %233 = vperm.xlu0 %232, %v163
  %v234 = vpop.permute.xlu0 %233
  %237 = vset.pattern.permute.xlu0 0
  %238 = vperm.xlu0 %237, %v164
  %v239 = vpop.permute.xlu0 %238
  %242 = vset.pattern.permute.xlu0 0
  %243 = vperm.xlu0 %242, %v165
  %v244 = vpop.permute.xlu0 %243
  %247 = vset.pattern.permute.xlu0 0
  %248 = vperm.xlu0 %247, %v166
  %v249 = vpop.permute.xlu0 %248
  %252 = vset.pattern.permute.xlu0 0
  %253 = vperm.xlu0 %252, %v167
  %v254 = vpop.permute.xlu0 %253
  %257 = vset.pattern.permute.xlu0 0
  %258 = vperm.xlu0 %257, %v168
  %v259 = vpop.permute.xlu0 %258
  %262 = vset.pattern.permute.xlu0 0
  %263 = vperm.xlu0 %262, %v169
  %v264 = vpop.permute.xlu0 %263
  %267 = vset.pattern.permute.xlu0 0
  %268 = vperm.xlu0 %267, %v170
  %v269 = vpop.permute.xlu0 %268
  %272 = vset.pattern.permute.xlu0 0
  %273 = vperm.xlu0 %272, %v171
  %v274 = vpop.permute.xlu0 %273
  %277 = vset.pattern.permute.xlu0 0
  %278 = vperm.xlu0 %277, %v172
  %v279 = vpop.permute.xlu0 %278
  %282 = vset.pattern.permute.xlu0 0
  %283 = vperm.xlu0 %282, %v173
  %v284 = vpop.permute.xlu0 %283
  %287 = vset.pattern.permute.xlu0 0
  %288 = vperm.xlu0 %287, %v174
  %v289 = vpop.permute.xlu0 %288
  %292 = vset.pattern.permute.xlu0 0
  %293 = vperm.xlu0 %292, %v175
  %v294 = vpop.permute.xlu0 %293
  %297 = vset.pattern.permute.xlu0 0
  %298 = vperm.xlu0 %297, %v176
  %v299 = vpop.permute.xlu0 %298
  %302 = vset.pattern.permute.xlu0 0
  %303 = vperm.xlu0 %302, %v177
  %v304 = vpop.permute.xlu0 %303
  %307 = vset.pattern.permute.xlu0 0
  %308 = vperm.xlu0 %307, %v178
  %v309 = vpop.permute.xlu0 %308
  %312 = vset.pattern.permute.xlu0 0
  %313 = vperm.xlu0 %312, %v179
  %v314 = vpop.permute.xlu0 %313
  %317 = vset.pattern.permute.xlu0 0
  %318 = vperm.xlu0 %317, %v180
  %v319 = vpop.permute.xlu0 %318
  %322 = vset.pattern.permute.xlu0 0
  %323 = vperm.xlu0 %322, %v181
  %v324 = vpop.permute.xlu0 %323
  %327 = vset.pattern.permute.xlu0 0
  %328 = vperm.xlu0 %327, %v182
  %v329 = vpop.permute.xlu0 %328
  %332 = vset.pattern.permute.xlu0 0
  %333 = vperm.xlu0 %332, %v183
  %v334 = vpop.permute.xlu0 %333
  %337 = vset.pattern.permute.xlu0 0
  %338 = vperm.xlu0 %337, %v184
  %v339 = vpop.permute.xlu0 %338
  %342 = vset.pattern.permute.xlu0 0
  %343 = vperm.xlu0 %342, %v185
  %v344 = vpop.permute.xlu0 %343
  %v410 = vunpack.c.l.b16 %v26
  %v411 = vunpack.c.h.b16 %v26
  %v412 = vunpack.c.l.b16 %v27
  %v413 = vunpack.c.h.b16 %v27
  %v414 = vunpack.c.l.b16 %v28
  %v415 = vunpack.c.h.b16 %v28
  %v416 = vunpack.c.l.b16 %v29
  %v417 = vunpack.c.h.b16 %v29
  %v418 = vunpack.c.l.b16 %v30
  %v419 = vunpack.c.h.b16 %v30
  %v420 = vunpack.c.l.b16 %v31
  %v421 = vunpack.c.h.b16 %v31
  %v422 = vunpack.c.l.b16 %v32
  %v423 = vunpack.c.h.b16 %v32
  %v424 = vunpack.c.l.b16 %v33
  %v425 = vunpack.c.h.b16 %v33
  %v426 = vunpack.c.l.b16 %v34
  %v427 = vunpack.c.h.b16 %v34
  %v428 = vunpack.c.l.b16 %v35
  %v429 = vunpack.c.h.b16 %v35
  %v430 = vunpack.c.l.b16 %v36
  %v431 = vunpack.c.h.b16 %v36
  %v432 = vunpack.c.l.b16 %v37
  %v433 = vunpack.c.h.b16 %v37
  %v434 = vunpack.c.l.b16 %v38
  %v435 = vunpack.c.h.b16 %v38
  %v436 = vunpack.c.l.b16 %v39
  %v437 = vunpack.c.h.b16 %v39
  %v438 = vunpack.c.l.b16 %v40
  %v439 = vunpack.c.h.b16 %v40
  %v440 = vunpack.c.l.b16 %v41
  %v441 = vunpack.c.h.b16 %v41
  %v442 = vunpack.c.l.b16 %v42
  %v443 = vunpack.c.h.b16 %v42
  %v444 = vunpack.c.l.b16 %v43
  %v445 = vunpack.c.h.b16 %v43
  %v446 = vunpack.c.l.b16 %v44
  %v447 = vunpack.c.h.b16 %v44
  %v448 = vunpack.c.l.b16 %v45
  %v449 = vunpack.c.h.b16 %v45
  %v450 = vunpack.c.l.b16 %v46
  %v451 = vunpack.c.h.b16 %v46
  %v452 = vunpack.c.l.b16 %v47
  %v453 = vunpack.c.h.b16 %v47
  %v454 = vunpack.c.l.b16 %v48
  %v455 = vunpack.c.h.b16 %v48
  %v456 = vunpack.c.l.b16 %v49
  %v457 = vunpack.c.h.b16 %v49
  %v458 = vunpack.c.l.b16 %v50
  %v459 = vunpack.c.h.b16 %v50
  %v460 = vunpack.c.l.b16 %v51
  %v461 = vunpack.c.h.b16 %v51
  %v462 = vunpack.c.l.b16 %v52
  %v463 = vunpack.c.h.b16 %v52
  %v464 = vunpack.c.l.b16 %v53
  %v465 = vunpack.c.h.b16 %v53
  %v466 = vunpack.c.l.b16 %v54
  %v467 = vunpack.c.h.b16 %v54
  %v468 = vunpack.c.l.b16 %v55
  %v469 = vunpack.c.h.b16 %v55
  %v470 = vunpack.c.l.b16 %v56
  %v471 = vunpack.c.h.b16 %v56
  %v472 = vunpack.c.l.b16 %v57
  %v473 = vunpack.c.h.b16 %v57
  %v474 = vunpack.c.l.b16 %v58
  %v475 = vunpack.c.h.b16 %v58
  %v476 = vunpack.c.l.b16 %v59
  %v477 = vunpack.c.h.b16 %v59
  %v478 = vunpack.c.l.b16 %v60
  %v479 = vunpack.c.h.b16 %v60
  %v480 = vunpack.c.l.b16 %v61
  %v481 = vunpack.c.h.b16 %v61
  %v482 = vunpack.c.l.b16 %v62
  %v483 = vunpack.c.h.b16 %v62
  %v484 = vunpack.c.l.b16 %v63
  %v485 = vunpack.c.h.b16 %v63
  %v486 = vunpack.c.l.b16 %v64
  %v487 = vunpack.c.h.b16 %v64
  %v488 = vunpack.c.l.b16 %v65
  %v489 = vunpack.c.h.b16 %v65
  %v490 = vunpack.c.l.b16 %v66
  %v491 = vunpack.c.h.b16 %v66
  %v492 = vunpack.c.l.b16 %v67
  %v493 = vunpack.c.h.b16 %v67
  %v494 = vunpack.c.l.b16 %v68
  %v495 = vunpack.c.h.b16 %v68
  %v496 = vunpack.c.l.b16 %v69
  %v497 = vunpack.c.h.b16 %v69
  %v498 = vunpack.c.l.b16 %v70
  %v499 = vunpack.c.h.b16 %v70
  %v500 = vunpack.c.l.b16 %v71
  %v501 = vunpack.c.h.b16 %v71
  %v502 = vunpack.c.l.b16 %v72
  %v503 = vunpack.c.h.b16 %v72
  %v504 = vunpack.c.l.b16 %v73
  %v505 = vunpack.c.h.b16 %v73
  %v506 = vunpack.c.l.b16 %v74
  %v507 = vunpack.c.h.b16 %v74
  %v508 = vunpack.c.l.b16 %v75
  %v509 = vunpack.c.h.b16 %v75
  %v510 = vunpack.c.l.b16 %v76
  %v511 = vunpack.c.h.b16 %v76
  %v512 = vunpack.c.l.b16 %v77
  %v513 = vunpack.c.h.b16 %v77
  %v514 = vunpack.c.l.b16 %v78
  %v515 = vunpack.c.h.b16 %v78
  %v516 = vunpack.c.l.b16 %v79
  %v517 = vunpack.c.h.b16 %v79
  %v518 = vunpack.c.l.b16 %v80
  %v519 = vunpack.c.h.b16 %v80
  %v520 = vunpack.c.l.b16 %v81
  %v521 = vunpack.c.h.b16 %v81
  %v522 = vunpack.c.l.b16 %v82
  %v523 = vunpack.c.h.b16 %v82
  %v524 = vunpack.c.l.b16 %v83
  %v525 = vunpack.c.h.b16 %v83
  %v526 = vunpack.c.l.b16 %v84
  %v527 = vunpack.c.h.b16 %v84
  %v528 = vunpack.c.l.b16 %v85
  %v529 = vunpack.c.h.b16 %v85
  %v530 = vunpack.c.l.b16 %v86
  %v531 = vunpack.c.h.b16 %v86
  %v532 = vunpack.c.l.b16 %v87
  %v533 = vunpack.c.h.b16 %v87
  %v534 = vunpack.c.l.b16 %v88
  %v535 = vunpack.c.h.b16 %v88
  %v536 = vunpack.c.l.b16 %v89
  %v537 = vunpack.c.h.b16 %v89
  %v538 = vpack.c.b16 %v414, %v410
  %v539 = vpack.c.b16 %v415, %v411
  %v540 = vpack.c.b16 %v416, %v412
  %v541 = vpack.c.b16 %v417, %v413
  %v542 = vpack.c.b16 %v422, %v418
  %v543 = vpack.c.b16 %v423, %v419
  %v544 = vpack.c.b16 %v424, %v420
  %v545 = vpack.c.b16 %v425, %v421
  %v546 = vpack.c.b16 %v430, %v426
  %v547 = vpack.c.b16 %v431, %v427
  %v548 = vpack.c.b16 %v432, %v428
  %v549 = vpack.c.b16 %v433, %v429
  %v550 = vpack.c.b16 %v438, %v434
  %v551 = vpack.c.b16 %v439, %v435
  %v552 = vpack.c.b16 %v440, %v436
  %v553 = vpack.c.b16 %v441, %v437
  %v554 = vpack.c.b16 %v446, %v442
  %v555 = vpack.c.b16 %v447, %v443
  %v556 = vpack.c.b16 %v448, %v444
  %v557 = vpack.c.b16 %v449, %v445
  %v558 = vpack.c.b16 %v454, %v450
  %v559 = vpack.c.b16 %v455, %v451
  %v560 = vpack.c.b16 %v456, %v452
  %v561 = vpack.c.b16 %v457, %v453
  %v562 = vpack.c.b16 %v462, %v458
  %v563 = vpack.c.b16 %v463, %v459
  %v564 = vpack.c.b16 %v464, %v460
  %v565 = vpack.c.b16 %v465, %v461
  %v566 = vpack.c.b16 %v470, %v466
  %v567 = vpack.c.b16 %v471, %v467
  %v568 = vpack.c.b16 %v472, %v468
  %v569 = vpack.c.b16 %v473, %v469
  %v570 = vpack.c.b16 %v478, %v474
  %v571 = vpack.c.b16 %v479, %v475
  %v572 = vpack.c.b16 %v480, %v476
  %v573 = vpack.c.b16 %v481, %v477
  %v574 = vpack.c.b16 %v486, %v482
  %v575 = vpack.c.b16 %v487, %v483
  %v576 = vpack.c.b16 %v488, %v484
  %v577 = vpack.c.b16 %v489, %v485
  %v578 = vpack.c.b16 %v494, %v490
  %v579 = vpack.c.b16 %v495, %v491
  %v580 = vpack.c.b16 %v496, %v492
  %v581 = vpack.c.b16 %v497, %v493
  %v582 = vpack.c.b16 %v502, %v498
  %v583 = vpack.c.b16 %v503, %v499
  %v584 = vpack.c.b16 %v504, %v500
  %v585 = vpack.c.b16 %v505, %v501
  %v586 = vpack.c.b16 %v510, %v506
  %v587 = vpack.c.b16 %v511, %v507
  %v588 = vpack.c.b16 %v512, %v508
  %v589 = vpack.c.b16 %v513, %v509
  %v590 = vpack.c.b16 %v518, %v514
  %v591 = vpack.c.b16 %v519, %v515
  %v592 = vpack.c.b16 %v520, %v516
  %v593 = vpack.c.b16 %v521, %v517
  %v594 = vpack.c.b16 %v526, %v522
  %v595 = vpack.c.b16 %v527, %v523
  %v596 = vpack.c.b16 %v528, %v524
  %v597 = vpack.c.b16 %v529, %v525
  %v598 = vpack.c.b16 %v534, %v530
  %v599 = vpack.c.b16 %v535, %v531
  %v600 = vpack.c.b16 %v536, %v532
  %v601 = vpack.c.b16 %v537, %v533
  %v730 = vunpack.c.l.b16 %v90
  %v731 = vunpack.c.l.b16 %v91
  %v732 = vunpack.c.l.b16 %v92
  %v733 = vunpack.c.l.b16 %v93
  %v734 = vunpack.c.l.b16 %v94
  %v735 = vunpack.c.l.b16 %v95
  %v736 = vunpack.c.l.b16 %v96
  %v737 = vunpack.c.l.b16 %v97
  %v738 = vunpack.c.l.b16 %v98
  %v739 = vunpack.c.l.b16 %v99
  %v740 = vunpack.c.l.b16 %v100
  %v741 = vunpack.c.l.b16 %v101
  %v742 = vunpack.c.l.b16 %v102
  %v743 = vunpack.c.l.b16 %v103
  %v744 = vunpack.c.l.b16 %v104
  %v745 = vunpack.c.l.b16 %v105
  %v746 = vunpack.c.l.b16 %v106
  %v747 = vunpack.c.l.b16 %v107
  %v748 = vunpack.c.l.b16 %v108
  %v749 = vunpack.c.l.b16 %v109
  %v750 = vunpack.c.l.b16 %v110
  %v751 = vunpack.c.l.b16 %v111
  %v752 = vunpack.c.l.b16 %v112
  %v753 = vunpack.c.l.b16 %v113
  %v754 = vunpack.c.l.b16 %v114
  %v755 = vunpack.c.l.b16 %v115
  %v756 = vunpack.c.l.b16 %v116
  %v757 = vunpack.c.l.b16 %v117
  %v758 = vunpack.c.l.b16 %v118
  %v759 = vunpack.c.l.b16 %v119
  %v760 = vunpack.c.l.b16 %v120
  %v761 = vunpack.c.l.b16 %v121
  %v762 = vunpack.c.l.b16 %v122
  %v763 = vunpack.c.l.b16 %v123
  %v764 = vunpack.c.l.b16 %v124
  %v765 = vunpack.c.l.b16 %v125
  %v766 = vunpack.c.l.b16 %v126
  %v767 = vunpack.c.l.b16 %v127
  %v768 = vunpack.c.l.b16 %v128
  %v769 = vunpack.c.l.b16 %v129
  %v770 = vunpack.c.l.b16 %v130
  %v771 = vunpack.c.l.b16 %v131
  %v772 = vunpack.c.l.b16 %v132
  %v773 = vunpack.c.l.b16 %v133
  %v774 = vunpack.c.l.b16 %v134
  %v775 = vunpack.c.l.b16 %v135
  %v776 = vunpack.c.l.b16 %v136
  %v777 = vunpack.c.l.b16 %v137
  %v778 = vunpack.c.l.b16 %v138
  %v779 = vunpack.c.l.b16 %v139
  %v780 = vunpack.c.l.b16 %v140
  %v781 = vunpack.c.l.b16 %v141
  %v782 = vunpack.c.l.b16 %v142
  %v783 = vunpack.c.l.b16 %v143
  %v784 = vunpack.c.l.b16 %v144
  %v785 = vunpack.c.l.b16 %v145
  %v786 = vunpack.c.l.b16 %v146
  %v787 = vunpack.c.l.b16 %v147
  %v788 = vunpack.c.l.b16 %v148
  %v789 = vunpack.c.l.b16 %v149
  %v790 = vunpack.c.l.b16 %v150
  %v791 = vunpack.c.l.b16 %v151
  %v792 = vunpack.c.l.b16 %v152
  %v793 = vunpack.c.l.b16 %v153
  %v794 = vpack.c.b16 %v731, %v730
  %v795 = vpack.c.b16 %v733, %v732
  %v796 = vpack.c.b16 %v735, %v734
  %v797 = vpack.c.b16 %v737, %v736
  %v798 = vpack.c.b16 %v739, %v738
  %v799 = vpack.c.b16 %v741, %v740
  %v800 = vpack.c.b16 %v743, %v742
  %v801 = vpack.c.b16 %v745, %v744
  %v802 = vpack.c.b16 %v747, %v746
  %v803 = vpack.c.b16 %v749, %v748
  %v804 = vpack.c.b16 %v751, %v750
  %v805 = vpack.c.b16 %v753, %v752
  %v806 = vpack.c.b16 %v755, %v754
  %v807 = vpack.c.b16 %v757, %v756
  %v808 = vpack.c.b16 %v759, %v758
  %v809 = vpack.c.b16 %v761, %v760
  %v810 = vpack.c.b16 %v763, %v762
  %v811 = vpack.c.b16 %v765, %v764
  %v812 = vpack.c.b16 %v767, %v766
  %v813 = vpack.c.b16 %v769, %v768
  %v814 = vpack.c.b16 %v771, %v770
  %v815 = vpack.c.b16 %v773, %v772
  %v816 = vpack.c.b16 %v775, %v774
  %v817 = vpack.c.b16 %v777, %v776
  %v818 = vpack.c.b16 %v779, %v778
  %v819 = vpack.c.b16 %v781, %v780
  %v820 = vpack.c.b16 %v783, %v782
  %v821 = vpack.c.b16 %v785, %v784
  %v822 = vpack.c.b16 %v787, %v786
  %v823 = vpack.c.b16 %v789, %v788
  %v824 = vpack.c.b16 %v791, %v790
  %v825 = vpack.c.b16 %v793, %v792
  %858 = vmatpush.bf16.msra.mxu0 %v801
  %859 = vmatpush.bf16.msra.mxu0 %v800
  %860 = vmatpush.bf16.msra.mxu0 %v799
  %861 = vmatpush.bf16.msra.mxu0 %v798
  %862 = vmatpush.bf16.msra.mxu0 %v797
  %863 = vmatpush.bf16.msra.mxu0 %v796
  %864 = vmatpush.bf16.msra.mxu0 %v795
  %865 = vmatpush.bf16.msra.mxu0 %v794
  %866 = vmatmul.bf16.gmra.mxu0 %v538
  %v867 = vpop.f32.mrf.mxu0
  %v868 = vadd.f32 %v189, %v867
  %v869 = vpop.f32.mrf.mxu0
  %v870 = vadd.f32 %v194, %v869
  %871 = vmatmul.bf16.gmra.mxu0 %v542
  %v872 = vpop.f32.mrf.mxu0
  %v873 = vadd.f32 %v199, %v872
  %v874 = vpop.f32.mrf.mxu0
  %v875 = vadd.f32 %v204, %v874
  %876 = vmatmul.bf16.gmra.mxu0 %v546
  %v877 = vpop.f32.mrf.mxu0
  %v878 = vadd.f32 %v209, %v877
  %v879 = vpop.f32.mrf.mxu0
  %v880 = vadd.f32 %v214, %v879
  %881 = vmatmul.bf16.gmra.mxu0 %v550
  %v882 = vpop.f32.mrf.mxu0
  %v883 = vadd.f32 %v219, %v882
  %v884 = vpop.f32.mrf.mxu0
  %v885 = vadd.f32 %v224, %v884
  %886 = vmatmul.bf16.gmra.mxu0 %v554
  %v887 = vpop.f32.mrf.mxu0
  %v888 = vadd.f32 %v229, %v887
  %v889 = vpop.f32.mrf.mxu0
  %v890 = vadd.f32 %v234, %v889
  %891 = vmatmul.bf16.gmra.mxu0 %v558
  %v892 = vpop.f32.mrf.mxu0
  %v893 = vadd.f32 %v239, %v892
  %v894 = vpop.f32.mrf.mxu0
  %v895 = vadd.f32 %v244, %v894
  %896 = vmatmul.bf16.gmra.mxu0 %v562
  %v897 = vpop.f32.mrf.mxu0
  %v898 = vadd.f32 %v249, %v897
  %v899 = vpop.f32.mrf.mxu0
  %v900 = vadd.f32 %v254, %v899
  %901 = vmatmul.bf16.gmra.mxu0 %v566
  %v902 = vpop.f32.mrf.mxu0
  %v903 = vadd.f32 %v259, %v902
  %v904 = vpop.f32.mrf.mxu0
  %v905 = vadd.f32 %v264, %v904
  %906 = vmatmul.bf16.gmra.mxu0 %v570
  %v907 = vpop.f32.mrf.mxu0
  %v908 = vadd.f32 %v269, %v907
  %v909 = vpop.f32.mrf.mxu0
  %v910 = vadd.f32 %v274, %v909
  %911 = vmatmul.bf16.gmra.mxu0 %v574
  %v912 = vpop.f32.mrf.mxu0
  %v913 = vadd.f32 %v279, %v912
  %v914 = vpop.f32.mrf.mxu0
  %v915 = vadd.f32 %v284, %v914
  %916 = vmatmul.bf16.gmra.mxu0 %v578
  %v917 = vpop.f32.mrf.mxu0
  %v918 = vadd.f32 %v289, %v917
  %v919 = vpop.f32.mrf.mxu0
  %v920 = vadd.f32 %v294, %v919
  %921 = vmatmul.bf16.gmra.mxu0 %v582
  %v922 = vpop.f32.mrf.mxu0
  %v923 = vadd.f32 %v299, %v922
  %v924 = vpop.f32.mrf.mxu0
  %v925 = vadd.f32 %v304, %v924
  %926 = vmatmul.bf16.gmra.mxu0 %v586
  %v927 = vpop.f32.mrf.mxu0
  %v928 = vadd.f32 %v309, %v927
  %v929 = vpop.f32.mrf.mxu0
  %v930 = vadd.f32 %v314, %v929
  %931 = vmatmul.bf16.gmra.mxu0 %v590
  %v932 = vpop.f32.mrf.mxu0
  %v933 = vadd.f32 %v319, %v932
  %v934 = vpop.f32.mrf.mxu0
  %v935 = vadd.f32 %v324, %v934
  %936 = vmatmul.bf16.gmra.mxu0 %v594
  %v937 = vpop.f32.mrf.mxu0
  %v938 = vadd.f32 %v329, %v937
  %v939 = vpop.f32.mrf.mxu0
  %v940 = vadd.f32 %v334, %v939
  %941 = vmatmul.bf16.gmra.mxu0 %v598
  %v942 = vpop.f32.mrf.mxu0
  %v943 = vadd.f32 %v339, %v942
  %v944 = vpop.f32.mrf.mxu0
  %v945 = vadd.f32 %v344, %v944
  %946 = vdwg.mxu0
  %947 = vmatpush.bf16.msra.mxu0 %v809
  %948 = vmatpush.bf16.msra.mxu0 %v808
  %949 = vmatpush.bf16.msra.mxu0 %v807
  %950 = vmatpush.bf16.msra.mxu0 %v806
  %951 = vmatpush.bf16.msra.mxu0 %v805
  %952 = vmatpush.bf16.msra.mxu0 %v804
  %953 = vmatpush.bf16.msra.mxu0 %v803
  %954 = vmatpush.bf16.msra.mxu0 %v802
  %955 = vmatmul.bf16.gmra.mxu0 %v539
  %v956 = vpop.f32.mrf.mxu0
  %v957 = vadd.f32 %v868, %v956
  %v958 = vpop.f32.mrf.mxu0
  %v959 = vadd.f32 %v870, %v958
  %960 = vmatmul.bf16.gmra.mxu0 %v543
  %v961 = vpop.f32.mrf.mxu0
  %v962 = vadd.f32 %v873, %v961
  %v963 = vpop.f32.mrf.mxu0
  %v964 = vadd.f32 %v875, %v963
  %965 = vmatmul.bf16.gmra.mxu0 %v547
  %v966 = vpop.f32.mrf.mxu0
  %v967 = vadd.f32 %v878, %v966
  %v968 = vpop.f32.mrf.mxu0
  %v969 = vadd.f32 %v880, %v968
  %970 = vmatmul.bf16.gmra.mxu0 %v551
  %v971 = vpop.f32.mrf.mxu0
  %v972 = vadd.f32 %v883, %v971
  %v973 = vpop.f32.mrf.mxu0
  %v974 = vadd.f32 %v885, %v973
  %975 = vmatmul.bf16.gmra.mxu0 %v555
  %v976 = vpop.f32.mrf.mxu0
  %v977 = vadd.f32 %v888, %v976
  %v978 = vpop.f32.mrf.mxu0
  %v979 = vadd.f32 %v890, %v978
  %980 = vmatmul.bf16.gmra.mxu0 %v559
  %v981 = vpop.f32.mrf.mxu0
  %v982 = vadd.f32 %v893, %v981
  %v983 = vpop.f32.mrf.mxu0
  %v984 = vadd.f32 %v895, %v983
  %985 = vmatmul.bf16.gmra.mxu0 %v563
  %v986 = vpop.f32.mrf.mxu0
  %v987 = vadd.f32 %v898, %v986
  %v988 = vpop.f32.mrf.mxu0
  %v989 = vadd.f32 %v900, %v988
  %990 = vmatmul.bf16.gmra.mxu0 %v567
  %v991 = vpop.f32.mrf.mxu0
  %v992 = vadd.f32 %v903, %v991
  %v993 = vpop.f32.mrf.mxu0
  %v994 = vadd.f32 %v905, %v993
  %995 = vmatmul.bf16.gmra.mxu0 %v571
  %v996 = vpop.f32.mrf.mxu0
  %v997 = vadd.f32 %v908, %v996
  %v998 = vpop.f32.mrf.mxu0
  %v999 = vadd.f32 %v910, %v998
  %1000 = vmatmul.bf16.gmra.mxu0 %v575
  %v1001 = vpop.f32.mrf.mxu0
  %v1002 = vadd.f32 %v913, %v1001
  %v1003 = vpop.f32.mrf.mxu0
  %v1004 = vadd.f32 %v915, %v1003
  %1005 = vmatmul.bf16.gmra.mxu0 %v579
  %v1006 = vpop.f32.mrf.mxu0
  %v1007 = vadd.f32 %v918, %v1006
  %v1008 = vpop.f32.mrf.mxu0
  %v1009 = vadd.f32 %v920, %v1008
  %1010 = vmatmul.bf16.gmra.mxu0 %v583
  %v1011 = vpop.f32.mrf.mxu0
  %v1012 = vadd.f32 %v923, %v1011
  %v1013 = vpop.f32.mrf.mxu0
  %v1014 = vadd.f32 %v925, %v1013
  %1015 = vmatmul.bf16.gmra.mxu0 %v587
  %v1016 = vpop.f32.mrf.mxu0
  %v1017 = vadd.f32 %v928, %v1016
  %v1018 = vpop.f32.mrf.mxu0
  %v1019 = vadd.f32 %v930, %v1018
  %1020 = vmatmul.bf16.gmra.mxu0 %v591
  %v1021 = vpop.f32.mrf.mxu0
  %v1022 = vadd.f32 %v933, %v1021
  %v1023 = vpop.f32.mrf.mxu0
  %v1024 = vadd.f32 %v935, %v1023
  %1025 = vmatmul.bf16.gmra.mxu0 %v595
  %v1026 = vpop.f32.mrf.mxu0
  %v1027 = vadd.f32 %v938, %v1026
  %v1028 = vpop.f32.mrf.mxu0
  %v1029 = vadd.f32 %v940, %v1028
  %1030 = vmatmul.bf16.gmra.mxu0 %v599
  %v1031 = vpop.f32.mrf.mxu0
  %v1032 = vadd.f32 %v943, %v1031
  %v1033 = vpop.f32.mrf.mxu0
  %v1034 = vadd.f32 %v945, %v1033
  %1035 = vdwg.mxu0
  %1036 = vmatpush.bf16.msra.mxu0 %v817
  %1037 = vmatpush.bf16.msra.mxu0 %v816
  %1038 = vmatpush.bf16.msra.mxu0 %v815
  %1039 = vmatpush.bf16.msra.mxu0 %v814
  %1040 = vmatpush.bf16.msra.mxu0 %v813
  %1041 = vmatpush.bf16.msra.mxu0 %v812
  %1042 = vmatpush.bf16.msra.mxu0 %v811
  %1043 = vmatpush.bf16.msra.mxu0 %v810
  %1044 = vmatmul.bf16.gmra.mxu0 %v540
  %v1045 = vpop.f32.mrf.mxu0
  %v1046 = vadd.f32 %v957, %v1045
  %v1047 = vpop.f32.mrf.mxu0
  %v1048 = vadd.f32 %v959, %v1047
  %1049 = vmatmul.bf16.gmra.mxu0 %v544
  %v1050 = vpop.f32.mrf.mxu0
  %v1051 = vadd.f32 %v962, %v1050
  %v1052 = vpop.f32.mrf.mxu0
  %v1053 = vadd.f32 %v964, %v1052
  %1054 = vmatmul.bf16.gmra.mxu0 %v548
  %v1055 = vpop.f32.mrf.mxu0
  %v1056 = vadd.f32 %v967, %v1055
  %v1057 = vpop.f32.mrf.mxu0
  %v1058 = vadd.f32 %v969, %v1057
  %1059 = vmatmul.bf16.gmra.mxu0 %v552
  %v1060 = vpop.f32.mrf.mxu0
  %v1061 = vadd.f32 %v972, %v1060
  %v1062 = vpop.f32.mrf.mxu0
  %v1063 = vadd.f32 %v974, %v1062
  %1064 = vmatmul.bf16.gmra.mxu0 %v556
  %v1065 = vpop.f32.mrf.mxu0
  %v1066 = vadd.f32 %v977, %v1065
  %v1067 = vpop.f32.mrf.mxu0
  %v1068 = vadd.f32 %v979, %v1067
  %1069 = vmatmul.bf16.gmra.mxu0 %v560
  %v1070 = vpop.f32.mrf.mxu0
  %v1071 = vadd.f32 %v982, %v1070
  %v1072 = vpop.f32.mrf.mxu0
  %v1073 = vadd.f32 %v984, %v1072
  %1074 = vmatmul.bf16.gmra.mxu0 %v564
  %v1075 = vpop.f32.mrf.mxu0
  %v1076 = vadd.f32 %v987, %v1075
  %v1077 = vpop.f32.mrf.mxu0
  %v1078 = vadd.f32 %v989, %v1077
  %1079 = vmatmul.bf16.gmra.mxu0 %v568
  %v1080 = vpop.f32.mrf.mxu0
  %v1081 = vadd.f32 %v992, %v1080
  %v1082 = vpop.f32.mrf.mxu0
  %v1083 = vadd.f32 %v994, %v1082
  %1084 = vmatmul.bf16.gmra.mxu0 %v572
  %v1085 = vpop.f32.mrf.mxu0
  %v1086 = vadd.f32 %v997, %v1085
  %v1087 = vpop.f32.mrf.mxu0
  %v1088 = vadd.f32 %v999, %v1087
  %1089 = vmatmul.bf16.gmra.mxu0 %v576
  %v1090 = vpop.f32.mrf.mxu0
  %v1091 = vadd.f32 %v1002, %v1090
  %v1092 = vpop.f32.mrf.mxu0
  %v1093 = vadd.f32 %v1004, %v1092
  %1094 = vmatmul.bf16.gmra.mxu0 %v580
  %v1095 = vpop.f32.mrf.mxu0
  %v1096 = vadd.f32 %v1007, %v1095
  %v1097 = vpop.f32.mrf.mxu0
  %v1098 = vadd.f32 %v1009, %v1097
  %1099 = vmatmul.bf16.gmra.mxu0 %v584
  %v1100 = vpop.f32.mrf.mxu0
  %v1101 = vadd.f32 %v1012, %v1100
  %v1102 = vpop.f32.mrf.mxu0
  %v1103 = vadd.f32 %v1014, %v1102
  %1104 = vmatmul.bf16.gmra.mxu0 %v588
  %v1105 = vpop.f32.mrf.mxu0
  %v1106 = vadd.f32 %v1017, %v1105
  %v1107 = vpop.f32.mrf.mxu0
  %v1108 = vadd.f32 %v1019, %v1107
  %1109 = vmatmul.bf16.gmra.mxu0 %v592
  %v1110 = vpop.f32.mrf.mxu0
  %v1111 = vadd.f32 %v1022, %v1110
  %v1112 = vpop.f32.mrf.mxu0
  %v1113 = vadd.f32 %v1024, %v1112
  %1114 = vmatmul.bf16.gmra.mxu0 %v596
  %v1115 = vpop.f32.mrf.mxu0
  %v1116 = vadd.f32 %v1027, %v1115
  %v1117 = vpop.f32.mrf.mxu0
  %v1118 = vadd.f32 %v1029, %v1117
  %1119 = vmatmul.bf16.gmra.mxu0 %v600
  %v1120 = vpop.f32.mrf.mxu0
  %v1121 = vadd.f32 %v1032, %v1120
  %v1122 = vpop.f32.mrf.mxu0
  %v1123 = vadd.f32 %v1034, %v1122
  %1124 = vdwg.mxu0
  %1125 = vmatpush.bf16.msra.mxu0 %v825
  %1126 = vmatpush.bf16.msra.mxu0 %v824
  %1127 = vmatpush.bf16.msra.mxu0 %v823
  %1128 = vmatpush.bf16.msra.mxu0 %v822
  %1129 = vmatpush.bf16.msra.mxu0 %v821
  %1130 = vmatpush.bf16.msra.mxu0 %v820
  %1131 = vmatpush.bf16.msra.mxu0 %v819
  %1132 = vmatpush.bf16.msra.mxu0 %v818
  %1133 = vmatmul.bf16.gmra.mxu0 %v541
  %v1134 = vpop.f32.mrf.mxu0
  %v1135 = vadd.f32 %v1046, %v1134
  %v1136 = vpop.f32.mrf.mxu0
  %v1137 = vadd.f32 %v1048, %v1136
  %1138 = vmatmul.bf16.gmra.mxu0 %v545
  %v1139 = vpop.f32.mrf.mxu0
  %v1140 = vadd.f32 %v1051, %v1139
  %v1141 = vpop.f32.mrf.mxu0
  %v1142 = vadd.f32 %v1053, %v1141
  %1143 = vmatmul.bf16.gmra.mxu0 %v549
  %v1144 = vpop.f32.mrf.mxu0
  %v1145 = vadd.f32 %v1056, %v1144
  %v1146 = vpop.f32.mrf.mxu0
  %v1147 = vadd.f32 %v1058, %v1146
  %1148 = vmatmul.bf16.gmra.mxu0 %v553
  %v1149 = vpop.f32.mrf.mxu0
  %v1150 = vadd.f32 %v1061, %v1149
  %v1151 = vpop.f32.mrf.mxu0
  %v1152 = vadd.f32 %v1063, %v1151
  %1153 = vmatmul.bf16.gmra.mxu0 %v557
  %v1154 = vpop.f32.mrf.mxu0
  %v1155 = vadd.f32 %v1066, %v1154
  %v1156 = vpop.f32.mrf.mxu0
  %v1157 = vadd.f32 %v1068, %v1156
  %1158 = vmatmul.bf16.gmra.mxu0 %v561
  %v1159 = vpop.f32.mrf.mxu0
  %v1160 = vadd.f32 %v1071, %v1159
  %v1161 = vpop.f32.mrf.mxu0
  %v1162 = vadd.f32 %v1073, %v1161
  %1163 = vmatmul.bf16.gmra.mxu0 %v565
  %v1164 = vpop.f32.mrf.mxu0
  %v1165 = vadd.f32 %v1076, %v1164
  %v1166 = vpop.f32.mrf.mxu0
  %v1167 = vadd.f32 %v1078, %v1166
  %1168 = vmatmul.bf16.gmra.mxu0 %v569
  %v1169 = vpop.f32.mrf.mxu0
  %v1170 = vadd.f32 %v1081, %v1169
  %v1171 = vpop.f32.mrf.mxu0
  %v1172 = vadd.f32 %v1083, %v1171
  %1173 = vmatmul.bf16.gmra.mxu0 %v573
  %v1174 = vpop.f32.mrf.mxu0
  %v1175 = vadd.f32 %v1086, %v1174
  %v1176 = vpop.f32.mrf.mxu0
  %v1177 = vadd.f32 %v1088, %v1176
  %1178 = vmatmul.bf16.gmra.mxu0 %v577
  %v1179 = vpop.f32.mrf.mxu0
  %v1180 = vadd.f32 %v1091, %v1179
  %v1181 = vpop.f32.mrf.mxu0
  %v1182 = vadd.f32 %v1093, %v1181
  %1183 = vmatmul.bf16.gmra.mxu0 %v581
  %v1184 = vpop.f32.mrf.mxu0
  %v1185 = vadd.f32 %v1096, %v1184
  %v1186 = vpop.f32.mrf.mxu0
  %v1187 = vadd.f32 %v1098, %v1186
  %1188 = vmatmul.bf16.gmra.mxu0 %v585
  %v1189 = vpop.f32.mrf.mxu0
  %v1190 = vadd.f32 %v1101, %v1189
  %v1191 = vpop.f32.mrf.mxu0
  %v1192 = vadd.f32 %v1103, %v1191
  %1193 = vmatmul.bf16.gmra.mxu0 %v589
  %v1194 = vpop.f32.mrf.mxu0
  %v1195 = vadd.f32 %v1106, %v1194
  %v1196 = vpop.f32.mrf.mxu0
  %v1197 = vadd.f32 %v1108, %v1196
  %1198 = vmatmul.bf16.gmra.mxu0 %v593
  %v1199 = vpop.f32.mrf.mxu0
  %v1200 = vadd.f32 %v1111, %v1199
  %v1201 = vpop.f32.mrf.mxu0
  %v1202 = vadd.f32 %v1113, %v1201
  %1203 = vmatmul.bf16.gmra.mxu0 %v597
  %v1204 = vpop.f32.mrf.mxu0
  %v1205 = vadd.f32 %v1116, %v1204
  %v1206 = vpop.f32.mrf.mxu0
  %v1207 = vadd.f32 %v1118, %v1206
  %1208 = vmatmul.bf16.gmra.mxu0 %v601
  %v1209 = vpop.f32.mrf.mxu0
  %v1210 = vadd.f32 %v1121, %v1209
  %v1211 = vpop.f32.mrf.mxu0
  %v1212 = vadd.f32 %v1123, %v1211
  %1213 = vdwg.mxu0
  %v1214 = vmax.f32 %v1135, 0.0
  %v1215 = vmax.f32 %v1137, 0.0
  %v1216 = vmax.f32 %v1140, 0.0
  %v1217 = vmax.f32 %v1142, 0.0
  %v1218 = vmax.f32 %v1145, 0.0
  %v1219 = vmax.f32 %v1147, 0.0
  %v1220 = vmax.f32 %v1150, 0.0
  %v1221 = vmax.f32 %v1152, 0.0
  %v1222 = vmax.f32 %v1155, 0.0
  %v1223 = vmax.f32 %v1157, 0.0
  %v1224 = vmax.f32 %v1160, 0.0
  %v1225 = vmax.f32 %v1162, 0.0
  %v1226 = vmax.f32 %v1165, 0.0
  %v1227 = vmax.f32 %v1167, 0.0
  %v1228 = vmax.f32 %v1170, 0.0
  %v1229 = vmax.f32 %v1172, 0.0
  %v1230 = vmax.f32 %v1175, 0.0
  %v1231 = vmax.f32 %v1177, 0.0
  %v1232 = vmax.f32 %v1180, 0.0
  %v1233 = vmax.f32 %v1182, 0.0
  %v1234 = vmax.f32 %v1185, 0.0
  %v1235 = vmax.f32 %v1187, 0.0
  %v1236 = vmax.f32 %v1190, 0.0
  %v1237 = vmax.f32 %v1192, 0.0
  %v1238 = vmax.f32 %v1195, 0.0
  %v1239 = vmax.f32 %v1197, 0.0
  %v1240 = vmax.f32 %v1200, 0.0
  %v1241 = vmax.f32 %v1202, 0.0
  %v1242 = vmax.f32 %v1205, 0.0
  %v1243 = vmax.f32 %v1207, 0.0
  %v1244 = vmax.f32 %v1210, 0.0
  %v1245 = vmax.f32 %v1212, 0.0
  %v1246 = vld [vmem:[%s3] sm:$0xff]
  %v1247 = vld [vmem:[%s3 + $0x8] sm:$0xff]
  %v1248 = vld [vmem:[%s3 + $0x10] sm:$0xff]
  %v1249 = vld [vmem:[%s3 + $0x18] sm:$0xff]
  %v1250 = vld [vmem:[%s3 + $0x20] sm:$0xff]
  %v1251 = vld [vmem:[%s3 + $0x28] sm:$0xff]
  %v1252 = vld [vmem:[%s3 + $0x30] sm:$0xff]
  %v1253 = vld [vmem:[%s3 + $0x38] sm:$0xff]
  %v1254 = vld [vmem:[%s3 + $0x40] sm:$0xff]
  %v1255 = vld [vmem:[%s3 + $0x48] sm:$0xff]
  %v1256 = vld [vmem:[%s3 + $0x50] sm:$0xff]
  %v1257 = vld [vmem:[%s3 + $0x58] sm:$0xff]
  %v1258 = vld [vmem:[%s3 + $0x60] sm:$0xff]
  %v1259 = vld [vmem:[%s3 + $0x68] sm:$0xff]
  %v1260 = vld [vmem:[%s3 + $0x70] sm:$0xff]
  %v1261 = vld [vmem:[%s3 + $0x78] sm:$0xff]
  %v1262 = vld [vmem:[%s3 + $0x80] sm:$0xff]
  %v1263 = vld [vmem:[%s3 + $0x88] sm:$0xff]
  %v1264 = vld [vmem:[%s3 + $0x90] sm:$0xff]
  %v1265 = vld [vmem:[%s3 + $0x98] sm:$0xff]
  %v1266 = vld [vmem:[%s3 + $0xa0] sm:$0xff]
  %v1267 = vld [vmem:[%s3 + $0xa8] sm:$0xff]
  %v1268 = vld [vmem:[%s3 + $0xb0] sm:$0xff]
  %v1269 = vld [vmem:[%s3 + $0xb8] sm:$0xff]
  %v1270 = vld [vmem:[%s3 + $0xc0] sm:$0xff]
  %v1271 = vld [vmem:[%s3 + $0xc8] sm:$0xff]
  %v1272 = vld [vmem:[%s3 + $0xd0] sm:$0xff]
  %v1273 = vld [vmem:[%s3 + $0xd8] sm:$0xff]
  %v1274 = vld [vmem:[%s3 + $0xe0] sm:$0xff]
  %v1275 = vld [vmem:[%s3 + $0xe8] sm:$0xff]
  %v1276 = vld [vmem:[%s3 + $0xf0] sm:$0xff]
  %v1277 = vld [vmem:[%s3 + $0xf8] sm:$0xff]
  %v1278 = vpack.c.bf16 %v1215, %v1214
  %v1279 = vpack.c.bf16 %v1217, %v1216
  %v1280 = vpack.c.bf16 %v1219, %v1218
  %v1281 = vpack.c.bf16 %v1221, %v1220
  %v1282 = vpack.c.bf16 %v1223, %v1222
  %v1283 = vpack.c.bf16 %v1225, %v1224
  %v1284 = vpack.c.bf16 %v1227, %v1226
  %v1285 = vpack.c.bf16 %v1229, %v1228
  %v1286 = vpack.c.bf16 %v1231, %v1230
  %v1287 = vpack.c.bf16 %v1233, %v1232
  %v1288 = vpack.c.bf16 %v1235, %v1234
  %v1289 = vpack.c.bf16 %v1237, %v1236
  %v1290 = vpack.c.bf16 %v1239, %v1238
  %v1291 = vpack.c.bf16 %v1241, %v1240
  %v1292 = vpack.c.bf16 %v1243, %v1242
  %v1293 = vpack.c.bf16 %v1245, %v1244
  %v1294 = vld [vmem:[%s4] sm:$0xff]
  %v1295 = vld [vmem:[%s4 + $0x8] sm:$0xff]
  %v1296 = vld [vmem:[%s4 + $0x10] sm:$0xff]
  %v1297 = vld [vmem:[%s4 + $0x18] sm:$0xff]
  %v1298 = vld [vmem:[%s4 + $0x20] sm:$0xff]
  %v1299 = vld [vmem:[%s4 + $0x28] sm:$0xff]
  %v1300 = vld [vmem:[%s4 + $0x30] sm:$0xff]
  %v1301 = vld [vmem:[%s4 + $0x38] sm:$0xff]
  %v1302 = vld [vmem:[%s4 + $0x40] sm:$0xff]
  %v1303 = vld [vmem:[%s4 + $0x48] sm:$0xff]
  %v1304 = vld [vmem:[%s4 + $0x50] sm:$0xff]
  %v1305 = vld [vmem:[%s4 + $0x58] sm:$0xff]
  %v1306 = vld [vmem:[%s4 + $0x60] sm:$0xff]
  %v1307 = vld [vmem:[%s4 + $0x68] sm:$0xff]
  %v1308 = vld [vmem:[%s4 + $0x70] sm:$0xff]
  %v1309 = vld [vmem:[%s4 + $0x78] sm:$0xff]
  %v1310 = vld [vmem:[%s4 + $0x80] sm:$0xff]
  %v1311 = vld [vmem:[%s4 + $0x88] sm:$0xff]
  %v1312 = vld [vmem:[%s4 + $0x90] sm:$0xff]
  %v1313 = vld [vmem:[%s4 + $0x98] sm:$0xff]
  %v1314 = vld [vmem:[%s4 + $0xa0] sm:$0xff]
  %v1315 = vld [vmem:[%s4 + $0xa8] sm:$0xff]
  %v1316 = vld [vmem:[%s4 + $0xb0] sm:$0xff]
  %v1317 = vld [vmem:[%s4 + $0xb8] sm:$0xff]
  %v1318 = vld [vmem:[%s4 + $0xc0] sm:$0xff]
  %v1319 = vld [vmem:[%s4 + $0xc8] sm:$0xff]
  %v1320 = vld [vmem:[%s4 + $0xd0] sm:$0xff]
  %v1321 = vld [vmem:[%s4 + $0xd8] sm:$0xff]
  %v1322 = vld [vmem:[%s4 + $0xe0] sm:$0xff]
  %v1323 = vld [vmem:[%s4 + $0xe8] sm:$0xff]
  %v1324 = vld [vmem:[%s4 + $0xf0] sm:$0xff]
  %v1325 = vld [vmem:[%s4 + $0xf8] sm:$0xff]
  %1327 = vset.pattern.permute.xlu0 0
  %1328 = vperm.xlu0 %1327, %v1294
  %v1329 = vpop.permute.xlu0 %1328
  %1332 = vset.pattern.permute.xlu0 0
  %1333 = vperm.xlu0 %1332, %v1295
  %v1334 = vpop.permute.xlu0 %1333
  %1337 = vset.pattern.permute.xlu0 0
  %1338 = vperm.xlu0 %1337, %v1296
  %v1339 = vpop.permute.xlu0 %1338
  %1342 = vset.pattern.permute.xlu0 0
  %1343 = vperm.xlu0 %1342, %v1297
  %v1344 = vpop.permute.xlu0 %1343
  %1347 = vset.pattern.permute.xlu0 0
  %1348 = vperm.xlu0 %1347, %v1298
  %v1349 = vpop.permute.xlu0 %1348
  %1352 = vset.pattern.permute.xlu0 0
  %1353 = vperm.xlu0 %1352, %v1299
  %v1354 = vpop.permute.xlu0 %1353
  %1357 = vset.pattern.permute.xlu0 0
  %1358 = vperm.xlu0 %1357, %v1300
  %v1359 = vpop.permute.xlu0 %1358
  %1362 = vset.pattern.permute.xlu0 0
  %1363 = vperm.xlu0 %1362, %v1301
  %v1364 = vpop.permute.xlu0 %1363
  %1367 = vset.pattern.permute.xlu0 0
  %1368 = vperm.xlu0 %1367, %v1302
  %v1369 = vpop.permute.xlu0 %1368
  %1372 = vset.pattern.permute.xlu0 0
  %1373 = vperm.xlu0 %1372, %v1303
  %v1374 = vpop.permute.xlu0 %1373
  %1377 = vset.pattern.permute.xlu0 0
  %1378 = vperm.xlu0 %1377, %v1304
  %v1379 = vpop.permute.xlu0 %1378
  %1382 = vset.pattern.permute.xlu0 0
  %1383 = vperm.xlu0 %1382, %v1305
  %v1384 = vpop.permute.xlu0 %1383
  %1387 = vset.pattern.permute.xlu0 0
  %1388 = vperm.xlu0 %1387, %v1306
  %v1389 = vpop.permute.xlu0 %1388
  %1392 = vset.pattern.permute.xlu0 0
  %1393 = vperm.xlu0 %1392, %v1307
  %v1394 = vpop.permute.xlu0 %1393
  %1397 = vset.pattern.permute.xlu0 0
  %1398 = vperm.xlu0 %1397, %v1308
  %v1399 = vpop.permute.xlu0 %1398
  %1402 = vset.pattern.permute.xlu0 0
  %1403 = vperm.xlu0 %1402, %v1309
  %v1404 = vpop.permute.xlu0 %1403
  %1407 = vset.pattern.permute.xlu0 0
  %1408 = vperm.xlu0 %1407, %v1310
  %v1409 = vpop.permute.xlu0 %1408
  %1412 = vset.pattern.permute.xlu0 0
  %1413 = vperm.xlu0 %1412, %v1311
  %v1414 = vpop.permute.xlu0 %1413
  %1417 = vset.pattern.permute.xlu0 0
  %1418 = vperm.xlu0 %1417, %v1312
  %v1419 = vpop.permute.xlu0 %1418
  %1422 = vset.pattern.permute.xlu0 0
  %1423 = vperm.xlu0 %1422, %v1313
  %v1424 = vpop.permute.xlu0 %1423
  %1427 = vset.pattern.permute.xlu0 0
  %1428 = vperm.xlu0 %1427, %v1314
  %v1429 = vpop.permute.xlu0 %1428
  %1432 = vset.pattern.permute.xlu0 0
  %1433 = vperm.xlu0 %1432, %v1315
  %v1434 = vpop.permute.xlu0 %1433
  %1437 = vset.pattern.permute.xlu0 0
  %1438 = vperm.xlu0 %1437, %v1316
  %v1439 = vpop.permute.xlu0 %1438
  %1442 = vset.pattern.permute.xlu0 0
  %1443 = vperm.xlu0 %1442, %v1317
  %v1444 = vpop.permute.xlu0 %1443
  %1447 = vset.pattern.permute.xlu0 0
  %1448 = vperm.xlu0 %1447, %v1318
  %v1449 = vpop.permute.xlu0 %1448
  %1452 = vset.pattern.permute.xlu0 0
  %1453 = vperm.xlu0 %1452, %v1319
  %v1454 = vpop.permute.xlu0 %1453
  %1457 = vset.pattern.permute.xlu0 0
  %1458 = vperm.xlu0 %1457, %v1320
  %v1459 = vpop.permute.xlu0 %1458
  %1462 = vset.pattern.permute.xlu0 0
  %1463 = vperm.xlu0 %1462, %v1321
  %v1464 = vpop.permute.xlu0 %1463
  %1467 = vset.pattern.permute.xlu0 0
  %1468 = vperm.xlu0 %1467, %v1322
  %v1469 = vpop.permute.xlu0 %1468
  %1472 = vset.pattern.permute.xlu0 0
  %1473 = vperm.xlu0 %1472, %v1323
  %v1474 = vpop.permute.xlu0 %1473
  %1477 = vset.pattern.permute.xlu0 0
  %1478 = vperm.xlu0 %1477, %v1324
  %v1479 = vpop.permute.xlu0 %1478
  %1482 = vset.pattern.permute.xlu0 0
  %1483 = vperm.xlu0 %1482, %v1325
  %v1484 = vpop.permute.xlu0 %1483
  %v1518 = vunpack.c.l.b16 %v1246
  %v1519 = vunpack.c.h.b16 %v1246
  %v1520 = vunpack.c.l.b16 %v1247
  %v1521 = vunpack.c.h.b16 %v1247
  %v1522 = vunpack.c.l.b16 %v1248
  %v1523 = vunpack.c.h.b16 %v1248
  %v1524 = vunpack.c.l.b16 %v1249
  %v1525 = vunpack.c.h.b16 %v1249
  %v1526 = vunpack.c.l.b16 %v1250
  %v1527 = vunpack.c.h.b16 %v1250
  %v1528 = vunpack.c.l.b16 %v1251
  %v1529 = vunpack.c.h.b16 %v1251
  %v1530 = vunpack.c.l.b16 %v1252
  %v1531 = vunpack.c.h.b16 %v1252
  %v1532 = vunpack.c.l.b16 %v1253
  %v1533 = vunpack.c.h.b16 %v1253
  %v1534 = vunpack.c.l.b16 %v1254
  %v1535 = vunpack.c.h.b16 %v1254
  %v1536 = vunpack.c.l.b16 %v1255
  %v1537 = vunpack.c.h.b16 %v1255
  %v1538 = vunpack.c.l.b16 %v1256
  %v1539 = vunpack.c.h.b16 %v1256
  %v1540 = vunpack.c.l.b16 %v1257
  %v1541 = vunpack.c.h.b16 %v1257
  %v1542 = vunpack.c.l.b16 %v1258
  %v1543 = vunpack.c.h.b16 %v1258
  %v1544 = vunpack.c.l.b16 %v1259
  %v1545 = vunpack.c.h.b16 %v1259
  %v1546 = vunpack.c.l.b16 %v1260
  %v1547 = vunpack.c.h.b16 %v1260
  %v1548 = vunpack.c.l.b16 %v1261
  %v1549 = vunpack.c.h.b16 %v1261
  %v1550 = vunpack.c.l.b16 %v1262
  %v1551 = vunpack.c.h.b16 %v1262
  %v1552 = vunpack.c.l.b16 %v1263
  %v1553 = vunpack.c.h.b16 %v1263
  %v1554 = vunpack.c.l.b16 %v1264
  %v1555 = vunpack.c.h.b16 %v1264
  %v1556 = vunpack.c.l.b16 %v1265
  %v1557 = vunpack.c.h.b16 %v1265
  %v1558 = vunpack.c.l.b16 %v1266
  %v1559 = vunpack.c.h.b16 %v1266
  %v1560 = vunpack.c.l.b16 %v1267
  %v1561 = vunpack.c.h.b16 %v1267
  %v1562 = vunpack.c.l.b16 %v1268
  %v1563 = vunpack.c.h.b16 %v1268
  %v1564 = vunpack.c.l.b16 %v1269
  %v1565 = vunpack.c.h.b16 %v1269
  %v1566 = vunpack.c.l.b16 %v1270
  %v1567 = vunpack.c.h.b16 %v1270
  %v1568 = vunpack.c.l.b16 %v1271
  %v1569 = vunpack.c.h.b16 %v1271
  %v1570 = vunpack.c.l.b16 %v1272
  %v1571 = vunpack.c.h.b16 %v1272
  %v1572 = vunpack.c.l.b16 %v1273
  %v1573 = vunpack.c.h.b16 %v1273
  %v1574 = vunpack.c.l.b16 %v1274
  %v1575 = vunpack.c.h.b16 %v1274
  %v1576 = vunpack.c.l.b16 %v1275
  %v1577 = vunpack.c.h.b16 %v1275
  %v1578 = vunpack.c.l.b16 %v1276
  %v1579 = vunpack.c.h.b16 %v1276
  %v1580 = vunpack.c.l.b16 %v1277
  %v1581 = vunpack.c.h.b16 %v1277
  %v1582 = vpack.c.b16 %v1520, %v1518
  %v1583 = vpack.c.b16 %v1521, %v1519
  %v1584 = vpack.c.b16 %v1524, %v1522
  %v1585 = vpack.c.b16 %v1525, %v1523
  %v1586 = vpack.c.b16 %v1528, %v1526
  %v1587 = vpack.c.b16 %v1529, %v1527
  %v1588 = vpack.c.b16 %v1532, %v1530
  %v1589 = vpack.c.b16 %v1533, %v1531
  %v1590 = vpack.c.b16 %v1536, %v1534
  %v1591 = vpack.c.b16 %v1537, %v1535
  %v1592 = vpack.c.b16 %v1540, %v1538
  %v1593 = vpack.c.b16 %v1541, %v1539
  %v1594 = vpack.c.b16 %v1544, %v1542
  %v1595 = vpack.c.b16 %v1545, %v1543
  %v1596 = vpack.c.b16 %v1548, %v1546
  %v1597 = vpack.c.b16 %v1549, %v1547
  %v1598 = vpack.c.b16 %v1552, %v1550
  %v1599 = vpack.c.b16 %v1553, %v1551
  %v1600 = vpack.c.b16 %v1556, %v1554
  %v1601 = vpack.c.b16 %v1557, %v1555
  %v1602 = vpack.c.b16 %v1560, %v1558
  %v1603 = vpack.c.b16 %v1561, %v1559
  %v1604 = vpack.c.b16 %v1564, %v1562
  %v1605 = vpack.c.b16 %v1565, %v1563
  %v1606 = vpack.c.b16 %v1568, %v1566
  %v1607 = vpack.c.b16 %v1569, %v1567
  %v1608 = vpack.c.b16 %v1572, %v1570
  %v1609 = vpack.c.b16 %v1573, %v1571
  %v1610 = vpack.c.b16 %v1576, %v1574
  %v1611 = vpack.c.b16 %v1577, %v1575
  %v1612 = vpack.c.b16 %v1580, %v1578
  %v1613 = vpack.c.b16 %v1581, %v1579
  %1646 = vmatpush.bf16.msra.mxu0 %v1285
  %1647 = vmatpush.bf16.msra.mxu0 %v1284
  %1648 = vmatpush.bf16.msra.mxu0 %v1283
  %1649 = vmatpush.bf16.msra.mxu0 %v1282
  %1650 = vmatpush.bf16.msra.mxu0 %v1281
  %1651 = vmatpush.bf16.msra.mxu0 %v1280
  %1652 = vmatpush.bf16.msra.mxu0 %v1279
  %1653 = vmatpush.bf16.msra.mxu0 %v1278
  %1654 = vmatmul.bf16.gmra.mxu0 %v1582
  %v1655 = vpop.f32.mrf.mxu0
  %v1656 = vadd.f32 %v1329, %v1655
  %v1657 = vpop.f32.mrf.mxu0
  %v1658 = vadd.f32 %v1334, %v1657
  %1659 = vmatmul.bf16.gmra.mxu0 %v1584
  %v1660 = vpop.f32.mrf.mxu0
  %v1661 = vadd.f32 %v1339, %v1660
  %v1662 = vpop.f32.mrf.mxu0
  %v1663 = vadd.f32 %v1344, %v1662
  %1664 = vmatmul.bf16.gmra.mxu0 %v1586
  %v1665 = vpop.f32.mrf.mxu0
  %v1666 = vadd.f32 %v1349, %v1665
  %v1667 = vpop.f32.mrf.mxu0
  %v1668 = vadd.f32 %v1354, %v1667
  %1669 = vmatmul.bf16.gmra.mxu0 %v1588
  %v1670 = vpop.f32.mrf.mxu0
  %v1671 = vadd.f32 %v1359, %v1670
  %v1672 = vpop.f32.mrf.mxu0
  %v1673 = vadd.f32 %v1364, %v1672
  %1674 = vmatmul.bf16.gmra.mxu0 %v1590
  %v1675 = vpop.f32.mrf.mxu0
  %v1676 = vadd.f32 %v1369, %v1675
  %v1677 = vpop.f32.mrf.mxu0
  %v1678 = vadd.f32 %v1374, %v1677
  %1679 = vmatmul.bf16.gmra.mxu0 %v1592
  %v1680 = vpop.f32.mrf.mxu0
  %v1681 = vadd.f32 %v1379, %v1680
  %v1682 = vpop.f32.mrf.mxu0
  %v1683 = vadd.f32 %v1384, %v1682
  %1684 = vmatmul.bf16.gmra.mxu0 %v1594
  %v1685 = vpop.f32.mrf.mxu0
  %v1686 = vadd.f32 %v1389, %v1685
  %v1687 = vpop.f32.mrf.mxu0
  %v1688 = vadd.f32 %v1394, %v1687
  %1689 = vmatmul.bf16.gmra.mxu0 %v1596
  %v1690 = vpop.f32.mrf.mxu0
  %v1691 = vadd.f32 %v1399, %v1690
  %v1692 = vpop.f32.mrf.mxu0
  %v1693 = vadd.f32 %v1404, %v1692
  %1694 = vmatmul.bf16.gmra.mxu0 %v1598
  %v1695 = vpop.f32.mrf.mxu0
  %v1696 = vadd.f32 %v1409, %v1695
  %v1697 = vpop.f32.mrf.mxu0
  %v1698 = vadd.f32 %v1414, %v1697
  %1699 = vmatmul.bf16.gmra.mxu0 %v1600
  %v1700 = vpop.f32.mrf.mxu0
  %v1701 = vadd.f32 %v1419, %v1700
  %v1702 = vpop.f32.mrf.mxu0
  %v1703 = vadd.f32 %v1424, %v1702
  %1704 = vmatmul.bf16.gmra.mxu0 %v1602
  %v1705 = vpop.f32.mrf.mxu0
  %v1706 = vadd.f32 %v1429, %v1705
  %v1707 = vpop.f32.mrf.mxu0
  %v1708 = vadd.f32 %v1434, %v1707
  %1709 = vmatmul.bf16.gmra.mxu0 %v1604
  %v1710 = vpop.f32.mrf.mxu0
  %v1711 = vadd.f32 %v1439, %v1710
  %v1712 = vpop.f32.mrf.mxu0
  %v1713 = vadd.f32 %v1444, %v1712
  %1714 = vmatmul.bf16.gmra.mxu0 %v1606
  %v1715 = vpop.f32.mrf.mxu0
  %v1716 = vadd.f32 %v1449, %v1715
  %v1717 = vpop.f32.mrf.mxu0
  %v1718 = vadd.f32 %v1454, %v1717
  %1719 = vmatmul.bf16.gmra.mxu0 %v1608
  %v1720 = vpop.f32.mrf.mxu0
  %v1721 = vadd.f32 %v1459, %v1720
  %v1722 = vpop.f32.mrf.mxu0
  %v1723 = vadd.f32 %v1464, %v1722
  %1724 = vmatmul.bf16.gmra.mxu0 %v1610
  %v1725 = vpop.f32.mrf.mxu0
  %v1726 = vadd.f32 %v1469, %v1725
  %v1727 = vpop.f32.mrf.mxu0
  %v1728 = vadd.f32 %v1474, %v1727
  %1729 = vmatmul.bf16.gmra.mxu0 %v1612
  %v1730 = vpop.f32.mrf.mxu0
  %v1731 = vadd.f32 %v1479, %v1730
  %v1732 = vpop.f32.mrf.mxu0
  %v1733 = vadd.f32 %v1484, %v1732
  %1734 = vdwg.mxu0
  %1735 = vmatpush.bf16.msra.mxu0 %v1293
  %1736 = vmatpush.bf16.msra.mxu0 %v1292
  %1737 = vmatpush.bf16.msra.mxu0 %v1291
  %1738 = vmatpush.bf16.msra.mxu0 %v1290
  %1739 = vmatpush.bf16.msra.mxu0 %v1289
  %1740 = vmatpush.bf16.msra.mxu0 %v1288
  %1741 = vmatpush.bf16.msra.mxu0 %v1287
  %1742 = vmatpush.bf16.msra.mxu0 %v1286
  %1743 = vmatmul.bf16.gmra.mxu0 %v1583
  %v1744 = vpop.f32.mrf.mxu0
  %v1745 = vadd.f32 %v1656, %v1744
  %v1746 = vpop.f32.mrf.mxu0
  %v1747 = vadd.f32 %v1658, %v1746
  %1748 = vmatmul.bf16.gmra.mxu0 %v1585
  %v1749 = vpop.f32.mrf.mxu0
  %v1750 = vadd.f32 %v1661, %v1749
  %v1751 = vpop.f32.mrf.mxu0
  %v1752 = vadd.f32 %v1663, %v1751
  %1753 = vmatmul.bf16.gmra.mxu0 %v1587
  %v1754 = vpop.f32.mrf.mxu0
  %v1755 = vadd.f32 %v1666, %v1754
  %v1756 = vpop.f32.mrf.mxu0
  %v1757 = vadd.f32 %v1668, %v1756
  %1758 = vmatmul.bf16.gmra.mxu0 %v1589
  %v1759 = vpop.f32.mrf.mxu0
  %v1760 = vadd.f32 %v1671, %v1759
  %v1761 = vpop.f32.mrf.mxu0
  %v1762 = vadd.f32 %v1673, %v1761
  %1763 = vmatmul.bf16.gmra.mxu0 %v1591
  %v1764 = vpop.f32.mrf.mxu0
  %v1765 = vadd.f32 %v1676, %v1764
  %v1766 = vpop.f32.mrf.mxu0
  %v1767 = vadd.f32 %v1678, %v1766
  %1768 = vmatmul.bf16.gmra.mxu0 %v1593
  %v1769 = vpop.f32.mrf.mxu0
  %v1770 = vadd.f32 %v1681, %v1769
  %v1771 = vpop.f32.mrf.mxu0
  %v1772 = vadd.f32 %v1683, %v1771
  %1773 = vmatmul.bf16.gmra.mxu0 %v1595
  %v1774 = vpop.f32.mrf.mxu0
  %v1775 = vadd.f32 %v1686, %v1774
  %v1776 = vpop.f32.mrf.mxu0
  %v1777 = vadd.f32 %v1688, %v1776
  %1778 = vmatmul.bf16.gmra.mxu0 %v1597
  %v1779 = vpop.f32.mrf.mxu0
  %v1780 = vadd.f32 %v1691, %v1779
  %v1781 = vpop.f32.mrf.mxu0
  %v1782 = vadd.f32 %v1693, %v1781
  %1783 = vmatmul.bf16.gmra.mxu0 %v1599
  %v1784 = vpop.f32.mrf.mxu0
  %v1785 = vadd.f32 %v1696, %v1784
  %v1786 = vpop.f32.mrf.mxu0
  %v1787 = vadd.f32 %v1698, %v1786
  %1788 = vmatmul.bf16.gmra.mxu0 %v1601
  %v1789 = vpop.f32.mrf.mxu0
  %v1790 = vadd.f32 %v1701, %v1789
  %v1791 = vpop.f32.mrf.mxu0
  %v1792 = vadd.f32 %v1703, %v1791
  %1793 = vmatmul.bf16.gmra.mxu0 %v1603
  %v1794 = vpop.f32.mrf.mxu0
  %v1795 = vadd.f32 %v1706, %v1794
  %v1796 = vpop.f32.mrf.mxu0
  %v1797 = vadd.f32 %v1708, %v1796
  %1798 = vmatmul.bf16.gmra.mxu0 %v1605
  %v1799 = vpop.f32.mrf.mxu0
  %v1800 = vadd.f32 %v1711, %v1799
  %v1801 = vpop.f32.mrf.mxu0
  %v1802 = vadd.f32 %v1713, %v1801
  %1803 = vmatmul.bf16.gmra.mxu0 %v1607
  %v1804 = vpop.f32.mrf.mxu0
  %v1805 = vadd.f32 %v1716, %v1804
  %v1806 = vpop.f32.mrf.mxu0
  %v1807 = vadd.f32 %v1718, %v1806
  %1808 = vmatmul.bf16.gmra.mxu0 %v1609
  %v1809 = vpop.f32.mrf.mxu0
  %v1810 = vadd.f32 %v1721, %v1809
  %v1811 = vpop.f32.mrf.mxu0
  %v1812 = vadd.f32 %v1723, %v1811
  %1813 = vmatmul.bf16.gmra.mxu0 %v1611
  %v1814 = vpop.f32.mrf.mxu0
  %v1815 = vadd.f32 %v1726, %v1814
  %v1816 = vpop.f32.mrf.mxu0
  %v1817 = vadd.f32 %v1728, %v1816
  %1818 = vmatmul.bf16.gmra.mxu0 %v1613
  %v1819 = vpop.f32.mrf.mxu0
  %v1820 = vadd.f32 %v1731, %v1819
  %v1821 = vpop.f32.mrf.mxu0
  %v1822 = vadd.f32 %v1733, %v1821
  %1823 = vdwg.mxu0
  %v1824 = vmax.f32 %v1745, 0.0
  %v1825 = vmax.f32 %v1747, 0.0
  %v1826 = vmax.f32 %v1750, 0.0
  %v1827 = vmax.f32 %v1752, 0.0
  %v1828 = vmax.f32 %v1755, 0.0
  %v1829 = vmax.f32 %v1757, 0.0
  %v1830 = vmax.f32 %v1760, 0.0
  %v1831 = vmax.f32 %v1762, 0.0
  %v1832 = vmax.f32 %v1765, 0.0
  %v1833 = vmax.f32 %v1767, 0.0
  %v1834 = vmax.f32 %v1770, 0.0
  %v1835 = vmax.f32 %v1772, 0.0
  %v1836 = vmax.f32 %v1775, 0.0
  %v1837 = vmax.f32 %v1777, 0.0
  %v1838 = vmax.f32 %v1780, 0.0
  %v1839 = vmax.f32 %v1782, 0.0
  %v1840 = vmax.f32 %v1785, 0.0
  %v1841 = vmax.f32 %v1787, 0.0
  %v1842 = vmax.f32 %v1790, 0.0
  %v1843 = vmax.f32 %v1792, 0.0
  %v1844 = vmax.f32 %v1795, 0.0
  %v1845 = vmax.f32 %v1797, 0.0
  %v1846 = vmax.f32 %v1800, 0.0
  %v1847 = vmax.f32 %v1802, 0.0
  %v1848 = vmax.f32 %v1805, 0.0
  %v1849 = vmax.f32 %v1807, 0.0
  %v1850 = vmax.f32 %v1810, 0.0
  %v1851 = vmax.f32 %v1812, 0.0
  %v1852 = vmax.f32 %v1815, 0.0
  %v1853 = vmax.f32 %v1817, 0.0
  %v1854 = vmax.f32 %v1820, 0.0
  %v1855 = vmax.f32 %v1822, 0.0
  %v1856 = vld [vmem:[%s5] sm:$0xff]
  %v1857 = vld [vmem:[%s5 + $0x8] sm:$0x11]
  %v1858 = vpack.c.bf16 %v1825, %v1824
  %v1859 = vpack.c.bf16 %v1827, %v1826
  %v1860 = vpack.c.bf16 %v1829, %v1828
  %v1861 = vpack.c.bf16 %v1831, %v1830
  %v1862 = vpack.c.bf16 %v1833, %v1832
  %v1863 = vpack.c.bf16 %v1835, %v1834
  %v1864 = vpack.c.bf16 %v1837, %v1836
  %v1865 = vpack.c.bf16 %v1839, %v1838
  %v1866 = vpack.c.bf16 %v1841, %v1840
  %v1867 = vpack.c.bf16 %v1843, %v1842
  %v1868 = vpack.c.bf16 %v1845, %v1844
  %v1869 = vpack.c.bf16 %v1847, %v1846
  %v1870 = vpack.c.bf16 %v1849, %v1848
  %v1871 = vpack.c.bf16 %v1851, %v1850
  %v1872 = vpack.c.bf16 %v1853, %v1852
  %v1873 = vpack.c.bf16 %v1855, %v1854
  %v1874 = vld [vmem:[%s6] sm:$0xff]
  %v1875 = vld [vmem:[%s6 + $0x8] sm:$0x3]
  %1877 = vset.pattern.permute.xlu0 0
  %1878 = vperm.xlu0 %1877, %v1874
  %v1879 = vpop.permute.xlu0 %1878
  %1882 = vset.pattern.permute.xlu0 0
  %1883 = vperm.xlu0 %1882, %v1875
  %v1884 = vpop.permute.xlu0 %1883
  %v1888 = vunpack.c.l.b16 %v1856
  %v1889 = vunpack.c.h.b16 %v1856
  %v1890 = vunpack.c.l.b16 %v1857
  %v1891 = vunpack.c.h.b16 %v1857
  %v1892 = vpack.c.b16 %v1890, %v1888
  %v1893 = vpack.c.b16 %v1891, %v1889
  %1896 = vmatpush.bf16.msra.mxu0 %v1865
  %1897 = vmatpush.bf16.msra.mxu0 %v1864
  %1898 = vmatpush.bf16.msra.mxu0 %v1863
  %1899 = vmatpush.bf16.msra.mxu0 %v1862
  %1900 = vmatpush.bf16.msra.mxu0 %v1861
  %1901 = vmatpush.bf16.msra.mxu0 %v1860
  %1902 = vmatpush.bf16.msra.mxu0 %v1859
  %1903 = vmatpush.bf16.msra.mxu0 %v1858
  %1904 = vmatmul.bf16.gmra.mxu0 %v1892
  %v1905 = vpop.f32.mrf.mxu0
  %v1906 = vadd.f32 %v1879, %v1905
  %v1907 = vpop.f32.mrf.mxu0
  %v1908 = vadd.f32 %v1884, %v1907
  %1909 = vdwg.mxu0
  %1910 = vmatpush.bf16.msra.mxu0 %v1873
  %1911 = vmatpush.bf16.msra.mxu0 %v1872
  %1912 = vmatpush.bf16.msra.mxu0 %v1871
  %1913 = vmatpush.bf16.msra.mxu0 %v1870
  %1914 = vmatpush.bf16.msra.mxu0 %v1869
  %1915 = vmatpush.bf16.msra.mxu0 %v1868
  %1916 = vmatpush.bf16.msra.mxu0 %v1867
  %1917 = vmatpush.bf16.msra.mxu0 %v1866
  %1918 = vmatmul.bf16.gmra.mxu0 %v1893
  %v1919 = vpop.f32.mrf.mxu0
  %v1920 = vadd.f32 %v1906, %v1919
  %v1921 = vpop.f32.mrf.mxu0
  %v1922 = vadd.f32 %v1908, %v1921
  %1923 = vdwg.mxu0
  %vm1924 = vcmask 15360
  %1925 = vst.msk [vmem:[%s7] sm:$0xff] %vm1924, %v1920
  %vm1926 = vcmask 9216
  %1927 = vst.msk [vmem:[%s7 + $0x8] sm:$0x3] %vm1926, %v1922
  // Predicated region
  $region30: #{cnn_forward.43} parent=0 // pred_check
    _
  $region31: #{cnn_forward.43} parent=0 // pred_check_branch
    %1929 = sbr.rel (0) target = $region33
  $region32: #{cnn_forward.43} parent=0 // pred_region
    _
  $region33: #{cnn_forward.43} parent=0 // pred_fallthru
    _
  // Predicated region
  $region34: #{cnn_forward.43} parent=0 // pred_check
    _
  $region35: #{cnn_forward.43} parent=0 // pred_check_branch
    %1931 = sbr.rel (0) target = $region37
  $region36: #{cnn_forward.43} parent=0 // pred_region
    _
  $region37: #{cnn_forward.43} parent=0 // pred_fallthru
    _

</llo_original>
